<compile_context>
chip_gen: v5e
topology: v5e:2x2
jax: 0.10.0
libtpu: 0.0.40
codegen_flags: <defaults>
</compile_context>

<pallas_src>
import functools
import math

import jax
import jax.numpy as jnp
from jax.experimental import pallas as pl
from jax.experimental.pallas import tpu as pltpu

_LN_EPS = 1e-5


# ----------------------------- kernels -------------------------------------


def _ln_qkv_kernel(x_ref, g_ref, be_ref, wqkv_ref, bqkv_ref, qkv_ref):
    """LayerNorm(norm1) fused with the single wide QKV linear (dim -> 3*dim)."""
    x = x_ref[0].astype(jnp.float32)                      # (tn, C)
    mu = jnp.mean(x, axis=-1, keepdims=True)
    xc = x - mu
    var = jnp.mean(xc * xc, axis=-1, keepdims=True)
    xn = xc * jax.lax.rsqrt(var + _LN_EPS)
    xn = xn * g_ref[0] + be_ref[0]
    xb = xn.astype(jnp.bfloat16)                          # bf16 MXU operand

    # one (tn, C) x (C, 3C) matmul, f32 accumulation on the MXU
    qkv = (jnp.dot(xb, wqkv_ref[...], preferred_element_type=jnp.float32)
           + bqkv_ref[0])
    qkv_ref[0] = qkv.astype(qkv_ref.dtype)                # bf16 store


def _wattn_kernel(q_ref, k_ref, v_ref, rpb_ref, o_ref, *, num_heads):
    """Grouped windowed multi-head attention with relative position bias.

    q_ref:   (G, nq, C)   nq = window_size^2   (q already scaled)
    k_ref:   (G, n,  C)   n  = overlap_win_size^2
    v_ref:   (G, n,  C)
    rpb_ref: (num_heads, nq, n)
    """
    q = q_ref[...]                                        # bf16
    k = k_ref[...]
    v = v_ref[...]
    C = q.shape[-1]
    d = C // num_heads

    outs = []
    for h in range(num_heads):                            # tiny static unroll
        qh = q[:, :, h * d:(h + 1) * d]
        kh = k[:, :, h * d:(h + 1) * d]
        vh = v[:, :, h * d:(h + 1) * d]
        # window-batched scores: (G, nq, d) x (G, n, d) -> (G, nq, n)
        s = jnp.einsum('gqd,gkd->gqk', qh, kh,
                       preferred_element_type=jnp.float32)
        s = s + rpb_ref[h][None]                          # (nq, n) bias
        m = jnp.max(s, axis=-1, keepdims=True)
        p = jnp.exp(s - m)
        denom = jnp.sum(p, axis=-1, keepdims=True)
        p = p * pl.reciprocal(denom, approx=True)
        outs.append(jnp.einsum('gqk,gkd->gqd', p.astype(jnp.bfloat16), vh,
                               preferred_element_type=jnp.float32))
    o_ref[...] = jnp.concatenate(outs, axis=-1).astype(o_ref.dtype)


def _proj_mlp_kernel(a_ref, sc_ref, wp_ref, bp_ref, g2_ref, be2_ref,
                     w1_ref, b1_ref, w2_ref, b2_ref, o_ref):
    """proj + shortcut, then LayerNorm(norm2) + MLP(GELU) + residual."""
    a = a_ref[0]                                          # (tn, C) bf16
    y = (jnp.dot(a, wp_ref[...], preferred_element_type=jnp.float32)
         + bp_ref[0]
         + sc_ref[0].astype(jnp.float32))                 # x = proj(x)+shortcut

    mu = jnp.mean(y, axis=-1, keepdims=True)
    yc = y - mu
    var = jnp.mean(yc * yc, axis=-1, keepdims=True)
    z = yc * jax.lax.rsqrt(var + _LN_EPS)
    z = z * g2_ref[0] + be2_ref[0]

    h1 = (jnp.dot(z.astype(jnp.bfloat16), w1_ref[...],
                  preferred_element_type=jnp.float32)
          + b1_ref[0])
    # TODO(synk): PyTorch nn.GELU default is the exact erf form; using the
    # tanh approximation here (guaranteed Mosaic lowering, negligible delta).
    h1 = jax.nn.gelu(h1, approximate=True)

    out = (y
           + jnp.dot(h1.astype(jnp.bfloat16), w2_ref[...],
                     preferred_element_type=jnp.float32)
           + b2_ref[0])
    o_ref[0] = out.astype(o_ref.dtype)


# ----------------------------- pallas_call wrappers -------------------------


def _pick_tile(n, cap=1024):
    """Largest divisor of n that is <= cap and a multiple of 8 (else n)."""
    if n <= cap:
        return n
    t = cap - (cap % 8)
    while t >= 8:
        if n % t == 0:
            return t
        t -= 8
    return n


def _pick_group(bw, cap=32):
    """Windows per attention grid step: divisor of bw, <= cap, prefer >=2 steps."""
    divs = [g for g in range(1, bw + 1) if bw % g == 0 and g <= cap]
    pref = [g for g in divs if bw // g >= 2]
    return max(pref) if pref else max(divs)


def _ln_qkv(x, g, be, wqkv, bqkv, *, tn):
    B, N, C = x.shape
    C3 = wqkv.shape[1]
    row_in = pl.BlockSpec((1, tn, C), lambda b, i: (b, i, 0))
    row_out = pl.BlockSpec((1, tn, C3), lambda b, i: (b, i, 0))
    vecC = pl.BlockSpec((1, C), lambda b, i: (0, 0))
    return pl.pallas_call(
        _ln_qkv_kernel,
        grid=(B, N // tn),
        in_specs=[row_in, vecC, vecC,
                  pl.BlockSpec((C, C3), lambda b, i: (0, 0)),
                  pl.BlockSpec((1, C3), lambda b, i: (0, 0))],
        out_specs=row_out,
        out_shape=jax.ShapeDtypeStruct((B, N, C3), jnp.bfloat16),
        compiler_params=pltpu.CompilerParams(
            dimension_semantics=("parallel", "parallel")),
    )(x, g, be, wqkv, bqkv)


def _window_attention(qw, kw, vw, rpb, *, num_heads, group):
    Bw, nq, C = qw.shape
    _, n, _ = kw.shape
    kern = functools.partial(_wattn_kernel, num_heads=num_heads)
    return pl.pallas_call(
        kern,
        grid=(Bw // group,),
        in_specs=[
            pl.BlockSpec((group, nq, C), lambda g: (g, 0, 0)),
            pl.BlockSpec((group, n, C), lambda g: (g, 0, 0)),
            pl.BlockSpec((group, n, C), lambda g: (g, 0, 0)),
            pl.BlockSpec((num_heads, nq, n), lambda g: (0, 0, 0)),
        ],
        out_specs=pl.BlockSpec((group, nq, C), lambda g: (g, 0, 0)),
        out_shape=jax.ShapeDtypeStruct((Bw, nq, C), jnp.bfloat16),
        compiler_params=pltpu.CompilerParams(
            dimension_semantics=("parallel",)),
    )(qw, kw, vw, rpb)


def _proj_mlp(a, sc, wp, bp, g2, be2, w1, b1, w2, b2, *, tn):
    B, N, C = a.shape
    Ch = w1.shape[1]
    row = pl.BlockSpec((1, tn, C), lambda b, i: (b, i, 0))
    vecC = pl.BlockSpec((1, C), lambda b, i: (0, 0))
    return pl.pallas_call(
        _proj_mlp_kernel,
        grid=(B, N // tn),
        in_specs=[row, row,
                  pl.BlockSpec((C, C), lambda b, i: (0, 0)), vecC,
                  vecC, vecC,
                  pl.BlockSpec((C, Ch), lambda b, i: (0, 0)),
                  pl.BlockSpec((1, Ch), lambda b, i: (0, 0)),
                  pl.BlockSpec((Ch, C), lambda b, i: (0, 0)), vecC],
        out_specs=row,
        out_shape=jax.ShapeDtypeStruct((B, N, C), sc.dtype),
        compiler_params=pltpu.CompilerParams(
            dimension_semantics=("parallel", "parallel")),
    )(a, sc, wp, bp, g2, be2, w1, b1, w2, b2)


# ----------------------------- OCAB forward ----------------------------------


def ocab_forward(x, rpi, params, *, x_size, window_size, overlap_win_size,
                 num_heads):
    """x: (B, H*W, C); rpi: (ws*ws, ows*ows) int32. Returns (B, H*W, C)."""
    h, w = x_size
    B, N, C = x.shape
    ws, ows = window_size, overlap_win_size
    d = C // num_heads
    scale = d ** (-0.5)
    shortcut = x

    tn = _pick_tile(N)

    # Fuse q/k/v weights into one (C, 3C) bf16 matrix; fold the attention scale
    # into the q columns (and q bias) so the attention kernel never rescales.
    wqkv = jnp.concatenate(
        [params["wq"] * scale, params["wk"], params["wv"]],
        axis=1).astype(jnp.bfloat16)
    bqkv = jnp.concatenate(
        [params["bq"] * scale, params["bk"], params["bv"]], axis=1)  # f32

    # 1) LayerNorm1 + fused QKV projection (one kernel, one wide output)
    qkv = _ln_qkv(x, params["ln1_g"], params["ln1_b"], wqkv, bqkv, tn=tn)
    q = qkv[..., :C]            # bf16 views, fused into the gathers below
    k = qkv[..., C:2 * C]
    v = qkv[..., 2 * C:]

    # 2) data rearrangement glue (gathers / reshapes only, all in bf16)
    nwh, nww = h // ws, w // ws
    nw = nwh * nww

    qwin = (q.reshape(B, nwh, ws, nww, ws, C)
             .transpose(0, 1, 3, 2, 4, 5)
             .reshape(B * nw, ws * ws, C))

    pad = (ows - ws) // 2
    rows = (jnp.arange(nwh) * ws)[:, None] + jnp.arange(ows)[None, :]
    cols = (jnp.arange(nww) * ws)[:, None] + jnp.arange(ows)[None, :]

    # TODO(synk): the overlapping k/v windows are still materialized (2.25x
    # expansion) in HBM, though now in bf16; a manual-DMA gather from the
    # padded image inside the attention kernel would remove this round trip.
    def overlap_windows(t):
        timg = t.reshape(B, h, w, C)
        tpad = jnp.pad(timg, ((0, 0), (pad, pad), (pad, pad), (0, 0)))
        tw = tpad[:, rows]                     # (B, nwh, ows, Wp, C)
        tw = tw[:, :, :, cols]                 # (B, nwh, ows, nww, ows, C)
        tw = tw.transpose(0, 1, 3, 2, 4, 5)    # (B, nwh, nww, ows, ows, C)
        return tw.reshape(B * nw, ows * ows, C)

    kwin = overlap_windows(k)
    vwin = overlap_windows(v)

    rpb = params["rpb_table"][rpi.reshape(-1)]
    rpb = rpb.reshape(ws * ws, ows * ows, num_heads)
    rpb = jnp.transpose(rpb, (2, 0, 1))        # (nh, nq, n) f32

    # 3) grouped windowed multi-head attention (softmax on-chip)
    group = _pick_group(B * nw)
    attn = _window_attention(qwin, kwin, vwin, rpb,
                             num_heads=num_heads, group=group)

    # window reverse (bf16)
    attn = (attn.reshape(B, nwh, nww, ws, ws, C)
                .transpose(0, 1, 3, 2, 4, 5)
                .reshape(B, N, C))

    # 4) proj + residual + LayerNorm2 + MLP + residual (fused, one kernel)
    out = _proj_mlp(attn, shortcut,
                    params["wp"].astype(jnp.bfloat16), params["bp"],
                    params["ln2_g"], params["ln2_b"],
                    params["w1"].astype(jnp.bfloat16), params["b1"],
                    params["w2"].astype(jnp.bfloat16), params["b2"], tn=tn)
    return out


# ----------------------------- params / rpi ----------------------------------


def calc_rpi_oca(ws, ows):
    """Relative position index between window (ws^2) and overlap window (ows^2)."""
    co = jnp.stack(jnp.meshgrid(jnp.arange(ws), jnp.arange(ws), indexing="ij"))
    co = co.reshape(2, -1)                                # (2, ws*ws)
    ce = jnp.stack(jnp.meshgrid(jnp.arange(ows), jnp.arange(ows), indexing="ij"))
    ce = ce.reshape(2, -1)                                # (2, ows*ows)
    rel = ce[:, None, :] - co[:, :, None]                 # (2, ws*ws, ows*ows)
    rel = rel.transpose(1, 2, 0) + (ws - 1)               # shift to start at 0
    idx = rel[..., 0] * (ws + ows - 1) + rel[..., 1]
    return idx.astype(jnp.int32)


def init_params(key, dim, num_heads, window_size, overlap_win_size, mlp_ratio):
    """Deterministic synthetic weights (PyTorch-style uniform fan-in init)."""
    ks = jax.random.split(key, 14)
    hidden = int(dim * mlp_ratio)

    def u(k, shape, fan_in):
        bound = 1.0 / math.sqrt(fan_in)
        return jax.random.uniform(k, shape, jnp.float32, -bound, bound)

    table_size = (window_size + overlap_win_size - 1) ** 2
    return {
        "ln1_g": jnp.ones((1, dim), jnp.float32),
        "ln1_b": jnp.zeros((1, dim), jnp.float32),
        # qkv Linear(dim, 3*dim) split column-wise into q/k/v, stored (Cin, Cout)
        "wq": u(ks[0], (dim, dim), dim), "bq": u(ks[1], (1, dim), dim),
        "wk": u(ks[2], (dim, dim), dim), "bk": u(ks[3], (1, dim), dim),
        "wv": u(ks[4], (dim, dim), dim), "bv": u(ks[5], (1, dim), dim),
        "rpb_table": 0.02 * jax.random.truncated_normal(
            ks[6], -2.0, 2.0, (table_size, num_heads), jnp.float32),
        "wp": u(ks[7], (dim, dim), dim), "bp": u(ks[8], (1, dim), dim),
        "ln2_g": jnp.ones((1, dim), jnp.float32),
        "ln2_b": jnp.zeros((1, dim), jnp.float32),
        "w1": u(ks[9], (dim, hidden), dim), "b1": u(ks[10], (1, hidden), dim),
        "w2": u(ks[11], (hidden, dim), hidden), "b2": u(ks[12], (1, dim), hidden),
    }


if __name__ == "__main__":
    key = jax.random.PRNGKey(0)
    kx, kp = jax.random.split(key)

    B = 2
    H = W = 16
    dim = 64
    num_heads = 2
    window_size = 8
    overlap_ratio = 0.5
    mlp_ratio = 2
    ows = int(window_size * overlap_ratio) + window_size   # 12

    N = H * W
    x = jax.random.normal(kx, (B, N, dim), dtype=jnp.float32)
    params = init_params(kp, dim, num_heads, window_size, ows, mlp_ratio)
    rpi = calc_rpi_oca(window_size, ows)

    fwd = jax.jit(functools.partial(
        ocab_forward, x_size=(H, W), window_size=window_size,
        overlap_win_size=ows, num_heads=num_heads))
    y = fwd(x, rpi, params)
    jax.block_until_ready(y)

    assert y.shape == (B, N, dim), y.shape
    assert bool(jnp.all(jnp.isfinite(y)))
    print("KERNEL_OK")
</pallas_src>

<mosaic_0001>
module attributes {stable_mosaic.version = 11 : i64} {
  func.func @_ln_qkv_kernel(%arg0: i32, %arg1: i32, %arg2: memref<1x256x64xf32, #tpu.memory_space<vmem>>, %arg3: memref<1x64xf32, #tpu.memory_space<vmem>>, %arg4: memref<1x64xf32, #tpu.memory_space<vmem>>, %arg5: memref<64x192xbf16, #tpu.memory_space<vmem>>, %arg6: memref<1x192xf32, #tpu.memory_space<vmem>>, %arg7: memref<1x256x192xbf16, #tpu.memory_space<vmem>>) attributes {dimension_semantics = [#tpu.dimension_semantics<parallel>, #tpu.dimension_semantics<parallel>], iteration_bounds = array<i64: 2, 1>, scalar_prefetch = 0 : i64, scratch_operands = 0 : i64, tpu.core_type = #tpu.core_type<tc>, window_params = [{transform_indices = @transform_0, window_bounds = array<i64: 1, 256, 64>}, {pipeline_mode = #tpu.pipeline_mode<synchronous>, transform_indices = @transform_1, window_bounds = array<i64: 1, 64>}, {pipeline_mode = #tpu.pipeline_mode<synchronous>, transform_indices = @transform_2, window_bounds = array<i64: 1, 64>}, {pipeline_mode = #tpu.pipeline_mode<synchronous>, transform_indices = @transform_3, window_bounds = array<i64: 64, 192>}, {pipeline_mode = #tpu.pipeline_mode<synchronous>, transform_indices = @transform_4, window_bounds = array<i64: 1, 192>}, {transform_indices = @transform_5, window_bounds = array<i64: 1, 256, 192>}]} {
    %c0 = arith.constant 0 : index
    %c0_0 = arith.constant 0 : index
    %c0_1 = arith.constant 0 : index
    %0 = vector.load %arg2[%c0, %c0_0, %c0_1] : memref<1x256x64xf32, #tpu.memory_space<vmem>>, vector<1x256x64xf32>
    %1 = vector.shape_cast %0 : vector<1x256x64xf32> to vector<256x64xf32>
    %cst = arith.constant dense<0.000000e+00> : vector<256xf32>
    %2 = vector.multi_reduction <add>, %1, %cst [1] : vector<256x64xf32> to vector<256xf32>
    %3 = vector.shape_cast %2 : vector<256xf32> to vector<256x1xf32>
    %cst_2 = arith.constant 6.400000e+01 : f32
    %4 = vector.broadcast %cst_2 : f32 to vector<256x1xf32>
    %5 = arith.divf %3, %4 : vector<256x1xf32>
    %6 = vector.broadcast %5 : vector<256x1xf32> to vector<256x64xf32>
    %7 = arith.subf %1, %6 : vector<256x64xf32>
    %8 = arith.mulf %7, %7 : vector<256x64xf32>
    %cst_3 = arith.constant dense<0.000000e+00> : vector<256xf32>
    %9 = vector.multi_reduction <add>, %8, %cst_3 [1] : vector<256x64xf32> to vector<256xf32>
    %10 = vector.shape_cast %9 : vector<256xf32> to vector<256x1xf32>
    %cst_4 = arith.constant 6.400000e+01 : f32
    %11 = vector.broadcast %cst_4 : f32 to vector<256x1xf32>
    %12 = arith.divf %10, %11 : vector<256x1xf32>
    %cst_5 = arith.constant 9.99999974E-6 : f32
    %13 = vector.broadcast %cst_5 : f32 to vector<256x1xf32>
    %14 = arith.addf %12, %13 : vector<256x1xf32>
    %15 = math.rsqrt %14 : vector<256x1xf32>
    %16 = vector.broadcast %15 : vector<256x1xf32> to vector<256x64xf32>
    %17 = arith.mulf %7, %16 : vector<256x64xf32>
    %c0_6 = arith.constant 0 : index
    %c0_7 = arith.constant 0 : index
    %18 = vector.load %arg3[%c0_6, %c0_7] : memref<1x64xf32, #tpu.memory_space<vmem>>, vector<1x64xf32>
    %19 = vector.shape_cast %18 : vector<1x64xf32> to vector<64xf32>
    %20 = vector.shape_cast %19 : vector<64xf32> to vector<1x64xf32>
    %21 = vector.broadcast %20 : vector<1x64xf32> to vector<256x64xf32>
    %22 = arith.mulf %17, %21 : vector<256x64xf32>
    %c0_8 = arith.constant 0 : index
    %c0_9 = arith.constant 0 : index
    %23 = vector.load %arg4[%c0_8, %c0_9] : memref<1x64xf32, #tpu.memory_space<vmem>>, vector<1x64xf32>
    %24 = vector.shape_cast %23 : vector<1x64xf32> to vector<64xf32>
    %25 = vector.shape_cast %24 : vector<64xf32> to vector<1x64xf32>
    %26 = vector.broadcast %25 : vector<1x64xf32> to vector<256x64xf32>
    %27 = arith.addf %22, %26 : vector<256x64xf32>
    %28 = arith.truncf %27 : vector<256x64xf32> to vector<256x64xbf16>
    %c0_10 = arith.constant 0 : index
    %c0_11 = arith.constant 0 : index
    %29 = vector.load %arg5[%c0_10, %c0_11] : memref<64x192xbf16, #tpu.memory_space<vmem>>, vector<64x192xbf16>
    %cst_12 = arith.constant dense<0.000000e+00> : vector<256x192xf32>
    %30 = tpu.matmul %28, %29, %cst_12 {dimension_numbers = #tpu.dot_dimension_numbers<[1], [0], [0], [1], [0, 0, 1, 1], [], []>} : vector<256x64xbf16>, vector<64x192xbf16>, vector<256x192xf32> -> vector<256x192xf32>
    %c0_13 = arith.constant 0 : index
    %c0_14 = arith.constant 0 : index
    %31 = vector.load %arg6[%c0_13, %c0_14] : memref<1x192xf32, #tpu.memory_space<vmem>>, vector<1x192xf32>
    %32 = vector.shape_cast %31 : vector<1x192xf32> to vector<192xf32>
    %33 = vector.shape_cast %32 : vector<192xf32> to vector<1x192xf32>
    %34 = vector.broadcast %33 : vector<1x192xf32> to vector<256x192xf32>
    %35 = arith.addf %30, %34 : vector<256x192xf32>
    %36 = arith.truncf %35 : vector<256x192xf32> to vector<256x192xbf16>
    %c0_15 = arith.constant 0 : index
    %c0_16 = arith.constant 0 : index
    %c0_17 = arith.constant 0 : index
    %37 = vector.load %arg7[%c0_15, %c0_16, %c0_17] : memref<1x256x192xbf16, #tpu.memory_space<vmem>>, vector<1x256x192xbf16>
    %38 = vector.shape_cast %37 : vector<1x256x192xbf16> to vector<256x192xbf16>
    %39 = vector.shape_cast %36 : vector<256x192xbf16> to vector<1x256x192xbf16>
    tpu.vector_store %arg7[%c0_15, %c0_16, %c0_17], %39 {strides = array<i32>} : memref<1x256x192xbf16, #tpu.memory_space<vmem>>, vector<1x256x192xbf16>,
    return
  }
  func.func @transform_0(%arg0: i32, %arg1: i32) -> (i32, i32, i32) {
    %c0_i32 = arith.constant 0 : i32
    %c0_i32_0 = arith.constant 0 : i32
    return %arg0, %arg1, %c0_i32 : i32, i32, i32
  }
  func.func @transform_1(%arg0: i32, %arg1: i32) -> (i32, i32) {
    %c0_i32 = arith.constant 0 : i32
    %c0_i32_0 = arith.constant 0 : i32
    %c0_i32_1 = arith.constant 0 : i32
    return %c0_i32, %c0_i32_0 : i32, i32
  }
  func.func @transform_2(%arg0: i32, %arg1: i32) -> (i32, i32) {
    %c0_i32 = arith.constant 0 : i32
    %c0_i32_0 = arith.constant 0 : i32
    %c0_i32_1 = arith.constant 0 : i32
    return %c0_i32, %c0_i32_0 : i32, i32
  }
  func.func @transform_3(%arg0: i32, %arg1: i32) -> (i32, i32) {
    %c0_i32 = arith.constant 0 : i32
    %c0_i32_0 = arith.constant 0 : i32
    %c0_i32_1 = arith.constant 0 : i32
    return %c0_i32, %c0_i32_0 : i32, i32
  }
  func.func @transform_4(%arg0: i32, %arg1: i32) -> (i32, i32) {
    %c0_i32 = arith.constant 0 : i32
    %c0_i32_0 = arith.constant 0 : i32
    %c0_i32_1 = arith.constant 0 : i32
    return %c0_i32, %c0_i32_0 : i32, i32
  }
  func.func @transform_5(%arg0: i32, %arg1: i32) -> (i32, i32, i32) {
    %c0_i32 = arith.constant 0 : i32
    %c0_i32_0 = arith.constant 0 : i32
    return %arg0, %arg1, %c0_i32 : i32, i32, i32
  }
}

module attributes {stable_mosaic.version = 11 : i64} {
  func.func @_wattn_kernel(%arg0: i32, %arg1: memref<4x64x64xbf16, #tpu.memory_space<vmem>>, %arg2: memref<4x144x64xbf16, #tpu.memory_space<vmem>>, %arg3: memref<4x144x64xbf16, #tpu.memory_space<vmem>>, %arg4: memref<2x64x144xf32, #tpu.memory_space<vmem>>, %arg5: memref<4x64x64xbf16, #tpu.memory_space<vmem>>) attributes {dimension_semantics = [#tpu.dimension_semantics<parallel>], iteration_bounds = array<i64: 2>, scalar_prefetch = 0 : i64, scratch_operands = 0 : i64, tpu.core_type = #tpu.core_type<tc>, window_params = [{transform_indices = @transform_0, window_bounds = array<i64: 4, 64, 64>}, {transform_indices = @transform_1, window_bounds = array<i64: 4, 144, 64>}, {transform_indices = @transform_2, window_bounds = array<i64: 4, 144, 64>}, {pipeline_mode = #tpu.pipeline_mode<synchronous>, transform_indices = @transform_3, window_bounds = array<i64: 2, 64, 144>}, {transform_indices = @transform_4, window_bounds = array<i64: 4, 64, 64>}]} {
    %c0 = arith.constant 0 : index
    %c0_0 = arith.constant 0 : index
    %c0_1 = arith.constant 0 : index
    %0 = vector.load %arg1[%c0, %c0_0, %c0_1] : memref<4x64x64xbf16, #tpu.memory_space<vmem>>, vector<4x64x64xbf16>
    %c0_2 = arith.constant 0 : index
    %c0_3 = arith.constant 0 : index
    %c0_4 = arith.constant 0 : index
    %1 = vector.load %arg2[%c0_2, %c0_3, %c0_4] : memref<4x144x64xbf16, #tpu.memory_space<vmem>>, vector<4x144x64xbf16>
    %c0_5 = arith.constant 0 : index
    %c0_6 = arith.constant 0 : index
    %c0_7 = arith.constant 0 : index
    %2 = vector.load %arg3[%c0_5, %c0_6, %c0_7] : memref<4x144x64xbf16, #tpu.memory_space<vmem>>, vector<4x144x64xbf16>
    %3 = vector.extract_strided_slice %0 {offsets = [0, 0, 0], sizes = [4, 64, 32], strides = [1, 1, 1]} : vector<4x64x64xbf16> to vector<4x64x32xbf16>
    %4 = vector.extract_strided_slice %1 {offsets = [0, 0, 0], sizes = [4, 144, 32], strides = [1, 1, 1]} : vector<4x144x64xbf16> to vector<4x144x32xbf16>
    %5 = vector.extract_strided_slice %2 {offsets = [0, 0, 0], sizes = [4, 144, 32], strides = [1, 1, 1]} : vector<4x144x64xbf16> to vector<4x144x32xbf16>
    "tpu.trace_start"() <{level = 10 : i32, message = "gqd,gkd->gqk"}> : () -> ()
    %cst = arith.constant dense<0.000000e+00> : vector<4x64x144xf32>
    %6 = tpu.matmul %3, %4, %cst {dimension_numbers = #tpu.dot_dimension_numbers<[2], [2], [1], [1], [0, 0, 0, 1, 1, 1], [0], [0]>} : vector<4x64x32xbf16>, vector<4x144x32xbf16>, vector<4x64x144xf32> -> vector<4x64x144xf32>
    "tpu.trace_stop"() : () -> ()
    %c0_8 = arith.constant 0 : index
    %c0_9 = arith.constant 0 : index
    %c0_10 = arith.constant 0 : index
    %7 = vector.load %arg4[%c0_8, %c0_9, %c0_10] : memref<2x64x144xf32, #tpu.memory_space<vmem>>, vector<1x64x144xf32>
    %8 = vector.shape_cast %7 : vector<1x64x144xf32> to vector<64x144xf32>
    %9 = vector.shape_cast %8 : vector<64x144xf32> to vector<1x64x144xf32>
    %10 = vector.broadcast %9 : vector<1x64x144xf32> to vector<4x64x144xf32>
    %11 = arith.addf %6, %10 : vector<4x64x144xf32>
    %cst_11 = arith.constant dense<0xFF800000> : vector<4x64xf32>
    %12 = vector.multi_reduction <maximumf>, %11, %cst_11 [2] : vector<4x64x144xf32> to vector<4x64xf32>
    %13 = vector.shape_cast %12 : vector<4x64xf32> to vector<4x64x1xf32>
    %14 = vector.broadcast %13 : vector<4x64x1xf32> to vector<4x64x144xf32>
    %15 = arith.subf %11, %14 : vector<4x64x144xf32>
    %16 = math.exp %15 : vector<4x64x144xf32>
    %cst_12 = arith.constant dense<0.000000e+00> : vector<4x64xf32>
    %17 = vector.multi_reduction <add>, %16, %cst_12 [2] : vector<4x64x144xf32> to vector<4x64xf32>
    %18 = vector.shape_cast %17 : vector<4x64xf32> to vector<4x64x1xf32>
    %19 = tpu.reciprocal %18 {approx = true} : vector<4x64x1xf32> -> vector<4x64x1xf32>
    %20 = vector.broadcast %19 : vector<4x64x1xf32> to vector<4x64x144xf32>
    %21 = arith.mulf %16, %20 : vector<4x64x144xf32>
    %22 = arith.truncf %21 : vector<4x64x144xf32> to vector<4x64x144xbf16>
    "tpu.trace_start"() <{level = 10 : i32, message = "gqk,gkd->gqd"}> : () -> ()
    %cst_13 = arith.constant dense<0.000000e+00> : vector<4x64x32xf32>
    %23 = tpu.matmul %22, %5, %cst_13 {dimension_numbers = #tpu.dot_dimension_numbers<[2], [1], [1], [2], [0, 0, 0, 1, 1, 2], [0], [0]>} : vector<4x64x144xbf16>, vector<4x144x32xbf16>, vector<4x64x32xf32> -> vector<4x64x32xf32>
    "tpu.trace_stop"() : () -> ()
    %24 = vector.extract_strided_slice %0 {offsets = [0, 0, 32], sizes = [4, 64, 32], strides = [1, 1, 1]} : vector<4x64x64xbf16> to vector<4x64x32xbf16>
    %25 = vector.extract_strided_slice %1 {offsets = [0, 0, 32], sizes = [4, 144, 32], strides = [1, 1, 1]} : vector<4x144x64xbf16> to vector<4x144x32xbf16>
    %26 = vector.extract_strided_slice %2 {offsets = [0, 0, 32], sizes = [4, 144, 32], strides = [1, 1, 1]} : vector<4x144x64xbf16> to vector<4x144x32xbf16>
    "tpu.trace_start"() <{level = 10 : i32, message = "gqd,gkd->gqk"}> : () -> ()
    %cst_14 = arith.constant dense<0.000000e+00> : vector<4x64x144xf32>
    %27 = tpu.matmul %24, %25, %cst_14 {dimension_numbers = #tpu.dot_dimension_numbers<[2], [2], [1], [1], [0, 0, 0, 1, 1, 1], [0], [0]>} : vector<4x64x32xbf16>, vector<4x144x32xbf16>, vector<4x64x144xf32> -> vector<4x64x144xf32>
    "tpu.trace_stop"() : () -> ()
    %c1 = arith.constant 1 : index
    %c0_15 = arith.constant 0 : index
    %c0_16 = arith.constant 0 : index
    %28 = vector.load %arg4[%c1, %c0_15, %c0_16] : memref<2x64x144xf32, #tpu.memory_space<vmem>>, vector<1x64x144xf32>
    %29 = vector.shape_cast %28 : vector<1x64x144xf32> to vector<64x144xf32>
    %30 = vector.shape_cast %29 : vector<64x144xf32> to vector<1x64x144xf32>
    %31 = vector.broadcast %30 : vector<1x64x144xf32> to vector<4x64x144xf32>
    %32 = arith.addf %27, %31 : vector<4x64x144xf32>
    %cst_17 = arith.constant dense<0xFF800000> : vector<4x64xf32>
    %33 = vector.multi_reduction <maximumf>, %32, %cst_17 [2] : vector<4x64x144xf32> to vector<4x64xf32>
    %34 = vector.shape_cast %33 : vector<4x64xf32> to vector<4x64x1xf32>
    %35 = vector.broadcast %34 : vector<4x64x1xf32> to vector<4x64x144xf32>
    %36 = arith.subf %32, %35 : vector<4x64x144xf32>
    %37 = math.exp %36 : vector<4x64x144xf32>
    %cst_18 = arith.constant dense<0.000000e+00> : vector<4x64xf32>
    %38 = vector.multi_reduction <add>, %37, %cst_18 [2] : vector<4x64x144xf32> to vector<4x64xf32>
    %39 = vector.shape_cast %38 : vector<4x64xf32> to vector<4x64x1xf32>
    %40 = tpu.reciprocal %39 {approx = true} : vector<4x64x1xf32> -> vector<4x64x1xf32>
    %41 = vector.broadcast %40 : vector<4x64x1xf32> to vector<4x64x144xf32>
    %42 = arith.mulf %37, %41 : vector<4x64x144xf32>
    %43 = arith.truncf %42 : vector<4x64x144xf32> to vector<4x64x144xbf16>
    "tpu.trace_start"() <{level = 10 : i32, message = "gqk,gkd->gqd"}> : () -> ()
    %cst_19 = arith.constant dense<0.000000e+00> : vector<4x64x32xf32>
    %44 = tpu.matmul %43, %26, %cst_19 {dimension_numbers = #tpu.dot_dimension_numbers<[2], [1], [1], [2], [0, 0, 0, 1, 1, 2], [0], [0]>} : vector<4x64x144xbf16>, vector<4x144x32xbf16>, vector<4x64x32xf32> -> vector<4x64x32xf32>
    "tpu.trace_stop"() : () -> ()
    %45 = tpu.concatenate %23, %44 in 2 : vector<4x64x32xf32>, vector<4x64x32xf32> -> vector<4x64x64xf32>
    %46 = arith.truncf %45 : vector<4x64x64xf32> to vector<4x64x64xbf16>
    %c0_20 = arith.constant 0 : index
    %c0_21 = arith.constant 0 : index
    %c0_22 = arith.constant 0 : index
    %47 = vector.load %arg5[%c0_20, %c0_21, %c0_22] : memref<4x64x64xbf16, #tpu.memory_space<vmem>>, vector<4x64x64xbf16>
    tpu.vector_store %arg5[%c0_20, %c0_21, %c0_22], %46 {strides = array<i32>} : memref<4x64x64xbf16, #tpu.memory_space<vmem>>, vector<4x64x64xbf16>,
    return
  }
  func.func @transform_0(%arg0: i32) -> (i32, i32, i32) {
    %c0_i32 = arith.constant 0 : i32
    %c0_i32_0 = arith.constant 0 : i32
    %c0_i32_1 = arith.constant 0 : i32
    return %arg0, %c0_i32, %c0_i32_0 : i32, i32, i32
  }
  func.func @transform_1(%arg0: i32) -> (i32, i32, i32) {
    %c0_i32 = arith.constant 0 : i32
    %c0_i32_0 = arith.constant 0 : i32
    %c0_i32_1 = arith.constant 0 : i32
    return %arg0, %c0_i32, %c0_i32_0 : i32, i32, i32
  }
  func.func @transform_2(%arg0: i32) -> (i32, i32, i32) {
    %c0_i32 = arith.constant 0 : i32
    %c0_i32_0 = arith.constant 0 : i32
    %c0_i32_1 = arith.constant 0 : i32
    return %arg0, %c0_i32, %c0_i32_0 : i32, i32, i32
  }
  func.func @transform_3(%arg0: i32) -> (i32, i32, i32) {
    %c0_i32 = arith.constant 0 : i32
    %c0_i32_0 = arith.constant 0 : i32
    %c0_i32_1 = arith.constant 0 : i32
    %c0_i32_2 = arith.constant 0 : i32
    return %c0_i32, %c0_i32_0, %c0_i32_1 : i32, i32, i32
  }
  func.func @transform_4(%arg0: i32) -> (i32, i32, i32) {
    %c0_i32 = arith.constant 0 : i32
    %c0_i32_0 = arith.constant 0 : i32
    %c0_i32_1 = arith.constant 0 : i32
    return %arg0, %c0_i32, %c0_i32_0 : i32, i32, i32
  }
}

module attributes {stable_mosaic.version = 11 : i64} {
  func.func @_proj_mlp_kernel(%arg0: i32, %arg1: i32, %arg2: memref<1x256x64xbf16, #tpu.memory_space<vmem>>, %arg3: memref<1x256x64xf32, #tpu.memory_space<vmem>>, %arg4: memref<64x64xbf16, #tpu.memory_space<vmem>>, %arg5: memref<1x64xf32, #tpu.memory_space<vmem>>, %arg6: memref<1x64xf32, #tpu.memory_space<vmem>>, %arg7: memref<1x64xf32, #tpu.memory_space<vmem>>, %arg8: memref<64x128xbf16, #tpu.memory_space<vmem>>, %arg9: memref<1x128xf32, #tpu.memory_space<vmem>>, %arg10: memref<128x64xbf16, #tpu.memory_space<vmem>>, %arg11: memref<1x64xf32, #tpu.memory_space<vmem>>, %arg12: memref<1x256x64xf32, #tpu.memory_space<vmem>>) attributes {dimension_semantics = [#tpu.dimension_semantics<parallel>, #tpu.dimension_semantics<parallel>], iteration_bounds = array<i64: 2, 1>, scalar_prefetch = 0 : i64, scratch_operands = 0 : i64, tpu.core_type = #tpu.core_type<tc>, window_params = [{transform_indices = @transform_0, window_bounds = array<i64: 1, 256, 64>}, {transform_indices = @transform_1, window_bounds = array<i64: 1, 256, 64>}, {pipeline_mode = #tpu.pipeline_mode<synchronous>, transform_indices = @transform_2, window_bounds = array<i64: 64, 64>}, {pipeline_mode = #tpu.pipeline_mode<synchronous>, transform_indices = @transform_3, window_bounds = array<i64: 1, 64>}, {pipeline_mode = #tpu.pipeline_mode<synchronous>, transform_indices = @transform_4, window_bounds = array<i64: 1, 64>}, {pipeline_mode = #tpu.pipeline_mode<synchronous>, transform_indices = @transform_5, window_bounds = array<i64: 1, 64>}, {pipeline_mode = #tpu.pipeline_mode<synchronous>, transform_indices = @transform_6, window_bounds = array<i64: 64, 128>}, {pipeline_mode = #tpu.pipeline_mode<synchronous>, transform_indices = @transform_7, window_bounds = array<i64: 1, 128>}, {pipeline_mode = #tpu.pipeline_mode<synchronous>, transform_indices = @transform_8, window_bounds = array<i64: 128, 64>}, {pipeline_mode = #tpu.pipeline_mode<synchronous>, transform_indices = @transform_9, window_bounds = array<i64: 1, 64>}, {transform_indices = @transform_10, window_bounds = array<i64: 1, 256, 64>}]} {
    %c0 = arith.constant 0 : index
    %c0_0 = arith.constant 0 : index
    %c0_1 = arith.constant 0 : index
    %0 = vector.load %arg2[%c0, %c0_0, %c0_1] : memref<1x256x64xbf16, #tpu.memory_space<vmem>>, vector<1x256x64xbf16>
    %1 = vector.shape_cast %0 : vector<1x256x64xbf16> to vector<256x64xbf16>
    %c0_2 = arith.constant 0 : index
    %c0_3 = arith.constant 0 : index
    %2 = vector.load %arg4[%c0_2, %c0_3] : memref<64x64xbf16, #tpu.memory_space<vmem>>, vector<64x64xbf16>
    %cst = arith.constant dense<0.000000e+00> : vector<256x64xf32>
    %3 = tpu.matmul %1, %2, %cst {dimension_numbers = #tpu.dot_dimension_numbers<[1], [0], [0], [1], [0, 0, 1, 1], [], []>} : vector<256x64xbf16>, vector<64x64xbf16>, vector<256x64xf32> -> vector<256x64xf32>
    %c0_4 = arith.constant 0 : index
    %c0_5 = arith.constant 0 : index
    %4 = vector.load %arg5[%c0_4, %c0_5] : memref<1x64xf32, #tpu.memory_space<vmem>>, vector<1x64xf32>
    %5 = vector.shape_cast %4 : vector<1x64xf32> to vector<64xf32>
    %6 = vector.shape_cast %5 : vector<64xf32> to vector<1x64xf32>
    %7 = vector.broadcast %6 : vector<1x64xf32> to vector<256x64xf32>
    %8 = arith.addf %3, %7 : vector<256x64xf32>
    %c0_6 = arith.constant 0 : index
    %c0_7 = arith.constant 0 : index
    %c0_8 = arith.constant 0 : index
    %9 = vector.load %arg3[%c0_6, %c0_7, %c0_8] : memref<1x256x64xf32, #tpu.memory_space<vmem>>, vector<1x256x64xf32>
    %10 = vector.shape_cast %9 : vector<1x256x64xf32> to vector<256x64xf32>
    %11 = arith.addf %8, %10 : vector<256x64xf32>
    %cst_9 = arith.constant dense<0.000000e+00> : vector<256xf32>
    %12 = vector.multi_reduction <add>, %11, %cst_9 [1] : vector<256x64xf32> to vector<256xf32>
    %13 = vector.shape_cast %12 : vector<256xf32> to vector<256x1xf32>
    %cst_10 = arith.constant 6.400000e+01 : f32
    %14 = vector.broadcast %cst_10 : f32 to vector<256x1xf32>
    %15 = arith.divf %13, %14 : vector<256x1xf32>
    %16 = vector.broadcast %15 : vector<256x1xf32> to vector<256x64xf32>
    %17 = arith.subf %11, %16 : vector<256x64xf32>
    %18 = arith.mulf %17, %17 : vector<256x64xf32>
    %cst_11 = arith.constant dense<0.000000e+00> : vector<256xf32>
    %19 = vector.multi_reduction <add>, %18, %cst_11 [1] : vector<256x64xf32> to vector<256xf32>
    %20 = vector.shape_cast %19 : vector<256xf32> to vector<256x1xf32>
    %cst_12 = arith.constant 6.400000e+01 : f32
    %21 = vector.broadcast %cst_12 : f32 to vector<256x1xf32>
    %22 = arith.divf %20, %21 : vector<256x1xf32>
    %cst_13 = arith.constant 9.99999974E-6 : f32
    %23 = vector.broadcast %cst_13 : f32 to vector<256x1xf32>
    %24 = arith.addf %22, %23 : vector<256x1xf32>
    %25 = math.rsqrt %24 : vector<256x1xf32>
    %26 = vector.broadcast %25 : vector<256x1xf32> to vector<256x64xf32>
    %27 = arith.mulf %17, %26 : vector<256x64xf32>
    %c0_14 = arith.constant 0 : index
    %c0_15 = arith.constant 0 : index
    %28 = vector.load %arg6[%c0_14, %c0_15] : memref<1x64xf32, #tpu.memory_space<vmem>>, vector<1x64xf32>
    %29 = vector.shape_cast %28 : vector<1x64xf32> to vector<64xf32>
    %30 = vector.shape_cast %29 : vector<64xf32> to vector<1x64xf32>
    %31 = vector.broadcast %30 : vector<1x64xf32> to vector<256x64xf32>
    %32 = arith.mulf %27, %31 : vector<256x64xf32>
    %c0_16 = arith.constant 0 : index
    %c0_17 = arith.constant 0 : index
    %33 = vector.load %arg7[%c0_16, %c0_17] : memref<1x64xf32, #tpu.memory_space<vmem>>, vector<1x64xf32>
    %34 = vector.shape_cast %33 : vector<1x64xf32> to vector<64xf32>
    %35 = vector.shape_cast %34 : vector<64xf32> to vector<1x64xf32>
    %36 = vector.broadcast %35 : vector<1x64xf32> to vector<256x64xf32>
    %37 = arith.addf %32, %36 : vector<256x64xf32>
    %38 = arith.truncf %37 : vector<256x64xf32> to vector<256x64xbf16>
    %c0_18 = arith.constant 0 : index
    %c0_19 = arith.constant 0 : index
    %39 = vector.load %arg8[%c0_18, %c0_19] : memref<64x128xbf16, #tpu.memory_space<vmem>>, vector<64x128xbf16>
    %cst_20 = arith.constant dense<0.000000e+00> : vector<256x128xf32>
    %40 = tpu.matmul %38, %39, %cst_20 {dimension_numbers = #tpu.dot_dimension_numbers<[1], [0], [0], [1], [0, 0, 1, 1], [], []>} : vector<256x64xbf16>, vector<64x128xbf16>, vector<256x128xf32> -> vector<256x128xf32>
    %c0_21 = arith.constant 0 : index
    %c0_22 = arith.constant 0 : index
    %41 = vector.load %arg9[%c0_21, %c0_22] : memref<1x128xf32, #tpu.memory_space<vmem>>, vector<1x128xf32>
    %42 = vector.shape_cast %41 : vector<1x128xf32> to vector<128xf32>
    %43 = vector.shape_cast %42 : vector<128xf32> to vector<1x128xf32>
    %44 = vector.broadcast %43 : vector<1x128xf32> to vector<256x128xf32>
    %45 = arith.addf %40, %44 : vector<256x128xf32>
    %46 = arith.mulf %45, %45 : vector<256x128xf32>
    %47 = arith.mulf %45, %46 : vector<256x128xf32>
    %cst_23 = arith.constant 4.471500e-02 : f32
    %48 = vector.broadcast %cst_23 : f32 to vector<256x128xf32>
    %49 = arith.mulf %48, %47 : vector<256x128xf32>
    %50 = arith.addf %45, %49 : vector<256x128xf32>
    %cst_24 = arith.constant 0.797884583 : f32
    %51 = vector.broadcast %cst_24 : f32 to vector<256x128xf32>
    %52 = arith.mulf %51, %50 : vector<256x128xf32>
    %53 = math.tanh %52 : vector<256x128xf32>
    %cst_25 = arith.constant 1.000000e+00 : f32
    %54 = vector.broadcast %cst_25 : f32 to vector<256x128xf32>
    %55 = arith.addf %54, %53 : vector<256x128xf32>
    %cst_26 = arith.constant 5.000000e-01 : f32
    %56 = vector.broadcast %cst_26 : f32 to vector<256x128xf32>
    %57 = arith.mulf %56, %55 : vector<256x128xf32>
    %58 = arith.mulf %45, %57 : vector<256x128xf32>
    %59 = arith.truncf %58 : vector<256x128xf32> to vector<256x128xbf16>
    %c0_27 = arith.constant 0 : index
    %c0_28 = arith.constant 0 : index
    %60 = vector.load %arg10[%c0_27, %c0_28] : memref<128x64xbf16, #tpu.memory_space<vmem>>, vector<128x64xbf16>
    %cst_29 = arith.constant dense<0.000000e+00> : vector<256x64xf32>
    %61 = tpu.matmul %59, %60, %cst_29 {dimension_numbers = #tpu.dot_dimension_numbers<[1], [0], [0], [1], [0, 0, 1, 1], [], []>} : vector<256x128xbf16>, vector<128x64xbf16>, vector<256x64xf32> -> vector<256x64xf32>
    %62 = arith.addf %11, %61 : vector<256x64xf32>
    %c0_30 = arith.constant 0 : index
    %c0_31 = arith.constant 0 : index
    %63 = vector.load %arg11[%c0_30, %c0_31] : memref<1x64xf32, #tpu.memory_space<vmem>>, vector<1x64xf32>
    %64 = vector.shape_cast %63 : vector<1x64xf32> to vector<64xf32>
    %65 = vector.shape_cast %64 : vector<64xf32> to vector<1x64xf32>
    %66 = vector.broadcast %65 : vector<1x64xf32> to vector<256x64xf32>
    %67 = arith.addf %62, %66 : vector<256x64xf32>
    %c0_32 = arith.constant 0 : index
    %c0_33 = arith.constant 0 : index
    %c0_34 = arith.constant 0 : index
    %68 = vector.load %arg12[%c0_32, %c0_33, %c0_34] : memref<1x256x64xf32, #tpu.memory_space<vmem>>, vector<1x256x64xf32>
    %69 = vector.shape_cast %68 : vector<1x256x64xf32> to vector<256x64xf32>
    %70 = vector.shape_cast %67 : vector<256x64xf32> to vector<1x256x64xf32>
    tpu.vector_store %arg12[%c0_32, %c0_33, %c0_34], %70 {strides = array<i32>} : memref<1x256x64xf32, #tpu.memory_space<vmem>>, vector<1x256x64xf32>,
    return
  }
  func.func @transform_0(%arg0: i32, %arg1: i32) -> (i32, i32, i32) {
    %c0_i32 = arith.constant 0 : i32
    %c0_i32_0 = arith.constant 0 : i32
    return %arg0, %arg1, %c0_i32 : i32, i32, i32
  }
  func.func @transform_1(%arg0: i32, %arg1: i32) -> (i32, i32, i32) {
    %c0_i32 = arith.constant 0 : i32
    %c0_i32_0 = arith.constant 0 : i32
    return %arg0, %arg1, %c0_i32 : i32, i32, i32
  }
  func.func @transform_2(%arg0: i32, %arg1: i32) -> (i32, i32) {
    %c0_i32 = arith.constant 0 : i32
    %c0_i32_0 = arith.constant 0 : i32
    %c0_i32_1 = arith.constant 0 : i32
    return %c0_i32, %c0_i32_0 : i32, i32
  }
  func.func @transform_3(%arg0: i32, %arg1: i32) -> (i32, i32) {
    %c0_i32 = arith.constant 0 : i32
    %c0_i32_0 = arith.constant 0 : i32
    %c0_i32_1 = arith.constant 0 : i32
    return %c0_i32, %c0_i32_0 : i32, i32
  }
  func.func @transform_4(%arg0: i32, %arg1: i32) -> (i32, i32) {
    %c0_i32 = arith.constant 0 : i32
    %c0_i32_0 = arith.constant 0 : i32
    %c0_i32_1 = arith.constant 0 : i32
    return %c0_i32, %c0_i32_0 : i32, i32
  }
  func.func @transform_5(%arg0: i32, %arg1: i32) -> (i32, i32) {
    %c0_i32 = arith.constant 0 : i32
    %c0_i32_0 = arith.constant 0 : i32
    %c0_i32_1 = arith.constant 0 : i32
    return %c0_i32, %c0_i32_0 : i32, i32
  }
  func.func @transform_6(%arg0: i32, %arg1: i32) -> (i32, i32) {
    %c0_i32 = arith.constant 0 : i32
    %c0_i32_0 = arith.constant 0 : i32
    %c0_i32_1 = arith.constant 0 : i32
    return %c0_i32, %c0_i32_0 : i32, i32
  }
  func.func @transform_7(%arg0: i32, %arg1: i32) -> (i32, i32) {
    %c0_i32 = arith.constant 0 : i32
    %c0_i32_0 = arith.constant 0 : i32
    %c0_i32_1 = arith.constant 0 : i32
    return %c0_i32, %c0_i32_0 : i32, i32
  }
  func.func @transform_8(%arg0: i32, %arg1: i32) -> (i32, i32) {
    %c0_i32 = arith.constant 0 : i32
    %c0_i32_0 = arith.constant 0 : i32
    %c0_i32_1 = arith.constant 0 : i32
    return %c0_i32, %c0_i32_0 : i32, i32
  }
  func.func @transform_9(%arg0: i32, %arg1: i32) -> (i32, i32) {
    %c0_i32 = arith.constant 0 : i32
    %c0_i32_0 = arith.constant 0 : i32
    %c0_i32_1 = arith.constant 0 : i32
    return %c0_i32, %c0_i32_0 : i32, i32
  }
  func.func @transform_10(%arg0: i32, %arg1: i32) -> (i32, i32, i32) {
    %c0_i32 = arith.constant 0 : i32
    %c0_i32_0 = arith.constant 0 : i32
    return %arg0, %arg1, %c0_i32 : i32, i32, i32
  }
}

</mosaic_0001>

<llo_original>
// kernel: ocab_forward.3
$region0: #{ocab_forward.3}
  #allocation0 [shape = 'u32[]', space=smem, size = 0x4, offset = 0x4, fixed_abs, tag = 'smem constant byte address 0x4 - core index']
  #allocation1 [shape = 'u32[72,128]{1,0:T(1,128)}', space=vmem, size = 0x9000, scoped, tag = 'internal scratch']
  %s0 = inlined_call_operand.vmem [shape: f32[2,256,64], index: 0, kind: input, shape index: {}]
  %s1 = inlined_call_operand.hbm [shape: f32[1,64], index: 1, kind: input, shape index: {}]
  %s2 = inlined_call_operand.hbm [shape: f32[1,64], index: 2, kind: input, shape index: {}]
  %s3 = inlined_call_operand.vmem [shape: bf16[64,192], index: 3, kind: input, shape index: {}]
  %s4 = inlined_call_operand.vmem [shape: f32[1,192], index: 4, kind: input, shape index: {}]
  %s5 = inlined_call_operand.vmem [shape: bf16[2,256,192], index: 5, kind: output, shape index: {}]
  %s6 = sld [smem:[#allocation0]]
  $region61: #{ocab_forward.3} parent=0
    _
  %s8 = ssub.s32 1, %s6
  %s9 = scalar_select 0, %s8, %s6
  $region1: #{ocab_forward.3} parent=0
    #allocation2 [shape = 'u8[512]{0}', space=vmem, size = 0x400, scoped, tag = 'input window, operand 1, single buffered']
    #allocation3 [shape = 's32[2]{0}', space=sflag, size = 0x8, scoped, tag = 'scoped memory for ocab_forward.3']
    #allocation4 [shape = 'u8[512]{0}', space=vmem, size = 0x400, scoped, tag = 'input window, operand 2, single buffered']
    #allocation5 [shape = 's32[1]{0}', space=sflag, size = 0x4, scoped, tag = 'scoped memory for ocab_forward.3']
    %10 = vsyncpa [#allocation3], 0
    %11 = vsyncpa [#allocation5], 0
    loop: start=0, step=1, limit=4
    $region2: #{ocab_forward.3} parent=1 // loop_pre_header
      _
    $region3: #{ocab_forward.3} parent=1 // loop_header
      %s13 = sphi 0, %s17
      %p14 = scmp.ge.s32.totalorder %s13, 4
      %s20 = sphi 0, %s32
      %s21 = sphi 0, %s28
      %s22 = sphi 0, %s20
      %s23 = sphi 0, %s21
      %s24 = sphi 0, %s22
      %s25 = sphi 0, %s23
      %s37 = sphi 0, %s39
      %s40 = sphi 0, %s37
      %s41 = sphi 0, %s40
      %s57 = sphi 0, %s41
      %s61 = sphi 0, %s61
      %s63 = sphi 0, %s61
      %s64 = sphi 0, %s63
      %s78 = sphi 0, %s64
      %s82 = sphi 0, %s82
      %s84 = sphi 0, %s82
      %s85 = sphi 0, %s84
      %s99 = sphi 0, %s85
      %s103 = sphi 0, %s103
      %s105 = sphi 0, %s103
      %s106 = sphi 0, %s105
      %s120 = sphi 0, %s106
      %s124 = sphi 0, %s124
      %s126 = sphi 0, %s124
      %s127 = sphi 0, %s126
      %s141 = sphi 0, %s127
      %s149 = sphi 0, %s151
      %s152 = sphi 0, %s149
      %s153 = sphi 0, %s152
      %s169 = sphi 0, %s153
    $region4: #{ocab_forward.3} parent=1 // loop_header_branch
      %16 = sbr.rel (%p14) target = $region8
    $region5: #{ocab_forward.3} parent=1 // loop_body
      %s18 = ssub.s32 %s13, 1
      %s19 = ssub.s32 %s13, 2
      %s26 = sadd.s32 1, %s21
      %p27 = scmp.ge.s32.totalorder %s26, 1
      %s28 = scalar_select %p27, 0, %s26
      %s29 = sadd.s32 1, %s20
      %s30 = scalar_select %p27, %s29, %s20
      %p31 = scmp.ge.s32.totalorder %s30, 2
      %s32 = scalar_select %p31, 0, %s30
      %s33 = ssub.s32 %s20, %s32
      %s34 = ssub.s32 %s21, %s28
      %s35 = sor.u32 %s33, %s34
      %p36 = scmp.eq.s32.totalorder %s35, 0
      %s38 = sadd.s32 %s37, 1
      %s39 = scalar_select %p36, %s37, %s38
      %p42 = pneg %p36
      %p43 = scmp.eq.s32.totalorder %s13, 1
      %p44 = por %p42, %p43
      %p45 = scmp.ne.s32.totalorder %s37, %s40
      %p46 = scmp.eq.s32.totalorder %s13, 0
      %p47 = por %p45, %p46
      %p48 = scmp.ne.s32.totalorder %s37, %s40
      %p49 = scmp.eq.s32.totalorder %s18, 1
      %p50 = por %p48, %p49
      %p51 = scmp.ne.s32.totalorder %s40, %s41
      %p52 = scmp.eq.s32.totalorder %s18, 0
      %p53 = por %p51, %p52
      %p54 = scmp.ne.s32.totalorder %s40, %s41
      %p55 = scmp.eq.s32.totalorder %s19, 1
      %p56 = por %p54, %p55
      %p58 = scmp.ne.s32.totalorder %s41, %s57
      %p59 = scmp.eq.s32.totalorder %s19, 0
      %p60 = por %p58, %p59
      %s62 = sadd.s32 %s61, 1
      %p65 = scmp.eq.s32.totalorder %s13, 1
      %p66 = scmp.ne.s32.totalorder %s61, %s63
      %p67 = scmp.eq.s32.totalorder %s13, 0
      %p68 = por %p66, %p67
      %p69 = scmp.ne.s32.totalorder %s61, %s63
      %p70 = scmp.eq.s32.totalorder %s18, 1
      %p71 = por %p69, %p70
      %p72 = scmp.ne.s32.totalorder %s63, %s64
      %p73 = scmp.eq.s32.totalorder %s18, 0
      %p74 = por %p72, %p73
      %p75 = scmp.ne.s32.totalorder %s63, %s64
      %p76 = scmp.eq.s32.totalorder %s19, 1
      %p77 = por %p75, %p76
      %p79 = scmp.ne.s32.totalorder %s64, %s78
      %p80 = scmp.eq.s32.totalorder %s19, 0
      %p81 = por %p79, %p80
      %s83 = sadd.s32 %s82, 1
      %p86 = scmp.eq.s32.totalorder %s13, 1
      %p87 = scmp.ne.s32.totalorder %s82, %s84
      %p88 = scmp.eq.s32.totalorder %s13, 0
      %p89 = por %p87, %p88
      %p90 = scmp.ne.s32.totalorder %s82, %s84
      %p91 = scmp.eq.s32.totalorder %s18, 1
      %p92 = por %p90, %p91
      %p93 = scmp.ne.s32.totalorder %s84, %s85
      %p94 = scmp.eq.s32.totalorder %s18, 0
      %p95 = por %p93, %p94
      %p96 = scmp.ne.s32.totalorder %s84, %s85
      %p97 = scmp.eq.s32.totalorder %s19, 1
      %p98 = por %p96, %p97
      %p100 = scmp.ne.s32.totalorder %s85, %s99
      %p101 = scmp.eq.s32.totalorder %s19, 0
      %p102 = por %p100, %p101
      %s104 = sadd.s32 %s103, 1
      %p107 = scmp.eq.s32.totalorder %s13, 1
      %p108 = scmp.ne.s32.totalorder %s103, %s105
      %p109 = scmp.eq.s32.totalorder %s13, 0
      %p110 = por %p108, %p109
      %p111 = scmp.ne.s32.totalorder %s103, %s105
      %p112 = scmp.eq.s32.totalorder %s18, 1
      %p113 = por %p111, %p112
      %p114 = scmp.ne.s32.totalorder %s105, %s106
      %p115 = scmp.eq.s32.totalorder %s18, 0
      %p116 = por %p114, %p115
      %p117 = scmp.ne.s32.totalorder %s105, %s106
      %p118 = scmp.eq.s32.totalorder %s19, 1
      %p119 = por %p117, %p118
      %p121 = scmp.ne.s32.totalorder %s106, %s120
      %p122 = scmp.eq.s32.totalorder %s19, 0
      %p123 = por %p121, %p122
      %s125 = sadd.s32 %s124, 1
      %p128 = scmp.eq.s32.totalorder %s13, 1
      %p129 = scmp.ne.s32.totalorder %s124, %s126
      %p130 = scmp.eq.s32.totalorder %s13, 0
      %p131 = por %p129, %p130
      %p132 = scmp.ne.s32.totalorder %s124, %s126
      %p133 = scmp.eq.s32.totalorder %s18, 1
      %p134 = por %p132, %p133
      %p135 = scmp.ne.s32.totalorder %s126, %s127
      %p136 = scmp.eq.s32.totalorder %s18, 0
      %p137 = por %p135, %p136
      %p138 = scmp.ne.s32.totalorder %s126, %s127
      %p139 = scmp.eq.s32.totalorder %s19, 1
      %p140 = por %p138, %p139
      %p142 = scmp.ne.s32.totalorder %s127, %s141
      %p143 = scmp.eq.s32.totalorder %s19, 0
      %p144 = por %p142, %p143
      %s145 = ssub.s32 %s20, %s32
      %s146 = ssub.s32 %s21, %s28
      %s147 = sor.u32 %s145, %s146
      %p148 = scmp.eq.s32.totalorder %s147, 0
      %s150 = sadd.s32 %s149, 1
      %s151 = scalar_select %p148, %s149, %s150
      %p154 = pneg %p148
      %p155 = scmp.eq.s32.totalorder %s13, 1
      %p156 = por %p154, %p155
      %p157 = scmp.ne.s32.totalorder %s149, %s152
      %p158 = scmp.eq.s32.totalorder %s13, 0
      %p159 = por %p157, %p158
      %p160 = scmp.ne.s32.totalorder %s149, %s152
      %p161 = scmp.eq.s32.totalorder %s18, 1
      %p162 = por %p160, %p161
      %p163 = scmp.ne.s32.totalorder %s152, %s153
      %p164 = scmp.eq.s32.totalorder %s18, 0
      %p165 = por %p163, %p164
      %p166 = scmp.ne.s32.totalorder %s152, %s153
      %p167 = scmp.eq.s32.totalorder %s19, 1
      %p168 = por %p166, %p167
      %p170 = scmp.ne.s32.totalorder %s153, %s169
      %p171 = scmp.eq.s32.totalorder %s19, 0
      %p172 = por %p170, %p171
      %p173 = scmp.le.s32.totalorder 1, %s13
      %p174 = scmp.lt.s32.totalorder %s13, 3
      %p175 = pnand %p173, %p174
      %p176 = pneg %p175
      // Predicated region
      $region9: #{ocab_forward.3} parent=5 // pred_check
        _
      $region10: #{ocab_forward.3} parent=5 // pred_check_branch
        %178 = sbr.rel (%p175) target = $region12
      $region11: #{ocab_forward.3} parent=5 // pred_region
        %s179 = ssub.s32 %s13, 1
        // Predicated region
        $region13: #{ocab_forward.3} parent=11 // pred_check
          %p180 = pneg %p74
        $region14: #{ocab_forward.3} parent=11 // pred_check_branch
          %182 = sbr.rel (%p180) target = $region16
        $region15: #{ocab_forward.3} parent=11 // pred_region
          %184 = vsyncadd [#allocation3], 0
          %s186 = sshll.u32 %s1, 4
          %s187 = int_to_ptr.hbm [resolvable:$true] %s186
          %s188 = sshll.u32 [#allocation2], 4
          %s189 = int_to_ptr.vmem [resolvable:$true] %s188
          %191 = dma.hbm_to_vmem [thread:$0]  %s187, 16, %s189, [#allocation3]
        $region16: #{ocab_forward.3} parent=11 // pred_fallthru
          _
        // Predicated region
        $region17: #{ocab_forward.3} parent=11 // pred_check
          %p192 = pneg %p95
        $region18: #{ocab_forward.3} parent=11 // pred_check_branch
          %194 = sbr.rel (%p192) target = $region20
        $region19: #{ocab_forward.3} parent=11 // pred_region
          %196 = vsyncadd [#allocation5], 0
          %s198 = sshll.u32 %s2, 4
          %s199 = int_to_ptr.hbm [resolvable:$true] %s198
          %s200 = sshll.u32 [#allocation4], 4
          %s201 = int_to_ptr.vmem [resolvable:$true] %s200
          %203 = dma.hbm_to_vmem [thread:$0]  %s199, 16, %s201, [#allocation5]
        $region20: #{ocab_forward.3} parent=11 // pred_fallthru
          _
        // Predicated region
        $region21: #{ocab_forward.3} parent=11 // pred_check
          %p204 = pneg %p116
        $region22: #{ocab_forward.3} parent=11 // pred_check_branch
          %206 = sbr.rel (%p204) target = $region24
        $region23: #{ocab_forward.3} parent=11 // pred_region
          _
        $region24: #{ocab_forward.3} parent=11 // pred_fallthru
          _
        // Predicated region
        $region25: #{ocab_forward.3} parent=11 // pred_check
          %p207 = pneg %p137
        $region26: #{ocab_forward.3} parent=11 // pred_check_branch
          %209 = sbr.rel (%p207) target = $region28
        $region27: #{ocab_forward.3} parent=11 // pred_region
          _
        $region28: #{ocab_forward.3} parent=11 // pred_fallthru
          _
      $region12: #{ocab_forward.3} parent=5 // pred_fallthru
        _
      %p210 = scmp.lt.s32.totalorder %s13, 2
      // Predicated region
      $region29: #{ocab_forward.3} parent=5 // pred_check
        %p211 = pneg %p210
      $region30: #{ocab_forward.3} parent=5 // pred_check_branch
        %213 = sbr.rel (%p211) target = $region32
      $region31: #{ocab_forward.3} parent=5 // pred_region
        // Predicated region
        $region33: #{ocab_forward.3} parent=31 // pred_check
          %p214 = pneg %p47
        $region34: #{ocab_forward.3} parent=31 // pred_check_branch
          %216 = sbr.rel (%p214) target = $region36
        $region35: #{ocab_forward.3} parent=31 // pred_region
          %s217 = smul.u32 32, %s21
          %p218 = scmp.lt.s32.totalorder %s20, 1
          %s219 = scalar_select %p218, %s20, 1
          %p220 = scmp.lt.s32.totalorder %s217, 31
          %s221 = scalar_select %p220, %s217, 31
          %s222 = smul.addr %s219, 32
          %s223 = sadd.s32 %s221, %s222
          %s224 = smul.addr %s223, 8
          %s225 = scalar_lea.vmem %s0, %s224
          %s226 = smul.u32 32, %s21
        $region36: #{ocab_forward.3} parent=31 // pred_fallthru
          _
      $region32: #{ocab_forward.3} parent=5 // pred_fallthru
        _
      %p227 = scmp.le.s32.totalorder 1, %s13
      %p228 = scmp.lt.s32.totalorder %s13, 3
      %p229 = pnand %p227, %p228
      %p230 = pneg %p229
      // Predicated region
      $region37: #{ocab_forward.3} parent=5 // pred_check
        _
      $region38: #{ocab_forward.3} parent=5 // pred_check_branch
        %232 = sbr.rel (%p229) target = $region40
      $region39: #{ocab_forward.3} parent=5 // pred_region
        %s233 = ssub.s32 %s13, 1
        // Predicated region
        $region41: #{ocab_forward.3} parent=39 // pred_check
          %p234 = pneg %p74
        $region42: #{ocab_forward.3} parent=39 // pred_check_branch
          %236 = sbr.rel (%p234) target = $region44
        $region43: #{ocab_forward.3} parent=39 // pred_region
          %238 = dma.done [#allocation3], 16
        $region44: #{ocab_forward.3} parent=39 // pred_fallthru
          _
        // Predicated region
        $region45: #{ocab_forward.3} parent=39 // pred_check
          %p239 = pneg %p95
        $region46: #{ocab_forward.3} parent=39 // pred_check_branch
          %241 = sbr.rel (%p239) target = $region48
        $region47: #{ocab_forward.3} parent=39 // pred_region
          %243 = dma.done [#allocation5], 16
        $region48: #{ocab_forward.3} parent=39 // pred_fallthru
          _
        %s244 = smul.u32 32, %s23
        %p245 = scmp.lt.s32.totalorder %s22, 1
        %s246 = scalar_select %p245, %s22, 1
        %p247 = scmp.lt.s32.totalorder %s244, 31
        %s248 = scalar_select %p247, %s244, 31
        %s249 = smul.addr %s246, 32
        %s250 = sadd.s32 %s248, %s249
        %s251 = smul.addr %s250, 8
        %s252 = scalar_lea.vmem %s0, %s251
        %p253 = pneg %p53
        %p254 = pneg %p50
        %p255 = pneg %p74
        %p256 = pneg %p71
        %p257 = pneg %p95
        %p258 = pneg %p92
        %p259 = pneg %p116
        %p260 = pneg %p113
        %p261 = pneg %p137
        %p262 = pneg %p134
        %p263 = pneg %p165
        %p264 = pneg %p162
        %s265 = smul.u32 32, %s23
        %p266 = scmp.lt.s32.totalorder %s22, 1
        %s267 = scalar_select %p266, %s22, 1
        %p268 = scmp.lt.s32.totalorder %s265, 31
        %s269 = scalar_select %p268, %s265, 31
        %s270 = smul.addr %s269, 2
        %s271 = smul.addr %s267, 64
        %s272 = sadd.s32 %s270, %s271
        %s273 = smul.addr %s272, 4
        %s274 = scalar_lea.vmem %s5, %s273
        %s275 = smul.u32 32, %s23
        %p276 = scmp.lt.s32.totalorder %s22, 1
        %s277 = scalar_select %p276, %s22, 1
        %p278 = scmp.lt.s32.totalorder %s275, 31
        %s279 = scalar_select %p278, %s275, 31
        %s280 = smul.addr %s277, 32
        %s281 = sadd.s32 %s279, %s280
        %s282 = smul.addr %s281, 8
        %s283 = scalar_lea.vmem %s0, %s282
        %s284 = smul.u32 32, %s23
        %s285 = smul.u32 32, %s23
        %p286 = scmp.lt.s32.totalorder %s22, 1
        %s287 = scalar_select %p286, %s22, 1
        %p288 = scmp.lt.s32.totalorder %s285, 31
        %s289 = scalar_select %p288, %s285, 31
        %s290 = smul.addr %s289, 2
        %s291 = smul.addr %s287, 64
        %s292 = sadd.s32 %s290, %s291
        %s293 = smul.addr %s292, 4
        %s294 = scalar_lea.vmem %s5, %s293
        %s295 = smul.u32 32, %s23
        %v297 = vld [vmem:[%s283] sm:$0xff]
        %v298 = vld [vmem:[%s283 + $0x8] sm:$0xff]
        %v299 = vld [vmem:[%s283 + $0x10] sm:$0xff]
        %v300 = vld [vmem:[%s283 + $0x18] sm:$0xff]
        %v301 = vld [vmem:[%s283 + $0x20] sm:$0xff]
        %v302 = vld [vmem:[%s283 + $0x28] sm:$0xff]
        %v303 = vld [vmem:[%s283 + $0x30] sm:$0xff]
        %v304 = vld [vmem:[%s283 + $0x38] sm:$0xff]
        %v305 = vld [vmem:[%s283 + $0x40] sm:$0xff]
        %v306 = vld [vmem:[%s283 + $0x48] sm:$0xff]
        %v307 = vld [vmem:[%s283 + $0x50] sm:$0xff]
        %v308 = vld [vmem:[%s283 + $0x58] sm:$0xff]
        %v309 = vld [vmem:[%s283 + $0x60] sm:$0xff]
        %v310 = vld [vmem:[%s283 + $0x68] sm:$0xff]
        %v311 = vld [vmem:[%s283 + $0x70] sm:$0xff]
        %v312 = vld [vmem:[%s283 + $0x78] sm:$0xff]
        %v313 = vld [vmem:[%s283 + $0x80] sm:$0xff]
        %v314 = vld [vmem:[%s283 + $0x88] sm:$0xff]
        %v315 = vld [vmem:[%s283 + $0x90] sm:$0xff]
        %v316 = vld [vmem:[%s283 + $0x98] sm:$0xff]
        %v317 = vld [vmem:[%s283 + $0xa0] sm:$0xff]
        %v318 = vld [vmem:[%s283 + $0xa8] sm:$0xff]
        %v319 = vld [vmem:[%s283 + $0xb0] sm:$0xff]
        %v320 = vld [vmem:[%s283 + $0xb8] sm:$0xff]
        %v321 = vld [vmem:[%s283 + $0xc0] sm:$0xff]
        %v322 = vld [vmem:[%s283 + $0xc8] sm:$0xff]
        %v323 = vld [vmem:[%s283 + $0xd0] sm:$0xff]
        %v324 = vld [vmem:[%s283 + $0xd8] sm:$0xff]
        %v325 = vld [vmem:[%s283 + $0xe0] sm:$0xff]
        %v326 = vld [vmem:[%s283 + $0xe8] sm:$0xff]
        %v327 = vld [vmem:[%s283 + $0xf0] sm:$0xff]
        %v328 = vld [vmem:[%s283 + $0xf8] sm:$0xff]
        %vm329 = vcmask 523264
        %v330 = vsel %vm329, %v297, 0.0
        %331 = vadd.xlane.f32.xlu0 %v330
        %v332 = vpop.xlane.xlu0 %331
        %v333 = vsel %vm329, %v298, 0.0
        %334 = vadd.xlane.f32.xlu0 %v333
        %v335 = vpop.xlane.xlu0 %334
        %v336 = vsel %vm329, %v299, 0.0
        %337 = vadd.xlane.f32.xlu0 %v336
        %v338 = vpop.xlane.xlu0 %337
        %v339 = vsel %vm329, %v300, 0.0
        %340 = vadd.xlane.f32.xlu0 %v339
        %v341 = vpop.xlane.xlu0 %340
        %v342 = vsel %vm329, %v301, 0.0
        %343 = vadd.xlane.f32.xlu0 %v342
        %v344 = vpop.xlane.xlu0 %343
        %v345 = vsel %vm329, %v302, 0.0
        %346 = vadd.xlane.f32.xlu0 %v345
        %v347 = vpop.xlane.xlu0 %346
        %v348 = vsel %vm329, %v303, 0.0
        %349 = vadd.xlane.f32.xlu0 %v348
        %v350 = vpop.xlane.xlu0 %349
        %v351 = vsel %vm329, %v304, 0.0
        %352 = vadd.xlane.f32.xlu0 %v351
        %v353 = vpop.xlane.xlu0 %352
        %v354 = vsel %vm329, %v305, 0.0
        %355 = vadd.xlane.f32.xlu0 %v354
        %v356 = vpop.xlane.xlu0 %355
        %v357 = vsel %vm329, %v306, 0.0
        %358 = vadd.xlane.f32.xlu0 %v357
        %v359 = vpop.xlane.xlu0 %358
        %v360 = vsel %vm329, %v307, 0.0
        %361 = vadd.xlane.f32.xlu0 %v360
        %v362 = vpop.xlane.xlu0 %361
        %v363 = vsel %vm329, %v308, 0.0
        %364 = vadd.xlane.f32.xlu0 %v363
        %v365 = vpop.xlane.xlu0 %364
        %v366 = vsel %vm329, %v309, 0.0
        %367 = vadd.xlane.f32.xlu0 %v366
        %v368 = vpop.xlane.xlu0 %367
        %v369 = vsel %vm329, %v310, 0.0
        %370 = vadd.xlane.f32.xlu0 %v369
        %v371 = vpop.xlane.xlu0 %370
        %v372 = vsel %vm329, %v311, 0.0
        %373 = vadd.xlane.f32.xlu0 %v372
        %v374 = vpop.xlane.xlu0 %373
        %v375 = vsel %vm329, %v312, 0.0
        %376 = vadd.xlane.f32.xlu0 %v375
        %v377 = vpop.xlane.xlu0 %376
        %v378 = vsel %vm329, %v313, 0.0
        %379 = vadd.xlane.f32.xlu0 %v378
        %v380 = vpop.xlane.xlu0 %379
        %v381 = vsel %vm329, %v314, 0.0
        %382 = vadd.xlane.f32.xlu0 %v381
        %v383 = vpop.xlane.xlu0 %382
        %v384 = vsel %vm329, %v315, 0.0
        %385 = vadd.xlane.f32.xlu0 %v384
        %v386 = vpop.xlane.xlu0 %385
        %v387 = vsel %vm329, %v316, 0.0
        %388 = vadd.xlane.f32.xlu0 %v387
        %v389 = vpop.xlane.xlu0 %388
        %v390 = vsel %vm329, %v317, 0.0
        %391 = vadd.xlane.f32.xlu0 %v390
        %v392 = vpop.xlane.xlu0 %391
        %v393 = vsel %vm329, %v318, 0.0
        %394 = vadd.xlane.f32.xlu0 %v393
        %v395 = vpop.xlane.xlu0 %394
        %v396 = vsel %vm329, %v319, 0.0
        %397 = vadd.xlane.f32.xlu0 %v396
        %v398 = vpop.xlane.xlu0 %397
        %v399 = vsel %vm329, %v320, 0.0
        %400 = vadd.xlane.f32.xlu0 %v399
        %v401 = vpop.xlane.xlu0 %400
        %v402 = vsel %vm329, %v321, 0.0
        %403 = vadd.xlane.f32.xlu0 %v402
        %v404 = vpop.xlane.xlu0 %403
        %v405 = vsel %vm329, %v322, 0.0
        %406 = vadd.xlane.f32.xlu0 %v405
        %v407 = vpop.xlane.xlu0 %406
        %v408 = vsel %vm329, %v323, 0.0
        %409 = vadd.xlane.f32.xlu0 %v408
        %v410 = vpop.xlane.xlu0 %409
        %v411 = vsel %vm329, %v324, 0.0
        %412 = vadd.xlane.f32.xlu0 %v411
        %v413 = vpop.xlane.xlu0 %412
        %v414 = vsel %vm329, %v325, 0.0
        %415 = vadd.xlane.f32.xlu0 %v414
        %v416 = vpop.xlane.xlu0 %415
        %v417 = vsel %vm329, %v326, 0.0
        %418 = vadd.xlane.f32.xlu0 %v417
        %v419 = vpop.xlane.xlu0 %418
        %v420 = vsel %vm329, %v327, 0.0
        %421 = vadd.xlane.f32.xlu0 %v420
        %v422 = vpop.xlane.xlu0 %421
        %v423 = vsel %vm329, %v328, 0.0
        %424 = vadd.xlane.f32.xlu0 %v423
        %v425 = vpop.xlane.xlu0 %424
        %v426 = vrcp.pop 64.0
        %v427 = vmul.f32 64.0, %v426
        %v428 = vsub.f32 1.0, %v427
        %v429 = vmul.f32 %v426, %v428
        %v430 = vadd.f32 %v426, %v429
        %vm431 = vweird.f32 %v426
        %v432 = vsel %vm431, %v426, %v430
        %v433 = vmul.f32 %v332, %v432
        %v434 = vmul.f32 %v335, %v432
        %v435 = vmul.f32 %v338, %v432
        %v436 = vmul.f32 %v341, %v432
        %v437 = vmul.f32 %v344, %v432
        %v438 = vmul.f32 %v347, %v432
        %v439 = vmul.f32 %v350, %v432
        %v440 = vmul.f32 %v353, %v432
        %v441 = vmul.f32 %v356, %v432
        %v442 = vmul.f32 %v359, %v432
        %v443 = vmul.f32 %v362, %v432
        %v444 = vmul.f32 %v365, %v432
        %v445 = vmul.f32 %v368, %v432
        %v446 = vmul.f32 %v371, %v432
        %v447 = vmul.f32 %v374, %v432
        %v448 = vmul.f32 %v377, %v432
        %v449 = vmul.f32 %v380, %v432
        %v450 = vmul.f32 %v383, %v432
        %v451 = vmul.f32 %v386, %v432
        %v452 = vmul.f32 %v389, %v432
        %v453 = vmul.f32 %v392, %v432
        %v454 = vmul.f32 %v395, %v432
        %v455 = vmul.f32 %v398, %v432
        %v456 = vmul.f32 %v401, %v432
        %v457 = vmul.f32 %v404, %v432
        %v458 = vmul.f32 %v407, %v432
        %v459 = vmul.f32 %v410, %v432
        %v460 = vmul.f32 %v413, %v432
        %v461 = vmul.f32 %v416, %v432
        %v462 = vmul.f32 %v419, %v432
        %v463 = vmul.f32 %v422, %v432
        %v464 = vmul.f32 %v425, %v432
        %v465 = vsub.f32 %v297, %v433
        %v466 = vsub.f32 %v298, %v434
        %v467 = vsub.f32 %v299, %v435
        %v468 = vsub.f32 %v300, %v436
        %v469 = vsub.f32 %v301, %v437
        %v470 = vsub.f32 %v302, %v438
        %v471 = vsub.f32 %v303, %v439
        %v472 = vsub.f32 %v304, %v440
        %v473 = vsub.f32 %v305, %v441
        %v474 = vsub.f32 %v306, %v442
        %v475 = vsub.f32 %v307, %v443
        %v476 = vsub.f32 %v308, %v444
        %v477 = vsub.f32 %v309, %v445
        %v478 = vsub.f32 %v310, %v446
        %v479 = vsub.f32 %v311, %v447
        %v480 = vsub.f32 %v312, %v448
        %v481 = vsub.f32 %v313, %v449
        %v482 = vsub.f32 %v314, %v450
        %v483 = vsub.f32 %v315, %v451
        %v484 = vsub.f32 %v316, %v452
        %v485 = vsub.f32 %v317, %v453
        %v486 = vsub.f32 %v318, %v454
        %v487 = vsub.f32 %v319, %v455
        %v488 = vsub.f32 %v320, %v456
        %v489 = vsub.f32 %v321, %v457
        %v490 = vsub.f32 %v322, %v458
        %v491 = vsub.f32 %v323, %v459
        %v492 = vsub.f32 %v324, %v460
        %v493 = vsub.f32 %v325, %v461
        %v494 = vsub.f32 %v326, %v462
        %v495 = vsub.f32 %v327, %v463
        %v496 = vsub.f32 %v328, %v464
        %v497 = vmul.f32 %v465, %v465
        %v498 = vmul.f32 %v466, %v466
        %v499 = vmul.f32 %v467, %v467
        %v500 = vmul.f32 %v468, %v468
        %v501 = vmul.f32 %v469, %v469
        %v502 = vmul.f32 %v470, %v470
        %v503 = vmul.f32 %v471, %v471
        %v504 = vmul.f32 %v472, %v472
        %v505 = vmul.f32 %v473, %v473
        %v506 = vmul.f32 %v474, %v474
        %v507 = vmul.f32 %v475, %v475
        %v508 = vmul.f32 %v476, %v476
        %v509 = vmul.f32 %v477, %v477
        %v510 = vmul.f32 %v478, %v478
        %v511 = vmul.f32 %v479, %v479
        %v512 = vmul.f32 %v480, %v480
        %v513 = vmul.f32 %v481, %v481
        %v514 = vmul.f32 %v482, %v482
        %v515 = vmul.f32 %v483, %v483
        %v516 = vmul.f32 %v484, %v484
        %v517 = vmul.f32 %v485, %v485
        %v518 = vmul.f32 %v486, %v486
        %v519 = vmul.f32 %v487, %v487
        %v520 = vmul.f32 %v488, %v488
        %v521 = vmul.f32 %v489, %v489
        %v522 = vmul.f32 %v490, %v490
        %v523 = vmul.f32 %v491, %v491
        %v524 = vmul.f32 %v492, %v492
        %v525 = vmul.f32 %v493, %v493
        %v526 = vmul.f32 %v494, %v494
        %v527 = vmul.f32 %v495, %v495
        %v528 = vmul.f32 %v496, %v496
        %v529 = vsel %vm329, %v497, 0.0
        %530 = vadd.xlane.f32.xlu0 %v529
        %v531 = vpop.xlane.xlu0 %530
        %v532 = vsel %vm329, %v498, 0.0
        %533 = vadd.xlane.f32.xlu0 %v532
        %v534 = vpop.xlane.xlu0 %533
        %v535 = vsel %vm329, %v499, 0.0
        %536 = vadd.xlane.f32.xlu0 %v535
        %v537 = vpop.xlane.xlu0 %536
        %v538 = vsel %vm329, %v500, 0.0
        %539 = vadd.xlane.f32.xlu0 %v538
        %v540 = vpop.xlane.xlu0 %539
        %v541 = vsel %vm329, %v501, 0.0
        %542 = vadd.xlane.f32.xlu0 %v541
        %v543 = vpop.xlane.xlu0 %542
        %v544 = vsel %vm329, %v502, 0.0
        %545 = vadd.xlane.f32.xlu0 %v544
        %v546 = vpop.xlane.xlu0 %545
        %v547 = vsel %vm329, %v503, 0.0
        %548 = vadd.xlane.f32.xlu0 %v547
        %v549 = vpop.xlane.xlu0 %548
        %v550 = vsel %vm329, %v504, 0.0
        %551 = vadd.xlane.f32.xlu0 %v550
        %v552 = vpop.xlane.xlu0 %551
        %v553 = vsel %vm329, %v505, 0.0
        %554 = vadd.xlane.f32.xlu0 %v553
        %v555 = vpop.xlane.xlu0 %554
        %v556 = vsel %vm329, %v506, 0.0
        %557 = vadd.xlane.f32.xlu0 %v556
        %v558 = vpop.xlane.xlu0 %557
        %v559 = vsel %vm329, %v507, 0.0
        %560 = vadd.xlane.f32.xlu0 %v559
        %v561 = vpop.xlane.xlu0 %560
        %v562 = vsel %vm329, %v508, 0.0
        %563 = vadd.xlane.f32.xlu0 %v562
        %v564 = vpop.xlane.xlu0 %563
        %v565 = vsel %vm329, %v509, 0.0
        %566 = vadd.xlane.f32.xlu0 %v565
        %v567 = vpop.xlane.xlu0 %566
        %v568 = vsel %vm329, %v510, 0.0
        %569 = vadd.xlane.f32.xlu0 %v568
        %v570 = vpop.xlane.xlu0 %569
        %v571 = vsel %vm329, %v511, 0.0
        %572 = vadd.xlane.f32.xlu0 %v571
        %v573 = vpop.xlane.xlu0 %572
        %v574 = vsel %vm329, %v512, 0.0
        %575 = vadd.xlane.f32.xlu0 %v574
        %v576 = vpop.xlane.xlu0 %575
        %v577 = vsel %vm329, %v513, 0.0
        %578 = vadd.xlane.f32.xlu0 %v577
        %v579 = vpop.xlane.xlu0 %578
        %v580 = vsel %vm329, %v514, 0.0
        %581 = vadd.xlane.f32.xlu0 %v580
        %v582 = vpop.xlane.xlu0 %581
        %v583 = vsel %vm329, %v515, 0.0
        %584 = vadd.xlane.f32.xlu0 %v583
        %v585 = vpop.xlane.xlu0 %584
        %v586 = vsel %vm329, %v516, 0.0
        %587 = vadd.xlane.f32.xlu0 %v586
        %v588 = vpop.xlane.xlu0 %587
        %v589 = vsel %vm329, %v517, 0.0
        %590 = vadd.xlane.f32.xlu0 %v589
        %v591 = vpop.xlane.xlu0 %590
        %v592 = vsel %vm329, %v518, 0.0
        %593 = vadd.xlane.f32.xlu0 %v592
        %v594 = vpop.xlane.xlu0 %593
        %v595 = vsel %vm329, %v519, 0.0
        %596 = vadd.xlane.f32.xlu0 %v595
        %v597 = vpop.xlane.xlu0 %596
        %v598 = vsel %vm329, %v520, 0.0
        %599 = vadd.xlane.f32.xlu0 %v598
        %v600 = vpop.xlane.xlu0 %599
        %v601 = vsel %vm329, %v521, 0.0
        %602 = vadd.xlane.f32.xlu0 %v601
        %v603 = vpop.xlane.xlu0 %602
        %v604 = vsel %vm329, %v522, 0.0
        %605 = vadd.xlane.f32.xlu0 %v604
        %v606 = vpop.xlane.xlu0 %605
        %v607 = vsel %vm329, %v523, 0.0
        %608 = vadd.xlane.f32.xlu0 %v607
        %v609 = vpop.xlane.xlu0 %608
        %v610 = vsel %vm329, %v524, 0.0
        %611 = vadd.xlane.f32.xlu0 %v610
        %v612 = vpop.xlane.xlu0 %611
        %v613 = vsel %vm329, %v525, 0.0
        %614 = vadd.xlane.f32.xlu0 %v613
        %v615 = vpop.xlane.xlu0 %614
        %v616 = vsel %vm329, %v526, 0.0
        %617 = vadd.xlane.f32.xlu0 %v616
        %v618 = vpop.xlane.xlu0 %617
        %v619 = vsel %vm329, %v527, 0.0
        %620 = vadd.xlane.f32.xlu0 %v619
        %v621 = vpop.xlane.xlu0 %620
        %v622 = vsel %vm329, %v528, 0.0
        %623 = vadd.xlane.f32.xlu0 %v622
        %v624 = vpop.xlane.xlu0 %623
        %v625 = vmul.f32 %v531, %v432
        %v626 = vmul.f32 %v534, %v432
        %v627 = vmul.f32 %v537, %v432
        %v628 = vmul.f32 %v540, %v432
        %v629 = vmul.f32 %v543, %v432
        %v630 = vmul.f32 %v546, %v432
        %v631 = vmul.f32 %v549, %v432
        %v632 = vmul.f32 %v552, %v432
        %v633 = vmul.f32 %v555, %v432
        %v634 = vmul.f32 %v558, %v432
        %v635 = vmul.f32 %v561, %v432
        %v636 = vmul.f32 %v564, %v432
        %v637 = vmul.f32 %v567, %v432
        %v638 = vmul.f32 %v570, %v432
        %v639 = vmul.f32 %v573, %v432
        %v640 = vmul.f32 %v576, %v432
        %v641 = vmul.f32 %v579, %v432
        %v642 = vmul.f32 %v582, %v432
        %v643 = vmul.f32 %v585, %v432
        %v644 = vmul.f32 %v588, %v432
        %v645 = vmul.f32 %v591, %v432
        %v646 = vmul.f32 %v594, %v432
        %v647 = vmul.f32 %v597, %v432
        %v648 = vmul.f32 %v600, %v432
        %v649 = vmul.f32 %v603, %v432
        %v650 = vmul.f32 %v606, %v432
        %v651 = vmul.f32 %v609, %v432
        %v652 = vmul.f32 %v612, %v432
        %v653 = vmul.f32 %v615, %v432
        %v654 = vmul.f32 %v618, %v432
        %v655 = vmul.f32 %v621, %v432
        %v656 = vmul.f32 %v624, %v432
        %v657 = vadd.f32 %v625, 1e-05
        %v658 = vadd.f32 %v626, 1e-05
        %v659 = vadd.f32 %v627, 1e-05
        %v660 = vadd.f32 %v628, 1e-05
        %v661 = vadd.f32 %v629, 1e-05
        %v662 = vadd.f32 %v630, 1e-05
        %v663 = vadd.f32 %v631, 1e-05
        %v664 = vadd.f32 %v632, 1e-05
        %v665 = vadd.f32 %v633, 1e-05
        %v666 = vadd.f32 %v634, 1e-05
        %v667 = vadd.f32 %v635, 1e-05
        %v668 = vadd.f32 %v636, 1e-05
        %v669 = vadd.f32 %v637, 1e-05
        %v670 = vadd.f32 %v638, 1e-05
        %v671 = vadd.f32 %v639, 1e-05
        %v672 = vadd.f32 %v640, 1e-05
        %v673 = vadd.f32 %v641, 1e-05
        %v674 = vadd.f32 %v642, 1e-05
        %v675 = vadd.f32 %v643, 1e-05
        %v676 = vadd.f32 %v644, 1e-05
        %v677 = vadd.f32 %v645, 1e-05
        %v678 = vadd.f32 %v646, 1e-05
        %v679 = vadd.f32 %v647, 1e-05
        %v680 = vadd.f32 %v648, 1e-05
        %v681 = vadd.f32 %v649, 1e-05
        %v682 = vadd.f32 %v650, 1e-05
        %v683 = vadd.f32 %v651, 1e-05
        %v684 = vadd.f32 %v652, 1e-05
        %v685 = vadd.f32 %v653, 1e-05
        %v686 = vadd.f32 %v654, 1e-05
        %v687 = vadd.f32 %v655, 1e-05
        %v688 = vadd.f32 %v656, 1e-05
        %v689 = vrsqrt.pop %v657
        %v690 = vmul.f32 %v689, %v657
        %v691 = vmul.f32 %v690, %v689
        %v692 = vmul.f32 0.5, %v691
        %v693 = vsub.f32 1.5, %v692
        %v694 = vmul.f32 %v689, %v693
        %vm695 = vweird.f32 %v657
        %vm696 = vweird.f32 %v689
        %vm697 = vmor %vm695, %vm696
        %v698 = vsel %vm697, %v689, %v694
        %v699 = vrsqrt.pop %v658
        %v700 = vmul.f32 %v699, %v658
        %v701 = vmul.f32 %v700, %v699
        %v702 = vmul.f32 0.5, %v701
        %v703 = vsub.f32 1.5, %v702
        %v704 = vmul.f32 %v699, %v703
        %vm705 = vweird.f32 %v658
        %vm706 = vweird.f32 %v699
        %vm707 = vmor %vm705, %vm706
        %v708 = vsel %vm707, %v699, %v704
        %v709 = vrsqrt.pop %v659
        %v710 = vmul.f32 %v709, %v659
        %v711 = vmul.f32 %v710, %v709
        %v712 = vmul.f32 0.5, %v711
        %v713 = vsub.f32 1.5, %v712
        %v714 = vmul.f32 %v709, %v713
        %vm715 = vweird.f32 %v659
        %vm716 = vweird.f32 %v709
        %vm717 = vmor %vm715, %vm716
        %v718 = vsel %vm717, %v709, %v714
        %v719 = vrsqrt.pop %v660
        %v720 = vmul.f32 %v719, %v660
        %v721 = vmul.f32 %v720, %v719
        %v722 = vmul.f32 0.5, %v721
        %v723 = vsub.f32 1.5, %v722
        %v724 = vmul.f32 %v719, %v723
        %vm725 = vweird.f32 %v660
        %vm726 = vweird.f32 %v719
        %vm727 = vmor %vm725, %vm726
        %v728 = vsel %vm727, %v719, %v724
        %v729 = vrsqrt.pop %v661
        %v730 = vmul.f32 %v729, %v661
        %v731 = vmul.f32 %v730, %v729
        %v732 = vmul.f32 0.5, %v731
        %v733 = vsub.f32 1.5, %v732
        %v734 = vmul.f32 %v729, %v733
        %vm735 = vweird.f32 %v661
        %vm736 = vweird.f32 %v729
        %vm737 = vmor %vm735, %vm736
        %v738 = vsel %vm737, %v729, %v734
        %v739 = vrsqrt.pop %v662
        %v740 = vmul.f32 %v739, %v662
        %v741 = vmul.f32 %v740, %v739
        %v742 = vmul.f32 0.5, %v741
        %v743 = vsub.f32 1.5, %v742
        %v744 = vmul.f32 %v739, %v743
        %vm745 = vweird.f32 %v662
        %vm746 = vweird.f32 %v739
        %vm747 = vmor %vm745, %vm746
        %v748 = vsel %vm747, %v739, %v744
        %v749 = vrsqrt.pop %v663
        %v750 = vmul.f32 %v749, %v663
        %v751 = vmul.f32 %v750, %v749
        %v752 = vmul.f32 0.5, %v751
        %v753 = vsub.f32 1.5, %v752
        %v754 = vmul.f32 %v749, %v753
        %vm755 = vweird.f32 %v663
        %vm756 = vweird.f32 %v749
        %vm757 = vmor %vm755, %vm756
        %v758 = vsel %vm757, %v749, %v754
        %v759 = vrsqrt.pop %v664
        %v760 = vmul.f32 %v759, %v664
        %v761 = vmul.f32 %v760, %v759
        %v762 = vmul.f32 0.5, %v761
        %v763 = vsub.f32 1.5, %v762
        %v764 = vmul.f32 %v759, %v763
        %vm765 = vweird.f32 %v664
        %vm766 = vweird.f32 %v759
        %vm767 = vmor %vm765, %vm766
        %v768 = vsel %vm767, %v759, %v764
        %v769 = vrsqrt.pop %v665
        %v770 = vmul.f32 %v769, %v665
        %v771 = vmul.f32 %v770, %v769
        %v772 = vmul.f32 0.5, %v771
        %v773 = vsub.f32 1.5, %v772
        %v774 = vmul.f32 %v769, %v773
        %vm775 = vweird.f32 %v665
        %vm776 = vweird.f32 %v769
        %vm777 = vmor %vm775, %vm776
        %v778 = vsel %vm777, %v769, %v774
        %v779 = vrsqrt.pop %v666
        %v780 = vmul.f32 %v779, %v666
        %v781 = vmul.f32 %v780, %v779
        %v782 = vmul.f32 0.5, %v781
        %v783 = vsub.f32 1.5, %v782
        %v784 = vmul.f32 %v779, %v783
        %vm785 = vweird.f32 %v666
        %vm786 = vweird.f32 %v779
        %vm787 = vmor %vm785, %vm786
        %v788 = vsel %vm787, %v779, %v784
        %v789 = vrsqrt.pop %v667
        %v790 = vmul.f32 %v789, %v667
        %v791 = vmul.f32 %v790, %v789
        %v792 = vmul.f32 0.5, %v791
        %v793 = vsub.f32 1.5, %v792
        %v794 = vmul.f32 %v789, %v793
        %vm795 = vweird.f32 %v667
        %vm796 = vweird.f32 %v789
        %vm797 = vmor %vm795, %vm796
        %v798 = vsel %vm797, %v789, %v794
        %v799 = vrsqrt.pop %v668
        %v800 = vmul.f32 %v799, %v668
        %v801 = vmul.f32 %v800, %v799
        %v802 = vmul.f32 0.5, %v801
        %v803 = vsub.f32 1.5, %v802
        %v804 = vmul.f32 %v799, %v803
        %vm805 = vweird.f32 %v668
        %vm806 = vweird.f32 %v799
        %vm807 = vmor %vm805, %vm806
        %v808 = vsel %vm807, %v799, %v804
        %v809 = vrsqrt.pop %v669
        %v810 = vmul.f32 %v809, %v669
        %v811 = vmul.f32 %v810, %v809
        %v812 = vmul.f32 0.5, %v811
        %v813 = vsub.f32 1.5, %v812
        %v814 = vmul.f32 %v809, %v813
        %vm815 = vweird.f32 %v669
        %vm816 = vweird.f32 %v809
        %vm817 = vmor %vm815, %vm816
        %v818 = vsel %vm817, %v809, %v814
        %v819 = vrsqrt.pop %v670
        %v820 = vmul.f32 %v819, %v670
        %v821 = vmul.f32 %v820, %v819
        %v822 = vmul.f32 0.5, %v821
        %v823 = vsub.f32 1.5, %v822
        %v824 = vmul.f32 %v819, %v823
        %vm825 = vweird.f32 %v670
        %vm826 = vweird.f32 %v819
        %vm827 = vmor %vm825, %vm826
        %v828 = vsel %vm827, %v819, %v824
        %v829 = vrsqrt.pop %v671
        %v830 = vmul.f32 %v829, %v671
        %v831 = vmul.f32 %v830, %v829
        %v832 = vmul.f32 0.5, %v831
        %v833 = vsub.f32 1.5, %v832
        %v834 = vmul.f32 %v829, %v833
        %vm835 = vweird.f32 %v671
        %vm836 = vweird.f32 %v829
        %vm837 = vmor %vm835, %vm836
        %v838 = vsel %vm837, %v829, %v834
        %v839 = vrsqrt.pop %v672
        %v840 = vmul.f32 %v839, %v672
        %v841 = vmul.f32 %v840, %v839
        %v842 = vmul.f32 0.5, %v841
        %v843 = vsub.f32 1.5, %v842
        %v844 = vmul.f32 %v839, %v843
        %vm845 = vweird.f32 %v672
        %vm846 = vweird.f32 %v839
        %vm847 = vmor %vm845, %vm846
        %v848 = vsel %vm847, %v839, %v844
        %v849 = vrsqrt.pop %v673
        %v850 = vmul.f32 %v849, %v673
        %v851 = vmul.f32 %v850, %v849
        %v852 = vmul.f32 0.5, %v851
        %v853 = vsub.f32 1.5, %v852
        %v854 = vmul.f32 %v849, %v853
        %vm855 = vweird.f32 %v673
        %vm856 = vweird.f32 %v849
        %vm857 = vmor %vm855, %vm856
        %v858 = vsel %vm857, %v849, %v854
        %v859 = vrsqrt.pop %v674
        %v860 = vmul.f32 %v859, %v674
        %v861 = vmul.f32 %v860, %v859
        %v862 = vmul.f32 0.5, %v861
        %v863 = vsub.f32 1.5, %v862
        %v864 = vmul.f32 %v859, %v863
        %vm865 = vweird.f32 %v674
        %vm866 = vweird.f32 %v859
        %vm867 = vmor %vm865, %vm866
        %v868 = vsel %vm867, %v859, %v864
        %v869 = vrsqrt.pop %v675
        %v870 = vmul.f32 %v869, %v675
        %v871 = vmul.f32 %v870, %v869
        %v872 = vmul.f32 0.5, %v871
        %v873 = vsub.f32 1.5, %v872
        %v874 = vmul.f32 %v869, %v873
        %vm875 = vweird.f32 %v675
        %vm876 = vweird.f32 %v869
        %vm877 = vmor %vm875, %vm876
        %v878 = vsel %vm877, %v869, %v874
        %v879 = vrsqrt.pop %v676
        %v880 = vmul.f32 %v879, %v676
        %v881 = vmul.f32 %v880, %v879
        %v882 = vmul.f32 0.5, %v881
        %v883 = vsub.f32 1.5, %v882
        %v884 = vmul.f32 %v879, %v883
        %vm885 = vweird.f32 %v676
        %vm886 = vweird.f32 %v879
        %vm887 = vmor %vm885, %vm886
        %v888 = vsel %vm887, %v879, %v884
        %v889 = vrsqrt.pop %v677
        %v890 = vmul.f32 %v889, %v677
        %v891 = vmul.f32 %v890, %v889
        %v892 = vmul.f32 0.5, %v891
        %v893 = vsub.f32 1.5, %v892
        %v894 = vmul.f32 %v889, %v893
        %vm895 = vweird.f32 %v677
        %vm896 = vweird.f32 %v889
        %vm897 = vmor %vm895, %vm896
        %v898 = vsel %vm897, %v889, %v894
        %v899 = vrsqrt.pop %v678
        %v900 = vmul.f32 %v899, %v678
        %v901 = vmul.f32 %v900, %v899
        %v902 = vmul.f32 0.5, %v901
        %v903 = vsub.f32 1.5, %v902
        %v904 = vmul.f32 %v899, %v903
        %vm905 = vweird.f32 %v678
        %vm906 = vweird.f32 %v899
        %vm907 = vmor %vm905, %vm906
        %v908 = vsel %vm907, %v899, %v904
        %v909 = vrsqrt.pop %v679
        %v910 = vmul.f32 %v909, %v679
        %v911 = vmul.f32 %v910, %v909
        %v912 = vmul.f32 0.5, %v911
        %v913 = vsub.f32 1.5, %v912
        %v914 = vmul.f32 %v909, %v913
        %vm915 = vweird.f32 %v679
        %vm916 = vweird.f32 %v909
        %vm917 = vmor %vm915, %vm916
        %v918 = vsel %vm917, %v909, %v914
        %v919 = vrsqrt.pop %v680
        %v920 = vmul.f32 %v919, %v680
        %v921 = vmul.f32 %v920, %v919
        %v922 = vmul.f32 0.5, %v921
        %v923 = vsub.f32 1.5, %v922
        %v924 = vmul.f32 %v919, %v923
        %vm925 = vweird.f32 %v680
        %vm926 = vweird.f32 %v919
        %vm927 = vmor %vm925, %vm926
        %v928 = vsel %vm927, %v919, %v924
        %v929 = vrsqrt.pop %v681
        %v930 = vmul.f32 %v929, %v681
        %v931 = vmul.f32 %v930, %v929
        %v932 = vmul.f32 0.5, %v931
        %v933 = vsub.f32 1.5, %v932
        %v934 = vmul.f32 %v929, %v933
        %vm935 = vweird.f32 %v681
        %vm936 = vweird.f32 %v929
        %vm937 = vmor %vm935, %vm936
        %v938 = vsel %vm937, %v929, %v934
        %v939 = vrsqrt.pop %v682
        %v940 = vmul.f32 %v939, %v682
        %v941 = vmul.f32 %v940, %v939
        %v942 = vmul.f32 0.5, %v941
        %v943 = vsub.f32 1.5, %v942
        %v944 = vmul.f32 %v939, %v943
        %vm945 = vweird.f32 %v682
        %vm946 = vweird.f32 %v939
        %vm947 = vmor %vm945, %vm946
        %v948 = vsel %vm947, %v939, %v944
        %v949 = vrsqrt.pop %v683
        %v950 = vmul.f32 %v949, %v683
        %v951 = vmul.f32 %v950, %v949
        %v952 = vmul.f32 0.5, %v951
        %v953 = vsub.f32 1.5, %v952
        %v954 = vmul.f32 %v949, %v953
        %vm955 = vweird.f32 %v683
        %vm956 = vweird.f32 %v949
        %vm957 = vmor %vm955, %vm956
        %v958 = vsel %vm957, %v949, %v954
        %v959 = vrsqrt.pop %v684
        %v960 = vmul.f32 %v959, %v684
        %v961 = vmul.f32 %v960, %v959
        %v962 = vmul.f32 0.5, %v961
        %v963 = vsub.f32 1.5, %v962
        %v964 = vmul.f32 %v959, %v963
        %vm965 = vweird.f32 %v684
        %vm966 = vweird.f32 %v959
        %vm967 = vmor %vm965, %vm966
        %v968 = vsel %vm967, %v959, %v964
        %v969 = vrsqrt.pop %v685
        %v970 = vmul.f32 %v969, %v685
        %v971 = vmul.f32 %v970, %v969
        %v972 = vmul.f32 0.5, %v971
        %v973 = vsub.f32 1.5, %v972
        %v974 = vmul.f32 %v969, %v973
        %vm975 = vweird.f32 %v685
        %vm976 = vweird.f32 %v969
        %vm977 = vmor %vm975, %vm976
        %v978 = vsel %vm977, %v969, %v974
        %v979 = vrsqrt.pop %v686
        %v980 = vmul.f32 %v979, %v686
        %v981 = vmul.f32 %v980, %v979
        %v982 = vmul.f32 0.5, %v981
        %v983 = vsub.f32 1.5, %v982
        %v984 = vmul.f32 %v979, %v983
        %vm985 = vweird.f32 %v686
        %vm986 = vweird.f32 %v979
        %vm987 = vmor %vm985, %vm986
        %v988 = vsel %vm987, %v979, %v984
        %v989 = vrsqrt.pop %v687
        %v990 = vmul.f32 %v989, %v687
        %v991 = vmul.f32 %v990, %v989
        %v992 = vmul.f32 0.5, %v991
        %v993 = vsub.f32 1.5, %v992
        %v994 = vmul.f32 %v989, %v993
        %vm995 = vweird.f32 %v687
        %vm996 = vweird.f32 %v989
        %vm997 = vmor %vm995, %vm996
        %v998 = vsel %vm997, %v989, %v994
        %v999 = vrsqrt.pop %v688
        %v1000 = vmul.f32 %v999, %v688
        %v1001 = vmul.f32 %v1000, %v999
        %v1002 = vmul.f32 0.5, %v1001
        %v1003 = vsub.f32 1.5, %v1002
        %v1004 = vmul.f32 %v999, %v1003
        %vm1005 = vweird.f32 %v688
        %vm1006 = vweird.f32 %v999
        %vm1007 = vmor %vm1005, %vm1006
        %v1008 = vsel %vm1007, %v999, %v1004
        %v1009 = vmul.f32 %v465, %v698
        %v1010 = vmul.f32 %v466, %v708
        %v1011 = vmul.f32 %v467, %v718
        %v1012 = vmul.f32 %v468, %v728
        %v1013 = vmul.f32 %v469, %v738
        %v1014 = vmul.f32 %v470, %v748
        %v1015 = vmul.f32 %v471, %v758
        %v1016 = vmul.f32 %v472, %v768
        %v1017 = vmul.f32 %v473, %v778
        %v1018 = vmul.f32 %v474, %v788
        %v1019 = vmul.f32 %v475, %v798
        %v1020 = vmul.f32 %v476, %v808
        %v1021 = vmul.f32 %v477, %v818
        %v1022 = vmul.f32 %v478, %v828
        %v1023 = vmul.f32 %v479, %v838
        %v1024 = vmul.f32 %v480, %v848
        %v1025 = vmul.f32 %v481, %v858
        %v1026 = vmul.f32 %v482, %v868
        %v1027 = vmul.f32 %v483, %v878
        %v1028 = vmul.f32 %v484, %v888
        %v1029 = vmul.f32 %v485, %v898
        %v1030 = vmul.f32 %v486, %v908
        %v1031 = vmul.f32 %v487, %v918
        %v1032 = vmul.f32 %v488, %v928
        %v1033 = vmul.f32 %v489, %v938
        %v1034 = vmul.f32 %v490, %v948
        %v1035 = vmul.f32 %v491, %v958
        %v1036 = vmul.f32 %v492, %v968
        %v1037 = vmul.f32 %v493, %v978
        %v1038 = vmul.f32 %v494, %v988
        %v1039 = vmul.f32 %v495, %v998
        %v1040 = vmul.f32 %v496, %v1008
        %v1041 = vld [vmem:[#allocation2] sm:$0x1]
        %v1043 = vperm.slane %v1041, 0
        %v1045 = vmul.f32 %v1009, %v1043
        %v1046 = vmul.f32 %v1010, %v1043
        %v1047 = vmul.f32 %v1011, %v1043
        %v1048 = vmul.f32 %v1012, %v1043
        %v1049 = vmul.f32 %v1013, %v1043
        %v1050 = vmul.f32 %v1014, %v1043
        %v1051 = vmul.f32 %v1015, %v1043
        %v1052 = vmul.f32 %v1016, %v1043
        %v1053 = vmul.f32 %v1017, %v1043
        %v1054 = vmul.f32 %v1018, %v1043
        %v1055 = vmul.f32 %v1019, %v1043
        %v1056 = vmul.f32 %v1020, %v1043
        %v1057 = vmul.f32 %v1021, %v1043
        %v1058 = vmul.f32 %v1022, %v1043
        %v1059 = vmul.f32 %v1023, %v1043
        %v1060 = vmul.f32 %v1024, %v1043
        %v1061 = vmul.f32 %v1025, %v1043
        %v1062 = vmul.f32 %v1026, %v1043
        %v1063 = vmul.f32 %v1027, %v1043
        %v1064 = vmul.f32 %v1028, %v1043
        %v1065 = vmul.f32 %v1029, %v1043
        %v1066 = vmul.f32 %v1030, %v1043
        %v1067 = vmul.f32 %v1031, %v1043
        %v1068 = vmul.f32 %v1032, %v1043
        %v1069 = vmul.f32 %v1033, %v1043
        %v1070 = vmul.f32 %v1034, %v1043
        %v1071 = vmul.f32 %v1035, %v1043
        %v1072 = vmul.f32 %v1036, %v1043
        %v1073 = vmul.f32 %v1037, %v1043
        %v1074 = vmul.f32 %v1038, %v1043
        %v1075 = vmul.f32 %v1039, %v1043
        %v1076 = vmul.f32 %v1040, %v1043
        %v1077 = vld [vmem:[#allocation4] sm:$0x1]
        %v1079 = vperm.slane %v1077, 0
        %v1081 = vadd.f32 %v1045, %v1079
        %v1082 = vadd.f32 %v1046, %v1079
        %v1083 = vadd.f32 %v1047, %v1079
        %v1084 = vadd.f32 %v1048, %v1079
        %v1085 = vadd.f32 %v1049, %v1079
        %v1086 = vadd.f32 %v1050, %v1079
        %v1087 = vadd.f32 %v1051, %v1079
        %v1088 = vadd.f32 %v1052, %v1079
        %v1089 = vadd.f32 %v1053, %v1079
        %v1090 = vadd.f32 %v1054, %v1079
        %v1091 = vadd.f32 %v1055, %v1079
        %v1092 = vadd.f32 %v1056, %v1079
        %v1093 = vadd.f32 %v1057, %v1079
        %v1094 = vadd.f32 %v1058, %v1079
        %v1095 = vadd.f32 %v1059, %v1079
        %v1096 = vadd.f32 %v1060, %v1079
        %v1097 = vadd.f32 %v1061, %v1079
        %v1098 = vadd.f32 %v1062, %v1079
        %v1099 = vadd.f32 %v1063, %v1079
        %v1100 = vadd.f32 %v1064, %v1079
        %v1101 = vadd.f32 %v1065, %v1079
        %v1102 = vadd.f32 %v1066, %v1079
        %v1103 = vadd.f32 %v1067, %v1079
        %v1104 = vadd.f32 %v1068, %v1079
        %v1105 = vadd.f32 %v1069, %v1079
        %v1106 = vadd.f32 %v1070, %v1079
        %v1107 = vadd.f32 %v1071, %v1079
        %v1108 = vadd.f32 %v1072, %v1079
        %v1109 = vadd.f32 %v1073, %v1079
        %v1110 = vadd.f32 %v1074, %v1079
        %v1111 = vadd.f32 %v1075, %v1079
        %v1112 = vadd.f32 %v1076, %v1079
        %v1113 = vpack.c.bf16 %v1082, %v1081
        %v1114 = vpack.c.bf16 %v1084, %v1083
        %v1115 = vpack.c.bf16 %v1086, %v1085
        %v1116 = vpack.c.bf16 %v1088, %v1087
        %v1117 = vpack.c.bf16 %v1090, %v1089
        %v1118 = vpack.c.bf16 %v1092, %v1091
        %v1119 = vpack.c.bf16 %v1094, %v1093
        %v1120 = vpack.c.bf16 %v1096, %v1095
        %v1121 = vpack.c.bf16 %v1098, %v1097
        %v1122 = vpack.c.bf16 %v1100, %v1099
        %v1123 = vpack.c.bf16 %v1102, %v1101
        %v1124 = vpack.c.bf16 %v1104, %v1103
        %v1125 = vpack.c.bf16 %v1106, %v1105
        %v1126 = vpack.c.bf16 %v1108, %v1107
        %v1127 = vpack.c.bf16 %v1110, %v1109
        %v1128 = vpack.c.bf16 %v1112, %v1111
        %v1129 = vld [vmem:[%s3] sm:$0xff]
        %v1130 = vld [vmem:[%s3 + $0x8] sm:$0xff]
        %v1131 = vld [vmem:[%s3 + $0x10] sm:$0xff]
        %v1132 = vld [vmem:[%s3 + $0x18] sm:$0xff]
        %v1133 = vld [vmem:[%s3 + $0x20] sm:$0xff]
        %v1134 = vld [vmem:[%s3 + $0x28] sm:$0xff]
        %v1135 = vld [vmem:[%s3 + $0x30] sm:$0xff]
        %v1136 = vld [vmem:[%s3 + $0x38] sm:$0xff]
        %v1137 = vld [vmem:[%s4] sm:$0x3]
        %v1139 = vperm.slane %v1137, 0
        %v1140 = vperm.slane %v1137, 1
        %v1151 = vunpack.c.l.b16 %v1129
        %v1152 = vunpack.c.h.b16 %v1129
        %v1153 = vunpack.c.l.b16 %v1130
        %v1154 = vunpack.c.h.b16 %v1130
        %v1155 = vunpack.c.l.b16 %v1131
        %v1156 = vunpack.c.h.b16 %v1131
        %v1157 = vunpack.c.l.b16 %v1132
        %v1158 = vunpack.c.h.b16 %v1132
        %v1159 = vunpack.c.l.b16 %v1133
        %v1160 = vunpack.c.h.b16 %v1133
        %v1161 = vunpack.c.l.b16 %v1134
        %v1162 = vunpack.c.h.b16 %v1134
        %v1163 = vunpack.c.l.b16 %v1135
        %v1164 = vunpack.c.h.b16 %v1135
        %v1165 = vunpack.c.l.b16 %v1136
        %v1166 = vunpack.c.h.b16 %v1136
        %v1167 = vpack.c.b16 %v1153, %v1151
        %v1168 = vpack.c.b16 %v1154, %v1152
        %v1169 = vpack.c.b16 %v1157, %v1155
        %v1170 = vpack.c.b16 %v1158, %v1156
        %v1171 = vpack.c.b16 %v1161, %v1159
        %v1172 = vpack.c.b16 %v1162, %v1160
        %v1173 = vpack.c.b16 %v1165, %v1163
        %v1174 = vpack.c.b16 %v1166, %v1164
        %v1184 = vsel %vm329, %v1113, 0
        %v1187 = vsel %vm329, %v1114, 0
        %v1190 = vsel %vm329, %v1115, 0
        %v1193 = vsel %vm329, %v1116, 0
        %v1196 = vsel %vm329, %v1117, 0
        %v1199 = vsel %vm329, %v1118, 0
        %v1202 = vsel %vm329, %v1119, 0
        %v1205 = vsel %vm329, %v1120, 0
        %v1208 = vsel %vm329, %v1121, 0
        %v1211 = vsel %vm329, %v1122, 0
        %v1214 = vsel %vm329, %v1123, 0
        %v1217 = vsel %vm329, %v1124, 0
        %v1220 = vsel %vm329, %v1125, 0
        %v1223 = vsel %vm329, %v1126, 0
        %v1226 = vsel %vm329, %v1127, 0
        %v1229 = vsel %vm329, %v1128, 0
        %1231 = vmatpush.bf16.msra.mxu0 0
        %1232 = vmatpush.bf16.msra.mxu0 0
        %1233 = vmatpush.bf16.msra.mxu0 0
        %1234 = vmatpush.bf16.msra.mxu0 0
        %1235 = vmatpush.bf16.msra.mxu0 %v1173
        %1236 = vmatpush.bf16.msra.mxu0 %v1171
        %1237 = vmatpush.bf16.msra.mxu0 %v1169
        %1238 = vmatpush.bf16.msra.mxu0 %v1167
        %1239 = vmatmul.bf16.gmra.mxu0 %v1184
        %v1240 = vpop.f32.mrf.mxu0
        %v1241 = vadd.f32 %v1139, %v1240
        %v1242 = vpop.f32.mrf.mxu0
        %v1243 = vadd.f32 %v1139, %v1242
        %1244 = vmatmul.bf16.gmra.mxu0 %v1187
        %v1245 = vpop.f32.mrf.mxu0
        %v1246 = vadd.f32 %v1139, %v1245
        %v1247 = vpop.f32.mrf.mxu0
        %v1248 = vadd.f32 %v1139, %v1247
        %1249 = vmatmul.bf16.gmra.mxu0 %v1190
        %v1250 = vpop.f32.mrf.mxu0
        %v1251 = vadd.f32 %v1139, %v1250
        %v1252 = vpop.f32.mrf.mxu0
        %v1253 = vadd.f32 %v1139, %v1252
        %1254 = vmatmul.bf16.gmra.mxu0 %v1193
        %v1255 = vpop.f32.mrf.mxu0
        %v1256 = vadd.f32 %v1139, %v1255
        %v1257 = vpop.f32.mrf.mxu0
        %v1258 = vadd.f32 %v1139, %v1257
        %1259 = vmatmul.bf16.gmra.mxu0 %v1196
        %v1260 = vpop.f32.mrf.mxu0
        %v1261 = vadd.f32 %v1139, %v1260
        %v1262 = vpop.f32.mrf.mxu0
        %v1263 = vadd.f32 %v1139, %v1262
        %1264 = vmatmul.bf16.gmra.mxu0 %v1199
        %v1265 = vpop.f32.mrf.mxu0
        %v1266 = vadd.f32 %v1139, %v1265
        %v1267 = vpop.f32.mrf.mxu0
        %v1268 = vadd.f32 %v1139, %v1267
        %1269 = vmatmul.bf16.gmra.mxu0 %v1202
        %v1270 = vpop.f32.mrf.mxu0
        %v1271 = vadd.f32 %v1139, %v1270
        %v1272 = vpop.f32.mrf.mxu0
        %v1273 = vadd.f32 %v1139, %v1272
        %1274 = vmatmul.bf16.gmra.mxu0 %v1205
        %v1275 = vpop.f32.mrf.mxu0
        %v1276 = vadd.f32 %v1139, %v1275
        %v1277 = vpop.f32.mrf.mxu0
        %v1278 = vadd.f32 %v1139, %v1277
        %1279 = vmatmul.bf16.gmra.mxu0 %v1208
        %v1280 = vpop.f32.mrf.mxu0
        %v1281 = vadd.f32 %v1139, %v1280
        %v1282 = vpop.f32.mrf.mxu0
        %v1283 = vadd.f32 %v1139, %v1282
        %1284 = vmatmul.bf16.gmra.mxu0 %v1211
        %v1285 = vpop.f32.mrf.mxu0
        %v1286 = vadd.f32 %v1139, %v1285
        %v1287 = vpop.f32.mrf.mxu0
        %v1288 = vadd.f32 %v1139, %v1287
        %1289 = vmatmul.bf16.gmra.mxu0 %v1214
        %v1290 = vpop.f32.mrf.mxu0
        %v1291 = vadd.f32 %v1139, %v1290
        %v1292 = vpop.f32.mrf.mxu0
        %v1293 = vadd.f32 %v1139, %v1292
        %1294 = vmatmul.bf16.gmra.mxu0 %v1217
        %v1295 = vpop.f32.mrf.mxu0
        %v1296 = vadd.f32 %v1139, %v1295
        %v1297 = vpop.f32.mrf.mxu0
        %v1298 = vadd.f32 %v1139, %v1297
        %1299 = vmatmul.bf16.gmra.mxu0 %v1220
        %v1300 = vpop.f32.mrf.mxu0
        %v1301 = vadd.f32 %v1139, %v1300
        %v1302 = vpop.f32.mrf.mxu0
        %v1303 = vadd.f32 %v1139, %v1302
        %1304 = vmatmul.bf16.gmra.mxu0 %v1223
        %v1305 = vpop.f32.mrf.mxu0
        %v1306 = vadd.f32 %v1139, %v1305
        %v1307 = vpop.f32.mrf.mxu0
        %v1308 = vadd.f32 %v1139, %v1307
        %1309 = vmatmul.bf16.gmra.mxu0 %v1226
        %v1310 = vpop.f32.mrf.mxu0
        %v1311 = vadd.f32 %v1139, %v1310
        %v1312 = vpop.f32.mrf.mxu0
        %v1313 = vadd.f32 %v1139, %v1312
        %1314 = vmatmul.bf16.gmra.mxu0 %v1229
        %v1315 = vpop.f32.mrf.mxu0
        %v1316 = vadd.f32 %v1139, %v1315
        %v1317 = vpop.f32.mrf.mxu0
        %v1318 = vadd.f32 %v1139, %v1317
        %1319 = vdwg.mxu0
        %1320 = vmatpush.bf16.msra.mxu0 0
        %1321 = vmatpush.bf16.msra.mxu0 0
        %1322 = vmatpush.bf16.msra.mxu0 0
        %1323 = vmatpush.bf16.msra.mxu0 0
        %1324 = vmatpush.bf16.msra.mxu0 %v1174
        %1325 = vmatpush.bf16.msra.mxu0 %v1172
        %1326 = vmatpush.bf16.msra.mxu0 %v1170
        %1327 = vmatpush.bf16.msra.mxu0 %v1168
        %1328 = vmatmul.bf16.gmra.mxu0 %v1184
        %v1329 = vpop.f32.mrf.mxu0
        %v1330 = vadd.f32 %v1140, %v1329
        %v1331 = vpop.f32.mrf.mxu0
        %v1332 = vadd.f32 %v1140, %v1331
        %1333 = vmatmul.bf16.gmra.mxu0 %v1187
        %v1334 = vpop.f32.mrf.mxu0
        %v1335 = vadd.f32 %v1140, %v1334
        %v1336 = vpop.f32.mrf.mxu0
        %v1337 = vadd.f32 %v1140, %v1336
        %1338 = vmatmul.bf16.gmra.mxu0 %v1190
        %v1339 = vpop.f32.mrf.mxu0
        %v1340 = vadd.f32 %v1140, %v1339
        %v1341 = vpop.f32.mrf.mxu0
        %v1342 = vadd.f32 %v1140, %v1341
        %1343 = vmatmul.bf16.gmra.mxu0 %v1193
        %v1344 = vpop.f32.mrf.mxu0
        %v1345 = vadd.f32 %v1140, %v1344
        %v1346 = vpop.f32.mrf.mxu0
        %v1347 = vadd.f32 %v1140, %v1346
        %1348 = vmatmul.bf16.gmra.mxu0 %v1196
        %v1349 = vpop.f32.mrf.mxu0
        %v1350 = vadd.f32 %v1140, %v1349
        %v1351 = vpop.f32.mrf.mxu0
        %v1352 = vadd.f32 %v1140, %v1351
        %1353 = vmatmul.bf16.gmra.mxu0 %v1199
        %v1354 = vpop.f32.mrf.mxu0
        %v1355 = vadd.f32 %v1140, %v1354
        %v1356 = vpop.f32.mrf.mxu0
        %v1357 = vadd.f32 %v1140, %v1356
        %1358 = vmatmul.bf16.gmra.mxu0 %v1202
        %v1359 = vpop.f32.mrf.mxu0
        %v1360 = vadd.f32 %v1140, %v1359
        %v1361 = vpop.f32.mrf.mxu0
        %v1362 = vadd.f32 %v1140, %v1361
        %1363 = vmatmul.bf16.gmra.mxu0 %v1205
        %v1364 = vpop.f32.mrf.mxu0
        %v1365 = vadd.f32 %v1140, %v1364
        %v1366 = vpop.f32.mrf.mxu0
        %v1367 = vadd.f32 %v1140, %v1366
        %1368 = vmatmul.bf16.gmra.mxu0 %v1208
        %v1369 = vpop.f32.mrf.mxu0
        %v1370 = vadd.f32 %v1140, %v1369
        %v1371 = vpop.f32.mrf.mxu0
        %v1372 = vadd.f32 %v1140, %v1371
        %1373 = vmatmul.bf16.gmra.mxu0 %v1211
        %v1374 = vpop.f32.mrf.mxu0
        %v1375 = vadd.f32 %v1140, %v1374
        %v1376 = vpop.f32.mrf.mxu0
        %v1377 = vadd.f32 %v1140, %v1376
        %1378 = vmatmul.bf16.gmra.mxu0 %v1214
        %v1379 = vpop.f32.mrf.mxu0
        %v1380 = vadd.f32 %v1140, %v1379
        %v1381 = vpop.f32.mrf.mxu0
        %v1382 = vadd.f32 %v1140, %v1381
        %1383 = vmatmul.bf16.gmra.mxu0 %v1217
        %v1384 = vpop.f32.mrf.mxu0
        %v1385 = vadd.f32 %v1140, %v1384
        %v1386 = vpop.f32.mrf.mxu0
        %v1387 = vadd.f32 %v1140, %v1386
        %1388 = vmatmul.bf16.gmra.mxu0 %v1220
        %v1389 = vpop.f32.mrf.mxu0
        %v1390 = vadd.f32 %v1140, %v1389
        %v1391 = vpop.f32.mrf.mxu0
        %v1392 = vadd.f32 %v1140, %v1391
        %1393 = vmatmul.bf16.gmra.mxu0 %v1223
        %v1394 = vpop.f32.mrf.mxu0
        %v1395 = vadd.f32 %v1140, %v1394
        %v1396 = vpop.f32.mrf.mxu0
        %v1397 = vadd.f32 %v1140, %v1396
        %1398 = vmatmul.bf16.gmra.mxu0 %v1226
        %v1399 = vpop.f32.mrf.mxu0
        %v1400 = vadd.f32 %v1140, %v1399
        %v1401 = vpop.f32.mrf.mxu0
        %v1402 = vadd.f32 %v1140, %v1401
        %1403 = vmatmul.bf16.gmra.mxu0 %v1229
        %v1404 = vpop.f32.mrf.mxu0
        %v1405 = vadd.f32 %v1140, %v1404
        %v1406 = vpop.f32.mrf.mxu0
        %v1407 = vadd.f32 %v1140, %v1406
        %1408 = vdwg.mxu0
        %v1409 = vpack.c.bf16 %v1330, %v1241
        %v1410 = vpack.c.bf16 %v1332, %v1243
        %v1411 = vpack.c.bf16 %v1335, %v1246
        %v1412 = vpack.c.bf16 %v1337, %v1248
        %v1413 = vpack.c.bf16 %v1340, %v1251
        %v1414 = vpack.c.bf16 %v1342, %v1253
        %v1415 = vpack.c.bf16 %v1345, %v1256
        %v1416 = vpack.c.bf16 %v1347, %v1258
        %v1417 = vpack.c.bf16 %v1350, %v1261
        %v1418 = vpack.c.bf16 %v1352, %v1263
        %v1419 = vpack.c.bf16 %v1355, %v1266
        %v1420 = vpack.c.bf16 %v1357, %v1268
        %v1421 = vpack.c.bf16 %v1360, %v1271
        %v1422 = vpack.c.bf16 %v1362, %v1273
        %v1423 = vpack.c.bf16 %v1365, %v1276
        %v1424 = vpack.c.bf16 %v1367, %v1278
        %v1425 = vpack.c.bf16 %v1370, %v1281
        %v1426 = vpack.c.bf16 %v1372, %v1283
        %v1427 = vpack.c.bf16 %v1375, %v1286
        %v1428 = vpack.c.bf16 %v1377, %v1288
        %v1429 = vpack.c.bf16 %v1380, %v1291
        %v1430 = vpack.c.bf16 %v1382, %v1293
        %v1431 = vpack.c.bf16 %v1385, %v1296
        %v1432 = vpack.c.bf16 %v1387, %v1298
        %v1433 = vpack.c.bf16 %v1390, %v1301
        %v1434 = vpack.c.bf16 %v1392, %v1303
        %v1435 = vpack.c.bf16 %v1395, %v1306
        %v1436 = vpack.c.bf16 %v1397, %v1308
        %v1437 = vpack.c.bf16 %v1400, %v1311
        %v1438 = vpack.c.bf16 %v1402, %v1313
        %v1439 = vpack.c.bf16 %v1405, %v1316
        %v1440 = vpack.c.bf16 %v1407, %v1318
        %vm1441 = vcmask 1043456
        %vm1442 = vcmask 523268
        %vm1443 = vmor %vm1442, %vm1441
        %1444 = vst.msk [vmem:[%s294] sm:$0xff] %vm1443, %v1409
        %1445 = vst.msk [vmem:[%s294 + $0x8] sm:$0xff] %vm1443, %v1410
        %1446 = vst.msk [vmem:[%s294 + $0x10] sm:$0xff] %vm1443, %v1411
        %1447 = vst.msk [vmem:[%s294 + $0x18] sm:$0xff] %vm1443, %v1412
        %1448 = vst.msk [vmem:[%s294 + $0x20] sm:$0xff] %vm1443, %v1413
        %1449 = vst.msk [vmem:[%s294 + $0x28] sm:$0xff] %vm1443, %v1414
        %1450 = vst.msk [vmem:[%s294 + $0x30] sm:$0xff] %vm1443, %v1415
        %1451 = vst.msk [vmem:[%s294 + $0x38] sm:$0xff] %vm1443, %v1416
        %1452 = vst.msk [vmem:[%s294 + $0x40] sm:$0xff] %vm1443, %v1417
        %1453 = vst.msk [vmem:[%s294 + $0x48] sm:$0xff] %vm1443, %v1418
        %1454 = vst.msk [vmem:[%s294 + $0x50] sm:$0xff] %vm1443, %v1419
        %1455 = vst.msk [vmem:[%s294 + $0x58] sm:$0xff] %vm1443, %v1420
        %1456 = vst.msk [vmem:[%s294 + $0x60] sm:$0xff] %vm1443, %v1421
        %1457 = vst.msk [vmem:[%s294 + $0x68] sm:$0xff] %vm1443, %v1422
        %1458 = vst.msk [vmem:[%s294 + $0x70] sm:$0xff] %vm1443, %v1423
        %1459 = vst.msk [vmem:[%s294 + $0x78] sm:$0xff] %vm1443, %v1424
        %1460 = vst.msk [vmem:[%s294 + $0x80] sm:$0xff] %vm1443, %v1425
        %1461 = vst.msk [vmem:[%s294 + $0x88] sm:$0xff] %vm1443, %v1426
        %1462 = vst.msk [vmem:[%s294 + $0x90] sm:$0xff] %vm1443, %v1427
        %1463 = vst.msk [vmem:[%s294 + $0x98] sm:$0xff] %vm1443, %v1428
        %1464 = vst.msk [vmem:[%s294 + $0xa0] sm:$0xff] %vm1443, %v1429
        %1465 = vst.msk [vmem:[%s294 + $0xa8] sm:$0xff] %vm1443, %v1430
        %1466 = vst.msk [vmem:[%s294 + $0xb0] sm:$0xff] %vm1443, %v1431
        %1467 = vst.msk [vmem:[%s294 + $0xb8] sm:$0xff] %vm1443, %v1432
        %1468 = vst.msk [vmem:[%s294 + $0xc0] sm:$0xff] %vm1443, %v1433
        %1469 = vst.msk [vmem:[%s294 + $0xc8] sm:$0xff] %vm1443, %v1434
        %1470 = vst.msk [vmem:[%s294 + $0xd0] sm:$0xff] %vm1443, %v1435
        %1471 = vst.msk [vmem:[%s294 + $0xd8] sm:$0xff] %vm1443, %v1436
        %1472 = vst.msk [vmem:[%s294 + $0xe0] sm:$0xff] %vm1443, %v1437
        %1473 = vst.msk [vmem:[%s294 + $0xe8] sm:$0xff] %vm1443, %v1438
        %1474 = vst.msk [vmem:[%s294 + $0xf0] sm:$0xff] %vm1443, %v1439
        %1475 = vst.msk [vmem:[%s294 + $0xf8] sm:$0xff] %vm1443, %v1440
        %s1476 = smul.u32 32, %s23
        %p1477 = scmp.lt.s32.totalorder %s22, 1
        %s1478 = scalar_select %p1477, %s22, 1
        %p1479 = scmp.lt.s32.totalorder %s1476, 31
        %s1480 = scalar_select %p1479, %s1476, 31
        %s1481 = smul.addr %s1480, 2
        %s1482 = smul.addr %s1478, 64
        %s1483 = sadd.s32 %s1481, %s1482
        %s1484 = smul.addr %s1483, 4
        %s1485 = scalar_lea.vmem %s5, %s1484
        // Predicated region
        $region49: #{ocab_forward.3} parent=39 // pred_check
          %p1486 = pneg %p162
        $region50: #{ocab_forward.3} parent=39 // pred_check_branch
          %1488 = sbr.rel (%p1486) target = $region52
        $region51: #{ocab_forward.3} parent=39 // pred_region
          %s1489 = smul.u32 32, %s23
        $region52: #{ocab_forward.3} parent=39 // pred_fallthru
          _
      $region40: #{ocab_forward.3} parent=5 // pred_fallthru
        _
      %p1490 = scmp.le.s32.totalorder 2, %s13
      // Predicated region
      $region53: #{ocab_forward.3} parent=5 // pred_check
        %p1491 = pneg %p1490
      $region54: #{ocab_forward.3} parent=5 // pred_check_branch
        %1493 = sbr.rel (%p1491) target = $region56
      $region55: #{ocab_forward.3} parent=5 // pred_region
        %s1494 = ssub.s32 %s13, 2
        // Predicated region
        $region57: #{ocab_forward.3} parent=55 // pred_check
          %p1495 = pneg %p168
        $region58: #{ocab_forward.3} parent=55 // pred_check_branch
          %1497 = sbr.rel (%p1495) target = $region60
        $region59: #{ocab_forward.3} parent=55 // pred_region
          %s1498 = smul.u32 32, %s25
          %p1499 = scmp.lt.s32.totalorder %s24, 1
          %s1500 = scalar_select %p1499, %s24, 1
          %p1501 = scmp.lt.s32.totalorder %s1498, 31
          %s1502 = scalar_select %p1501, %s1498, 31
          %s1503 = smul.addr %s1502, 2
          %s1504 = smul.addr %s1500, 64
          %s1505 = sadd.s32 %s1503, %s1504
          %s1506 = smul.addr %s1505, 4
          %s1507 = scalar_lea.vmem %s5, %s1506
        $region60: #{ocab_forward.3} parent=55 // pred_fallthru
          _
      $region56: #{ocab_forward.3} parent=5 // pred_fallthru
        _
    $region6: #{ocab_forward.3} parent=1 // loop_footer
      %s17 = sadd.s32 1, %s13
    $region7: #{ocab_forward.3} parent=1 // loop_footer_branch
      %12 = sbr.rel target = $region3
    $region8: #{ocab_forward.3} parent=1 // loop_exit
      _
    %1508 = vsyncpa [#allocation3], 1
    %s1509 = scalar_lea.sflag [#allocation3], 1
    %1510 = vsyncpa %s1509, 1
    %1511 = vsyncpa [#allocation5], 1

// kernel: ocab_forward.5
$region0: #{ocab_forward.5}
  #allocation0 [shape = 'u32[]', space=smem, size = 0x4, offset = 0x4, fixed_abs, tag = 'smem constant byte address 0x4 - core index']
  #allocation1 [shape = 'u32[72,128]{1,0:T(1,128)}', space=vmem, size = 0x9000, scoped, tag = 'internal scratch']
  %s0 = inlined_call_operand.vmem [shape: bf16[2,256,64], index: 0, kind: input, shape index: {}]
  %s1 = inlined_call_operand.vmem [shape: f32[2,256,64], index: 1, kind: input, shape index: {}]
  %s2 = inlined_call_operand.vmem [shape: bf16[64,64], index: 2, kind: input, shape index: {}]
  %s3 = inlined_call_operand.vmem [shape: f32[1,64], index: 3, kind: input, shape index: {}]
  %s4 = inlined_call_operand.vmem [shape: f32[1,64], index: 4, kind: input, shape index: {}]
  %s5 = inlined_call_operand.vmem [shape: f32[1,64], index: 5, kind: input, shape index: {}]
  %s6 = inlined_call_operand.vmem [shape: bf16[64,128], index: 6, kind: input, shape index: {}]
  %s7 = inlined_call_operand.vmem [shape: f32[1,128], index: 7, kind: input, shape index: {}]
  %s8 = inlined_call_operand.vmem [shape: bf16[128,64], index: 8, kind: input, shape index: {}]
  %s9 = inlined_call_operand.vmem [shape: f32[1,64], index: 9, kind: input, shape index: {}]
  %s10 = inlined_call_operand.vmem [shape: f32[2,256,64], index: 10, kind: output, shape index: {}]
  %s11 = sld [smem:[#allocation0]]
  $region73: #{ocab_forward.5} parent=0
    _
  %s13 = ssub.s32 1, %s11
  %s14 = scalar_select 0, %s13, %s11
  loop: start=0, step=1, limit=4
  $region2: #{ocab_forward.5} parent=0 // loop_pre_header
    _
  $region3: #{ocab_forward.5} parent=0 // loop_header
    %s16 = sphi 0, %s20
    %p17 = scmp.ge.s32.totalorder %s16, 4
    %s23 = sphi 0, %s35
    %s24 = sphi 0, %s31
    %s25 = sphi 0, %s23
    %s26 = sphi 0, %s24
    %s27 = sphi 0, %s25
    %s28 = sphi 0, %s26
    %s40 = sphi 0, %s42
    %s43 = sphi 0, %s40
    %s44 = sphi 0, %s43
    %s60 = sphi 0, %s44
    %s68 = sphi 0, %s70
    %s71 = sphi 0, %s68
    %s72 = sphi 0, %s71
    %s88 = sphi 0, %s72
    %s92 = sphi 0, %s92
    %s94 = sphi 0, %s92
    %s95 = sphi 0, %s94
    %s109 = sphi 0, %s95
    %s113 = sphi 0, %s113
    %s115 = sphi 0, %s113
    %s116 = sphi 0, %s115
    %s130 = sphi 0, %s116
    %s134 = sphi 0, %s134
    %s136 = sphi 0, %s134
    %s137 = sphi 0, %s136
    %s151 = sphi 0, %s137
    %s155 = sphi 0, %s155
    %s157 = sphi 0, %s155
    %s158 = sphi 0, %s157
    %s172 = sphi 0, %s158
    %s176 = sphi 0, %s176
    %s178 = sphi 0, %s176
    %s179 = sphi 0, %s178
    %s193 = sphi 0, %s179
    %s197 = sphi 0, %s197
    %s199 = sphi 0, %s197
    %s200 = sphi 0, %s199
    %s214 = sphi 0, %s200
    %s218 = sphi 0, %s218
    %s220 = sphi 0, %s218
    %s221 = sphi 0, %s220
    %s235 = sphi 0, %s221
    %s239 = sphi 0, %s239
    %s241 = sphi 0, %s239
    %s242 = sphi 0, %s241
    %s256 = sphi 0, %s242
    %s264 = sphi 0, %s266
    %s267 = sphi 0, %s264
    %s268 = sphi 0, %s267
    %s284 = sphi 0, %s268
  $region4: #{ocab_forward.5} parent=0 // loop_header_branch
    %19 = sbr.rel (%p17) target = $region8
  $region5: #{ocab_forward.5} parent=0 // loop_body
    %s21 = ssub.s32 %s16, 1
    %s22 = ssub.s32 %s16, 2
    %s29 = sadd.s32 1, %s24
    %p30 = scmp.ge.s32.totalorder %s29, 1
    %s31 = scalar_select %p30, 0, %s29
    %s32 = sadd.s32 1, %s23
    %s33 = scalar_select %p30, %s32, %s23
    %p34 = scmp.ge.s32.totalorder %s33, 2
    %s35 = scalar_select %p34, 0, %s33
    %s36 = ssub.s32 %s23, %s35
    %s37 = ssub.s32 %s24, %s31
    %s38 = sor.u32 %s36, %s37
    %p39 = scmp.eq.s32.totalorder %s38, 0
    %s41 = sadd.s32 %s40, 1
    %s42 = scalar_select %p39, %s40, %s41
    %p45 = pneg %p39
    %p46 = scmp.eq.s32.totalorder %s16, 1
    %p47 = por %p45, %p46
    %p48 = scmp.ne.s32.totalorder %s40, %s43
    %p49 = scmp.eq.s32.totalorder %s16, 0
    %p50 = por %p48, %p49
    %p51 = scmp.ne.s32.totalorder %s40, %s43
    %p52 = scmp.eq.s32.totalorder %s21, 1
    %p53 = por %p51, %p52
    %p54 = scmp.ne.s32.totalorder %s43, %s44
    %p55 = scmp.eq.s32.totalorder %s21, 0
    %p56 = por %p54, %p55
    %p57 = scmp.ne.s32.totalorder %s43, %s44
    %p58 = scmp.eq.s32.totalorder %s22, 1
    %p59 = por %p57, %p58
    %p61 = scmp.ne.s32.totalorder %s44, %s60
    %p62 = scmp.eq.s32.totalorder %s22, 0
    %p63 = por %p61, %p62
    %s64 = ssub.s32 %s23, %s35
    %s65 = ssub.s32 %s24, %s31
    %s66 = sor.u32 %s64, %s65
    %p67 = scmp.eq.s32.totalorder %s66, 0
    %s69 = sadd.s32 %s68, 1
    %s70 = scalar_select %p67, %s68, %s69
    %p73 = pneg %p67
    %p74 = scmp.eq.s32.totalorder %s16, 1
    %p75 = por %p73, %p74
    %p76 = scmp.ne.s32.totalorder %s68, %s71
    %p77 = scmp.eq.s32.totalorder %s16, 0
    %p78 = por %p76, %p77
    %p79 = scmp.ne.s32.totalorder %s68, %s71
    %p80 = scmp.eq.s32.totalorder %s21, 1
    %p81 = por %p79, %p80
    %p82 = scmp.ne.s32.totalorder %s71, %s72
    %p83 = scmp.eq.s32.totalorder %s21, 0
    %p84 = por %p82, %p83
    %p85 = scmp.ne.s32.totalorder %s71, %s72
    %p86 = scmp.eq.s32.totalorder %s22, 1
    %p87 = por %p85, %p86
    %p89 = scmp.ne.s32.totalorder %s72, %s88
    %p90 = scmp.eq.s32.totalorder %s22, 0
    %p91 = por %p89, %p90
    %s93 = sadd.s32 %s92, 1
    %p96 = scmp.eq.s32.totalorder %s16, 1
    %p97 = scmp.ne.s32.totalorder %s92, %s94
    %p98 = scmp.eq.s32.totalorder %s16, 0
    %p99 = por %p97, %p98
    %p100 = scmp.ne.s32.totalorder %s92, %s94
    %p101 = scmp.eq.s32.totalorder %s21, 1
    %p102 = por %p100, %p101
    %p103 = scmp.ne.s32.totalorder %s94, %s95
    %p104 = scmp.eq.s32.totalorder %s21, 0
    %p105 = por %p103, %p104
    %p106 = scmp.ne.s32.totalorder %s94, %s95
    %p107 = scmp.eq.s32.totalorder %s22, 1
    %p108 = por %p106, %p107
    %p110 = scmp.ne.s32.totalorder %s95, %s109
    %p111 = scmp.eq.s32.totalorder %s22, 0
    %p112 = por %p110, %p111
    %s114 = sadd.s32 %s113, 1
    %p117 = scmp.eq.s32.totalorder %s16, 1
    %p118 = scmp.ne.s32.totalorder %s113, %s115
    %p119 = scmp.eq.s32.totalorder %s16, 0
    %p120 = por %p118, %p119
    %p121 = scmp.ne.s32.totalorder %s113, %s115
    %p122 = scmp.eq.s32.totalorder %s21, 1
    %p123 = por %p121, %p122
    %p124 = scmp.ne.s32.totalorder %s115, %s116
    %p125 = scmp.eq.s32.totalorder %s21, 0
    %p126 = por %p124, %p125
    %p127 = scmp.ne.s32.totalorder %s115, %s116
    %p128 = scmp.eq.s32.totalorder %s22, 1
    %p129 = por %p127, %p128
    %p131 = scmp.ne.s32.totalorder %s116, %s130
    %p132 = scmp.eq.s32.totalorder %s22, 0
    %p133 = por %p131, %p132
    %s135 = sadd.s32 %s134, 1
    %p138 = scmp.eq.s32.totalorder %s16, 1
    %p139 = scmp.ne.s32.totalorder %s134, %s136
    %p140 = scmp.eq.s32.totalorder %s16, 0
    %p141 = por %p139, %p140
    %p142 = scmp.ne.s32.totalorder %s134, %s136
    %p143 = scmp.eq.s32.totalorder %s21, 1
    %p144 = por %p142, %p143
    %p145 = scmp.ne.s32.totalorder %s136, %s137
    %p146 = scmp.eq.s32.totalorder %s21, 0
    %p147 = por %p145, %p146
    %p148 = scmp.ne.s32.totalorder %s136, %s137
    %p149 = scmp.eq.s32.totalorder %s22, 1
    %p150 = por %p148, %p149
    %p152 = scmp.ne.s32.totalorder %s137, %s151
    %p153 = scmp.eq.s32.totalorder %s22, 0
    %p154 = por %p152, %p153
    %s156 = sadd.s32 %s155, 1
    %p159 = scmp.eq.s32.totalorder %s16, 1
    %p160 = scmp.ne.s32.totalorder %s155, %s157
    %p161 = scmp.eq.s32.totalorder %s16, 0
    %p162 = por %p160, %p161
    %p163 = scmp.ne.s32.totalorder %s155, %s157
    %p164 = scmp.eq.s32.totalorder %s21, 1
    %p165 = por %p163, %p164
    %p166 = scmp.ne.s32.totalorder %s157, %s158
    %p167 = scmp.eq.s32.totalorder %s21, 0
    %p168 = por %p166, %p167
    %p169 = scmp.ne.s32.totalorder %s157, %s158
    %p170 = scmp.eq.s32.totalorder %s22, 1
    %p171 = por %p169, %p170
    %p173 = scmp.ne.s32.totalorder %s158, %s172
    %p174 = scmp.eq.s32.totalorder %s22, 0
    %p175 = por %p173, %p174
    %s177 = sadd.s32 %s176, 1
    %p180 = scmp.eq.s32.totalorder %s16, 1
    %p181 = scmp.ne.s32.totalorder %s176, %s178
    %p182 = scmp.eq.s32.totalorder %s16, 0
    %p183 = por %p181, %p182
    %p184 = scmp.ne.s32.totalorder %s176, %s178
    %p185 = scmp.eq.s32.totalorder %s21, 1
    %p186 = por %p184, %p185
    %p187 = scmp.ne.s32.totalorder %s178, %s179
    %p188 = scmp.eq.s32.totalorder %s21, 0
    %p189 = por %p187, %p188
    %p190 = scmp.ne.s32.totalorder %s178, %s179
    %p191 = scmp.eq.s32.totalorder %s22, 1
    %p192 = por %p190, %p191
    %p194 = scmp.ne.s32.totalorder %s179, %s193
    %p195 = scmp.eq.s32.totalorder %s22, 0
    %p196 = por %p194, %p195
    %s198 = sadd.s32 %s197, 1
    %p201 = scmp.eq.s32.totalorder %s16, 1
    %p202 = scmp.ne.s32.totalorder %s197, %s199
    %p203 = scmp.eq.s32.totalorder %s16, 0
    %p204 = por %p202, %p203
    %p205 = scmp.ne.s32.totalorder %s197, %s199
    %p206 = scmp.eq.s32.totalorder %s21, 1
    %p207 = por %p205, %p206
    %p208 = scmp.ne.s32.totalorder %s199, %s200
    %p209 = scmp.eq.s32.totalorder %s21, 0
    %p210 = por %p208, %p209
    %p211 = scmp.ne.s32.totalorder %s199, %s200
    %p212 = scmp.eq.s32.totalorder %s22, 1
    %p213 = por %p211, %p212
    %p215 = scmp.ne.s32.totalorder %s200, %s214
    %p216 = scmp.eq.s32.totalorder %s22, 0
    %p217 = por %p215, %p216
    %s219 = sadd.s32 %s218, 1
    %p222 = scmp.eq.s32.totalorder %s16, 1
    %p223 = scmp.ne.s32.totalorder %s218, %s220
    %p224 = scmp.eq.s32.totalorder %s16, 0
    %p225 = por %p223, %p224
    %p226 = scmp.ne.s32.totalorder %s218, %s220
    %p227 = scmp.eq.s32.totalorder %s21, 1
    %p228 = por %p226, %p227
    %p229 = scmp.ne.s32.totalorder %s220, %s221
    %p230 = scmp.eq.s32.totalorder %s21, 0
    %p231 = por %p229, %p230
    %p232 = scmp.ne.s32.totalorder %s220, %s221
    %p233 = scmp.eq.s32.totalorder %s22, 1
    %p234 = por %p232, %p233
    %p236 = scmp.ne.s32.totalorder %s221, %s235
    %p237 = scmp.eq.s32.totalorder %s22, 0
    %p238 = por %p236, %p237
    %s240 = sadd.s32 %s239, 1
    %p243 = scmp.eq.s32.totalorder %s16, 1
    %p244 = scmp.ne.s32.totalorder %s239, %s241
    %p245 = scmp.eq.s32.totalorder %s16, 0
    %p246 = por %p244, %p245
    %p247 = scmp.ne.s32.totalorder %s239, %s241
    %p248 = scmp.eq.s32.totalorder %s21, 1
    %p249 = por %p247, %p248
    %p250 = scmp.ne.s32.totalorder %s241, %s242
    %p251 = scmp.eq.s32.totalorder %s21, 0
    %p252 = por %p250, %p251
    %p253 = scmp.ne.s32.totalorder %s241, %s242
    %p254 = scmp.eq.s32.totalorder %s22, 1
    %p255 = por %p253, %p254
    %p257 = scmp.ne.s32.totalorder %s242, %s256
    %p258 = scmp.eq.s32.totalorder %s22, 0
    %p259 = por %p257, %p258
    %s260 = ssub.s32 %s23, %s35
    %s261 = ssub.s32 %s24, %s31
    %s262 = sor.u32 %s260, %s261
    %p263 = scmp.eq.s32.totalorder %s262, 0
    %s265 = sadd.s32 %s264, 1
    %s266 = scalar_select %p263, %s264, %s265
    %p269 = pneg %p263
    %p270 = scmp.eq.s32.totalorder %s16, 1
    %p271 = por %p269, %p270
    %p272 = scmp.ne.s32.totalorder %s264, %s267
    %p273 = scmp.eq.s32.totalorder %s16, 0
    %p274 = por %p272, %p273
    %p275 = scmp.ne.s32.totalorder %s264, %s267
    %p276 = scmp.eq.s32.totalorder %s21, 1
    %p277 = por %p275, %p276
    %p278 = scmp.ne.s32.totalorder %s267, %s268
    %p279 = scmp.eq.s32.totalorder %s21, 0
    %p280 = por %p278, %p279
    %p281 = scmp.ne.s32.totalorder %s267, %s268
    %p282 = scmp.eq.s32.totalorder %s22, 1
    %p283 = por %p281, %p282
    %p285 = scmp.ne.s32.totalorder %s268, %s284
    %p286 = scmp.eq.s32.totalorder %s22, 0
    %p287 = por %p285, %p286
    %p288 = scmp.le.s32.totalorder 1, %s16
    %p289 = scmp.lt.s32.totalorder %s16, 3
    %p290 = pnand %p288, %p289
    %p291 = pneg %p290
    // Predicated region
    $region9: #{ocab_forward.5} parent=5 // pred_check
      _
    $region10: #{ocab_forward.5} parent=5 // pred_check_branch
      %293 = sbr.rel (%p290) target = $region12
    $region11: #{ocab_forward.5} parent=5 // pred_region
      %s294 = ssub.s32 %s16, 1
      // Predicated region
      $region13: #{ocab_forward.5} parent=11 // pred_check
        %p295 = pneg %p105
      $region14: #{ocab_forward.5} parent=11 // pred_check_branch
        %297 = sbr.rel (%p295) target = $region16
      $region15: #{ocab_forward.5} parent=11 // pred_region
        _
      $region16: #{ocab_forward.5} parent=11 // pred_fallthru
        _
      // Predicated region
      $region17: #{ocab_forward.5} parent=11 // pred_check
        %p298 = pneg %p126
      $region18: #{ocab_forward.5} parent=11 // pred_check_branch
        %300 = sbr.rel (%p298) target = $region20
      $region19: #{ocab_forward.5} parent=11 // pred_region
        _
      $region20: #{ocab_forward.5} parent=11 // pred_fallthru
        _
      // Predicated region
      $region21: #{ocab_forward.5} parent=11 // pred_check
        %p301 = pneg %p147
      $region22: #{ocab_forward.5} parent=11 // pred_check_branch
        %303 = sbr.rel (%p301) target = $region24
      $region23: #{ocab_forward.5} parent=11 // pred_region
        _
      $region24: #{ocab_forward.5} parent=11 // pred_fallthru
        _
      // Predicated region
      $region25: #{ocab_forward.5} parent=11 // pred_check
        %p304 = pneg %p168
      $region26: #{ocab_forward.5} parent=11 // pred_check_branch
        %306 = sbr.rel (%p304) target = $region28
      $region27: #{ocab_forward.5} parent=11 // pred_region
        _
      $region28: #{ocab_forward.5} parent=11 // pred_fallthru
        _
      // Predicated region
      $region29: #{ocab_forward.5} parent=11 // pred_check
        %p307 = pneg %p189
      $region30: #{ocab_forward.5} parent=11 // pred_check_branch
        %309 = sbr.rel (%p307) target = $region32
      $region31: #{ocab_forward.5} parent=11 // pred_region
        _
      $region32: #{ocab_forward.5} parent=11 // pred_fallthru
        _
      // Predicated region
      $region33: #{ocab_forward.5} parent=11 // pred_check
        %p310 = pneg %p210
      $region34: #{ocab_forward.5} parent=11 // pred_check_branch
        %312 = sbr.rel (%p310) target = $region36
      $region35: #{ocab_forward.5} parent=11 // pred_region
        _
      $region36: #{ocab_forward.5} parent=11 // pred_fallthru
        _
      // Predicated region
      $region37: #{ocab_forward.5} parent=11 // pred_check
        %p313 = pneg %p231
      $region38: #{ocab_forward.5} parent=11 // pred_check_branch
        %315 = sbr.rel (%p313) target = $region40
      $region39: #{ocab_forward.5} parent=11 // pred_region
        _
      $region40: #{ocab_forward.5} parent=11 // pred_fallthru
        _
      // Predicated region
      $region41: #{ocab_forward.5} parent=11 // pred_check
        %p316 = pneg %p252
      $region42: #{ocab_forward.5} parent=11 // pred_check_branch
        %318 = sbr.rel (%p316) target = $region44
      $region43: #{ocab_forward.5} parent=11 // pred_region
        _
      $region44: #{ocab_forward.5} parent=11 // pred_fallthru
        _
    $region12: #{ocab_forward.5} parent=5 // pred_fallthru
      _
    %p319 = scmp.lt.s32.totalorder %s16, 2
    // Predicated region
    $region45: #{ocab_forward.5} parent=5 // pred_check
      %p320 = pneg %p319
    $region46: #{ocab_forward.5} parent=5 // pred_check_branch
      %322 = sbr.rel (%p320) target = $region48
    $region47: #{ocab_forward.5} parent=5 // pred_region
      // Predicated region
      $region49: #{ocab_forward.5} parent=47 // pred_check
        %p323 = pneg %p50
      $region50: #{ocab_forward.5} parent=47 // pred_check_branch
        %325 = sbr.rel (%p323) target = $region52
      $region51: #{ocab_forward.5} parent=47 // pred_region
        %s326 = smul.u32 32, %s24
        %p327 = scmp.lt.s32.totalorder %s23, 1
        %s328 = scalar_select %p327, %s23, 1
        %p329 = scmp.lt.s32.totalorder %s326, 31
        %s330 = scalar_select %p329, %s326, 31
        %s331 = smul.addr %s328, 32
        %s332 = sadd.s32 %s330, %s331
        %s333 = smul.addr %s332, 4
        %s334 = scalar_lea.vmem %s0, %s333
        %s335 = smul.u32 32, %s24
      $region52: #{ocab_forward.5} parent=47 // pred_fallthru
        _
      // Predicated region
      $region53: #{ocab_forward.5} parent=47 // pred_check
        %p336 = pneg %p78
      $region54: #{ocab_forward.5} parent=47 // pred_check_branch
        %338 = sbr.rel (%p336) target = $region56
      $region55: #{ocab_forward.5} parent=47 // pred_region
        %s339 = smul.u32 32, %s24
        %p340 = scmp.lt.s32.totalorder %s23, 1
        %s341 = scalar_select %p340, %s23, 1
        %p342 = scmp.lt.s32.totalorder %s339, 31
        %s343 = scalar_select %p342, %s339, 31
        %s344 = smul.addr %s341, 32
        %s345 = sadd.s32 %s343, %s344
        %s346 = smul.addr %s345, 8
        %s347 = scalar_lea.vmem %s1, %s346
        %s348 = smul.u32 32, %s24
      $region56: #{ocab_forward.5} parent=47 // pred_fallthru
        _
    $region48: #{ocab_forward.5} parent=5 // pred_fallthru
      _
    %p349 = scmp.le.s32.totalorder 1, %s16
    %p350 = scmp.lt.s32.totalorder %s16, 3
    %p351 = pnand %p349, %p350
    %p352 = pneg %p351
    // Predicated region
    $region57: #{ocab_forward.5} parent=5 // pred_check
      _
    $region58: #{ocab_forward.5} parent=5 // pred_check_branch
      %354 = sbr.rel (%p351) target = $region60
    $region59: #{ocab_forward.5} parent=5 // pred_region
      %s355 = ssub.s32 %s16, 1
      %s356 = smul.u32 32, %s26
      %p357 = scmp.lt.s32.totalorder %s25, 1
      %s358 = scalar_select %p357, %s25, 1
      %p359 = scmp.lt.s32.totalorder %s356, 31
      %s360 = scalar_select %p359, %s356, 31
      %s361 = smul.addr %s358, 32
      %s362 = sadd.s32 %s360, %s361
      %s363 = smul.addr %s362, 4
      %s364 = scalar_lea.vmem %s0, %s363
      %p365 = pneg %p56
      %p366 = pneg %p53
      %s367 = smul.u32 32, %s26
      %p368 = scmp.lt.s32.totalorder %s25, 1
      %s369 = scalar_select %p368, %s25, 1
      %p370 = scmp.lt.s32.totalorder %s367, 31
      %s371 = scalar_select %p370, %s367, 31
      %s372 = smul.addr %s369, 32
      %s373 = sadd.s32 %s371, %s372
      %s374 = smul.addr %s373, 8
      %s375 = scalar_lea.vmem %s1, %s374
      %p376 = pneg %p84
      %p377 = pneg %p81
      %p378 = pneg %p105
      %p379 = pneg %p102
      %p380 = pneg %p126
      %p381 = pneg %p123
      %p382 = pneg %p147
      %p383 = pneg %p144
      %p384 = pneg %p168
      %p385 = pneg %p165
      %p386 = pneg %p189
      %p387 = pneg %p186
      %p388 = pneg %p210
      %p389 = pneg %p207
      %p390 = pneg %p231
      %p391 = pneg %p228
      %p392 = pneg %p252
      %p393 = pneg %p249
      %p394 = pneg %p280
      %p395 = pneg %p277
      %s396 = smul.u32 32, %s26
      %p397 = scmp.lt.s32.totalorder %s25, 1
      %s398 = scalar_select %p397, %s25, 1
      %p399 = scmp.lt.s32.totalorder %s396, 31
      %s400 = scalar_select %p399, %s396, 31
      %s401 = smul.addr %s398, 32
      %s402 = sadd.s32 %s400, %s401
      %s403 = smul.addr %s402, 8
      %s404 = scalar_lea.vmem %s10, %s403
      %s405 = smul.u32 32, %s26
      %p406 = scmp.lt.s32.totalorder %s25, 1
      %s407 = scalar_select %p406, %s25, 1
      %p408 = scmp.lt.s32.totalorder %s405, 31
      %s409 = scalar_select %p408, %s405, 31
      %s410 = smul.addr %s407, 32
      %s411 = sadd.s32 %s409, %s410
      %s412 = smul.addr %s411, 4
      %s413 = scalar_lea.vmem %s0, %s412
      %s414 = smul.u32 32, %s26
      %s415 = smul.u32 32, %s26
      %p416 = scmp.lt.s32.totalorder %s25, 1
      %s417 = scalar_select %p416, %s25, 1
      %p418 = scmp.lt.s32.totalorder %s415, 31
      %s419 = scalar_select %p418, %s415, 31
      %s420 = smul.addr %s417, 32
      %s421 = sadd.s32 %s419, %s420
      %s422 = smul.addr %s421, 8
      %s423 = scalar_lea.vmem %s1, %s422
      %s424 = smul.u32 32, %s26
      %s425 = smul.u32 32, %s26
      %p426 = scmp.lt.s32.totalorder %s25, 1
      %s427 = scalar_select %p426, %s25, 1
      %p428 = scmp.lt.s32.totalorder %s425, 31
      %s429 = scalar_select %p428, %s425, 31
      %s430 = smul.addr %s427, 32
      %s431 = sadd.s32 %s429, %s430
      %s432 = smul.addr %s431, 8
      %s433 = scalar_lea.vmem %s10, %s432
      %s434 = smul.u32 32, %s26
      %v436 = vld [vmem:[%s413] sm:$0xf]
      %v437 = vld [vmem:[%s413 + $0x4] sm:$0xf]
      %v438 = vld [vmem:[%s413 + $0x8] sm:$0xf]
      %v439 = vld [vmem:[%s413 + $0xc] sm:$0xf]
      %v440 = vld [vmem:[%s413 + $0x10] sm:$0xf]
      %v441 = vld [vmem:[%s413 + $0x14] sm:$0xf]
      %v442 = vld [vmem:[%s413 + $0x18] sm:$0xf]
      %v443 = vld [vmem:[%s413 + $0x1c] sm:$0xf]
      %v444 = vld [vmem:[%s413 + $0x20] sm:$0xf]
      %v445 = vld [vmem:[%s413 + $0x24] sm:$0xf]
      %v446 = vld [vmem:[%s413 + $0x28] sm:$0xf]
      %v447 = vld [vmem:[%s413 + $0x2c] sm:$0xf]
      %v448 = vld [vmem:[%s413 + $0x30] sm:$0xf]
      %v449 = vld [vmem:[%s413 + $0x34] sm:$0xf]
      %v450 = vld [vmem:[%s413 + $0x38] sm:$0xf]
      %v451 = vld [vmem:[%s413 + $0x3c] sm:$0xf]
      %v452 = vld [vmem:[%s413 + $0x40] sm:$0xf]
      %v453 = vld [vmem:[%s413 + $0x44] sm:$0xf]
      %v454 = vld [vmem:[%s413 + $0x48] sm:$0xf]
      %v455 = vld [vmem:[%s413 + $0x4c] sm:$0xf]
      %v456 = vld [vmem:[%s413 + $0x50] sm:$0xf]
      %v457 = vld [vmem:[%s413 + $0x54] sm:$0xf]
      %v458 = vld [vmem:[%s413 + $0x58] sm:$0xf]
      %v459 = vld [vmem:[%s413 + $0x5c] sm:$0xf]
      %v460 = vld [vmem:[%s413 + $0x60] sm:$0xf]
      %v461 = vld [vmem:[%s413 + $0x64] sm:$0xf]
      %v462 = vld [vmem:[%s413 + $0x68] sm:$0xf]
      %v463 = vld [vmem:[%s413 + $0x6c] sm:$0xf]
      %v464 = vld [vmem:[%s413 + $0x70] sm:$0xf]
      %v465 = vld [vmem:[%s413 + $0x74] sm:$0xf]
      %v466 = vld [vmem:[%s413 + $0x78] sm:$0xf]
      %v467 = vld [vmem:[%s413 + $0x7c] sm:$0xf]
      %v468 = vld [vmem:[%s2] sm:$0xf]
      %v469 = vld [vmem:[%s2 + $0x4] sm:$0xf]
      %v470 = vld [vmem:[%s2 + $0x8] sm:$0xf]
      %v471 = vld [vmem:[%s2 + $0xc] sm:$0xf]
      %v472 = vld [vmem:[%s2 + $0x10] sm:$0xf]
      %v473 = vld [vmem:[%s2 + $0x14] sm:$0xf]
      %v474 = vld [vmem:[%s2 + $0x18] sm:$0xf]
      %v475 = vld [vmem:[%s2 + $0x1c] sm:$0xf]
      %v476 = vld [vmem:[%s3] sm:$0x1]
      %v478 = vperm.slane %v476, 0
      %v512 = vunpack.c.l.b16 %v436
      %v513 = vunpack.c.l.b16 %v437
      %v514 = vunpack.c.l.b16 %v438
      %v515 = vunpack.c.l.b16 %v439
      %v516 = vunpack.c.l.b16 %v440
      %v517 = vunpack.c.l.b16 %v441
      %v518 = vunpack.c.l.b16 %v442
      %v519 = vunpack.c.l.b16 %v443
      %v520 = vunpack.c.l.b16 %v444
      %v521 = vunpack.c.l.b16 %v445
      %v522 = vunpack.c.l.b16 %v446
      %v523 = vunpack.c.l.b16 %v447
      %v524 = vunpack.c.l.b16 %v448
      %v525 = vunpack.c.l.b16 %v449
      %v526 = vunpack.c.l.b16 %v450
      %v527 = vunpack.c.l.b16 %v451
      %v528 = vunpack.c.l.b16 %v452
      %v529 = vunpack.c.l.b16 %v453
      %v530 = vunpack.c.l.b16 %v454
      %v531 = vunpack.c.l.b16 %v455
      %v532 = vunpack.c.l.b16 %v456
      %v533 = vunpack.c.l.b16 %v457
      %v534 = vunpack.c.l.b16 %v458
      %v535 = vunpack.c.l.b16 %v459
      %v536 = vunpack.c.l.b16 %v460
      %v537 = vunpack.c.l.b16 %v461
      %v538 = vunpack.c.l.b16 %v462
      %v539 = vunpack.c.l.b16 %v463
      %v540 = vunpack.c.l.b16 %v464
      %v541 = vunpack.c.l.b16 %v465
      %v542 = vunpack.c.l.b16 %v466
      %v543 = vunpack.c.l.b16 %v467
      %v544 = vpack.c.b16 %v513, %v512
      %v545 = vpack.c.b16 %v515, %v514
      %v546 = vpack.c.b16 %v517, %v516
      %v547 = vpack.c.b16 %v519, %v518
      %v548 = vpack.c.b16 %v521, %v520
      %v549 = vpack.c.b16 %v523, %v522
      %v550 = vpack.c.b16 %v525, %v524
      %v551 = vpack.c.b16 %v527, %v526
      %v552 = vpack.c.b16 %v529, %v528
      %v553 = vpack.c.b16 %v531, %v530
      %v554 = vpack.c.b16 %v533, %v532
      %v555 = vpack.c.b16 %v535, %v534
      %v556 = vpack.c.b16 %v537, %v536
      %v557 = vpack.c.b16 %v539, %v538
      %v558 = vpack.c.b16 %v541, %v540
      %v559 = vpack.c.b16 %v543, %v542
      %v568 = vunpack.c.l.b16 %v468
      %v569 = vunpack.c.l.b16 %v469
      %v570 = vunpack.c.l.b16 %v470
      %v571 = vunpack.c.l.b16 %v471
      %v572 = vunpack.c.l.b16 %v472
      %v573 = vunpack.c.l.b16 %v473
      %v574 = vunpack.c.l.b16 %v474
      %v575 = vunpack.c.l.b16 %v475
      %v576 = vpack.c.b16 %v569, %v568
      %v577 = vpack.c.b16 %v571, %v570
      %v578 = vpack.c.b16 %v573, %v572
      %v579 = vpack.c.b16 %v575, %v574
      %vm584 = vcmask 523264
      %v586 = vsel %vm584, %v544, 0
      %v589 = vsel %vm584, %v545, 0
      %v592 = vsel %vm584, %v546, 0
      %v595 = vsel %vm584, %v547, 0
      %v598 = vsel %vm584, %v548, 0
      %v601 = vsel %vm584, %v549, 0
      %v604 = vsel %vm584, %v550, 0
      %v607 = vsel %vm584, %v551, 0
      %v610 = vsel %vm584, %v552, 0
      %v613 = vsel %vm584, %v553, 0
      %v616 = vsel %vm584, %v554, 0
      %v619 = vsel %vm584, %v555, 0
      %v622 = vsel %vm584, %v556, 0
      %v625 = vsel %vm584, %v557, 0
      %v628 = vsel %vm584, %v558, 0
      %v631 = vsel %vm584, %v559, 0
      %633 = vmatpush.bf16.msra.mxu0 0
      %634 = vmatpush.bf16.msra.mxu0 0
      %635 = vmatpush.bf16.msra.mxu0 0
      %636 = vmatpush.bf16.msra.mxu0 0
      %637 = vmatpush.bf16.msra.mxu0 %v579
      %638 = vmatpush.bf16.msra.mxu0 %v578
      %639 = vmatpush.bf16.msra.mxu0 %v577
      %640 = vmatpush.bf16.msra.mxu0 %v576
      %641 = vmatmul.bf16.gmra.mxu0 %v586
      %v642 = vpop.f32.mrf.mxu0
      %v643 = vadd.f32 %v478, %v642
      %v644 = vpop.f32.mrf.mxu0
      %v645 = vadd.f32 %v478, %v644
      %646 = vmatmul.bf16.gmra.mxu0 %v589
      %v647 = vpop.f32.mrf.mxu0
      %v648 = vadd.f32 %v478, %v647
      %v649 = vpop.f32.mrf.mxu0
      %v650 = vadd.f32 %v478, %v649
      %651 = vmatmul.bf16.gmra.mxu0 %v592
      %v652 = vpop.f32.mrf.mxu0
      %v653 = vadd.f32 %v478, %v652
      %v654 = vpop.f32.mrf.mxu0
      %v655 = vadd.f32 %v478, %v654
      %656 = vmatmul.bf16.gmra.mxu0 %v595
      %v657 = vpop.f32.mrf.mxu0
      %v658 = vadd.f32 %v478, %v657
      %v659 = vpop.f32.mrf.mxu0
      %v660 = vadd.f32 %v478, %v659
      %661 = vmatmul.bf16.gmra.mxu0 %v598
      %v662 = vpop.f32.mrf.mxu0
      %v663 = vadd.f32 %v478, %v662
      %v664 = vpop.f32.mrf.mxu0
      %v665 = vadd.f32 %v478, %v664
      %666 = vmatmul.bf16.gmra.mxu0 %v601
      %v667 = vpop.f32.mrf.mxu0
      %v668 = vadd.f32 %v478, %v667
      %v669 = vpop.f32.mrf.mxu0
      %v670 = vadd.f32 %v478, %v669
      %671 = vmatmul.bf16.gmra.mxu0 %v604
      %v672 = vpop.f32.mrf.mxu0
      %v673 = vadd.f32 %v478, %v672
      %v674 = vpop.f32.mrf.mxu0
      %v675 = vadd.f32 %v478, %v674
      %676 = vmatmul.bf16.gmra.mxu0 %v607
      %v677 = vpop.f32.mrf.mxu0
      %v678 = vadd.f32 %v478, %v677
      %v679 = vpop.f32.mrf.mxu0
      %v680 = vadd.f32 %v478, %v679
      %681 = vmatmul.bf16.gmra.mxu0 %v610
      %v682 = vpop.f32.mrf.mxu0
      %v683 = vadd.f32 %v478, %v682
      %v684 = vpop.f32.mrf.mxu0
      %v685 = vadd.f32 %v478, %v684
      %686 = vmatmul.bf16.gmra.mxu0 %v613
      %v687 = vpop.f32.mrf.mxu0
      %v688 = vadd.f32 %v478, %v687
      %v689 = vpop.f32.mrf.mxu0
      %v690 = vadd.f32 %v478, %v689
      %691 = vmatmul.bf16.gmra.mxu0 %v616
      %v692 = vpop.f32.mrf.mxu0
      %v693 = vadd.f32 %v478, %v692
      %v694 = vpop.f32.mrf.mxu0
      %v695 = vadd.f32 %v478, %v694
      %696 = vmatmul.bf16.gmra.mxu0 %v619
      %v697 = vpop.f32.mrf.mxu0
      %v698 = vadd.f32 %v478, %v697
      %v699 = vpop.f32.mrf.mxu0
      %v700 = vadd.f32 %v478, %v699
      %701 = vmatmul.bf16.gmra.mxu0 %v622
      %v702 = vpop.f32.mrf.mxu0
      %v703 = vadd.f32 %v478, %v702
      %v704 = vpop.f32.mrf.mxu0
      %v705 = vadd.f32 %v478, %v704
      %706 = vmatmul.bf16.gmra.mxu0 %v625
      %v707 = vpop.f32.mrf.mxu0
      %v708 = vadd.f32 %v478, %v707
      %v709 = vpop.f32.mrf.mxu0
      %v710 = vadd.f32 %v478, %v709
      %711 = vmatmul.bf16.gmra.mxu0 %v628
      %v712 = vpop.f32.mrf.mxu0
      %v713 = vadd.f32 %v478, %v712
      %v714 = vpop.f32.mrf.mxu0
      %v715 = vadd.f32 %v478, %v714
      %716 = vmatmul.bf16.gmra.mxu0 %v631
      %v717 = vpop.f32.mrf.mxu0
      %v718 = vadd.f32 %v478, %v717
      %v719 = vpop.f32.mrf.mxu0
      %v720 = vadd.f32 %v478, %v719
      %721 = vdwg.mxu0
      %v722 = vld [vmem:[%s423] sm:$0xff]
      %v723 = vld [vmem:[%s423 + $0x8] sm:$0xff]
      %v724 = vld [vmem:[%s423 + $0x10] sm:$0xff]
      %v725 = vld [vmem:[%s423 + $0x18] sm:$0xff]
      %v726 = vld [vmem:[%s423 + $0x20] sm:$0xff]
      %v727 = vld [vmem:[%s423 + $0x28] sm:$0xff]
      %v728 = vld [vmem:[%s423 + $0x30] sm:$0xff]
      %v729 = vld [vmem:[%s423 + $0x38] sm:$0xff]
      %v730 = vld [vmem:[%s423 + $0x40] sm:$0xff]
      %v731 = vld [vmem:[%s423 + $0x48] sm:$0xff]
      %v732 = vld [vmem:[%s423 + $0x50] sm:$0xff]
      %v733 = vld [vmem:[%s423 + $0x58] sm:$0xff]
      %v734 = vld [vmem:[%s423 + $0x60] sm:$0xff]
      %v735 = vld [vmem:[%s423 + $0x68] sm:$0xff]
      %v736 = vld [vmem:[%s423 + $0x70] sm:$0xff]
      %v737 = vld [vmem:[%s423 + $0x78] sm:$0xff]
      %v738 = vld [vmem:[%s423 + $0x80] sm:$0xff]
      %v739 = vld [vmem:[%s423 + $0x88] sm:$0xff]
      %v740 = vld [vmem:[%s423 + $0x90] sm:$0xff]
      %v741 = vld [vmem:[%s423 + $0x98] sm:$0xff]
      %v742 = vld [vmem:[%s423 + $0xa0] sm:$0xff]
      %v743 = vld [vmem:[%s423 + $0xa8] sm:$0xff]
      %v744 = vld [vmem:[%s423 + $0xb0] sm:$0xff]
      %v745 = vld [vmem:[%s423 + $0xb8] sm:$0xff]
      %v746 = vld [vmem:[%s423 + $0xc0] sm:$0xff]
      %v747 = vld [vmem:[%s423 + $0xc8] sm:$0xff]
      %v748 = vld [vmem:[%s423 + $0xd0] sm:$0xff]
      %v749 = vld [vmem:[%s423 + $0xd8] sm:$0xff]
      %v750 = vld [vmem:[%s423 + $0xe0] sm:$0xff]
      %v751 = vld [vmem:[%s423 + $0xe8] sm:$0xff]
      %v752 = vld [vmem:[%s423 + $0xf0] sm:$0xff]
      %v753 = vld [vmem:[%s423 + $0xf8] sm:$0xff]
      %v754 = vadd.f32 %v643, %v722
      %v755 = vadd.f32 %v645, %v723
      %v756 = vadd.f32 %v648, %v724
      %v757 = vadd.f32 %v650, %v725
      %v758 = vadd.f32 %v653, %v726
      %v759 = vadd.f32 %v655, %v727
      %v760 = vadd.f32 %v658, %v728
      %v761 = vadd.f32 %v660, %v729
      %v762 = vadd.f32 %v663, %v730
      %v763 = vadd.f32 %v665, %v731
      %v764 = vadd.f32 %v668, %v732
      %v765 = vadd.f32 %v670, %v733
      %v766 = vadd.f32 %v673, %v734
      %v767 = vadd.f32 %v675, %v735
      %v768 = vadd.f32 %v678, %v736
      %v769 = vadd.f32 %v680, %v737
      %v770 = vadd.f32 %v683, %v738
      %v771 = vadd.f32 %v685, %v739
      %v772 = vadd.f32 %v688, %v740
      %v773 = vadd.f32 %v690, %v741
      %v774 = vadd.f32 %v693, %v742
      %v775 = vadd.f32 %v695, %v743
      %v776 = vadd.f32 %v698, %v744
      %v777 = vadd.f32 %v700, %v745
      %v778 = vadd.f32 %v703, %v746
      %v779 = vadd.f32 %v705, %v747
      %v780 = vadd.f32 %v708, %v748
      %v781 = vadd.f32 %v710, %v749
      %v782 = vadd.f32 %v713, %v750
      %v783 = vadd.f32 %v715, %v751
      %v784 = vadd.f32 %v718, %v752
      %v785 = vadd.f32 %v720, %v753
      %v786 = vsel %vm584, %v754, 0.0
      %787 = vadd.xlane.f32.xlu0 %v786
      %v788 = vpop.xlane.xlu0 %787
      %v789 = vsel %vm584, %v755, 0.0
      %790 = vadd.xlane.f32.xlu0 %v789
      %v791 = vpop.xlane.xlu0 %790
      %v792 = vsel %vm584, %v756, 0.0
      %793 = vadd.xlane.f32.xlu0 %v792
      %v794 = vpop.xlane.xlu0 %793
      %v795 = vsel %vm584, %v757, 0.0
      %796 = vadd.xlane.f32.xlu0 %v795
      %v797 = vpop.xlane.xlu0 %796
      %v798 = vsel %vm584, %v758, 0.0
      %799 = vadd.xlane.f32.xlu0 %v798
      %v800 = vpop.xlane.xlu0 %799
      %v801 = vsel %vm584, %v759, 0.0
      %802 = vadd.xlane.f32.xlu0 %v801
      %v803 = vpop.xlane.xlu0 %802
      %v804 = vsel %vm584, %v760, 0.0
      %805 = vadd.xlane.f32.xlu0 %v804
      %v806 = vpop.xlane.xlu0 %805
      %v807 = vsel %vm584, %v761, 0.0
      %808 = vadd.xlane.f32.xlu0 %v807
      %v809 = vpop.xlane.xlu0 %808
      %v810 = vsel %vm584, %v762, 0.0
      %811 = vadd.xlane.f32.xlu0 %v810
      %v812 = vpop.xlane.xlu0 %811
      %v813 = vsel %vm584, %v763, 0.0
      %814 = vadd.xlane.f32.xlu0 %v813
      %v815 = vpop.xlane.xlu0 %814
      %v816 = vsel %vm584, %v764, 0.0
      %817 = vadd.xlane.f32.xlu0 %v816
      %v818 = vpop.xlane.xlu0 %817
      %v819 = vsel %vm584, %v765, 0.0
      %820 = vadd.xlane.f32.xlu0 %v819
      %v821 = vpop.xlane.xlu0 %820
      %v822 = vsel %vm584, %v766, 0.0
      %823 = vadd.xlane.f32.xlu0 %v822
      %v824 = vpop.xlane.xlu0 %823
      %v825 = vsel %vm584, %v767, 0.0
      %826 = vadd.xlane.f32.xlu0 %v825
      %v827 = vpop.xlane.xlu0 %826
      %v828 = vsel %vm584, %v768, 0.0
      %829 = vadd.xlane.f32.xlu0 %v828
      %v830 = vpop.xlane.xlu0 %829
      %v831 = vsel %vm584, %v769, 0.0
      %832 = vadd.xlane.f32.xlu0 %v831
      %v833 = vpop.xlane.xlu0 %832
      %v834 = vsel %vm584, %v770, 0.0
      %835 = vadd.xlane.f32.xlu0 %v834
      %v836 = vpop.xlane.xlu0 %835
      %v837 = vsel %vm584, %v771, 0.0
      %838 = vadd.xlane.f32.xlu0 %v837
      %v839 = vpop.xlane.xlu0 %838
      %v840 = vsel %vm584, %v772, 0.0
      %841 = vadd.xlane.f32.xlu0 %v840
      %v842 = vpop.xlane.xlu0 %841
      %v843 = vsel %vm584, %v773, 0.0
      %844 = vadd.xlane.f32.xlu0 %v843
      %v845 = vpop.xlane.xlu0 %844
      %v846 = vsel %vm584, %v774, 0.0
      %847 = vadd.xlane.f32.xlu0 %v846
      %v848 = vpop.xlane.xlu0 %847
      %v849 = vsel %vm584, %v775, 0.0
      %850 = vadd.xlane.f32.xlu0 %v849
      %v851 = vpop.xlane.xlu0 %850
      %v852 = vsel %vm584, %v776, 0.0
      %853 = vadd.xlane.f32.xlu0 %v852
      %v854 = vpop.xlane.xlu0 %853
      %v855 = vsel %vm584, %v777, 0.0
      %856 = vadd.xlane.f32.xlu0 %v855
      %v857 = vpop.xlane.xlu0 %856
      %v858 = vsel %vm584, %v778, 0.0
      %859 = vadd.xlane.f32.xlu0 %v858
      %v860 = vpop.xlane.xlu0 %859
      %v861 = vsel %vm584, %v779, 0.0
      %862 = vadd.xlane.f32.xlu0 %v861
      %v863 = vpop.xlane.xlu0 %862
      %v864 = vsel %vm584, %v780, 0.0
      %865 = vadd.xlane.f32.xlu0 %v864
      %v866 = vpop.xlane.xlu0 %865
      %v867 = vsel %vm584, %v781, 0.0
      %868 = vadd.xlane.f32.xlu0 %v867
      %v869 = vpop.xlane.xlu0 %868
      %v870 = vsel %vm584, %v782, 0.0
      %871 = vadd.xlane.f32.xlu0 %v870
      %v872 = vpop.xlane.xlu0 %871
      %v873 = vsel %vm584, %v783, 0.0
      %874 = vadd.xlane.f32.xlu0 %v873
      %v875 = vpop.xlane.xlu0 %874
      %v876 = vsel %vm584, %v784, 0.0
      %877 = vadd.xlane.f32.xlu0 %v876
      %v878 = vpop.xlane.xlu0 %877
      %v879 = vsel %vm584, %v785, 0.0
      %880 = vadd.xlane.f32.xlu0 %v879
      %v881 = vpop.xlane.xlu0 %880
      %v882 = vrcp.pop 64.0
      %v883 = vmul.f32 64.0, %v882
      %v884 = vsub.f32 1.0, %v883
      %v885 = vmul.f32 %v882, %v884
      %v886 = vadd.f32 %v882, %v885
      %vm887 = vweird.f32 %v882
      %v888 = vsel %vm887, %v882, %v886
      %v889 = vmul.f32 %v788, %v888
      %v890 = vmul.f32 %v791, %v888
      %v891 = vmul.f32 %v794, %v888
      %v892 = vmul.f32 %v797, %v888
      %v893 = vmul.f32 %v800, %v888
      %v894 = vmul.f32 %v803, %v888
      %v895 = vmul.f32 %v806, %v888
      %v896 = vmul.f32 %v809, %v888
      %v897 = vmul.f32 %v812, %v888
      %v898 = vmul.f32 %v815, %v888
      %v899 = vmul.f32 %v818, %v888
      %v900 = vmul.f32 %v821, %v888
      %v901 = vmul.f32 %v824, %v888
      %v902 = vmul.f32 %v827, %v888
      %v903 = vmul.f32 %v830, %v888
      %v904 = vmul.f32 %v833, %v888
      %v905 = vmul.f32 %v836, %v888
      %v906 = vmul.f32 %v839, %v888
      %v907 = vmul.f32 %v842, %v888
      %v908 = vmul.f32 %v845, %v888
      %v909 = vmul.f32 %v848, %v888
      %v910 = vmul.f32 %v851, %v888
      %v911 = vmul.f32 %v854, %v888
      %v912 = vmul.f32 %v857, %v888
      %v913 = vmul.f32 %v860, %v888
      %v914 = vmul.f32 %v863, %v888
      %v915 = vmul.f32 %v866, %v888
      %v916 = vmul.f32 %v869, %v888
      %v917 = vmul.f32 %v872, %v888
      %v918 = vmul.f32 %v875, %v888
      %v919 = vmul.f32 %v878, %v888
      %v920 = vmul.f32 %v881, %v888
      %v921 = vsub.f32 %v754, %v889
      %v922 = vsub.f32 %v755, %v890
      %v923 = vsub.f32 %v756, %v891
      %v924 = vsub.f32 %v757, %v892
      %v925 = vsub.f32 %v758, %v893
      %v926 = vsub.f32 %v759, %v894
      %v927 = vsub.f32 %v760, %v895
      %v928 = vsub.f32 %v761, %v896
      %v929 = vsub.f32 %v762, %v897
      %v930 = vsub.f32 %v763, %v898
      %v931 = vsub.f32 %v764, %v899
      %v932 = vsub.f32 %v765, %v900
      %v933 = vsub.f32 %v766, %v901
      %v934 = vsub.f32 %v767, %v902
      %v935 = vsub.f32 %v768, %v903
      %v936 = vsub.f32 %v769, %v904
      %v937 = vsub.f32 %v770, %v905
      %v938 = vsub.f32 %v771, %v906
      %v939 = vsub.f32 %v772, %v907
      %v940 = vsub.f32 %v773, %v908
      %v941 = vsub.f32 %v774, %v909
      %v942 = vsub.f32 %v775, %v910
      %v943 = vsub.f32 %v776, %v911
      %v944 = vsub.f32 %v777, %v912
      %v945 = vsub.f32 %v778, %v913
      %v946 = vsub.f32 %v779, %v914
      %v947 = vsub.f32 %v780, %v915
      %v948 = vsub.f32 %v781, %v916
      %v949 = vsub.f32 %v782, %v917
      %v950 = vsub.f32 %v783, %v918
      %v951 = vsub.f32 %v784, %v919
      %v952 = vsub.f32 %v785, %v920
      %v953 = vmul.f32 %v921, %v921
      %v954 = vmul.f32 %v922, %v922
      %v955 = vmul.f32 %v923, %v923
      %v956 = vmul.f32 %v924, %v924
      %v957 = vmul.f32 %v925, %v925
      %v958 = vmul.f32 %v926, %v926
      %v959 = vmul.f32 %v927, %v927
      %v960 = vmul.f32 %v928, %v928
      %v961 = vmul.f32 %v929, %v929
      %v962 = vmul.f32 %v930, %v930
      %v963 = vmul.f32 %v931, %v931
      %v964 = vmul.f32 %v932, %v932
      %v965 = vmul.f32 %v933, %v933
      %v966 = vmul.f32 %v934, %v934
      %v967 = vmul.f32 %v935, %v935
      %v968 = vmul.f32 %v936, %v936
      %v969 = vmul.f32 %v937, %v937
      %v970 = vmul.f32 %v938, %v938
      %v971 = vmul.f32 %v939, %v939
      %v972 = vmul.f32 %v940, %v940
      %v973 = vmul.f32 %v941, %v941
      %v974 = vmul.f32 %v942, %v942
      %v975 = vmul.f32 %v943, %v943
      %v976 = vmul.f32 %v944, %v944
      %v977 = vmul.f32 %v945, %v945
      %v978 = vmul.f32 %v946, %v946
      %v979 = vmul.f32 %v947, %v947
      %v980 = vmul.f32 %v948, %v948
      %v981 = vmul.f32 %v949, %v949
      %v982 = vmul.f32 %v950, %v950
      %v983 = vmul.f32 %v951, %v951
      %v984 = vmul.f32 %v952, %v952
      %v985 = vsel %vm584, %v953, 0.0
      %986 = vadd.xlane.f32.xlu0 %v985
      %v987 = vpop.xlane.xlu0 %986
      %v988 = vsel %vm584, %v954, 0.0
      %989 = vadd.xlane.f32.xlu0 %v988
      %v990 = vpop.xlane.xlu0 %989
      %v991 = vsel %vm584, %v955, 0.0
      %992 = vadd.xlane.f32.xlu0 %v991
      %v993 = vpop.xlane.xlu0 %992
      %v994 = vsel %vm584, %v956, 0.0
      %995 = vadd.xlane.f32.xlu0 %v994
      %v996 = vpop.xlane.xlu0 %995
      %v997 = vsel %vm584, %v957, 0.0
      %998 = vadd.xlane.f32.xlu0 %v997
      %v999 = vpop.xlane.xlu0 %998
      %v1000 = vsel %vm584, %v958, 0.0
      %1001 = vadd.xlane.f32.xlu0 %v1000
      %v1002 = vpop.xlane.xlu0 %1001
      %v1003 = vsel %vm584, %v959, 0.0
      %1004 = vadd.xlane.f32.xlu0 %v1003
      %v1005 = vpop.xlane.xlu0 %1004
      %v1006 = vsel %vm584, %v960, 0.0
      %1007 = vadd.xlane.f32.xlu0 %v1006
      %v1008 = vpop.xlane.xlu0 %1007
      %v1009 = vsel %vm584, %v961, 0.0
      %1010 = vadd.xlane.f32.xlu0 %v1009
      %v1011 = vpop.xlane.xlu0 %1010
      %v1012 = vsel %vm584, %v962, 0.0
      %1013 = vadd.xlane.f32.xlu0 %v1012
      %v1014 = vpop.xlane.xlu0 %1013
      %v1015 = vsel %vm584, %v963, 0.0
      %1016 = vadd.xlane.f32.xlu0 %v1015
      %v1017 = vpop.xlane.xlu0 %1016
      %v1018 = vsel %vm584, %v964, 0.0
      %1019 = vadd.xlane.f32.xlu0 %v1018
      %v1020 = vpop.xlane.xlu0 %1019
      %v1021 = vsel %vm584, %v965, 0.0
      %1022 = vadd.xlane.f32.xlu0 %v1021
      %v1023 = vpop.xlane.xlu0 %1022
      %v1024 = vsel %vm584, %v966, 0.0
      %1025 = vadd.xlane.f32.xlu0 %v1024
      %v1026 = vpop.xlane.xlu0 %1025
      %v1027 = vsel %vm584, %v967, 0.0
      %1028 = vadd.xlane.f32.xlu0 %v1027
      %v1029 = vpop.xlane.xlu0 %1028
      %v1030 = vsel %vm584, %v968, 0.0
      %1031 = vadd.xlane.f32.xlu0 %v1030
      %v1032 = vpop.xlane.xlu0 %1031
      %v1033 = vsel %vm584, %v969, 0.0
      %1034 = vadd.xlane.f32.xlu0 %v1033
      %v1035 = vpop.xlane.xlu0 %1034
      %v1036 = vsel %vm584, %v970, 0.0
      %1037 = vadd.xlane.f32.xlu0 %v1036
      %v1038 = vpop.xlane.xlu0 %1037
      %v1039 = vsel %vm584, %v971, 0.0
      %1040 = vadd.xlane.f32.xlu0 %v1039
      %v1041 = vpop.xlane.xlu0 %1040
      %v1042 = vsel %vm584, %v972, 0.0
      %1043 = vadd.xlane.f32.xlu0 %v1042
      %v1044 = vpop.xlane.xlu0 %1043
      %v1045 = vsel %vm584, %v973, 0.0
      %1046 = vadd.xlane.f32.xlu0 %v1045
      %v1047 = vpop.xlane.xlu0 %1046
      %v1048 = vsel %vm584, %v974, 0.0
      %1049 = vadd.xlane.f32.xlu0 %v1048
      %v1050 = vpop.xlane.xlu0 %1049
      %v1051 = vsel %vm584, %v975, 0.0
      %1052 = vadd.xlane.f32.xlu0 %v1051
      %v1053 = vpop.xlane.xlu0 %1052
      %v1054 = vsel %vm584, %v976, 0.0
      %1055 = vadd.xlane.f32.xlu0 %v1054
      %v1056 = vpop.xlane.xlu0 %1055
      %v1057 = vsel %vm584, %v977, 0.0
      %1058 = vadd.xlane.f32.xlu0 %v1057
      %v1059 = vpop.xlane.xlu0 %1058
      %v1060 = vsel %vm584, %v978, 0.0
      %1061 = vadd.xlane.f32.xlu0 %v1060
      %v1062 = vpop.xlane.xlu0 %1061
      %v1063 = vsel %vm584, %v979, 0.0
      %1064 = vadd.xlane.f32.xlu0 %v1063
      %v1065 = vpop.xlane.xlu0 %1064
      %v1066 = vsel %vm584, %v980, 0.0
      %1067 = vadd.xlane.f32.xlu0 %v1066
      %v1068 = vpop.xlane.xlu0 %1067
      %v1069 = vsel %vm584, %v981, 0.0
      %1070 = vadd.xlane.f32.xlu0 %v1069
      %v1071 = vpop.xlane.xlu0 %1070
      %v1072 = vsel %vm584, %v982, 0.0
      %1073 = vadd.xlane.f32.xlu0 %v1072
      %v1074 = vpop.xlane.xlu0 %1073
      %v1075 = vsel %vm584, %v983, 0.0
      %1076 = vadd.xlane.f32.xlu0 %v1075
      %v1077 = vpop.xlane.xlu0 %1076
      %v1078 = vsel %vm584, %v984, 0.0
      %1079 = vadd.xlane.f32.xlu0 %v1078
      %v1080 = vpop.xlane.xlu0 %1079
      %v1081 = vmul.f32 %v987, %v888
      %v1082 = vmul.f32 %v990, %v888
      %v1083 = vmul.f32 %v993, %v888
      %v1084 = vmul.f32 %v996, %v888
      %v1085 = vmul.f32 %v999, %v888
      %v1086 = vmul.f32 %v1002, %v888
      %v1087 = vmul.f32 %v1005, %v888
      %v1088 = vmul.f32 %v1008, %v888
      %v1089 = vmul.f32 %v1011, %v888
      %v1090 = vmul.f32 %v1014, %v888
      %v1091 = vmul.f32 %v1017, %v888
      %v1092 = vmul.f32 %v1020, %v888
      %v1093 = vmul.f32 %v1023, %v888
      %v1094 = vmul.f32 %v1026, %v888
      %v1095 = vmul.f32 %v1029, %v888
      %v1096 = vmul.f32 %v1032, %v888
      %v1097 = vmul.f32 %v1035, %v888
      %v1098 = vmul.f32 %v1038, %v888
      %v1099 = vmul.f32 %v1041, %v888
      %v1100 = vmul.f32 %v1044, %v888
      %v1101 = vmul.f32 %v1047, %v888
      %v1102 = vmul.f32 %v1050, %v888
      %v1103 = vmul.f32 %v1053, %v888
      %v1104 = vmul.f32 %v1056, %v888
      %v1105 = vmul.f32 %v1059, %v888
      %v1106 = vmul.f32 %v1062, %v888
      %v1107 = vmul.f32 %v1065, %v888
      %v1108 = vmul.f32 %v1068, %v888
      %v1109 = vmul.f32 %v1071, %v888
      %v1110 = vmul.f32 %v1074, %v888
      %v1111 = vmul.f32 %v1077, %v888
      %v1112 = vmul.f32 %v1080, %v888
      %v1113 = vadd.f32 %v1081, 1e-05
      %v1114 = vadd.f32 %v1082, 1e-05
      %v1115 = vadd.f32 %v1083, 1e-05
      %v1116 = vadd.f32 %v1084, 1e-05
      %v1117 = vadd.f32 %v1085, 1e-05
      %v1118 = vadd.f32 %v1086, 1e-05
      %v1119 = vadd.f32 %v1087, 1e-05
      %v1120 = vadd.f32 %v1088, 1e-05
      %v1121 = vadd.f32 %v1089, 1e-05
      %v1122 = vadd.f32 %v1090, 1e-05
      %v1123 = vadd.f32 %v1091, 1e-05
      %v1124 = vadd.f32 %v1092, 1e-05
      %v1125 = vadd.f32 %v1093, 1e-05
      %v1126 = vadd.f32 %v1094, 1e-05
      %v1127 = vadd.f32 %v1095, 1e-05
      %v1128 = vadd.f32 %v1096, 1e-05
      %v1129 = vadd.f32 %v1097, 1e-05
      %v1130 = vadd.f32 %v1098, 1e-05
      %v1131 = vadd.f32 %v1099, 1e-05
      %v1132 = vadd.f32 %v1100, 1e-05
      %v1133 = vadd.f32 %v1101, 1e-05
      %v1134 = vadd.f32 %v1102, 1e-05
      %v1135 = vadd.f32 %v1103, 1e-05
      %v1136 = vadd.f32 %v1104, 1e-05
      %v1137 = vadd.f32 %v1105, 1e-05
      %v1138 = vadd.f32 %v1106, 1e-05
      %v1139 = vadd.f32 %v1107, 1e-05
      %v1140 = vadd.f32 %v1108, 1e-05
      %v1141 = vadd.f32 %v1109, 1e-05
      %v1142 = vadd.f32 %v1110, 1e-05
      %v1143 = vadd.f32 %v1111, 1e-05
      %v1144 = vadd.f32 %v1112, 1e-05
      %v1145 = vrsqrt.pop %v1113
      %v1146 = vmul.f32 %v1145, %v1113
      %v1147 = vmul.f32 %v1146, %v1145
      %v1148 = vmul.f32 0.5, %v1147
      %v1149 = vsub.f32 1.5, %v1148
      %v1150 = vmul.f32 %v1145, %v1149
      %vm1151 = vweird.f32 %v1113
      %vm1152 = vweird.f32 %v1145
      %vm1153 = vmor %vm1151, %vm1152
      %v1154 = vsel %vm1153, %v1145, %v1150
      %v1155 = vrsqrt.pop %v1114
      %v1156 = vmul.f32 %v1155, %v1114
      %v1157 = vmul.f32 %v1156, %v1155
      %v1158 = vmul.f32 0.5, %v1157
      %v1159 = vsub.f32 1.5, %v1158
      %v1160 = vmul.f32 %v1155, %v1159
      %vm1161 = vweird.f32 %v1114
      %vm1162 = vweird.f32 %v1155
      %vm1163 = vmor %vm1161, %vm1162
      %v1164 = vsel %vm1163, %v1155, %v1160
      %v1165 = vrsqrt.pop %v1115
      %v1166 = vmul.f32 %v1165, %v1115
      %v1167 = vmul.f32 %v1166, %v1165
      %v1168 = vmul.f32 0.5, %v1167
      %v1169 = vsub.f32 1.5, %v1168
      %v1170 = vmul.f32 %v1165, %v1169
      %vm1171 = vweird.f32 %v1115
      %vm1172 = vweird.f32 %v1165
      %vm1173 = vmor %vm1171, %vm1172
      %v1174 = vsel %vm1173, %v1165, %v1170
      %v1175 = vrsqrt.pop %v1116
      %v1176 = vmul.f32 %v1175, %v1116
      %v1177 = vmul.f32 %v1176, %v1175
      %v1178 = vmul.f32 0.5, %v1177
      %v1179 = vsub.f32 1.5, %v1178
      %v1180 = vmul.f32 %v1175, %v1179
      %vm1181 = vweird.f32 %v1116
      %vm1182 = vweird.f32 %v1175
      %vm1183 = vmor %vm1181, %vm1182
      %v1184 = vsel %vm1183, %v1175, %v1180
      %v1185 = vrsqrt.pop %v1117
      %v1186 = vmul.f32 %v1185, %v1117
      %v1187 = vmul.f32 %v1186, %v1185
      %v1188 = vmul.f32 0.5, %v1187
      %v1189 = vsub.f32 1.5, %v1188
      %v1190 = vmul.f32 %v1185, %v1189
      %vm1191 = vweird.f32 %v1117
      %vm1192 = vweird.f32 %v1185
      %vm1193 = vmor %vm1191, %vm1192
      %v1194 = vsel %vm1193, %v1185, %v1190
      %v1195 = vrsqrt.pop %v1118
      %v1196 = vmul.f32 %v1195, %v1118
      %v1197 = vmul.f32 %v1196, %v1195
      %v1198 = vmul.f32 0.5, %v1197
      %v1199 = vsub.f32 1.5, %v1198
      %v1200 = vmul.f32 %v1195, %v1199
      %vm1201 = vweird.f32 %v1118
      %vm1202 = vweird.f32 %v1195
      %vm1203 = vmor %vm1201, %vm1202
      %v1204 = vsel %vm1203, %v1195, %v1200
      %v1205 = vrsqrt.pop %v1119
      %v1206 = vmul.f32 %v1205, %v1119
      %v1207 = vmul.f32 %v1206, %v1205
      %v1208 = vmul.f32 0.5, %v1207
      %v1209 = vsub.f32 1.5, %v1208
      %v1210 = vmul.f32 %v1205, %v1209
      %vm1211 = vweird.f32 %v1119
      %vm1212 = vweird.f32 %v1205
      %vm1213 = vmor %vm1211, %vm1212
      %v1214 = vsel %vm1213, %v1205, %v1210
      %v1215 = vrsqrt.pop %v1120
      %v1216 = vmul.f32 %v1215, %v1120
      %v1217 = vmul.f32 %v1216, %v1215
      %v1218 = vmul.f32 0.5, %v1217
      %v1219 = vsub.f32 1.5, %v1218
      %v1220 = vmul.f32 %v1215, %v1219
      %vm1221 = vweird.f32 %v1120
      %vm1222 = vweird.f32 %v1215
      %vm1223 = vmor %vm1221, %vm1222
      %v1224 = vsel %vm1223, %v1215, %v1220
      %v1225 = vrsqrt.pop %v1121
      %v1226 = vmul.f32 %v1225, %v1121
      %v1227 = vmul.f32 %v1226, %v1225
      %v1228 = vmul.f32 0.5, %v1227
      %v1229 = vsub.f32 1.5, %v1228
      %v1230 = vmul.f32 %v1225, %v1229
      %vm1231 = vweird.f32 %v1121
      %vm1232 = vweird.f32 %v1225
      %vm1233 = vmor %vm1231, %vm1232
      %v1234 = vsel %vm1233, %v1225, %v1230
      %v1235 = vrsqrt.pop %v1122
      %v1236 = vmul.f32 %v1235, %v1122
      %v1237 = vmul.f32 %v1236, %v1235
      %v1238 = vmul.f32 0.5, %v1237
      %v1239 = vsub.f32 1.5, %v1238
      %v1240 = vmul.f32 %v1235, %v1239
      %vm1241 = vweird.f32 %v1122
      %vm1242 = vweird.f32 %v1235
      %vm1243 = vmor %vm1241, %vm1242
      %v1244 = vsel %vm1243, %v1235, %v1240
      %v1245 = vrsqrt.pop %v1123
      %v1246 = vmul.f32 %v1245, %v1123
      %v1247 = vmul.f32 %v1246, %v1245
      %v1248 = vmul.f32 0.5, %v1247
      %v1249 = vsub.f32 1.5, %v1248
      %v1250 = vmul.f32 %v1245, %v1249
      %vm1251 = vweird.f32 %v1123
      %vm1252 = vweird.f32 %v1245
      %vm1253 = vmor %vm1251, %vm1252
      %v1254 = vsel %vm1253, %v1245, %v1250
      %v1255 = vrsqrt.pop %v1124
      %v1256 = vmul.f32 %v1255, %v1124
      %v1257 = vmul.f32 %v1256, %v1255
      %v1258 = vmul.f32 0.5, %v1257
      %v1259 = vsub.f32 1.5, %v1258
      %v1260 = vmul.f32 %v1255, %v1259
      %vm1261 = vweird.f32 %v1124
      %vm1262 = vweird.f32 %v1255
      %vm1263 = vmor %vm1261, %vm1262
      %v1264 = vsel %vm1263, %v1255, %v1260
      %v1265 = vrsqrt.pop %v1125
      %v1266 = vmul.f32 %v1265, %v1125
      %v1267 = vmul.f32 %v1266, %v1265
      %v1268 = vmul.f32 0.5, %v1267
      %v1269 = vsub.f32 1.5, %v1268
      %v1270 = vmul.f32 %v1265, %v1269
      %vm1271 = vweird.f32 %v1125
      %vm1272 = vweird.f32 %v1265
      %vm1273 = vmor %vm1271, %vm1272
      %v1274 = vsel %vm1273, %v1265, %v1270
      %v1275 = vrsqrt.pop %v1126
      %v1276 = vmul.f32 %v1275, %v1126
      %v1277 = vmul.f32 %v1276, %v1275
      %v1278 = vmul.f32 0.5, %v1277
      %v1279 = vsub.f32 1.5, %v1278
      %v1280 = vmul.f32 %v1275, %v1279
      %vm1281 = vweird.f32 %v1126
      %vm1282 = vweird.f32 %v1275
      %vm1283 = vmor %vm1281, %vm1282
      %v1284 = vsel %vm1283, %v1275, %v1280
      %v1285 = vrsqrt.pop %v1127
      %v1286 = vmul.f32 %v1285, %v1127
      %v1287 = vmul.f32 %v1286, %v1285
      %v1288 = vmul.f32 0.5, %v1287
      %v1289 = vsub.f32 1.5, %v1288
      %v1290 = vmul.f32 %v1285, %v1289
      %vm1291 = vweird.f32 %v1127
      %vm1292 = vweird.f32 %v1285
      %vm1293 = vmor %vm1291, %vm1292
      %v1294 = vsel %vm1293, %v1285, %v1290
      %v1295 = vrsqrt.pop %v1128
      %v1296 = vmul.f32 %v1295, %v1128
      %v1297 = vmul.f32 %v1296, %v1295
      %v1298 = vmul.f32 0.5, %v1297
      %v1299 = vsub.f32 1.5, %v1298
      %v1300 = vmul.f32 %v1295, %v1299
      %vm1301 = vweird.f32 %v1128
      %vm1302 = vweird.f32 %v1295
      %vm1303 = vmor %vm1301, %vm1302
      %v1304 = vsel %vm1303, %v1295, %v1300
      %v1305 = vrsqrt.pop %v1129
      %v1306 = vmul.f32 %v1305, %v1129
      %v1307 = vmul.f32 %v1306, %v1305
      %v1308 = vmul.f32 0.5, %v1307
      %v1309 = vsub.f32 1.5, %v1308
      %v1310 = vmul.f32 %v1305, %v1309
      %vm1311 = vweird.f32 %v1129
      %vm1312 = vweird.f32 %v1305
      %vm1313 = vmor %vm1311, %vm1312
      %v1314 = vsel %vm1313, %v1305, %v1310
      %v1315 = vrsqrt.pop %v1130
      %v1316 = vmul.f32 %v1315, %v1130
      %v1317 = vmul.f32 %v1316, %v1315
      %v1318 = vmul.f32 0.5, %v1317
      %v1319 = vsub.f32 1.5, %v1318
      %v1320 = vmul.f32 %v1315, %v1319
      %vm1321 = vweird.f32 %v1130
      %vm1322 = vweird.f32 %v1315
      %vm1323 = vmor %vm1321, %vm1322
      %v1324 = vsel %vm1323, %v1315, %v1320
      %v1325 = vrsqrt.pop %v1131
      %v1326 = vmul.f32 %v1325, %v1131
      %v1327 = vmul.f32 %v1326, %v1325
      %v1328 = vmul.f32 0.5, %v1327
      %v1329 = vsub.f32 1.5, %v1328
      %v1330 = vmul.f32 %v1325, %v1329
      %vm1331 = vweird.f32 %v1131
      %vm1332 = vweird.f32 %v1325
      %vm1333 = vmor %vm1331, %vm1332
      %v1334 = vsel %vm1333, %v1325, %v1330
      %v1335 = vrsqrt.pop %v1132
      %v1336 = vmul.f32 %v1335, %v1132
      %v1337 = vmul.f32 %v1336, %v1335
      %v1338 = vmul.f32 0.5, %v1337
      %v1339 = vsub.f32 1.5, %v1338
      %v1340 = vmul.f32 %v1335, %v1339
      %vm1341 = vweird.f32 %v1132
      %vm1342 = vweird.f32 %v1335
      %vm1343 = vmor %vm1341, %vm1342
      %v1344 = vsel %vm1343, %v1335, %v1340
      %v1345 = vrsqrt.pop %v1133
      %v1346 = vmul.f32 %v1345, %v1133
      %v1347 = vmul.f32 %v1346, %v1345
      %v1348 = vmul.f32 0.5, %v1347
      %v1349 = vsub.f32 1.5, %v1348
      %v1350 = vmul.f32 %v1345, %v1349
      %vm1351 = vweird.f32 %v1133
      %vm1352 = vweird.f32 %v1345
      %vm1353 = vmor %vm1351, %vm1352
      %v1354 = vsel %vm1353, %v1345, %v1350
      %v1355 = vrsqrt.pop %v1134
      %v1356 = vmul.f32 %v1355, %v1134
      %v1357 = vmul.f32 %v1356, %v1355
      %v1358 = vmul.f32 0.5, %v1357
      %v1359 = vsub.f32 1.5, %v1358
      %v1360 = vmul.f32 %v1355, %v1359
      %vm1361 = vweird.f32 %v1134
      %vm1362 = vweird.f32 %v1355
      %vm1363 = vmor %vm1361, %vm1362
      %v1364 = vsel %vm1363, %v1355, %v1360
      %v1365 = vrsqrt.pop %v1135
      %v1366 = vmul.f32 %v1365, %v1135
      %v1367 = vmul.f32 %v1366, %v1365
      %v1368 = vmul.f32 0.5, %v1367
      %v1369 = vsub.f32 1.5, %v1368
      %v1370 = vmul.f32 %v1365, %v1369
      %vm1371 = vweird.f32 %v1135
      %vm1372 = vweird.f32 %v1365
      %vm1373 = vmor %vm1371, %vm1372
      %v1374 = vsel %vm1373, %v1365, %v1370
      %v1375 = vrsqrt.pop %v1136
      %v1376 = vmul.f32 %v1375, %v1136
      %v1377 = vmul.f32 %v1376, %v1375
      %v1378 = vmul.f32 0.5, %v1377
      %v1379 = vsub.f32 1.5, %v1378
      %v1380 = vmul.f32 %v1375, %v1379
      %vm1381 = vweird.f32 %v1136
      %vm1382 = vweird.f32 %v1375
      %vm1383 = vmor %vm1381, %vm1382
      %v1384 = vsel %vm1383, %v1375, %v1380
      %v1385 = vrsqrt.pop %v1137
      %v1386 = vmul.f32 %v1385, %v1137
      %v1387 = vmul.f32 %v1386, %v1385
      %v1388 = vmul.f32 0.5, %v1387
      %v1389 = vsub.f32 1.5, %v1388
      %v1390 = vmul.f32 %v1385, %v1389
      %vm1391 = vweird.f32 %v1137
      %vm1392 = vweird.f32 %v1385
      %vm1393 = vmor %vm1391, %vm1392
      %v1394 = vsel %vm1393, %v1385, %v1390
      %v1395 = vrsqrt.pop %v1138
      %v1396 = vmul.f32 %v1395, %v1138
      %v1397 = vmul.f32 %v1396, %v1395
      %v1398 = vmul.f32 0.5, %v1397
      %v1399 = vsub.f32 1.5, %v1398
      %v1400 = vmul.f32 %v1395, %v1399
      %vm1401 = vweird.f32 %v1138
      %vm1402 = vweird.f32 %v1395
      %vm1403 = vmor %vm1401, %vm1402
      %v1404 = vsel %vm1403, %v1395, %v1400
      %v1405 = vrsqrt.pop %v1139
      %v1406 = vmul.f32 %v1405, %v1139
      %v1407 = vmul.f32 %v1406, %v1405
      %v1408 = vmul.f32 0.5, %v1407
      %v1409 = vsub.f32 1.5, %v1408
      %v1410 = vmul.f32 %v1405, %v1409
      %vm1411 = vweird.f32 %v1139
      %vm1412 = vweird.f32 %v1405
      %vm1413 = vmor %vm1411, %vm1412
      %v1414 = vsel %vm1413, %v1405, %v1410
      %v1415 = vrsqrt.pop %v1140
      %v1416 = vmul.f32 %v1415, %v1140
      %v1417 = vmul.f32 %v1416, %v1415
      %v1418 = vmul.f32 0.5, %v1417
      %v1419 = vsub.f32 1.5, %v1418
      %v1420 = vmul.f32 %v1415, %v1419
      %vm1421 = vweird.f32 %v1140
      %vm1422 = vweird.f32 %v1415
      %vm1423 = vmor %vm1421, %vm1422
      %v1424 = vsel %vm1423, %v1415, %v1420
      %v1425 = vrsqrt.pop %v1141
      %v1426 = vmul.f32 %v1425, %v1141
      %v1427 = vmul.f32 %v1426, %v1425
      %v1428 = vmul.f32 0.5, %v1427
      %v1429 = vsub.f32 1.5, %v1428
      %v1430 = vmul.f32 %v1425, %v1429
      %vm1431 = vweird.f32 %v1141
      %vm1432 = vweird.f32 %v1425
      %vm1433 = vmor %vm1431, %vm1432
      %v1434 = vsel %vm1433, %v1425, %v1430
      %v1435 = vrsqrt.pop %v1142
      %v1436 = vmul.f32 %v1435, %v1142
      %v1437 = vmul.f32 %v1436, %v1435
      %v1438 = vmul.f32 0.5, %v1437
      %v1439 = vsub.f32 1.5, %v1438
      %v1440 = vmul.f32 %v1435, %v1439
      %vm1441 = vweird.f32 %v1142
      %vm1442 = vweird.f32 %v1435
      %vm1443 = vmor %vm1441, %vm1442
      %v1444 = vsel %vm1443, %v1435, %v1440
      %v1445 = vrsqrt.pop %v1143
      %v1446 = vmul.f32 %v1445, %v1143
      %v1447 = vmul.f32 %v1446, %v1445
      %v1448 = vmul.f32 0.5, %v1447
      %v1449 = vsub.f32 1.5, %v1448
      %v1450 = vmul.f32 %v1445, %v1449
      %vm1451 = vweird.f32 %v1143
      %vm1452 = vweird.f32 %v1445
      %vm1453 = vmor %vm1451, %vm1452
      %v1454 = vsel %vm1453, %v1445, %v1450
      %v1455 = vrsqrt.pop %v1144
      %v1456 = vmul.f32 %v1455, %v1144
      %v1457 = vmul.f32 %v1456, %v1455
      %v1458 = vmul.f32 0.5, %v1457
      %v1459 = vsub.f32 1.5, %v1458
      %v1460 = vmul.f32 %v1455, %v1459
      %vm1461 = vweird.f32 %v1144
      %vm1462 = vweird.f32 %v1455
      %vm1463 = vmor %vm1461, %vm1462
      %v1464 = vsel %vm1463, %v1455, %v1460
      %v1465 = vmul.f32 %v921, %v1154
      %v1466 = vmul.f32 %v922, %v1164
      %v1467 = vmul.f32 %v923, %v1174
      %v1468 = vmul.f32 %v924, %v1184
      %v1469 = vmul.f32 %v925, %v1194
      %v1470 = vmul.f32 %v926, %v1204
      %v1471 = vmul.f32 %v927, %v1214
      %v1472 = vmul.f32 %v928, %v1224
      %v1473 = vmul.f32 %v929, %v1234
      %v1474 = vmul.f32 %v930, %v1244
      %v1475 = vmul.f32 %v931, %v1254
      %v1476 = vmul.f32 %v932, %v1264
      %v1477 = vmul.f32 %v933, %v1274
      %v1478 = vmul.f32 %v934, %v1284
      %v1479 = vmul.f32 %v935, %v1294
      %v1480 = vmul.f32 %v936, %v1304
      %v1481 = vmul.f32 %v937, %v1314
      %v1482 = vmul.f32 %v938, %v1324
      %v1483 = vmul.f32 %v939, %v1334
      %v1484 = vmul.f32 %v940, %v1344
      %v1485 = vmul.f32 %v941, %v1354
      %v1486 = vmul.f32 %v942, %v1364
      %v1487 = vmul.f32 %v943, %v1374
      %v1488 = vmul.f32 %v944, %v1384
      %v1489 = vmul.f32 %v945, %v1394
      %v1490 = vmul.f32 %v946, %v1404
      %v1491 = vmul.f32 %v947, %v1414
      %v1492 = vmul.f32 %v948, %v1424
      %v1493 = vmul.f32 %v949, %v1434
      %v1494 = vmul.f32 %v950, %v1444
      %v1495 = vmul.f32 %v951, %v1454
      %v1496 = vmul.f32 %v952, %v1464
      %v1497 = vld [vmem:[%s4] sm:$0x1]
      %v1499 = vperm.slane %v1497, 0
      %v1501 = vmul.f32 %v1465, %v1499
      %v1502 = vmul.f32 %v1466, %v1499
      %v1503 = vmul.f32 %v1467, %v1499
      %v1504 = vmul.f32 %v1468, %v1499
      %v1505 = vmul.f32 %v1469, %v1499
      %v1506 = vmul.f32 %v1470, %v1499
      %v1507 = vmul.f32 %v1471, %v1499
      %v1508 = vmul.f32 %v1472, %v1499
      %v1509 = vmul.f32 %v1473, %v1499
      %v1510 = vmul.f32 %v1474, %v1499
      %v1511 = vmul.f32 %v1475, %v1499
      %v1512 = vmul.f32 %v1476, %v1499
      %v1513 = vmul.f32 %v1477, %v1499
      %v1514 = vmul.f32 %v1478, %v1499
      %v1515 = vmul.f32 %v1479, %v1499
      %v1516 = vmul.f32 %v1480, %v1499
      %v1517 = vmul.f32 %v1481, %v1499
      %v1518 = vmul.f32 %v1482, %v1499
      %v1519 = vmul.f32 %v1483, %v1499
      %v1520 = vmul.f32 %v1484, %v1499
      %v1521 = vmul.f32 %v1485, %v1499
      %v1522 = vmul.f32 %v1486, %v1499
      %v1523 = vmul.f32 %v1487, %v1499
      %v1524 = vmul.f32 %v1488, %v1499
      %v1525 = vmul.f32 %v1489, %v1499
      %v1526 = vmul.f32 %v1490, %v1499
      %v1527 = vmul.f32 %v1491, %v1499
      %v1528 = vmul.f32 %v1492, %v1499
      %v1529 = vmul.f32 %v1493, %v1499
      %v1530 = vmul.f32 %v1494, %v1499
      %v1531 = vmul.f32 %v1495, %v1499
      %v1532 = vmul.f32 %v1496, %v1499
      %v1533 = vld [vmem:[%s5] sm:$0x1]
      %v1535 = vperm.slane %v1533, 0
      %v1537 = vadd.f32 %v1501, %v1535
      %v1538 = vadd.f32 %v1502, %v1535
      %v1539 = vadd.f32 %v1503, %v1535
      %v1540 = vadd.f32 %v1504, %v1535
      %v1541 = vadd.f32 %v1505, %v1535
      %v1542 = vadd.f32 %v1506, %v1535
      %v1543 = vadd.f32 %v1507, %v1535
      %v1544 = vadd.f32 %v1508, %v1535
      %v1545 = vadd.f32 %v1509, %v1535
      %v1546 = vadd.f32 %v1510, %v1535
      %v1547 = vadd.f32 %v1511, %v1535
      %v1548 = vadd.f32 %v1512, %v1535
      %v1549 = vadd.f32 %v1513, %v1535
      %v1550 = vadd.f32 %v1514, %v1535
      %v1551 = vadd.f32 %v1515, %v1535
      %v1552 = vadd.f32 %v1516, %v1535
      %v1553 = vadd.f32 %v1517, %v1535
      %v1554 = vadd.f32 %v1518, %v1535
      %v1555 = vadd.f32 %v1519, %v1535
      %v1556 = vadd.f32 %v1520, %v1535
      %v1557 = vadd.f32 %v1521, %v1535
      %v1558 = vadd.f32 %v1522, %v1535
      %v1559 = vadd.f32 %v1523, %v1535
      %v1560 = vadd.f32 %v1524, %v1535
      %v1561 = vadd.f32 %v1525, %v1535
      %v1562 = vadd.f32 %v1526, %v1535
      %v1563 = vadd.f32 %v1527, %v1535
      %v1564 = vadd.f32 %v1528, %v1535
      %v1565 = vadd.f32 %v1529, %v1535
      %v1566 = vadd.f32 %v1530, %v1535
      %v1567 = vadd.f32 %v1531, %v1535
      %v1568 = vadd.f32 %v1532, %v1535
      %v1569 = vpack.c.bf16 %v1538, %v1537
      %v1570 = vpack.c.bf16 %v1540, %v1539
      %v1571 = vpack.c.bf16 %v1542, %v1541
      %v1572 = vpack.c.bf16 %v1544, %v1543
      %v1573 = vpack.c.bf16 %v1546, %v1545
      %v1574 = vpack.c.bf16 %v1548, %v1547
      %v1575 = vpack.c.bf16 %v1550, %v1549
      %v1576 = vpack.c.bf16 %v1552, %v1551
      %v1577 = vpack.c.bf16 %v1554, %v1553
      %v1578 = vpack.c.bf16 %v1556, %v1555
      %v1579 = vpack.c.bf16 %v1558, %v1557
      %v1580 = vpack.c.bf16 %v1560, %v1559
      %v1581 = vpack.c.bf16 %v1562, %v1561
      %v1582 = vpack.c.bf16 %v1564, %v1563
      %v1583 = vpack.c.bf16 %v1566, %v1565
      %v1584 = vpack.c.bf16 %v1568, %v1567
      %v1585 = vld [vmem:[%s6] sm:$0xf]
      %v1586 = vld [vmem:[%s6 + $0x4] sm:$0xf]
      %v1587 = vld [vmem:[%s6 + $0x8] sm:$0xf]
      %v1588 = vld [vmem:[%s6 + $0xc] sm:$0xf]
      %v1589 = vld [vmem:[%s6 + $0x10] sm:$0xf]
      %v1590 = vld [vmem:[%s6 + $0x14] sm:$0xf]
      %v1591 = vld [vmem:[%s6 + $0x18] sm:$0xf]
      %v1592 = vld [vmem:[%s6 + $0x1c] sm:$0xf]
      %v1593 = vld [vmem:[%s7] sm:$0x1]
      %v1595 = vperm.slane %v1593, 0
      %v1605 = vunpack.c.l.b16 %v1585
      %v1606 = vunpack.c.l.b16 %v1586
      %v1607 = vunpack.c.l.b16 %v1587
      %v1608 = vunpack.c.l.b16 %v1588
      %v1609 = vunpack.c.l.b16 %v1589
      %v1610 = vunpack.c.l.b16 %v1590
      %v1611 = vunpack.c.l.b16 %v1591
      %v1612 = vunpack.c.l.b16 %v1592
      %v1613 = vpack.c.b16 %v1606, %v1605
      %v1614 = vpack.c.b16 %v1608, %v1607
      %v1615 = vpack.c.b16 %v1610, %v1609
      %v1616 = vpack.c.b16 %v1612, %v1611
      %v1622 = vsel %vm584, %v1569, 0
      %v1625 = vsel %vm584, %v1570, 0
      %v1628 = vsel %vm584, %v1571, 0
      %v1631 = vsel %vm584, %v1572, 0
      %v1634 = vsel %vm584, %v1573, 0
      %v1637 = vsel %vm584, %v1574, 0
      %v1640 = vsel %vm584, %v1575, 0
      %v1643 = vsel %vm584, %v1576, 0
      %v1646 = vsel %vm584, %v1577, 0
      %v1649 = vsel %vm584, %v1578, 0
      %v1652 = vsel %vm584, %v1579, 0
      %v1655 = vsel %vm584, %v1580, 0
      %v1658 = vsel %vm584, %v1581, 0
      %v1661 = vsel %vm584, %v1582, 0
      %v1664 = vsel %vm584, %v1583, 0
      %v1667 = vsel %vm584, %v1584, 0
      %1669 = vmatpush.bf16.msra.mxu0 0
      %1670 = vmatpush.bf16.msra.mxu0 0
      %1671 = vmatpush.bf16.msra.mxu0 0
      %1672 = vmatpush.bf16.msra.mxu0 0
      %1673 = vmatpush.bf16.msra.mxu0 %v1616
      %1674 = vmatpush.bf16.msra.mxu0 %v1615
      %1675 = vmatpush.bf16.msra.mxu0 %v1614
      %1676 = vmatpush.bf16.msra.mxu0 %v1613
      %1677 = vmatmul.bf16.gmra.mxu0 %v1622
      %v1678 = vpop.f32.mrf.mxu0
      %v1679 = vadd.f32 %v1595, %v1678
      %v1680 = vpop.f32.mrf.mxu0
      %v1681 = vadd.f32 %v1595, %v1680
      %1682 = vmatmul.bf16.gmra.mxu0 %v1625
      %v1683 = vpop.f32.mrf.mxu0
      %v1684 = vadd.f32 %v1595, %v1683
      %v1685 = vpop.f32.mrf.mxu0
      %v1686 = vadd.f32 %v1595, %v1685
      %1687 = vmatmul.bf16.gmra.mxu0 %v1628
      %v1688 = vpop.f32.mrf.mxu0
      %v1689 = vadd.f32 %v1595, %v1688
      %v1690 = vpop.f32.mrf.mxu0
      %v1691 = vadd.f32 %v1595, %v1690
      %1692 = vmatmul.bf16.gmra.mxu0 %v1631
      %v1693 = vpop.f32.mrf.mxu0
      %v1694 = vadd.f32 %v1595, %v1693
      %v1695 = vpop.f32.mrf.mxu0
      %v1696 = vadd.f32 %v1595, %v1695
      %1697 = vmatmul.bf16.gmra.mxu0 %v1634
      %v1698 = vpop.f32.mrf.mxu0
      %v1699 = vadd.f32 %v1595, %v1698
      %v1700 = vpop.f32.mrf.mxu0
      %v1701 = vadd.f32 %v1595, %v1700
      %1702 = vmatmul.bf16.gmra.mxu0 %v1637
      %v1703 = vpop.f32.mrf.mxu0
      %v1704 = vadd.f32 %v1595, %v1703
      %v1705 = vpop.f32.mrf.mxu0
      %v1706 = vadd.f32 %v1595, %v1705
      %1707 = vmatmul.bf16.gmra.mxu0 %v1640
      %v1708 = vpop.f32.mrf.mxu0
      %v1709 = vadd.f32 %v1595, %v1708
      %v1710 = vpop.f32.mrf.mxu0
      %v1711 = vadd.f32 %v1595, %v1710
      %1712 = vmatmul.bf16.gmra.mxu0 %v1643
      %v1713 = vpop.f32.mrf.mxu0
      %v1714 = vadd.f32 %v1595, %v1713
      %v1715 = vpop.f32.mrf.mxu0
      %v1716 = vadd.f32 %v1595, %v1715
      %1717 = vmatmul.bf16.gmra.mxu0 %v1646
      %v1718 = vpop.f32.mrf.mxu0
      %v1719 = vadd.f32 %v1595, %v1718
      %v1720 = vpop.f32.mrf.mxu0
      %v1721 = vadd.f32 %v1595, %v1720
      %1722 = vmatmul.bf16.gmra.mxu0 %v1649
      %v1723 = vpop.f32.mrf.mxu0
      %v1724 = vadd.f32 %v1595, %v1723
      %v1725 = vpop.f32.mrf.mxu0
      %v1726 = vadd.f32 %v1595, %v1725
      %1727 = vmatmul.bf16.gmra.mxu0 %v1652
      %v1728 = vpop.f32.mrf.mxu0
      %v1729 = vadd.f32 %v1595, %v1728
      %v1730 = vpop.f32.mrf.mxu0
      %v1731 = vadd.f32 %v1595, %v1730
      %1732 = vmatmul.bf16.gmra.mxu0 %v1655
      %v1733 = vpop.f32.mrf.mxu0
      %v1734 = vadd.f32 %v1595, %v1733
      %v1735 = vpop.f32.mrf.mxu0
      %v1736 = vadd.f32 %v1595, %v1735
      %1737 = vmatmul.bf16.gmra.mxu0 %v1658
      %v1738 = vpop.f32.mrf.mxu0
      %v1739 = vadd.f32 %v1595, %v1738
      %v1740 = vpop.f32.mrf.mxu0
      %v1741 = vadd.f32 %v1595, %v1740
      %1742 = vmatmul.bf16.gmra.mxu0 %v1661
      %v1743 = vpop.f32.mrf.mxu0
      %v1744 = vadd.f32 %v1595, %v1743
      %v1745 = vpop.f32.mrf.mxu0
      %v1746 = vadd.f32 %v1595, %v1745
      %1747 = vmatmul.bf16.gmra.mxu0 %v1664
      %v1748 = vpop.f32.mrf.mxu0
      %v1749 = vadd.f32 %v1595, %v1748
      %v1750 = vpop.f32.mrf.mxu0
      %v1751 = vadd.f32 %v1595, %v1750
      %1752 = vmatmul.bf16.gmra.mxu0 %v1667
      %v1753 = vpop.f32.mrf.mxu0
      %v1754 = vadd.f32 %v1595, %v1753
      %v1755 = vpop.f32.mrf.mxu0
      %v1756 = vadd.f32 %v1595, %v1755
      %1757 = vdwg.mxu0
      %v1758 = vmul.f32 %v1679, %v1679
      %v1759 = vmul.f32 %v1681, %v1681
      %v1760 = vmul.f32 %v1684, %v1684
      %v1761 = vmul.f32 %v1686, %v1686
      %v1762 = vmul.f32 %v1689, %v1689
      %v1763 = vmul.f32 %v1691, %v1691
      %v1764 = vmul.f32 %v1694, %v1694
      %v1765 = vmul.f32 %v1696, %v1696
      %v1766 = vmul.f32 %v1699, %v1699
      %v1767 = vmul.f32 %v1701, %v1701
      %v1768 = vmul.f32 %v1704, %v1704
      %v1769 = vmul.f32 %v1706, %v1706
      %v1770 = vmul.f32 %v1709, %v1709
      %v1771 = vmul.f32 %v1711, %v1711
      %v1772 = vmul.f32 %v1714, %v1714
      %v1773 = vmul.f32 %v1716, %v1716
      %v1774 = vmul.f32 %v1719, %v1719
      %v1775 = vmul.f32 %v1721, %v1721
      %v1776 = vmul.f32 %v1724, %v1724
      %v1777 = vmul.f32 %v1726, %v1726
      %v1778 = vmul.f32 %v1729, %v1729
      %v1779 = vmul.f32 %v1731, %v1731
      %v1780 = vmul.f32 %v1734, %v1734
      %v1781 = vmul.f32 %v1736, %v1736
      %v1782 = vmul.f32 %v1739, %v1739
      %v1783 = vmul.f32 %v1741, %v1741
      %v1784 = vmul.f32 %v1744, %v1744
      %v1785 = vmul.f32 %v1746, %v1746
      %v1786 = vmul.f32 %v1749, %v1749
      %v1787 = vmul.f32 %v1751, %v1751
      %v1788 = vmul.f32 %v1754, %v1754
      %v1789 = vmul.f32 %v1756, %v1756
      %v1790 = vmul.f32 %v1679, %v1758
      %v1791 = vmul.f32 %v1681, %v1759
      %v1792 = vmul.f32 %v1684, %v1760
      %v1793 = vmul.f32 %v1686, %v1761
      %v1794 = vmul.f32 %v1689, %v1762
      %v1795 = vmul.f32 %v1691, %v1763
      %v1796 = vmul.f32 %v1694, %v1764
      %v1797 = vmul.f32 %v1696, %v1765
      %v1798 = vmul.f32 %v1699, %v1766
      %v1799 = vmul.f32 %v1701, %v1767
      %v1800 = vmul.f32 %v1704, %v1768
      %v1801 = vmul.f32 %v1706, %v1769
      %v1802 = vmul.f32 %v1709, %v1770
      %v1803 = vmul.f32 %v1711, %v1771
      %v1804 = vmul.f32 %v1714, %v1772
      %v1805 = vmul.f32 %v1716, %v1773
      %v1806 = vmul.f32 %v1719, %v1774
      %v1807 = vmul.f32 %v1721, %v1775
      %v1808 = vmul.f32 %v1724, %v1776
      %v1809 = vmul.f32 %v1726, %v1777
      %v1810 = vmul.f32 %v1729, %v1778
      %v1811 = vmul.f32 %v1731, %v1779
      %v1812 = vmul.f32 %v1734, %v1780
      %v1813 = vmul.f32 %v1736, %v1781
      %v1814 = vmul.f32 %v1739, %v1782
      %v1815 = vmul.f32 %v1741, %v1783
      %v1816 = vmul.f32 %v1744, %v1784
      %v1817 = vmul.f32 %v1746, %v1785
      %v1818 = vmul.f32 %v1749, %v1786
      %v1819 = vmul.f32 %v1751, %v1787
      %v1820 = vmul.f32 %v1754, %v1788
      %v1821 = vmul.f32 %v1756, %v1789
      %v1822 = vmul.f32 %v1790, 0.044715
      %v1823 = vmul.f32 %v1791, 0.044715
      %v1824 = vmul.f32 %v1792, 0.044715
      %v1825 = vmul.f32 %v1793, 0.044715
      %v1826 = vmul.f32 %v1794, 0.044715
      %v1827 = vmul.f32 %v1795, 0.044715
      %v1828 = vmul.f32 %v1796, 0.044715
      %v1829 = vmul.f32 %v1797, 0.044715
      %v1830 = vmul.f32 %v1798, 0.044715
      %v1831 = vmul.f32 %v1799, 0.044715
      %v1832 = vmul.f32 %v1800, 0.044715
      %v1833 = vmul.f32 %v1801, 0.044715
      %v1834 = vmul.f32 %v1802, 0.044715
      %v1835 = vmul.f32 %v1803, 0.044715
      %v1836 = vmul.f32 %v1804, 0.044715
      %v1837 = vmul.f32 %v1805, 0.044715
      %v1838 = vmul.f32 %v1806, 0.044715
      %v1839 = vmul.f32 %v1807, 0.044715
      %v1840 = vmul.f32 %v1808, 0.044715
      %v1841 = vmul.f32 %v1809, 0.044715
      %v1842 = vmul.f32 %v1810, 0.044715
      %v1843 = vmul.f32 %v1811, 0.044715
      %v1844 = vmul.f32 %v1812, 0.044715
      %v1845 = vmul.f32 %v1813, 0.044715
      %v1846 = vmul.f32 %v1814, 0.044715
      %v1847 = vmul.f32 %v1815, 0.044715
      %v1848 = vmul.f32 %v1816, 0.044715
      %v1849 = vmul.f32 %v1817, 0.044715
      %v1850 = vmul.f32 %v1818, 0.044715
      %v1851 = vmul.f32 %v1819, 0.044715
      %v1852 = vmul.f32 %v1820, 0.044715
      %v1853 = vmul.f32 %v1821, 0.044715
      %v1854 = vadd.f32 %v1679, %v1822
      %v1855 = vadd.f32 %v1681, %v1823
      %v1856 = vadd.f32 %v1684, %v1824
      %v1857 = vadd.f32 %v1686, %v1825
      %v1858 = vadd.f32 %v1689, %v1826
      %v1859 = vadd.f32 %v1691, %v1827
      %v1860 = vadd.f32 %v1694, %v1828
      %v1861 = vadd.f32 %v1696, %v1829
      %v1862 = vadd.f32 %v1699, %v1830
      %v1863 = vadd.f32 %v1701, %v1831
      %v1864 = vadd.f32 %v1704, %v1832
      %v1865 = vadd.f32 %v1706, %v1833
      %v1866 = vadd.f32 %v1709, %v1834
      %v1867 = vadd.f32 %v1711, %v1835
      %v1868 = vadd.f32 %v1714, %v1836
      %v1869 = vadd.f32 %v1716, %v1837
      %v1870 = vadd.f32 %v1719, %v1838
      %v1871 = vadd.f32 %v1721, %v1839
      %v1872 = vadd.f32 %v1724, %v1840
      %v1873 = vadd.f32 %v1726, %v1841
      %v1874 = vadd.f32 %v1729, %v1842
      %v1875 = vadd.f32 %v1731, %v1843
      %v1876 = vadd.f32 %v1734, %v1844
      %v1877 = vadd.f32 %v1736, %v1845
      %v1878 = vadd.f32 %v1739, %v1846
      %v1879 = vadd.f32 %v1741, %v1847
      %v1880 = vadd.f32 %v1744, %v1848
      %v1881 = vadd.f32 %v1746, %v1849
      %v1882 = vadd.f32 %v1749, %v1850
      %v1883 = vadd.f32 %v1751, %v1851
      %v1884 = vadd.f32 %v1754, %v1852
      %v1885 = vadd.f32 %v1756, %v1853
      %v1886 = vmul.f32 %v1854, 0.7978846
      %v1887 = vmul.f32 %v1855, 0.7978846
      %v1888 = vmul.f32 %v1856, 0.7978846
      %v1889 = vmul.f32 %v1857, 0.7978846
      %v1890 = vmul.f32 %v1858, 0.7978846
      %v1891 = vmul.f32 %v1859, 0.7978846
      %v1892 = vmul.f32 %v1860, 0.7978846
      %v1893 = vmul.f32 %v1861, 0.7978846
      %v1894 = vmul.f32 %v1862, 0.7978846
      %v1895 = vmul.f32 %v1863, 0.7978846
      %v1896 = vmul.f32 %v1864, 0.7978846
      %v1897 = vmul.f32 %v1865, 0.7978846
      %v1898 = vmul.f32 %v1866, 0.7978846
      %v1899 = vmul.f32 %v1867, 0.7978846
      %v1900 = vmul.f32 %v1868, 0.7978846
      %v1901 = vmul.f32 %v1869, 0.7978846
      %v1902 = vmul.f32 %v1870, 0.7978846
      %v1903 = vmul.f32 %v1871, 0.7978846
      %v1904 = vmul.f32 %v1872, 0.7978846
      %v1905 = vmul.f32 %v1873, 0.7978846
      %v1906 = vmul.f32 %v1874, 0.7978846
      %v1907 = vmul.f32 %v1875, 0.7978846
      %v1908 = vmul.f32 %v1876, 0.7978846
      %v1909 = vmul.f32 %v1877, 0.7978846
      %v1910 = vmul.f32 %v1878, 0.7978846
      %v1911 = vmul.f32 %v1879, 0.7978846
      %v1912 = vmul.f32 %v1880, 0.7978846
      %v1913 = vmul.f32 %v1881, 0.7978846
      %v1914 = vmul.f32 %v1882, 0.7978846
      %v1915 = vmul.f32 %v1883, 0.7978846
      %v1916 = vmul.f32 %v1884, 0.7978846
      %v1917 = vmul.f32 %v1885, 0.7978846
      %v1918 = vtanh.pop %v1886
      %v1919 = vtanh.pop %v1887
      %v1920 = vtanh.pop %v1888
      %v1921 = vtanh.pop %v1889
      %v1922 = vtanh.pop %v1890
      %v1923 = vtanh.pop %v1891
      %v1924 = vtanh.pop %v1892
      %v1925 = vtanh.pop %v1893
      %v1926 = vtanh.pop %v1894
      %v1927 = vtanh.pop %v1895
      %v1928 = vtanh.pop %v1896
      %v1929 = vtanh.pop %v1897
      %v1930 = vtanh.pop %v1898
      %v1931 = vtanh.pop %v1899
      %v1932 = vtanh.pop %v1900
      %v1933 = vtanh.pop %v1901
      %v1934 = vtanh.pop %v1902
      %v1935 = vtanh.pop %v1903
      %v1936 = vtanh.pop %v1904
      %v1937 = vtanh.pop %v1905
      %v1938 = vtanh.pop %v1906
      %v1939 = vtanh.pop %v1907
      %v1940 = vtanh.pop %v1908
      %v1941 = vtanh.pop %v1909
      %v1942 = vtanh.pop %v1910
      %v1943 = vtanh.pop %v1911
      %v1944 = vtanh.pop %v1912
      %v1945 = vtanh.pop %v1913
      %v1946 = vtanh.pop %v1914
      %v1947 = vtanh.pop %v1915
      %v1948 = vtanh.pop %v1916
      %v1949 = vtanh.pop %v1917
      %v1950 = vadd.f32 %v1918, 1.0
      %v1951 = vadd.f32 %v1919, 1.0
      %v1952 = vadd.f32 %v1920, 1.0
      %v1953 = vadd.f32 %v1921, 1.0
      %v1954 = vadd.f32 %v1922, 1.0
      %v1955 = vadd.f32 %v1923, 1.0
      %v1956 = vadd.f32 %v1924, 1.0
      %v1957 = vadd.f32 %v1925, 1.0
      %v1958 = vadd.f32 %v1926, 1.0
      %v1959 = vadd.f32 %v1927, 1.0
      %v1960 = vadd.f32 %v1928, 1.0
      %v1961 = vadd.f32 %v1929, 1.0
      %v1962 = vadd.f32 %v1930, 1.0
      %v1963 = vadd.f32 %v1931, 1.0
      %v1964 = vadd.f32 %v1932, 1.0
      %v1965 = vadd.f32 %v1933, 1.0
      %v1966 = vadd.f32 %v1934, 1.0
      %v1967 = vadd.f32 %v1935, 1.0
      %v1968 = vadd.f32 %v1936, 1.0
      %v1969 = vadd.f32 %v1937, 1.0
      %v1970 = vadd.f32 %v1938, 1.0
      %v1971 = vadd.f32 %v1939, 1.0
      %v1972 = vadd.f32 %v1940, 1.0
      %v1973 = vadd.f32 %v1941, 1.0
      %v1974 = vadd.f32 %v1942, 1.0
      %v1975 = vadd.f32 %v1943, 1.0
      %v1976 = vadd.f32 %v1944, 1.0
      %v1977 = vadd.f32 %v1945, 1.0
      %v1978 = vadd.f32 %v1946, 1.0
      %v1979 = vadd.f32 %v1947, 1.0
      %v1980 = vadd.f32 %v1948, 1.0
      %v1981 = vadd.f32 %v1949, 1.0
      %v1982 = vmul.f32 %v1950, 0.5
      %v1983 = vmul.f32 %v1951, 0.5
      %v1984 = vmul.f32 %v1952, 0.5
      %v1985 = vmul.f32 %v1953, 0.5
      %v1986 = vmul.f32 %v1954, 0.5
      %v1987 = vmul.f32 %v1955, 0.5
      %v1988 = vmul.f32 %v1956, 0.5
      %v1989 = vmul.f32 %v1957, 0.5
      %v1990 = vmul.f32 %v1958, 0.5
      %v1991 = vmul.f32 %v1959, 0.5
      %v1992 = vmul.f32 %v1960, 0.5
      %v1993 = vmul.f32 %v1961, 0.5
      %v1994 = vmul.f32 %v1962, 0.5
      %v1995 = vmul.f32 %v1963, 0.5
      %v1996 = vmul.f32 %v1964, 0.5
      %v1997 = vmul.f32 %v1965, 0.5
      %v1998 = vmul.f32 %v1966, 0.5
      %v1999 = vmul.f32 %v1967, 0.5
      %v2000 = vmul.f32 %v1968, 0.5
      %v2001 = vmul.f32 %v1969, 0.5
      %v2002 = vmul.f32 %v1970, 0.5
      %v2003 = vmul.f32 %v1971, 0.5
      %v2004 = vmul.f32 %v1972, 0.5
      %v2005 = vmul.f32 %v1973, 0.5
      %v2006 = vmul.f32 %v1974, 0.5
      %v2007 = vmul.f32 %v1975, 0.5
      %v2008 = vmul.f32 %v1976, 0.5
      %v2009 = vmul.f32 %v1977, 0.5
      %v2010 = vmul.f32 %v1978, 0.5
      %v2011 = vmul.f32 %v1979, 0.5
      %v2012 = vmul.f32 %v1980, 0.5
      %v2013 = vmul.f32 %v1981, 0.5
      %v2014 = vmul.f32 %v1679, %v1982
      %v2015 = vmul.f32 %v1681, %v1983
      %v2016 = vmul.f32 %v1684, %v1984
      %v2017 = vmul.f32 %v1686, %v1985
      %v2018 = vmul.f32 %v1689, %v1986
      %v2019 = vmul.f32 %v1691, %v1987
      %v2020 = vmul.f32 %v1694, %v1988
      %v2021 = vmul.f32 %v1696, %v1989
      %v2022 = vmul.f32 %v1699, %v1990
      %v2023 = vmul.f32 %v1701, %v1991
      %v2024 = vmul.f32 %v1704, %v1992
      %v2025 = vmul.f32 %v1706, %v1993
      %v2026 = vmul.f32 %v1709, %v1994
      %v2027 = vmul.f32 %v1711, %v1995
      %v2028 = vmul.f32 %v1714, %v1996
      %v2029 = vmul.f32 %v1716, %v1997
      %v2030 = vmul.f32 %v1719, %v1998
      %v2031 = vmul.f32 %v1721, %v1999
      %v2032 = vmul.f32 %v1724, %v2000
      %v2033 = vmul.f32 %v1726, %v2001
      %v2034 = vmul.f32 %v1729, %v2002
      %v2035 = vmul.f32 %v1731, %v2003
      %v2036 = vmul.f32 %v1734, %v2004
      %v2037 = vmul.f32 %v1736, %v2005
      %v2038 = vmul.f32 %v1739, %v2006
      %v2039 = vmul.f32 %v1741, %v2007
      %v2040 = vmul.f32 %v1744, %v2008
      %v2041 = vmul.f32 %v1746, %v2009
      %v2042 = vmul.f32 %v1749, %v2010
      %v2043 = vmul.f32 %v1751, %v2011
      %v2044 = vmul.f32 %v1754, %v2012
      %v2045 = vmul.f32 %v1756, %v2013
      %v2046 = vpack.c.bf16 %v2015, %v2014
      %v2047 = vpack.c.bf16 %v2017, %v2016
      %v2048 = vpack.c.bf16 %v2019, %v2018
      %v2049 = vpack.c.bf16 %v2021, %v2020
      %v2050 = vpack.c.bf16 %v2023, %v2022
      %v2051 = vpack.c.bf16 %v2025, %v2024
      %v2052 = vpack.c.bf16 %v2027, %v2026
      %v2053 = vpack.c.bf16 %v2029, %v2028
      %v2054 = vpack.c.bf16 %v2031, %v2030
      %v2055 = vpack.c.bf16 %v2033, %v2032
      %v2056 = vpack.c.bf16 %v2035, %v2034
      %v2057 = vpack.c.bf16 %v2037, %v2036
      %v2058 = vpack.c.bf16 %v2039, %v2038
      %v2059 = vpack.c.bf16 %v2041, %v2040
      %v2060 = vpack.c.bf16 %v2043, %v2042
      %v2061 = vpack.c.bf16 %v2045, %v2044
      %v2062 = vld [vmem:[%s8] sm:$0xf]
      %v2063 = vld [vmem:[%s8 + $0x4] sm:$0xf]
      %v2064 = vld [vmem:[%s8 + $0x8] sm:$0xf]
      %v2065 = vld [vmem:[%s8 + $0xc] sm:$0xf]
      %v2066 = vld [vmem:[%s8 + $0x10] sm:$0xf]
      %v2067 = vld [vmem:[%s8 + $0x14] sm:$0xf]
      %v2068 = vld [vmem:[%s8 + $0x18] sm:$0xf]
      %v2069 = vld [vmem:[%s8 + $0x1c] sm:$0xf]
      %v2070 = vld [vmem:[%s8 + $0x20] sm:$0xf]
      %v2071 = vld [vmem:[%s8 + $0x24] sm:$0xf]
      %v2072 = vld [vmem:[%s8 + $0x28] sm:$0xf]
      %v2073 = vld [vmem:[%s8 + $0x2c] sm:$0xf]
      %v2074 = vld [vmem:[%s8 + $0x30] sm:$0xf]
      %v2075 = vld [vmem:[%s8 + $0x34] sm:$0xf]
      %v2076 = vld [vmem:[%s8 + $0x38] sm:$0xf]
      %v2077 = vld [vmem:[%s8 + $0x3c] sm:$0xf]
      %v2094 = vunpack.c.l.b16 %v2062
      %v2095 = vunpack.c.l.b16 %v2063
      %v2096 = vunpack.c.l.b16 %v2064
      %v2097 = vunpack.c.l.b16 %v2065
      %v2098 = vunpack.c.l.b16 %v2066
      %v2099 = vunpack.c.l.b16 %v2067
      %v2100 = vunpack.c.l.b16 %v2068
      %v2101 = vunpack.c.l.b16 %v2069
      %v2102 = vunpack.c.l.b16 %v2070
      %v2103 = vunpack.c.l.b16 %v2071
      %v2104 = vunpack.c.l.b16 %v2072
      %v2105 = vunpack.c.l.b16 %v2073
      %v2106 = vunpack.c.l.b16 %v2074
      %v2107 = vunpack.c.l.b16 %v2075
      %v2108 = vunpack.c.l.b16 %v2076
      %v2109 = vunpack.c.l.b16 %v2077
      %v2110 = vpack.c.b16 %v2095, %v2094
      %v2111 = vpack.c.b16 %v2097, %v2096
      %v2112 = vpack.c.b16 %v2099, %v2098
      %v2113 = vpack.c.b16 %v2101, %v2100
      %v2114 = vpack.c.b16 %v2103, %v2102
      %v2115 = vpack.c.b16 %v2105, %v2104
      %v2116 = vpack.c.b16 %v2107, %v2106
      %v2117 = vpack.c.b16 %v2109, %v2108
      %2126 = vmatpush.bf16.msra.mxu0 %v2117
      %2127 = vmatpush.bf16.msra.mxu0 %v2116
      %2128 = vmatpush.bf16.msra.mxu0 %v2115
      %2129 = vmatpush.bf16.msra.mxu0 %v2114
      %2130 = vmatpush.bf16.msra.mxu0 %v2113
      %2131 = vmatpush.bf16.msra.mxu0 %v2112
      %2132 = vmatpush.bf16.msra.mxu0 %v2111
      %2133 = vmatpush.bf16.msra.mxu0 %v2110
      %2134 = vmatmul.bf16.gmra.mxu0 %v2046
      %v2135 = vpop.f32.mrf.mxu0
      %v2136 = vadd.f32 0.0, %v2135
      %v2137 = vpop.f32.mrf.mxu0
      %v2138 = vadd.f32 0.0, %v2137
      %2139 = vmatmul.bf16.gmra.mxu0 %v2047
      %v2140 = vpop.f32.mrf.mxu0
      %v2141 = vadd.f32 0.0, %v2140
      %v2142 = vpop.f32.mrf.mxu0
      %v2143 = vadd.f32 0.0, %v2142
      %2144 = vmatmul.bf16.gmra.mxu0 %v2048
      %v2145 = vpop.f32.mrf.mxu0
      %v2146 = vadd.f32 0.0, %v2145
      %v2147 = vpop.f32.mrf.mxu0
      %v2148 = vadd.f32 0.0, %v2147
      %2149 = vmatmul.bf16.gmra.mxu0 %v2049
      %v2150 = vpop.f32.mrf.mxu0
      %v2151 = vadd.f32 0.0, %v2150
      %v2152 = vpop.f32.mrf.mxu0
      %v2153 = vadd.f32 0.0, %v2152
      %2154 = vmatmul.bf16.gmra.mxu0 %v2050
      %v2155 = vpop.f32.mrf.mxu0
      %v2156 = vadd.f32 0.0, %v2155
      %v2157 = vpop.f32.mrf.mxu0
      %v2158 = vadd.f32 0.0, %v2157
      %2159 = vmatmul.bf16.gmra.mxu0 %v2051
      %v2160 = vpop.f32.mrf.mxu0
      %v2161 = vadd.f32 0.0, %v2160
      %v2162 = vpop.f32.mrf.mxu0
      %v2163 = vadd.f32 0.0, %v2162
      %2164 = vmatmul.bf16.gmra.mxu0 %v2052
      %v2165 = vpop.f32.mrf.mxu0
      %v2166 = vadd.f32 0.0, %v2165
      %v2167 = vpop.f32.mrf.mxu0
      %v2168 = vadd.f32 0.0, %v2167
      %2169 = vmatmul.bf16.gmra.mxu0 %v2053
      %v2170 = vpop.f32.mrf.mxu0
      %v2171 = vadd.f32 0.0, %v2170
      %v2172 = vpop.f32.mrf.mxu0
      %v2173 = vadd.f32 0.0, %v2172
      %2174 = vmatmul.bf16.gmra.mxu0 %v2054
      %v2175 = vpop.f32.mrf.mxu0
      %v2176 = vadd.f32 0.0, %v2175
      %v2177 = vpop.f32.mrf.mxu0
      %v2178 = vadd.f32 0.0, %v2177
      %2179 = vmatmul.bf16.gmra.mxu0 %v2055
      %v2180 = vpop.f32.mrf.mxu0
      %v2181 = vadd.f32 0.0, %v2180
      %v2182 = vpop.f32.mrf.mxu0
      %v2183 = vadd.f32 0.0, %v2182
      %2184 = vmatmul.bf16.gmra.mxu0 %v2056
      %v2185 = vpop.f32.mrf.mxu0
      %v2186 = vadd.f32 0.0, %v2185
      %v2187 = vpop.f32.mrf.mxu0
      %v2188 = vadd.f32 0.0, %v2187
      %2189 = vmatmul.bf16.gmra.mxu0 %v2057
      %v2190 = vpop.f32.mrf.mxu0
      %v2191 = vadd.f32 0.0, %v2190
      %v2192 = vpop.f32.mrf.mxu0
      %v2193 = vadd.f32 0.0, %v2192
      %2194 = vmatmul.bf16.gmra.mxu0 %v2058
      %v2195 = vpop.f32.mrf.mxu0
      %v2196 = vadd.f32 0.0, %v2195
      %v2197 = vpop.f32.mrf.mxu0
      %v2198 = vadd.f32 0.0, %v2197
      %2199 = vmatmul.bf16.gmra.mxu0 %v2059
      %v2200 = vpop.f32.mrf.mxu0
      %v2201 = vadd.f32 0.0, %v2200
      %v2202 = vpop.f32.mrf.mxu0
      %v2203 = vadd.f32 0.0, %v2202
      %2204 = vmatmul.bf16.gmra.mxu0 %v2060
      %v2205 = vpop.f32.mrf.mxu0
      %v2206 = vadd.f32 0.0, %v2205
      %v2207 = vpop.f32.mrf.mxu0
      %v2208 = vadd.f32 0.0, %v2207
      %2209 = vmatmul.bf16.gmra.mxu0 %v2061
      %v2210 = vpop.f32.mrf.mxu0
      %v2211 = vadd.f32 0.0, %v2210
      %v2212 = vpop.f32.mrf.mxu0
      %v2213 = vadd.f32 0.0, %v2212
      %2214 = vdwg.mxu0
      %v2215 = vadd.f32 %v754, %v2136
      %v2216 = vadd.f32 %v755, %v2138
      %v2217 = vadd.f32 %v756, %v2141
      %v2218 = vadd.f32 %v757, %v2143
      %v2219 = vadd.f32 %v758, %v2146
      %v2220 = vadd.f32 %v759, %v2148
      %v2221 = vadd.f32 %v760, %v2151
      %v2222 = vadd.f32 %v761, %v2153
      %v2223 = vadd.f32 %v762, %v2156
      %v2224 = vadd.f32 %v763, %v2158
      %v2225 = vadd.f32 %v764, %v2161
      %v2226 = vadd.f32 %v765, %v2163
      %v2227 = vadd.f32 %v766, %v2166
      %v2228 = vadd.f32 %v767, %v2168
      %v2229 = vadd.f32 %v768, %v2171
      %v2230 = vadd.f32 %v769, %v2173
      %v2231 = vadd.f32 %v770, %v2176
      %v2232 = vadd.f32 %v771, %v2178
      %v2233 = vadd.f32 %v772, %v2181
      %v2234 = vadd.f32 %v773, %v2183
      %v2235 = vadd.f32 %v774, %v2186
      %v2236 = vadd.f32 %v775, %v2188
      %v2237 = vadd.f32 %v776, %v2191
      %v2238 = vadd.f32 %v777, %v2193
      %v2239 = vadd.f32 %v778, %v2196
      %v2240 = vadd.f32 %v779, %v2198
      %v2241 = vadd.f32 %v780, %v2201
      %v2242 = vadd.f32 %v781, %v2203
      %v2243 = vadd.f32 %v782, %v2206
      %v2244 = vadd.f32 %v783, %v2208
      %v2245 = vadd.f32 %v784, %v2211
      %v2246 = vadd.f32 %v785, %v2213
      %v2247 = vld [vmem:[%s9] sm:$0x1]
      %v2249 = vperm.slane %v2247, 0
      %v2251 = vadd.f32 %v2215, %v2249
      %v2252 = vadd.f32 %v2216, %v2249
      %v2253 = vadd.f32 %v2217, %v2249
      %v2254 = vadd.f32 %v2218, %v2249
      %v2255 = vadd.f32 %v2219, %v2249
      %v2256 = vadd.f32 %v2220, %v2249
      %v2257 = vadd.f32 %v2221, %v2249
      %v2258 = vadd.f32 %v2222, %v2249
      %v2259 = vadd.f32 %v2223, %v2249
      %v2260 = vadd.f32 %v2224, %v2249
      %v2261 = vadd.f32 %v2225, %v2249
      %v2262 = vadd.f32 %v2226, %v2249
      %v2263 = vadd.f32 %v2227, %v2249
      %v2264 = vadd.f32 %v2228, %v2249
      %v2265 = vadd.f32 %v2229, %v2249
      %v2266 = vadd.f32 %v2230, %v2249
      %v2267 = vadd.f32 %v2231, %v2249
      %v2268 = vadd.f32 %v2232, %v2249
      %v2269 = vadd.f32 %v2233, %v2249
      %v2270 = vadd.f32 %v2234, %v2249
      %v2271 = vadd.f32 %v2235, %v2249
      %v2272 = vadd.f32 %v2236, %v2249
      %v2273 = vadd.f32 %v2237, %v2249
      %v2274 = vadd.f32 %v2238, %v2249
      %v2275 = vadd.f32 %v2239, %v2249
      %v2276 = vadd.f32 %v2240, %v2249
      %v2277 = vadd.f32 %v2241, %v2249
      %v2278 = vadd.f32 %v2242, %v2249
      %v2279 = vadd.f32 %v2243, %v2249
      %v2280 = vadd.f32 %v2244, %v2249
      %v2281 = vadd.f32 %v2245, %v2249
      %v2282 = vadd.f32 %v2246, %v2249
      %2283 = vst.msk [vmem:[%s433] sm:$0xff] %vm584, %v2251
      %2284 = vst.msk [vmem:[%s433 + $0x8] sm:$0xff] %vm584, %v2252
      %2285 = vst.msk [vmem:[%s433 + $0x10] sm:$0xff] %vm584, %v2253
      %2286 = vst.msk [vmem:[%s433 + $0x18] sm:$0xff] %vm584, %v2254
      %2287 = vst.msk [vmem:[%s433 + $0x20] sm:$0xff] %vm584, %v2255
      %2288 = vst.msk [vmem:[%s433 + $0x28] sm:$0xff] %vm584, %v2256
      %2289 = vst.msk [vmem:[%s433 + $0x30] sm:$0xff] %vm584, %v2257
      %2290 = vst.msk [vmem:[%s433 + $0x38] sm:$0xff] %vm584, %v2258
      %2291 = vst.msk [vmem:[%s433 + $0x40] sm:$0xff] %vm584, %v2259
      %2292 = vst.msk [vmem:[%s433 + $0x48] sm:$0xff] %vm584, %v2260
      %2293 = vst.msk [vmem:[%s433 + $0x50] sm:$0xff] %vm584, %v2261
      %2294 = vst.msk [vmem:[%s433 + $0x58] sm:$0xff] %vm584, %v2262
      %2295 = vst.msk [vmem:[%s433 + $0x60] sm:$0xff] %vm584, %v2263
      %2296 = vst.msk [vmem:[%s433 + $0x68] sm:$0xff] %vm584, %v2264
      %2297 = vst.msk [vmem:[%s433 + $0x70] sm:$0xff] %vm584, %v2265
      %2298 = vst.msk [vmem:[%s433 + $0x78] sm:$0xff] %vm584, %v2266
      %2299 = vst.msk [vmem:[%s433 + $0x80] sm:$0xff] %vm584, %v2267
      %2300 = vst.msk [vmem:[%s433 + $0x88] sm:$0xff] %vm584, %v2268
      %2301 = vst.msk [vmem:[%s433 + $0x90] sm:$0xff] %vm584, %v2269
      %2302 = vst.msk [vmem:[%s433 + $0x98] sm:$0xff] %vm584, %v2270
      %2303 = vst.msk [vmem:[%s433 + $0xa0] sm:$0xff] %vm584, %v2271
      %2304 = vst.msk [vmem:[%s433 + $0xa8] sm:$0xff] %vm584, %v2272
      %2305 = vst.msk [vmem:[%s433 + $0xb0] sm:$0xff] %vm584, %v2273
      %2306 = vst.msk [vmem:[%s433 + $0xb8] sm:$0xff] %vm584, %v2274
      %2307 = vst.msk [vmem:[%s433 + $0xc0] sm:$0xff] %vm584, %v2275
      %2308 = vst.msk [vmem:[%s433 + $0xc8] sm:$0xff] %vm584, %v2276
      %2309 = vst.msk [vmem:[%s433 + $0xd0] sm:$0xff] %vm584, %v2277
      %2310 = vst.msk [vmem:[%s433 + $0xd8] sm:$0xff] %vm584, %v2278
      %2311 = vst.msk [vmem:[%s433 + $0xe0] sm:$0xff] %vm584, %v2279
      %2312 = vst.msk [vmem:[%s433 + $0xe8] sm:$0xff] %vm584, %v2280
      %2313 = vst.msk [vmem:[%s433 + $0xf0] sm:$0xff] %vm584, %v2281
      %2314 = vst.msk [vmem:[%s433 + $0xf8] sm:$0xff] %vm584, %v2282
      %s2315 = smul.u32 32, %s26
      %p2316 = scmp.lt.s32.totalorder %s25, 1
      %s2317 = scalar_select %p2316, %s25, 1
      %p2318 = scmp.lt.s32.totalorder %s2315, 31
      %s2319 = scalar_select %p2318, %s2315, 31
      %s2320 = smul.addr %s2317, 32
      %s2321 = sadd.s32 %s2319, %s2320
      %s2322 = smul.addr %s2321, 8
      %s2323 = scalar_lea.vmem %s10, %s2322
      // Predicated region
      $region61: #{ocab_forward.5} parent=59 // pred_check
        %p2324 = pneg %p277
      $region62: #{ocab_forward.5} parent=59 // pred_check_branch
        %2326 = sbr.rel (%p2324) target = $region64
      $region63: #{ocab_forward.5} parent=59 // pred_region
        %s2327 = smul.u32 32, %s26
      $region64: #{ocab_forward.5} parent=59 // pred_fallthru
        _
    $region60: #{ocab_forward.5} parent=5 // pred_fallthru
      _
    %p2328 = scmp.le.s32.totalorder 2, %s16
    // Predicated region
    $region65: #{ocab_forward.5} parent=5 // pred_check
      %p2329 = pneg %p2328
    $region66: #{ocab_forward.5} parent=5 // pred_check_branch
      %2331 = sbr.rel (%p2329) target = $region68
    $region67: #{ocab_forward.5} parent=5 // pred_region
      %s2332 = ssub.s32 %s16, 2
      // Predicated region
      $region69: #{ocab_forward.5} parent=67 // pred_check
        %p2333 = pneg %p283
      $region70: #{ocab_forward.5} parent=67 // pred_check_branch
        %2335 = sbr.rel (%p2333) target = $region72
      $region71: #{ocab_forward.5} parent=67 // pred_region
        %s2336 = smul.u32 32, %s28
        %p2337 = scmp.lt.s32.totalorder %s27, 1
        %s2338 = scalar_select %p2337, %s27, 1
        %p2339 = scmp.lt.s32.totalorder %s2336, 31
        %s2340 = scalar_select %p2339, %s2336, 31
        %s2341 = smul.addr %s2338, 32
        %s2342 = sadd.s32 %s2340, %s2341
        %s2343 = smul.addr %s2342, 8
        %s2344 = scalar_lea.vmem %s10, %s2343
      $region72: #{ocab_forward.5} parent=67 // pred_fallthru
        _
    $region68: #{ocab_forward.5} parent=5 // pred_fallthru
      _
  $region6: #{ocab_forward.5} parent=0 // loop_footer
    %s20 = sadd.s32 1, %s16
  $region7: #{ocab_forward.5} parent=0 // loop_footer_branch
    %15 = sbr.rel target = $region3
  $region8: #{ocab_forward.5} parent=0 // loop_exit
    _

// kernel: ocab_forward.4
$region0: #{ocab_forward.4}
  #allocation0 [shape = 'u32[]', space=smem, size = 0x4, offset = 0x4, fixed_abs, tag = 'smem constant byte address 0x4 - core index']
  #allocation1 [shape = 'u32[72,128]{1,0:T(1,128)}', space=vmem, size = 0x9000, scoped, tag = 'internal scratch']
  %s0 = inlined_call_operand.vmem [shape: bf16[8,64,64], index: 0, kind: input, shape index: {}]
  %s1 = inlined_call_operand.vmem [shape: bf16[8,144,64], index: 1, kind: input, shape index: {}]
  %s2 = inlined_call_operand.vmem [shape: bf16[8,144,64], index: 2, kind: input, shape index: {}]
  %s3 = inlined_call_operand.vmem [shape: f32[2,64,144], index: 3, kind: input, shape index: {}]
  %s4 = inlined_call_operand.vmem [shape: bf16[8,64,64], index: 4, kind: output, shape index: {}]
  %s5 = sld [smem:[#allocation0]]
  $region49: #{ocab_forward.4} parent=0
    _
  %s7 = ssub.s32 1, %s5
  %s8 = scalar_select 0, %s7, %s5
  loop: start=0, step=1, limit=4
  $region2: #{ocab_forward.4} parent=0 // loop_pre_header
    _
  $region3: #{ocab_forward.4} parent=0 // loop_header
    %s10 = sphi 0, %s14
    %p11 = scmp.ge.s32.totalorder %s10, 4
    %s20 = sphi 0, %s22
    %s23 = sphi 0, %s20
    %s24 = sphi 0, %s23
    %s40 = sphi 0, %s24
    %s46 = sphi 0, %s48
    %s49 = sphi 0, %s46
    %s50 = sphi 0, %s49
    %s66 = sphi 0, %s50
    %s72 = sphi 0, %s74
    %s75 = sphi 0, %s72
    %s76 = sphi 0, %s75
    %s92 = sphi 0, %s76
    %s96 = sphi 0, %s96
    %s98 = sphi 0, %s96
    %s99 = sphi 0, %s98
    %s113 = sphi 0, %s99
    %s119 = sphi 0, %s121
    %s122 = sphi 0, %s119
    %s123 = sphi 0, %s122
    %s139 = sphi 0, %s123
  $region4: #{ocab_forward.4} parent=0 // loop_header_branch
    %13 = sbr.rel (%p11) target = $region8
  $region5: #{ocab_forward.4} parent=0 // loop_body
    %s15 = ssub.s32 %s10, 1
    %s16 = ssub.s32 %s10, 2
    %s17 = sadd.s32 %s10, 1
    %s18 = ssub.s32 %s10, %s17
    %p19 = scmp.eq.s32.totalorder %s18, 0
    %s21 = sadd.s32 %s20, 1
    %s22 = scalar_select %p19, %s20, %s21
    %p25 = pneg %p19
    %p26 = scmp.eq.s32.totalorder %s10, 1
    %p27 = por %p25, %p26
    %p28 = scmp.ne.s32.totalorder %s20, %s23
    %p29 = scmp.eq.s32.totalorder %s10, 0
    %p30 = por %p28, %p29
    %p31 = scmp.ne.s32.totalorder %s20, %s23
    %p32 = scmp.eq.s32.totalorder %s15, 1
    %p33 = por %p31, %p32
    %p34 = scmp.ne.s32.totalorder %s23, %s24
    %p35 = scmp.eq.s32.totalorder %s15, 0
    %p36 = por %p34, %p35
    %p37 = scmp.ne.s32.totalorder %s23, %s24
    %p38 = scmp.eq.s32.totalorder %s16, 1
    %p39 = por %p37, %p38
    %p41 = scmp.ne.s32.totalorder %s24, %s40
    %p42 = scmp.eq.s32.totalorder %s16, 0
    %p43 = por %p41, %p42
    %s44 = ssub.s32 %s10, %s17
    %p45 = scmp.eq.s32.totalorder %s44, 0
    %s47 = sadd.s32 %s46, 1
    %s48 = scalar_select %p45, %s46, %s47
    %p51 = pneg %p45
    %p52 = scmp.eq.s32.totalorder %s10, 1
    %p53 = por %p51, %p52
    %p54 = scmp.ne.s32.totalorder %s46, %s49
    %p55 = scmp.eq.s32.totalorder %s10, 0
    %p56 = por %p54, %p55
    %p57 = scmp.ne.s32.totalorder %s46, %s49
    %p58 = scmp.eq.s32.totalorder %s15, 1
    %p59 = por %p57, %p58
    %p60 = scmp.ne.s32.totalorder %s49, %s50
    %p61 = scmp.eq.s32.totalorder %s15, 0
    %p62 = por %p60, %p61
    %p63 = scmp.ne.s32.totalorder %s49, %s50
    %p64 = scmp.eq.s32.totalorder %s16, 1
    %p65 = por %p63, %p64
    %p67 = scmp.ne.s32.totalorder %s50, %s66
    %p68 = scmp.eq.s32.totalorder %s16, 0
    %p69 = por %p67, %p68
    %s70 = ssub.s32 %s10, %s17
    %p71 = scmp.eq.s32.totalorder %s70, 0
    %s73 = sadd.s32 %s72, 1
    %s74 = scalar_select %p71, %s72, %s73
    %p77 = pneg %p71
    %p78 = scmp.eq.s32.totalorder %s10, 1
    %p79 = por %p77, %p78
    %p80 = scmp.ne.s32.totalorder %s72, %s75
    %p81 = scmp.eq.s32.totalorder %s10, 0
    %p82 = por %p80, %p81
    %p83 = scmp.ne.s32.totalorder %s72, %s75
    %p84 = scmp.eq.s32.totalorder %s15, 1
    %p85 = por %p83, %p84
    %p86 = scmp.ne.s32.totalorder %s75, %s76
    %p87 = scmp.eq.s32.totalorder %s15, 0
    %p88 = por %p86, %p87
    %p89 = scmp.ne.s32.totalorder %s75, %s76
    %p90 = scmp.eq.s32.totalorder %s16, 1
    %p91 = por %p89, %p90
    %p93 = scmp.ne.s32.totalorder %s76, %s92
    %p94 = scmp.eq.s32.totalorder %s16, 0
    %p95 = por %p93, %p94
    %s97 = sadd.s32 %s96, 1
    %p100 = scmp.eq.s32.totalorder %s10, 1
    %p101 = scmp.ne.s32.totalorder %s96, %s98
    %p102 = scmp.eq.s32.totalorder %s10, 0
    %p103 = por %p101, %p102
    %p104 = scmp.ne.s32.totalorder %s96, %s98
    %p105 = scmp.eq.s32.totalorder %s15, 1
    %p106 = por %p104, %p105
    %p107 = scmp.ne.s32.totalorder %s98, %s99
    %p108 = scmp.eq.s32.totalorder %s15, 0
    %p109 = por %p107, %p108
    %p110 = scmp.ne.s32.totalorder %s98, %s99
    %p111 = scmp.eq.s32.totalorder %s16, 1
    %p112 = por %p110, %p111
    %p114 = scmp.ne.s32.totalorder %s99, %s113
    %p115 = scmp.eq.s32.totalorder %s16, 0
    %p116 = por %p114, %p115
    %s117 = ssub.s32 %s10, %s17
    %p118 = scmp.eq.s32.totalorder %s117, 0
    %s120 = sadd.s32 %s119, 1
    %s121 = scalar_select %p118, %s119, %s120
    %p124 = pneg %p118
    %p125 = scmp.eq.s32.totalorder %s10, 1
    %p126 = por %p124, %p125
    %p127 = scmp.ne.s32.totalorder %s119, %s122
    %p128 = scmp.eq.s32.totalorder %s10, 0
    %p129 = por %p127, %p128
    %p130 = scmp.ne.s32.totalorder %s119, %s122
    %p131 = scmp.eq.s32.totalorder %s15, 1
    %p132 = por %p130, %p131
    %p133 = scmp.ne.s32.totalorder %s122, %s123
    %p134 = scmp.eq.s32.totalorder %s15, 0
    %p135 = por %p133, %p134
    %p136 = scmp.ne.s32.totalorder %s122, %s123
    %p137 = scmp.eq.s32.totalorder %s16, 1
    %p138 = por %p136, %p137
    %p140 = scmp.ne.s32.totalorder %s123, %s139
    %p141 = scmp.eq.s32.totalorder %s16, 0
    %p142 = por %p140, %p141
    %p143 = scmp.le.s32.totalorder 1, %s10
    %p144 = scmp.lt.s32.totalorder %s10, 3
    %p145 = pnand %p143, %p144
    %p146 = pneg %p145
    // Predicated region
    $region9: #{ocab_forward.4} parent=5 // pred_check
      _
    $region10: #{ocab_forward.4} parent=5 // pred_check_branch
      %148 = sbr.rel (%p145) target = $region12
    $region11: #{ocab_forward.4} parent=5 // pred_region
      %s149 = ssub.s32 %s10, 1
      // Predicated region
      $region13: #{ocab_forward.4} parent=11 // pred_check
        %p150 = pneg %p109
      $region14: #{ocab_forward.4} parent=11 // pred_check_branch
        %152 = sbr.rel (%p150) target = $region16
      $region15: #{ocab_forward.4} parent=11 // pred_region
        _
      $region16: #{ocab_forward.4} parent=11 // pred_fallthru
        _
    $region12: #{ocab_forward.4} parent=5 // pred_fallthru
      _
    %p153 = scmp.lt.s32.totalorder %s10, 2
    // Predicated region
    $region17: #{ocab_forward.4} parent=5 // pred_check
      %p154 = pneg %p153
    $region18: #{ocab_forward.4} parent=5 // pred_check_branch
      %156 = sbr.rel (%p154) target = $region20
    $region19: #{ocab_forward.4} parent=5 // pred_region
      // Predicated region
      $region21: #{ocab_forward.4} parent=19 // pred_check
        %p157 = pneg %p30
      $region22: #{ocab_forward.4} parent=19 // pred_check_branch
        %159 = sbr.rel (%p157) target = $region24
      $region23: #{ocab_forward.4} parent=19 // pred_region
        %s160 = smul.u32 4, %s10
        %p161 = scmp.lt.s32.totalorder %s160, 7
        %s162 = scalar_select %p161, %s160, 7
        %s163 = smul.addr %s162, 8
        %s164 = smul.addr %s163, 4
        %s165 = scalar_lea.vmem %s0, %s164
        %s166 = smul.u32 4, %s10
      $region24: #{ocab_forward.4} parent=19 // pred_fallthru
        _
      // Predicated region
      $region25: #{ocab_forward.4} parent=19 // pred_check
        %p167 = pneg %p56
      $region26: #{ocab_forward.4} parent=19 // pred_check_branch
        %169 = sbr.rel (%p167) target = $region28
      $region27: #{ocab_forward.4} parent=19 // pred_region
        %s170 = smul.u32 4, %s10
        %p171 = scmp.lt.s32.totalorder %s170, 7
        %s172 = scalar_select %p171, %s170, 7
        %s173 = smul.addr %s172, 18
        %s174 = smul.addr %s173, 4
        %s175 = scalar_lea.vmem %s1, %s174
        %s176 = smul.u32 4, %s10
      $region28: #{ocab_forward.4} parent=19 // pred_fallthru
        _
      // Predicated region
      $region29: #{ocab_forward.4} parent=19 // pred_check
        %p177 = pneg %p82
      $region30: #{ocab_forward.4} parent=19 // pred_check_branch
        %179 = sbr.rel (%p177) target = $region32
      $region31: #{ocab_forward.4} parent=19 // pred_region
        %s180 = smul.u32 4, %s10
        %p181 = scmp.lt.s32.totalorder %s180, 7
        %s182 = scalar_select %p181, %s180, 7
        %s183 = smul.addr %s182, 18
        %s184 = smul.addr %s183, 4
        %s185 = scalar_lea.vmem %s2, %s184
        %s186 = smul.u32 4, %s10
      $region32: #{ocab_forward.4} parent=19 // pred_fallthru
        _
    $region20: #{ocab_forward.4} parent=5 // pred_fallthru
      _
    %p187 = scmp.le.s32.totalorder 1, %s10
    %p188 = scmp.lt.s32.totalorder %s10, 3
    %p189 = pnand %p187, %p188
    %p190 = pneg %p189
    // Predicated region
    $region33: #{ocab_forward.4} parent=5 // pred_check
      _
    $region34: #{ocab_forward.4} parent=5 // pred_check_branch
      %192 = sbr.rel (%p189) target = $region36
    $region35: #{ocab_forward.4} parent=5 // pred_region
      %s193 = ssub.s32 %s10, 1
      %s194 = smul.u32 4, %s15
      %p195 = scmp.lt.s32.totalorder %s194, 7
      %s196 = scalar_select %p195, %s194, 7
      %s197 = smul.addr %s196, 8
      %s198 = smul.addr %s197, 4
      %s199 = scalar_lea.vmem %s0, %s198
      %p200 = pneg %p36
      %p201 = pneg %p33
      %s202 = smul.u32 4, %s15
      %p203 = scmp.lt.s32.totalorder %s202, 7
      %s204 = scalar_select %p203, %s202, 7
      %s205 = smul.addr %s204, 18
      %s206 = smul.addr %s205, 4
      %s207 = scalar_lea.vmem %s1, %s206
      %p208 = pneg %p62
      %p209 = pneg %p59
      %s210 = smul.u32 4, %s15
      %p211 = scmp.lt.s32.totalorder %s210, 7
      %s212 = scalar_select %p211, %s210, 7
      %s213 = smul.addr %s212, 18
      %s214 = smul.addr %s213, 4
      %s215 = scalar_lea.vmem %s2, %s214
      %p216 = pneg %p88
      %p217 = pneg %p85
      %p218 = pneg %p109
      %p219 = pneg %p106
      %p220 = pneg %p135
      %p221 = pneg %p132
      %s222 = smul.u32 4, %s15
      %p223 = scmp.lt.s32.totalorder %s222, 7
      %s224 = scalar_select %p223, %s222, 7
      %s225 = smul.addr %s224, 8
      %s226 = smul.addr %s225, 4
      %s227 = scalar_lea.vmem %s4, %s226
      %s228 = smul.u32 4, %s15
      %p229 = scmp.lt.s32.totalorder %s228, 7
      %s230 = scalar_select %p229, %s228, 7
      %s231 = smul.addr %s230, 8
      %s232 = smul.addr %s231, 4
      %s233 = scalar_lea.vmem %s0, %s232
      %s234 = smul.u32 4, %s15
      %s235 = smul.u32 4, %s15
      %p236 = scmp.lt.s32.totalorder %s235, 7
      %s237 = scalar_select %p236, %s235, 7
      %s238 = smul.addr %s237, 18
      %s239 = smul.addr %s238, 4
      %s240 = scalar_lea.vmem %s1, %s239
      %s241 = smul.u32 4, %s15
      %s242 = smul.u32 4, %s15
      %p243 = scmp.lt.s32.totalorder %s242, 7
      %s244 = scalar_select %p243, %s242, 7
      %s245 = smul.addr %s244, 18
      %s246 = smul.addr %s245, 4
      %s247 = scalar_lea.vmem %s2, %s246
      %s248 = smul.u32 4, %s15
      %s249 = smul.u32 4, %s15
      %p250 = scmp.lt.s32.totalorder %s249, 7
      %s251 = scalar_select %p250, %s249, 7
      %s252 = smul.addr %s251, 8
      %s253 = smul.addr %s252, 4
      %s254 = scalar_lea.vmem %s4, %s253
      %s255 = smul.u32 4, %s15
      %v257 = vld [vmem:[%s233] sm:$0xf]
      %v258 = vld [vmem:[%s233 + $0x4] sm:$0xf]
      %v259 = vld [vmem:[%s233 + $0x8] sm:$0xf]
      %v260 = vld [vmem:[%s233 + $0xc] sm:$0xf]
      %v261 = vld [vmem:[%s233 + $0x10] sm:$0xf]
      %v262 = vld [vmem:[%s233 + $0x14] sm:$0xf]
      %v263 = vld [vmem:[%s233 + $0x18] sm:$0xf]
      %v264 = vld [vmem:[%s233 + $0x1c] sm:$0xf]
      %v265 = vld [vmem:[%s233 + $0x20] sm:$0xf]
      %v266 = vld [vmem:[%s233 + $0x24] sm:$0xf]
      %v267 = vld [vmem:[%s233 + $0x28] sm:$0xf]
      %v268 = vld [vmem:[%s233 + $0x2c] sm:$0xf]
      %v269 = vld [vmem:[%s233 + $0x30] sm:$0xf]
      %v270 = vld [vmem:[%s233 + $0x34] sm:$0xf]
      %v271 = vld [vmem:[%s233 + $0x38] sm:$0xf]
      %v272 = vld [vmem:[%s233 + $0x3c] sm:$0xf]
      %v273 = vld [vmem:[%s233 + $0x40] sm:$0xf]
      %v274 = vld [vmem:[%s233 + $0x44] sm:$0xf]
      %v275 = vld [vmem:[%s233 + $0x48] sm:$0xf]
      %v276 = vld [vmem:[%s233 + $0x4c] sm:$0xf]
      %v277 = vld [vmem:[%s233 + $0x50] sm:$0xf]
      %v278 = vld [vmem:[%s233 + $0x54] sm:$0xf]
      %v279 = vld [vmem:[%s233 + $0x58] sm:$0xf]
      %v280 = vld [vmem:[%s233 + $0x5c] sm:$0xf]
      %v281 = vld [vmem:[%s233 + $0x60] sm:$0xf]
      %v282 = vld [vmem:[%s233 + $0x64] sm:$0xf]
      %v283 = vld [vmem:[%s233 + $0x68] sm:$0xf]
      %v284 = vld [vmem:[%s233 + $0x6c] sm:$0xf]
      %v285 = vld [vmem:[%s233 + $0x70] sm:$0xf]
      %v286 = vld [vmem:[%s233 + $0x74] sm:$0xf]
      %v287 = vld [vmem:[%s233 + $0x78] sm:$0xf]
      %v288 = vld [vmem:[%s233 + $0x7c] sm:$0xf]
      %v289 = vld [vmem:[%s240] sm:$0xf]
      %v290 = vld [vmem:[%s240 + $0x4] sm:$0xf]
      %v291 = vld [vmem:[%s240 + $0x8] sm:$0xf]
      %v292 = vld [vmem:[%s240 + $0xc] sm:$0xf]
      %v293 = vld [vmem:[%s240 + $0x10] sm:$0xf]
      %v294 = vld [vmem:[%s240 + $0x14] sm:$0xf]
      %v295 = vld [vmem:[%s240 + $0x18] sm:$0xf]
      %v296 = vld [vmem:[%s240 + $0x1c] sm:$0xf]
      %v297 = vld [vmem:[%s240 + $0x20] sm:$0xf]
      %v298 = vld [vmem:[%s240 + $0x24] sm:$0xf]
      %v299 = vld [vmem:[%s240 + $0x28] sm:$0xf]
      %v300 = vld [vmem:[%s240 + $0x2c] sm:$0xf]
      %v301 = vld [vmem:[%s240 + $0x30] sm:$0xf]
      %v302 = vld [vmem:[%s240 + $0x34] sm:$0xf]
      %v303 = vld [vmem:[%s240 + $0x38] sm:$0xf]
      %v304 = vld [vmem:[%s240 + $0x3c] sm:$0xf]
      %v305 = vld [vmem:[%s240 + $0x40] sm:$0xf]
      %v306 = vld [vmem:[%s240 + $0x44] sm:$0xf]
      %v307 = vld [vmem:[%s240 + $0x48] sm:$0xf]
      %v308 = vld [vmem:[%s240 + $0x4c] sm:$0xf]
      %v309 = vld [vmem:[%s240 + $0x50] sm:$0xf]
      %v310 = vld [vmem:[%s240 + $0x54] sm:$0xf]
      %v311 = vld [vmem:[%s240 + $0x58] sm:$0xf]
      %v312 = vld [vmem:[%s240 + $0x5c] sm:$0xf]
      %v313 = vld [vmem:[%s240 + $0x60] sm:$0xf]
      %v314 = vld [vmem:[%s240 + $0x64] sm:$0xf]
      %v315 = vld [vmem:[%s240 + $0x68] sm:$0xf]
      %v316 = vld [vmem:[%s240 + $0x6c] sm:$0xf]
      %v317 = vld [vmem:[%s240 + $0x70] sm:$0xf]
      %v318 = vld [vmem:[%s240 + $0x74] sm:$0xf]
      %v319 = vld [vmem:[%s240 + $0x78] sm:$0xf]
      %v320 = vld [vmem:[%s240 + $0x7c] sm:$0xf]
      %v321 = vld [vmem:[%s240 + $0x80] sm:$0xf]
      %v322 = vld [vmem:[%s240 + $0x84] sm:$0xf]
      %v323 = vld [vmem:[%s240 + $0x88] sm:$0xf]
      %v324 = vld [vmem:[%s240 + $0x8c] sm:$0xf]
      %v325 = vld [vmem:[%s240 + $0x90] sm:$0xf]
      %v326 = vld [vmem:[%s240 + $0x94] sm:$0xf]
      %v327 = vld [vmem:[%s240 + $0x98] sm:$0xf]
      %v328 = vld [vmem:[%s240 + $0x9c] sm:$0xf]
      %v329 = vld [vmem:[%s240 + $0xa0] sm:$0xf]
      %v330 = vld [vmem:[%s240 + $0xa4] sm:$0xf]
      %v331 = vld [vmem:[%s240 + $0xa8] sm:$0xf]
      %v332 = vld [vmem:[%s240 + $0xac] sm:$0xf]
      %v333 = vld [vmem:[%s240 + $0xb0] sm:$0xf]
      %v334 = vld [vmem:[%s240 + $0xb4] sm:$0xf]
      %v335 = vld [vmem:[%s240 + $0xb8] sm:$0xf]
      %v336 = vld [vmem:[%s240 + $0xbc] sm:$0xf]
      %v337 = vld [vmem:[%s240 + $0xc0] sm:$0xf]
      %v338 = vld [vmem:[%s240 + $0xc4] sm:$0xf]
      %v339 = vld [vmem:[%s240 + $0xc8] sm:$0xf]
      %v340 = vld [vmem:[%s240 + $0xcc] sm:$0xf]
      %v341 = vld [vmem:[%s240 + $0xd0] sm:$0xf]
      %v342 = vld [vmem:[%s240 + $0xd4] sm:$0xf]
      %v343 = vld [vmem:[%s240 + $0xd8] sm:$0xf]
      %v344 = vld [vmem:[%s240 + $0xdc] sm:$0xf]
      %v345 = vld [vmem:[%s240 + $0xe0] sm:$0xf]
      %v346 = vld [vmem:[%s240 + $0xe4] sm:$0xf]
      %v347 = vld [vmem:[%s240 + $0xe8] sm:$0xf]
      %v348 = vld [vmem:[%s240 + $0xec] sm:$0xf]
      %v349 = vld [vmem:[%s240 + $0xf0] sm:$0xf]
      %v350 = vld [vmem:[%s240 + $0xf4] sm:$0xf]
      %v351 = vld [vmem:[%s240 + $0xf8] sm:$0xf]
      %v352 = vld [vmem:[%s240 + $0xfc] sm:$0xf]
      %v353 = vld [vmem:[%s240 + $0x100] sm:$0xf]
      %v354 = vld [vmem:[%s240 + $0x104] sm:$0xf]
      %v355 = vld [vmem:[%s240 + $0x108] sm:$0xf]
      %v356 = vld [vmem:[%s240 + $0x10c] sm:$0xf]
      %v357 = vld [vmem:[%s240 + $0x110] sm:$0xf]
      %v358 = vld [vmem:[%s240 + $0x114] sm:$0xf]
      %v359 = vld [vmem:[%s240 + $0x118] sm:$0xf]
      %v360 = vld [vmem:[%s240 + $0x11c] sm:$0xf]
      %v361 = vld [vmem:[%s247] sm:$0xf]
      %v362 = vld [vmem:[%s247 + $0x4] sm:$0xf]
      %v363 = vld [vmem:[%s247 + $0x8] sm:$0xf]
      %v364 = vld [vmem:[%s247 + $0xc] sm:$0xf]
      %v365 = vld [vmem:[%s247 + $0x10] sm:$0xf]
      %v366 = vld [vmem:[%s247 + $0x14] sm:$0xf]
      %v367 = vld [vmem:[%s247 + $0x18] sm:$0xf]
      %v368 = vld [vmem:[%s247 + $0x1c] sm:$0xf]
      %v369 = vld [vmem:[%s247 + $0x20] sm:$0xf]
      %v370 = vld [vmem:[%s247 + $0x24] sm:$0xf]
      %v371 = vld [vmem:[%s247 + $0x28] sm:$0xf]
      %v372 = vld [vmem:[%s247 + $0x2c] sm:$0xf]
      %v373 = vld [vmem:[%s247 + $0x30] sm:$0xf]
      %v374 = vld [vmem:[%s247 + $0x34] sm:$0xf]
      %v375 = vld [vmem:[%s247 + $0x38] sm:$0xf]
      %v376 = vld [vmem:[%s247 + $0x3c] sm:$0xf]
      %v377 = vld [vmem:[%s247 + $0x40] sm:$0xf]
      %v378 = vld [vmem:[%s247 + $0x44] sm:$0xf]
      %v379 = vld [vmem:[%s247 + $0x48] sm:$0xf]
      %v380 = vld [vmem:[%s247 + $0x4c] sm:$0xf]
      %v381 = vld [vmem:[%s247 + $0x50] sm:$0xf]
      %v382 = vld [vmem:[%s247 + $0x54] sm:$0xf]
      %v383 = vld [vmem:[%s247 + $0x58] sm:$0xf]
      %v384 = vld [vmem:[%s247 + $0x5c] sm:$0xf]
      %v385 = vld [vmem:[%s247 + $0x60] sm:$0xf]
      %v386 = vld [vmem:[%s247 + $0x64] sm:$0xf]
      %v387 = vld [vmem:[%s247 + $0x68] sm:$0xf]
      %v388 = vld [vmem:[%s247 + $0x6c] sm:$0xf]
      %v389 = vld [vmem:[%s247 + $0x70] sm:$0xf]
      %v390 = vld [vmem:[%s247 + $0x74] sm:$0xf]
      %v391 = vld [vmem:[%s247 + $0x78] sm:$0xf]
      %v392 = vld [vmem:[%s247 + $0x7c] sm:$0xf]
      %v393 = vld [vmem:[%s247 + $0x80] sm:$0xf]
      %v394 = vld [vmem:[%s247 + $0x84] sm:$0xf]
      %v395 = vld [vmem:[%s247 + $0x88] sm:$0xf]
      %v396 = vld [vmem:[%s247 + $0x8c] sm:$0xf]
      %v397 = vld [vmem:[%s247 + $0x90] sm:$0xf]
      %v398 = vld [vmem:[%s247 + $0x94] sm:$0xf]
      %v399 = vld [vmem:[%s247 + $0x98] sm:$0xf]
      %v400 = vld [vmem:[%s247 + $0x9c] sm:$0xf]
      %v401 = vld [vmem:[%s247 + $0xa0] sm:$0xf]
      %v402 = vld [vmem:[%s247 + $0xa4] sm:$0xf]
      %v403 = vld [vmem:[%s247 + $0xa8] sm:$0xf]
      %v404 = vld [vmem:[%s247 + $0xac] sm:$0xf]
      %v405 = vld [vmem:[%s247 + $0xb0] sm:$0xf]
      %v406 = vld [vmem:[%s247 + $0xb4] sm:$0xf]
      %v407 = vld [vmem:[%s247 + $0xb8] sm:$0xf]
      %v408 = vld [vmem:[%s247 + $0xbc] sm:$0xf]
      %v409 = vld [vmem:[%s247 + $0xc0] sm:$0xf]
      %v410 = vld [vmem:[%s247 + $0xc4] sm:$0xf]
      %v411 = vld [vmem:[%s247 + $0xc8] sm:$0xf]
      %v412 = vld [vmem:[%s247 + $0xcc] sm:$0xf]
      %v413 = vld [vmem:[%s247 + $0xd0] sm:$0xf]
      %v414 = vld [vmem:[%s247 + $0xd4] sm:$0xf]
      %v415 = vld [vmem:[%s247 + $0xd8] sm:$0xf]
      %v416 = vld [vmem:[%s247 + $0xdc] sm:$0xf]
      %v417 = vld [vmem:[%s247 + $0xe0] sm:$0xf]
      %v418 = vld [vmem:[%s247 + $0xe4] sm:$0xf]
      %v419 = vld [vmem:[%s247 + $0xe8] sm:$0xf]
      %v420 = vld [vmem:[%s247 + $0xec] sm:$0xf]
      %v421 = vld [vmem:[%s247 + $0xf0] sm:$0xf]
      %v422 = vld [vmem:[%s247 + $0xf4] sm:$0xf]
      %v423 = vld [vmem:[%s247 + $0xf8] sm:$0xf]
      %v424 = vld [vmem:[%s247 + $0xfc] sm:$0xf]
      %v425 = vld [vmem:[%s247 + $0x100] sm:$0xf]
      %v426 = vld [vmem:[%s247 + $0x104] sm:$0xf]
      %v427 = vld [vmem:[%s247 + $0x108] sm:$0xf]
      %v428 = vld [vmem:[%s247 + $0x10c] sm:$0xf]
      %v429 = vld [vmem:[%s247 + $0x110] sm:$0xf]
      %v430 = vld [vmem:[%s247 + $0x114] sm:$0xf]
      %v431 = vld [vmem:[%s247 + $0x118] sm:$0xf]
      %v432 = vld [vmem:[%s247 + $0x11c] sm:$0xf]
      %v433 = vld [vmem:[%s3] sm:$0xff]
      %v434 = vld [vmem:[%s3 + $0x8] sm:$0xff]
      %v435 = vld [vmem:[%s3 + $0x10] sm:$0xff]
      %v436 = vld [vmem:[%s3 + $0x18] sm:$0xff]
      %v437 = vld [vmem:[%s3 + $0x20] sm:$0xff]
      %v438 = vld [vmem:[%s3 + $0x28] sm:$0xff]
      %v439 = vld [vmem:[%s3 + $0x30] sm:$0xff]
      %v440 = vld [vmem:[%s3 + $0x38] sm:$0xff]
      %v441 = vld [vmem:[%s3 + $0x40] sm:$0xff]
      %v442 = vld [vmem:[%s3 + $0x48] sm:$0xff]
      %v443 = vld [vmem:[%s3 + $0x50] sm:$0xff]
      %v444 = vld [vmem:[%s3 + $0x58] sm:$0xff]
      %v445 = vld [vmem:[%s3 + $0x60] sm:$0xff]
      %v446 = vld [vmem:[%s3 + $0x68] sm:$0xff]
      %v447 = vld [vmem:[%s3 + $0x70] sm:$0xff]
      %v448 = vld [vmem:[%s3 + $0x78] sm:$0xff]
      %v457 = vunpack.c.l.b16 %v257
      %v458 = vunpack.c.l.b16 %v258
      %v459 = vunpack.c.l.b16 %v259
      %v460 = vunpack.c.l.b16 %v260
      %v461 = vunpack.c.l.b16 %v261
      %v462 = vunpack.c.l.b16 %v262
      %v463 = vunpack.c.l.b16 %v263
      %v464 = vunpack.c.l.b16 %v264
      %v465 = vpack.c.b16 %v458, %v457
      %v466 = vpack.c.b16 %v460, %v459
      %v467 = vpack.c.b16 %v462, %v461
      %v468 = vpack.c.b16 %v464, %v463
      %v487 = vunpack.c.l.b16 %v289
      %v488 = vunpack.c.l.b16 %v290
      %v489 = vunpack.c.l.b16 %v291
      %v490 = vunpack.c.l.b16 %v292
      %v491 = vunpack.c.l.b16 %v293
      %v492 = vunpack.c.l.b16 %v294
      %v493 = vunpack.c.l.b16 %v295
      %v494 = vunpack.c.l.b16 %v296
      %v495 = vunpack.c.l.b16 %v297
      %v496 = vunpack.c.l.b16 %v298
      %v497 = vunpack.c.l.b16 %v299
      %v498 = vunpack.c.l.b16 %v300
      %v499 = vunpack.c.l.b16 %v301
      %v500 = vunpack.c.l.b16 %v302
      %v501 = vunpack.c.l.b16 %v303
      %v502 = vunpack.c.l.b16 %v304
      %v503 = vunpack.c.l.b16 %v305
      %v504 = vunpack.c.l.b16 %v306
      %v505 = vpack.c.b16 %v488, %v487
      %v506 = vpack.c.b16 %v490, %v489
      %v507 = vpack.c.b16 %v492, %v491
      %v508 = vpack.c.b16 %v494, %v493
      %v509 = vpack.c.b16 %v496, %v495
      %v510 = vpack.c.b16 %v498, %v497
      %v511 = vpack.c.b16 %v500, %v499
      %v512 = vpack.c.b16 %v502, %v501
      %v513 = vpack.c.b16 %v504, %v503
      %vm514 = vcmask 261120
      %v516 = vsel %vm514, %v465, 0
      %v519 = vsel %vm514, %v466, 0
      %v522 = vsel %vm514, %v467, 0
      %v525 = vsel %vm514, %v468, 0
      %v528 = vsel %vm514, %v505, 0
      %v531 = vsel %vm514, %v506, 0
      %v534 = vsel %vm514, %v507, 0
      %v537 = vsel %vm514, %v508, 0
      %v540 = vsel %vm514, %v509, 0
      %v543 = vsel %vm514, %v510, 0
      %v546 = vsel %vm514, %v511, 0
      %v549 = vsel %vm514, %v512, 0
      %v552 = vsel %vm514, %v513, 0
      %554 = vmatpush.bf16.xpose.msra.mxu0 %v549
      %555 = vmatpush.bf16.xpose.msra.mxu0 %v546
      %556 = vmatpush.bf16.xpose.msra.mxu0 %v543
      %557 = vmatpush.bf16.xpose.msra.mxu0 %v540
      %558 = vmatpush.bf16.xpose.msra.mxu0 %v537
      %559 = vmatpush.bf16.xpose.msra.mxu0 %v534
      %560 = vmatpush.bf16.xpose.msra.mxu0 %v531
      %561 = vmatpush.bf16.xpose.msra.mxu0 %v528
      %562 = vmatmul.bf16.gmra.mxu0 %v516
      %v563 = vpop.f32.mrf.mxu0
      %v564 = vadd.f32 %v433, %v563
      %v565 = vpop.f32.mrf.mxu0
      %v566 = vadd.f32 %v435, %v565
      %567 = vmatmul.bf16.gmra.mxu0 %v519
      %v568 = vpop.f32.mrf.mxu0
      %v569 = vadd.f32 %v437, %v568
      %v570 = vpop.f32.mrf.mxu0
      %v571 = vadd.f32 %v439, %v570
      %572 = vmatmul.bf16.gmra.mxu0 %v522
      %v573 = vpop.f32.mrf.mxu0
      %v574 = vadd.f32 %v441, %v573
      %v575 = vpop.f32.mrf.mxu0
      %v576 = vadd.f32 %v443, %v575
      %577 = vmatmul.bf16.gmra.mxu0 %v525
      %v578 = vpop.f32.mrf.mxu0
      %v579 = vadd.f32 %v445, %v578
      %v580 = vpop.f32.mrf.mxu0
      %v581 = vadd.f32 %v447, %v580
      %582 = vdwg.mxu0
      %583 = vmatpush.bf16.xpose.msra.mxu0 0
      %584 = vmatpush.bf16.xpose.msra.mxu0 0
      %585 = vmatpush.bf16.xpose.msra.mxu0 0
      %586 = vmatpush.bf16.xpose.msra.mxu0 0
      %587 = vmatpush.bf16.xpose.msra.mxu0 0
      %588 = vmatpush.bf16.xpose.msra.mxu0 0
      %589 = vmatpush.bf16.xpose.msra.mxu0 0
      %590 = vmatpush.bf16.xpose.msra.mxu0 %v552
      %591 = vmatmul.bf16.gmra.mxu0 %v516
      %v592 = vpop.f32.mrf.mxu0
      %v593 = vadd.f32 %v434, %v592
      %v594 = vpop.f32.mrf.mxu0
      %v595 = vadd.f32 %v436, %v594
      %596 = vmatmul.bf16.gmra.mxu0 %v519
      %v597 = vpop.f32.mrf.mxu0
      %v598 = vadd.f32 %v438, %v597
      %v599 = vpop.f32.mrf.mxu0
      %v600 = vadd.f32 %v440, %v599
      %601 = vmatmul.bf16.gmra.mxu0 %v522
      %v602 = vpop.f32.mrf.mxu0
      %v603 = vadd.f32 %v442, %v602
      %v604 = vpop.f32.mrf.mxu0
      %v605 = vadd.f32 %v444, %v604
      %606 = vmatmul.bf16.gmra.mxu0 %v525
      %v607 = vpop.f32.mrf.mxu0
      %v608 = vadd.f32 %v446, %v607
      %v609 = vpop.f32.mrf.mxu0
      %v610 = vadd.f32 %v448, %v609
      %611 = vdwg.mxu0
      %v620 = vunpack.c.l.b16 %v265
      %v621 = vunpack.c.l.b16 %v266
      %v622 = vunpack.c.l.b16 %v267
      %v623 = vunpack.c.l.b16 %v268
      %v624 = vunpack.c.l.b16 %v269
      %v625 = vunpack.c.l.b16 %v270
      %v626 = vunpack.c.l.b16 %v271
      %v627 = vunpack.c.l.b16 %v272
      %v628 = vpack.c.b16 %v621, %v620
      %v629 = vpack.c.b16 %v623, %v622
      %v630 = vpack.c.b16 %v625, %v624
      %v631 = vpack.c.b16 %v627, %v626
      %v650 = vunpack.c.l.b16 %v307
      %v651 = vunpack.c.l.b16 %v308
      %v652 = vunpack.c.l.b16 %v309
      %v653 = vunpack.c.l.b16 %v310
      %v654 = vunpack.c.l.b16 %v311
      %v655 = vunpack.c.l.b16 %v312
      %v656 = vunpack.c.l.b16 %v313
      %v657 = vunpack.c.l.b16 %v314
      %v658 = vunpack.c.l.b16 %v315
      %v659 = vunpack.c.l.b16 %v316
      %v660 = vunpack.c.l.b16 %v317
      %v661 = vunpack.c.l.b16 %v318
      %v662 = vunpack.c.l.b16 %v319
      %v663 = vunpack.c.l.b16 %v320
      %v664 = vunpack.c.l.b16 %v321
      %v665 = vunpack.c.l.b16 %v322
      %v666 = vunpack.c.l.b16 %v323
      %v667 = vunpack.c.l.b16 %v324
      %v668 = vpack.c.b16 %v651, %v650
      %v669 = vpack.c.b16 %v653, %v652
      %v670 = vpack.c.b16 %v655, %v654
      %v671 = vpack.c.b16 %v657, %v656
      %v672 = vpack.c.b16 %v659, %v658
      %v673 = vpack.c.b16 %v661, %v660
      %v674 = vpack.c.b16 %v663, %v662
      %v675 = vpack.c.b16 %v665, %v664
      %v676 = vpack.c.b16 %v667, %v666
      %v678 = vsel %vm514, %v628, 0
      %v681 = vsel %vm514, %v629, 0
      %v684 = vsel %vm514, %v630, 0
      %v687 = vsel %vm514, %v631, 0
      %v690 = vsel %vm514, %v668, 0
      %v693 = vsel %vm514, %v669, 0
      %v696 = vsel %vm514, %v670, 0
      %v699 = vsel %vm514, %v671, 0
      %v702 = vsel %vm514, %v672, 0
      %v705 = vsel %vm514, %v673, 0
      %v708 = vsel %vm514, %v674, 0
      %v711 = vsel %vm514, %v675, 0
      %v714 = vsel %vm514, %v676, 0
      %716 = vmatpush.bf16.xpose.msra.mxu0 %v711
      %717 = vmatpush.bf16.xpose.msra.mxu0 %v708
      %718 = vmatpush.bf16.xpose.msra.mxu0 %v705
      %719 = vmatpush.bf16.xpose.msra.mxu0 %v702
      %720 = vmatpush.bf16.xpose.msra.mxu0 %v699
      %721 = vmatpush.bf16.xpose.msra.mxu0 %v696
      %722 = vmatpush.bf16.xpose.msra.mxu0 %v693
      %723 = vmatpush.bf16.xpose.msra.mxu0 %v690
      %724 = vmatmul.bf16.gmra.mxu0 %v678
      %v725 = vpop.f32.mrf.mxu0
      %v726 = vadd.f32 %v433, %v725
      %v727 = vpop.f32.mrf.mxu0
      %v728 = vadd.f32 %v435, %v727
      %729 = vmatmul.bf16.gmra.mxu0 %v681
      %v730 = vpop.f32.mrf.mxu0
      %v731 = vadd.f32 %v437, %v730
      %v732 = vpop.f32.mrf.mxu0
      %v733 = vadd.f32 %v439, %v732
      %734 = vmatmul.bf16.gmra.mxu0 %v684
      %v735 = vpop.f32.mrf.mxu0
      %v736 = vadd.f32 %v441, %v735
      %v737 = vpop.f32.mrf.mxu0
      %v738 = vadd.f32 %v443, %v737
      %739 = vmatmul.bf16.gmra.mxu0 %v687
      %v740 = vpop.f32.mrf.mxu0
      %v741 = vadd.f32 %v445, %v740
      %v742 = vpop.f32.mrf.mxu0
      %v743 = vadd.f32 %v447, %v742
      %744 = vdwg.mxu0
      %745 = vmatpush.bf16.xpose.msra.mxu0 0
      %746 = vmatpush.bf16.xpose.msra.mxu0 0
      %747 = vmatpush.bf16.xpose.msra.mxu0 0
      %748 = vmatpush.bf16.xpose.msra.mxu0 0
      %749 = vmatpush.bf16.xpose.msra.mxu0 0
      %750 = vmatpush.bf16.xpose.msra.mxu0 0
      %751 = vmatpush.bf16.xpose.msra.mxu0 0
      %752 = vmatpush.bf16.xpose.msra.mxu0 %v714
      %753 = vmatmul.bf16.gmra.mxu0 %v678
      %v754 = vpop.f32.mrf.mxu0
      %v755 = vadd.f32 %v434, %v754
      %v756 = vpop.f32.mrf.mxu0
      %v757 = vadd.f32 %v436, %v756
      %758 = vmatmul.bf16.gmra.mxu0 %v681
      %v759 = vpop.f32.mrf.mxu0
      %v760 = vadd.f32 %v438, %v759
      %v761 = vpop.f32.mrf.mxu0
      %v762 = vadd.f32 %v440, %v761
      %763 = vmatmul.bf16.gmra.mxu0 %v684
      %v764 = vpop.f32.mrf.mxu0
      %v765 = vadd.f32 %v442, %v764
      %v766 = vpop.f32.mrf.mxu0
      %v767 = vadd.f32 %v444, %v766
      %768 = vmatmul.bf16.gmra.mxu0 %v687
      %v769 = vpop.f32.mrf.mxu0
      %v770 = vadd.f32 %v446, %v769
      %v771 = vpop.f32.mrf.mxu0
      %v772 = vadd.f32 %v448, %v771
      %773 = vdwg.mxu0
      %v782 = vunpack.c.l.b16 %v273
      %v783 = vunpack.c.l.b16 %v274
      %v784 = vunpack.c.l.b16 %v275
      %v785 = vunpack.c.l.b16 %v276
      %v786 = vunpack.c.l.b16 %v277
      %v787 = vunpack.c.l.b16 %v278
      %v788 = vunpack.c.l.b16 %v279
      %v789 = vunpack.c.l.b16 %v280
      %v790 = vpack.c.b16 %v783, %v782
      %v791 = vpack.c.b16 %v785, %v784
      %v792 = vpack.c.b16 %v787, %v786
      %v793 = vpack.c.b16 %v789, %v788
      %v812 = vunpack.c.l.b16 %v325
      %v813 = vunpack.c.l.b16 %v326
      %v814 = vunpack.c.l.b16 %v327
      %v815 = vunpack.c.l.b16 %v328
      %v816 = vunpack.c.l.b16 %v329
      %v817 = vunpack.c.l.b16 %v330
      %v818 = vunpack.c.l.b16 %v331
      %v819 = vunpack.c.l.b16 %v332
      %v820 = vunpack.c.l.b16 %v333
      %v821 = vunpack.c.l.b16 %v334
      %v822 = vunpack.c.l.b16 %v335
      %v823 = vunpack.c.l.b16 %v336
      %v824 = vunpack.c.l.b16 %v337
      %v825 = vunpack.c.l.b16 %v338
      %v826 = vunpack.c.l.b16 %v339
      %v827 = vunpack.c.l.b16 %v340
      %v828 = vunpack.c.l.b16 %v341
      %v829 = vunpack.c.l.b16 %v342
      %v830 = vpack.c.b16 %v813, %v812
      %v831 = vpack.c.b16 %v815, %v814
      %v832 = vpack.c.b16 %v817, %v816
      %v833 = vpack.c.b16 %v819, %v818
      %v834 = vpack.c.b16 %v821, %v820
      %v835 = vpack.c.b16 %v823, %v822
      %v836 = vpack.c.b16 %v825, %v824
      %v837 = vpack.c.b16 %v827, %v826
      %v838 = vpack.c.b16 %v829, %v828
      %v840 = vsel %vm514, %v790, 0
      %v843 = vsel %vm514, %v791, 0
      %v846 = vsel %vm514, %v792, 0
      %v849 = vsel %vm514, %v793, 0
      %v852 = vsel %vm514, %v830, 0
      %v855 = vsel %vm514, %v831, 0
      %v858 = vsel %vm514, %v832, 0
      %v861 = vsel %vm514, %v833, 0
      %v864 = vsel %vm514, %v834, 0
      %v867 = vsel %vm514, %v835, 0
      %v870 = vsel %vm514, %v836, 0
      %v873 = vsel %vm514, %v837, 0
      %v876 = vsel %vm514, %v838, 0
      %878 = vmatpush.bf16.xpose.msra.mxu0 %v873
      %879 = vmatpush.bf16.xpose.msra.mxu0 %v870
      %880 = vmatpush.bf16.xpose.msra.mxu0 %v867
      %881 = vmatpush.bf16.xpose.msra.mxu0 %v864
      %882 = vmatpush.bf16.xpose.msra.mxu0 %v861
      %883 = vmatpush.bf16.xpose.msra.mxu0 %v858
      %884 = vmatpush.bf16.xpose.msra.mxu0 %v855
      %885 = vmatpush.bf16.xpose.msra.mxu0 %v852
      %886 = vmatmul.bf16.gmra.mxu0 %v840
      %v887 = vpop.f32.mrf.mxu0
      %v888 = vadd.f32 %v433, %v887
      %v889 = vpop.f32.mrf.mxu0
      %v890 = vadd.f32 %v435, %v889
      %891 = vmatmul.bf16.gmra.mxu0 %v843
      %v892 = vpop.f32.mrf.mxu0
      %v893 = vadd.f32 %v437, %v892
      %v894 = vpop.f32.mrf.mxu0
      %v895 = vadd.f32 %v439, %v894
      %896 = vmatmul.bf16.gmra.mxu0 %v846
      %v897 = vpop.f32.mrf.mxu0
      %v898 = vadd.f32 %v441, %v897
      %v899 = vpop.f32.mrf.mxu0
      %v900 = vadd.f32 %v443, %v899
      %901 = vmatmul.bf16.gmra.mxu0 %v849
      %v902 = vpop.f32.mrf.mxu0
      %v903 = vadd.f32 %v445, %v902
      %v904 = vpop.f32.mrf.mxu0
      %v905 = vadd.f32 %v447, %v904
      %906 = vdwg.mxu0
      %907 = vmatpush.bf16.xpose.msra.mxu0 0
      %908 = vmatpush.bf16.xpose.msra.mxu0 0
      %909 = vmatpush.bf16.xpose.msra.mxu0 0
      %910 = vmatpush.bf16.xpose.msra.mxu0 0
      %911 = vmatpush.bf16.xpose.msra.mxu0 0
      %912 = vmatpush.bf16.xpose.msra.mxu0 0
      %913 = vmatpush.bf16.xpose.msra.mxu0 0
      %914 = vmatpush.bf16.xpose.msra.mxu0 %v876
      %915 = vmatmul.bf16.gmra.mxu0 %v840
      %v916 = vpop.f32.mrf.mxu0
      %v917 = vadd.f32 %v434, %v916
      %v918 = vpop.f32.mrf.mxu0
      %v919 = vadd.f32 %v436, %v918
      %920 = vmatmul.bf16.gmra.mxu0 %v843
      %v921 = vpop.f32.mrf.mxu0
      %v922 = vadd.f32 %v438, %v921
      %v923 = vpop.f32.mrf.mxu0
      %v924 = vadd.f32 %v440, %v923
      %925 = vmatmul.bf16.gmra.mxu0 %v846
      %v926 = vpop.f32.mrf.mxu0
      %v927 = vadd.f32 %v442, %v926
      %v928 = vpop.f32.mrf.mxu0
      %v929 = vadd.f32 %v444, %v928
      %930 = vmatmul.bf16.gmra.mxu0 %v849
      %v931 = vpop.f32.mrf.mxu0
      %v932 = vadd.f32 %v446, %v931
      %v933 = vpop.f32.mrf.mxu0
      %v934 = vadd.f32 %v448, %v933
      %935 = vdwg.mxu0
      %v944 = vunpack.c.l.b16 %v281
      %v945 = vunpack.c.l.b16 %v282
      %v946 = vunpack.c.l.b16 %v283
      %v947 = vunpack.c.l.b16 %v284
      %v948 = vunpack.c.l.b16 %v285
      %v949 = vunpack.c.l.b16 %v286
      %v950 = vunpack.c.l.b16 %v287
      %v951 = vunpack.c.l.b16 %v288
      %v952 = vpack.c.b16 %v945, %v944
      %v953 = vpack.c.b16 %v947, %v946
      %v954 = vpack.c.b16 %v949, %v948
      %v955 = vpack.c.b16 %v951, %v950
      %v974 = vunpack.c.l.b16 %v343
      %v975 = vunpack.c.l.b16 %v344
      %v976 = vunpack.c.l.b16 %v345
      %v977 = vunpack.c.l.b16 %v346
      %v978 = vunpack.c.l.b16 %v347
      %v979 = vunpack.c.l.b16 %v348
      %v980 = vunpack.c.l.b16 %v349
      %v981 = vunpack.c.l.b16 %v350
      %v982 = vunpack.c.l.b16 %v351
      %v983 = vunpack.c.l.b16 %v352
      %v984 = vunpack.c.l.b16 %v353
      %v985 = vunpack.c.l.b16 %v354
      %v986 = vunpack.c.l.b16 %v355
      %v987 = vunpack.c.l.b16 %v356
      %v988 = vunpack.c.l.b16 %v357
      %v989 = vunpack.c.l.b16 %v358
      %v990 = vunpack.c.l.b16 %v359
      %v991 = vunpack.c.l.b16 %v360
      %v992 = vpack.c.b16 %v975, %v974
      %v993 = vpack.c.b16 %v977, %v976
      %v994 = vpack.c.b16 %v979, %v978
      %v995 = vpack.c.b16 %v981, %v980
      %v996 = vpack.c.b16 %v983, %v982
      %v997 = vpack.c.b16 %v985, %v984
      %v998 = vpack.c.b16 %v987, %v986
      %v999 = vpack.c.b16 %v989, %v988
      %v1000 = vpack.c.b16 %v991, %v990
      %v1002 = vsel %vm514, %v952, 0
      %v1005 = vsel %vm514, %v953, 0
      %v1008 = vsel %vm514, %v954, 0
      %v1011 = vsel %vm514, %v955, 0
      %v1014 = vsel %vm514, %v992, 0
      %v1017 = vsel %vm514, %v993, 0
      %v1020 = vsel %vm514, %v994, 0
      %v1023 = vsel %vm514, %v995, 0
      %v1026 = vsel %vm514, %v996, 0
      %v1029 = vsel %vm514, %v997, 0
      %v1032 = vsel %vm514, %v998, 0
      %v1035 = vsel %vm514, %v999, 0
      %v1038 = vsel %vm514, %v1000, 0
      %1040 = vmatpush.bf16.xpose.msra.mxu0 %v1035
      %1041 = vmatpush.bf16.xpose.msra.mxu0 %v1032
      %1042 = vmatpush.bf16.xpose.msra.mxu0 %v1029
      %1043 = vmatpush.bf16.xpose.msra.mxu0 %v1026
      %1044 = vmatpush.bf16.xpose.msra.mxu0 %v1023
      %1045 = vmatpush.bf16.xpose.msra.mxu0 %v1020
      %1046 = vmatpush.bf16.xpose.msra.mxu0 %v1017
      %1047 = vmatpush.bf16.xpose.msra.mxu0 %v1014
      %1048 = vmatmul.bf16.gmra.mxu0 %v1002
      %v1049 = vpop.f32.mrf.mxu0
      %v1050 = vadd.f32 %v433, %v1049
      %v1051 = vpop.f32.mrf.mxu0
      %v1052 = vadd.f32 %v435, %v1051
      %1053 = vmatmul.bf16.gmra.mxu0 %v1005
      %v1054 = vpop.f32.mrf.mxu0
      %v1055 = vadd.f32 %v437, %v1054
      %v1056 = vpop.f32.mrf.mxu0
      %v1057 = vadd.f32 %v439, %v1056
      %1058 = vmatmul.bf16.gmra.mxu0 %v1008
      %v1059 = vpop.f32.mrf.mxu0
      %v1060 = vadd.f32 %v441, %v1059
      %v1061 = vpop.f32.mrf.mxu0
      %v1062 = vadd.f32 %v443, %v1061
      %1063 = vmatmul.bf16.gmra.mxu0 %v1011
      %v1064 = vpop.f32.mrf.mxu0
      %v1065 = vadd.f32 %v445, %v1064
      %v1066 = vpop.f32.mrf.mxu0
      %v1067 = vadd.f32 %v447, %v1066
      %1068 = vdwg.mxu0
      %1069 = vmatpush.bf16.xpose.msra.mxu0 0
      %1070 = vmatpush.bf16.xpose.msra.mxu0 0
      %1071 = vmatpush.bf16.xpose.msra.mxu0 0
      %1072 = vmatpush.bf16.xpose.msra.mxu0 0
      %1073 = vmatpush.bf16.xpose.msra.mxu0 0
      %1074 = vmatpush.bf16.xpose.msra.mxu0 0
      %1075 = vmatpush.bf16.xpose.msra.mxu0 0
      %1076 = vmatpush.bf16.xpose.msra.mxu0 %v1038
      %1077 = vmatmul.bf16.gmra.mxu0 %v1002
      %v1078 = vpop.f32.mrf.mxu0
      %v1079 = vadd.f32 %v434, %v1078
      %v1080 = vpop.f32.mrf.mxu0
      %v1081 = vadd.f32 %v436, %v1080
      %1082 = vmatmul.bf16.gmra.mxu0 %v1005
      %v1083 = vpop.f32.mrf.mxu0
      %v1084 = vadd.f32 %v438, %v1083
      %v1085 = vpop.f32.mrf.mxu0
      %v1086 = vadd.f32 %v440, %v1085
      %1087 = vmatmul.bf16.gmra.mxu0 %v1008
      %v1088 = vpop.f32.mrf.mxu0
      %v1089 = vadd.f32 %v442, %v1088
      %v1090 = vpop.f32.mrf.mxu0
      %v1091 = vadd.f32 %v444, %v1090
      %1092 = vmatmul.bf16.gmra.mxu0 %v1011
      %v1093 = vpop.f32.mrf.mxu0
      %v1094 = vadd.f32 %v446, %v1093
      %v1095 = vpop.f32.mrf.mxu0
      %v1096 = vadd.f32 %v448, %v1095
      %1097 = vdwg.mxu0
      %vm1098 = vcmask 130048
      %v1099 = vsel %vm1098, %v593, -inf
      %v1100 = vmax.f32 %v564, %v1099
      %1101 = vmax.xlane.f32.xlu0 %v1100
      %v1102 = vpop.xlane.xlu0 %1101
      %v1103 = vsel %vm1098, %v595, -inf
      %v1104 = vmax.f32 %v566, %v1103
      %1105 = vmax.xlane.f32.xlu0 %v1104
      %v1106 = vpop.xlane.xlu0 %1105
      %v1107 = vsel %vm1098, %v598, -inf
      %v1108 = vmax.f32 %v569, %v1107
      %1109 = vmax.xlane.f32.xlu0 %v1108
      %v1110 = vpop.xlane.xlu0 %1109
      %v1111 = vsel %vm1098, %v600, -inf
      %v1112 = vmax.f32 %v571, %v1111
      %1113 = vmax.xlane.f32.xlu0 %v1112
      %v1114 = vpop.xlane.xlu0 %1113
      %v1115 = vsel %vm1098, %v603, -inf
      %v1116 = vmax.f32 %v574, %v1115
      %1117 = vmax.xlane.f32.xlu0 %v1116
      %v1118 = vpop.xlane.xlu0 %1117
      %v1119 = vsel %vm1098, %v605, -inf
      %v1120 = vmax.f32 %v576, %v1119
      %1121 = vmax.xlane.f32.xlu0 %v1120
      %v1122 = vpop.xlane.xlu0 %1121
      %v1123 = vsel %vm1098, %v608, -inf
      %v1124 = vmax.f32 %v579, %v1123
      %1125 = vmax.xlane.f32.xlu0 %v1124
      %v1126 = vpop.xlane.xlu0 %1125
      %v1127 = vsel %vm1098, %v610, -inf
      %v1128 = vmax.f32 %v581, %v1127
      %1129 = vmax.xlane.f32.xlu0 %v1128
      %v1130 = vpop.xlane.xlu0 %1129
      %v1131 = vsel %vm1098, %v755, -inf
      %v1132 = vmax.f32 %v726, %v1131
      %1133 = vmax.xlane.f32.xlu0 %v1132
      %v1134 = vpop.xlane.xlu0 %1133
      %v1135 = vsel %vm1098, %v757, -inf
      %v1136 = vmax.f32 %v728, %v1135
      %1137 = vmax.xlane.f32.xlu0 %v1136
      %v1138 = vpop.xlane.xlu0 %1137
      %v1139 = vsel %vm1098, %v760, -inf
      %v1140 = vmax.f32 %v731, %v1139
      %1141 = vmax.xlane.f32.xlu0 %v1140
      %v1142 = vpop.xlane.xlu0 %1141
      %v1143 = vsel %vm1098, %v762, -inf
      %v1144 = vmax.f32 %v733, %v1143
      %1145 = vmax.xlane.f32.xlu0 %v1144
      %v1146 = vpop.xlane.xlu0 %1145
      %v1147 = vsel %vm1098, %v765, -inf
      %v1148 = vmax.f32 %v736, %v1147
      %1149 = vmax.xlane.f32.xlu0 %v1148
      %v1150 = vpop.xlane.xlu0 %1149
      %v1151 = vsel %vm1098, %v767, -inf
      %v1152 = vmax.f32 %v738, %v1151
      %1153 = vmax.xlane.f32.xlu0 %v1152
      %v1154 = vpop.xlane.xlu0 %1153
      %v1155 = vsel %vm1098, %v770, -inf
      %v1156 = vmax.f32 %v741, %v1155
      %1157 = vmax.xlane.f32.xlu0 %v1156
      %v1158 = vpop.xlane.xlu0 %1157
      %v1159 = vsel %vm1098, %v772, -inf
      %v1160 = vmax.f32 %v743, %v1159
      %1161 = vmax.xlane.f32.xlu0 %v1160
      %v1162 = vpop.xlane.xlu0 %1161
      %v1163 = vsel %vm1098, %v917, -inf
      %v1164 = vmax.f32 %v888, %v1163
      %1165 = vmax.xlane.f32.xlu0 %v1164
      %v1166 = vpop.xlane.xlu0 %1165
      %v1167 = vsel %vm1098, %v919, -inf
      %v1168 = vmax.f32 %v890, %v1167
      %1169 = vmax.xlane.f32.xlu0 %v1168
      %v1170 = vpop.xlane.xlu0 %1169
      %v1171 = vsel %vm1098, %v922, -inf
      %v1172 = vmax.f32 %v893, %v1171
      %1173 = vmax.xlane.f32.xlu0 %v1172
      %v1174 = vpop.xlane.xlu0 %1173
      %v1175 = vsel %vm1098, %v924, -inf
      %v1176 = vmax.f32 %v895, %v1175
      %1177 = vmax.xlane.f32.xlu0 %v1176
      %v1178 = vpop.xlane.xlu0 %1177
      %v1179 = vsel %vm1098, %v927, -inf
      %v1180 = vmax.f32 %v898, %v1179
      %1181 = vmax.xlane.f32.xlu0 %v1180
      %v1182 = vpop.xlane.xlu0 %1181
      %v1183 = vsel %vm1098, %v929, -inf
      %v1184 = vmax.f32 %v900, %v1183
      %1185 = vmax.xlane.f32.xlu0 %v1184
      %v1186 = vpop.xlane.xlu0 %1185
      %v1187 = vsel %vm1098, %v932, -inf
      %v1188 = vmax.f32 %v903, %v1187
      %1189 = vmax.xlane.f32.xlu0 %v1188
      %v1190 = vpop.xlane.xlu0 %1189
      %v1191 = vsel %vm1098, %v934, -inf
      %v1192 = vmax.f32 %v905, %v1191
      %1193 = vmax.xlane.f32.xlu0 %v1192
      %v1194 = vpop.xlane.xlu0 %1193
      %v1195 = vsel %vm1098, %v1079, -inf
      %v1196 = vmax.f32 %v1050, %v1195
      %1197 = vmax.xlane.f32.xlu0 %v1196
      %v1198 = vpop.xlane.xlu0 %1197
      %v1199 = vsel %vm1098, %v1081, -inf
      %v1200 = vmax.f32 %v1052, %v1199
      %1201 = vmax.xlane.f32.xlu0 %v1200
      %v1202 = vpop.xlane.xlu0 %1201
      %v1203 = vsel %vm1098, %v1084, -inf
      %v1204 = vmax.f32 %v1055, %v1203
      %1205 = vmax.xlane.f32.xlu0 %v1204
      %v1206 = vpop.xlane.xlu0 %1205
      %v1207 = vsel %vm1098, %v1086, -inf
      %v1208 = vmax.f32 %v1057, %v1207
      %1209 = vmax.xlane.f32.xlu0 %v1208
      %v1210 = vpop.xlane.xlu0 %1209
      %v1211 = vsel %vm1098, %v1089, -inf
      %v1212 = vmax.f32 %v1060, %v1211
      %1213 = vmax.xlane.f32.xlu0 %v1212
      %v1214 = vpop.xlane.xlu0 %1213
      %v1215 = vsel %vm1098, %v1091, -inf
      %v1216 = vmax.f32 %v1062, %v1215
      %1217 = vmax.xlane.f32.xlu0 %v1216
      %v1218 = vpop.xlane.xlu0 %1217
      %v1219 = vsel %vm1098, %v1094, -inf
      %v1220 = vmax.f32 %v1065, %v1219
      %1221 = vmax.xlane.f32.xlu0 %v1220
      %v1222 = vpop.xlane.xlu0 %1221
      %v1223 = vsel %vm1098, %v1096, -inf
      %v1224 = vmax.f32 %v1067, %v1223
      %1225 = vmax.xlane.f32.xlu0 %v1224
      %v1226 = vpop.xlane.xlu0 %1225
      %v1227 = vsub.f32 %v564, %v1102
      %v1228 = vsub.f32 %v593, %v1102
      %v1229 = vsub.f32 %v566, %v1106
      %v1230 = vsub.f32 %v595, %v1106
      %v1231 = vsub.f32 %v569, %v1110
      %v1232 = vsub.f32 %v598, %v1110
      %v1233 = vsub.f32 %v571, %v1114
      %v1234 = vsub.f32 %v600, %v1114
      %v1235 = vsub.f32 %v574, %v1118
      %v1236 = vsub.f32 %v603, %v1118
      %v1237 = vsub.f32 %v576, %v1122
      %v1238 = vsub.f32 %v605, %v1122
      %v1239 = vsub.f32 %v579, %v1126
      %v1240 = vsub.f32 %v608, %v1126
      %v1241 = vsub.f32 %v581, %v1130
      %v1242 = vsub.f32 %v610, %v1130
      %v1243 = vsub.f32 %v726, %v1134
      %v1244 = vsub.f32 %v755, %v1134
      %v1245 = vsub.f32 %v728, %v1138
      %v1246 = vsub.f32 %v757, %v1138
      %v1247 = vsub.f32 %v731, %v1142
      %v1248 = vsub.f32 %v760, %v1142
      %v1249 = vsub.f32 %v733, %v1146
      %v1250 = vsub.f32 %v762, %v1146
      %v1251 = vsub.f32 %v736, %v1150
      %v1252 = vsub.f32 %v765, %v1150
      %v1253 = vsub.f32 %v738, %v1154
      %v1254 = vsub.f32 %v767, %v1154
      %v1255 = vsub.f32 %v741, %v1158
      %v1256 = vsub.f32 %v770, %v1158
      %v1257 = vsub.f32 %v743, %v1162
      %v1258 = vsub.f32 %v772, %v1162
      %v1259 = vsub.f32 %v888, %v1166
      %v1260 = vsub.f32 %v917, %v1166
      %v1261 = vsub.f32 %v890, %v1170
      %v1262 = vsub.f32 %v919, %v1170
      %v1263 = vsub.f32 %v893, %v1174
      %v1264 = vsub.f32 %v922, %v1174
      %v1265 = vsub.f32 %v895, %v1178
      %v1266 = vsub.f32 %v924, %v1178
      %v1267 = vsub.f32 %v898, %v1182
      %v1268 = vsub.f32 %v927, %v1182
      %v1269 = vsub.f32 %v900, %v1186
      %v1270 = vsub.f32 %v929, %v1186
      %v1271 = vsub.f32 %v903, %v1190
      %v1272 = vsub.f32 %v932, %v1190
      %v1273 = vsub.f32 %v905, %v1194
      %v1274 = vsub.f32 %v934, %v1194
      %v1275 = vsub.f32 %v1050, %v1198
      %v1276 = vsub.f32 %v1079, %v1198
      %v1277 = vsub.f32 %v1052, %v1202
      %v1278 = vsub.f32 %v1081, %v1202
      %v1279 = vsub.f32 %v1055, %v1206
      %v1280 = vsub.f32 %v1084, %v1206
      %v1281 = vsub.f32 %v1057, %v1210
      %v1282 = vsub.f32 %v1086, %v1210
      %v1283 = vsub.f32 %v1060, %v1214
      %v1284 = vsub.f32 %v1089, %v1214
      %v1285 = vsub.f32 %v1062, %v1218
      %v1286 = vsub.f32 %v1091, %v1218
      %v1287 = vsub.f32 %v1065, %v1222
      %v1288 = vsub.f32 %v1094, %v1222
      %v1289 = vsub.f32 %v1067, %v1226
      %v1290 = vsub.f32 %v1096, %v1226
      %v1291 = vmul.f32 %v1227, 1.442695
      %v1292 = vpow.pop %v1291
      %v1293 = vmul.f32 %v1228, 1.442695
      %v1294 = vpow.pop %v1293
      %v1295 = vmul.f32 %v1229, 1.442695
      %v1296 = vpow.pop %v1295
      %v1297 = vmul.f32 %v1230, 1.442695
      %v1298 = vpow.pop %v1297
      %v1299 = vmul.f32 %v1231, 1.442695
      %v1300 = vpow.pop %v1299
      %v1301 = vmul.f32 %v1232, 1.442695
      %v1302 = vpow.pop %v1301
      %v1303 = vmul.f32 %v1233, 1.442695
      %v1304 = vpow.pop %v1303
      %v1305 = vmul.f32 %v1234, 1.442695
      %v1306 = vpow.pop %v1305
      %v1307 = vmul.f32 %v1235, 1.442695
      %v1308 = vpow.pop %v1307
      %v1309 = vmul.f32 %v1236, 1.442695
      %v1310 = vpow.pop %v1309
      %v1311 = vmul.f32 %v1237, 1.442695
      %v1312 = vpow.pop %v1311
      %v1313 = vmul.f32 %v1238, 1.442695
      %v1314 = vpow.pop %v1313
      %v1315 = vmul.f32 %v1239, 1.442695
      %v1316 = vpow.pop %v1315
      %v1317 = vmul.f32 %v1240, 1.442695
      %v1318 = vpow.pop %v1317
      %v1319 = vmul.f32 %v1241, 1.442695
      %v1320 = vpow.pop %v1319
      %v1321 = vmul.f32 %v1242, 1.442695
      %v1322 = vpow.pop %v1321
      %v1323 = vmul.f32 %v1243, 1.442695
      %v1324 = vpow.pop %v1323
      %v1325 = vmul.f32 %v1244, 1.442695
      %v1326 = vpow.pop %v1325
      %v1327 = vmul.f32 %v1245, 1.442695
      %v1328 = vpow.pop %v1327
      %v1329 = vmul.f32 %v1246, 1.442695
      %v1330 = vpow.pop %v1329
      %v1331 = vmul.f32 %v1247, 1.442695
      %v1332 = vpow.pop %v1331
      %v1333 = vmul.f32 %v1248, 1.442695
      %v1334 = vpow.pop %v1333
      %v1335 = vmul.f32 %v1249, 1.442695
      %v1336 = vpow.pop %v1335
      %v1337 = vmul.f32 %v1250, 1.442695
      %v1338 = vpow.pop %v1337
      %v1339 = vmul.f32 %v1251, 1.442695
      %v1340 = vpow.pop %v1339
      %v1341 = vmul.f32 %v1252, 1.442695
      %v1342 = vpow.pop %v1341
      %v1343 = vmul.f32 %v1253, 1.442695
      %v1344 = vpow.pop %v1343
      %v1345 = vmul.f32 %v1254, 1.442695
      %v1346 = vpow.pop %v1345
      %v1347 = vmul.f32 %v1255, 1.442695
      %v1348 = vpow.pop %v1347
      %v1349 = vmul.f32 %v1256, 1.442695
      %v1350 = vpow.pop %v1349
      %v1351 = vmul.f32 %v1257, 1.442695
      %v1352 = vpow.pop %v1351
      %v1353 = vmul.f32 %v1258, 1.442695
      %v1354 = vpow.pop %v1353
      %v1355 = vmul.f32 %v1259, 1.442695
      %v1356 = vpow.pop %v1355
      %v1357 = vmul.f32 %v1260, 1.442695
      %v1358 = vpow.pop %v1357
      %v1359 = vmul.f32 %v1261, 1.442695
      %v1360 = vpow.pop %v1359
      %v1361 = vmul.f32 %v1262, 1.442695
      %v1362 = vpow.pop %v1361
      %v1363 = vmul.f32 %v1263, 1.442695
      %v1364 = vpow.pop %v1363
      %v1365 = vmul.f32 %v1264, 1.442695
      %v1366 = vpow.pop %v1365
      %v1367 = vmul.f32 %v1265, 1.442695
      %v1368 = vpow.pop %v1367
      %v1369 = vmul.f32 %v1266, 1.442695
      %v1370 = vpow.pop %v1369
      %v1371 = vmul.f32 %v1267, 1.442695
      %v1372 = vpow.pop %v1371
      %v1373 = vmul.f32 %v1268, 1.442695
      %v1374 = vpow.pop %v1373
      %v1375 = vmul.f32 %v1269, 1.442695
      %v1376 = vpow.pop %v1375
      %v1377 = vmul.f32 %v1270, 1.442695
      %v1378 = vpow.pop %v1377
      %v1379 = vmul.f32 %v1271, 1.442695
      %v1380 = vpow.pop %v1379
      %v1381 = vmul.f32 %v1272, 1.442695
      %v1382 = vpow.pop %v1381
      %v1383 = vmul.f32 %v1273, 1.442695
      %v1384 = vpow.pop %v1383
      %v1385 = vmul.f32 %v1274, 1.442695
      %v1386 = vpow.pop %v1385
      %v1387 = vmul.f32 %v1275, 1.442695
      %v1388 = vpow.pop %v1387
      %v1389 = vmul.f32 %v1276, 1.442695
      %v1390 = vpow.pop %v1389
      %v1391 = vmul.f32 %v1277, 1.442695
      %v1392 = vpow.pop %v1391
      %v1393 = vmul.f32 %v1278, 1.442695
      %v1394 = vpow.pop %v1393
      %v1395 = vmul.f32 %v1279, 1.442695
      %v1396 = vpow.pop %v1395
      %v1397 = vmul.f32 %v1280, 1.442695
      %v1398 = vpow.pop %v1397
      %v1399 = vmul.f32 %v1281, 1.442695
      %v1400 = vpow.pop %v1399
      %v1401 = vmul.f32 %v1282, 1.442695
      %v1402 = vpow.pop %v1401
      %v1403 = vmul.f32 %v1283, 1.442695
      %v1404 = vpow.pop %v1403
      %v1405 = vmul.f32 %v1284, 1.442695
      %v1406 = vpow.pop %v1405
      %v1407 = vmul.f32 %v1285, 1.442695
      %v1408 = vpow.pop %v1407
      %v1409 = vmul.f32 %v1286, 1.442695
      %v1410 = vpow.pop %v1409
      %v1411 = vmul.f32 %v1287, 1.442695
      %v1412 = vpow.pop %v1411
      %v1413 = vmul.f32 %v1288, 1.442695
      %v1414 = vpow.pop %v1413
      %v1415 = vmul.f32 %v1289, 1.442695
      %v1416 = vpow.pop %v1415
      %v1417 = vmul.f32 %v1290, 1.442695
      %v1418 = vpow.pop %v1417
      %v1419 = vsel %vm1098, %v1294, 0.0
      %v1420 = vadd.f32 %v1292, %v1419
      %1421 = vadd.xlane.f32.xlu0 %v1420
      %v1422 = vpop.xlane.xlu0 %1421
      %v1423 = vsel %vm1098, %v1298, 0.0
      %v1424 = vadd.f32 %v1296, %v1423
      %1425 = vadd.xlane.f32.xlu0 %v1424
      %v1426 = vpop.xlane.xlu0 %1425
      %v1427 = vsel %vm1098, %v1302, 0.0
      %v1428 = vadd.f32 %v1300, %v1427
      %1429 = vadd.xlane.f32.xlu0 %v1428
      %v1430 = vpop.xlane.xlu0 %1429
      %v1431 = vsel %vm1098, %v1306, 0.0
      %v1432 = vadd.f32 %v1304, %v1431
      %1433 = vadd.xlane.f32.xlu0 %v1432
      %v1434 = vpop.xlane.xlu0 %1433
      %v1435 = vsel %vm1098, %v1310, 0.0
      %v1436 = vadd.f32 %v1308, %v1435
      %1437 = vadd.xlane.f32.xlu0 %v1436
      %v1438 = vpop.xlane.xlu0 %1437
      %v1439 = vsel %vm1098, %v1314, 0.0
      %v1440 = vadd.f32 %v1312, %v1439
      %1441 = vadd.xlane.f32.xlu0 %v1440
      %v1442 = vpop.xlane.xlu0 %1441
      %v1443 = vsel %vm1098, %v1318, 0.0
      %v1444 = vadd.f32 %v1316, %v1443
      %1445 = vadd.xlane.f32.xlu0 %v1444
      %v1446 = vpop.xlane.xlu0 %1445
      %v1447 = vsel %vm1098, %v1322, 0.0
      %v1448 = vadd.f32 %v1320, %v1447
      %1449 = vadd.xlane.f32.xlu0 %v1448
      %v1450 = vpop.xlane.xlu0 %1449
      %v1451 = vsel %vm1098, %v1326, 0.0
      %v1452 = vadd.f32 %v1324, %v1451
      %1453 = vadd.xlane.f32.xlu0 %v1452
      %v1454 = vpop.xlane.xlu0 %1453
      %v1455 = vsel %vm1098, %v1330, 0.0
      %v1456 = vadd.f32 %v1328, %v1455
      %1457 = vadd.xlane.f32.xlu0 %v1456
      %v1458 = vpop.xlane.xlu0 %1457
      %v1459 = vsel %vm1098, %v1334, 0.0
      %v1460 = vadd.f32 %v1332, %v1459
      %1461 = vadd.xlane.f32.xlu0 %v1460
      %v1462 = vpop.xlane.xlu0 %1461
      %v1463 = vsel %vm1098, %v1338, 0.0
      %v1464 = vadd.f32 %v1336, %v1463
      %1465 = vadd.xlane.f32.xlu0 %v1464
      %v1466 = vpop.xlane.xlu0 %1465
      %v1467 = vsel %vm1098, %v1342, 0.0
      %v1468 = vadd.f32 %v1340, %v1467
      %1469 = vadd.xlane.f32.xlu0 %v1468
      %v1470 = vpop.xlane.xlu0 %1469
      %v1471 = vsel %vm1098, %v1346, 0.0
      %v1472 = vadd.f32 %v1344, %v1471
      %1473 = vadd.xlane.f32.xlu0 %v1472
      %v1474 = vpop.xlane.xlu0 %1473
      %v1475 = vsel %vm1098, %v1350, 0.0
      %v1476 = vadd.f32 %v1348, %v1475
      %1477 = vadd.xlane.f32.xlu0 %v1476
      %v1478 = vpop.xlane.xlu0 %1477
      %v1479 = vsel %vm1098, %v1354, 0.0
      %v1480 = vadd.f32 %v1352, %v1479
      %1481 = vadd.xlane.f32.xlu0 %v1480
      %v1482 = vpop.xlane.xlu0 %1481
      %v1483 = vsel %vm1098, %v1358, 0.0
      %v1484 = vadd.f32 %v1356, %v1483
      %1485 = vadd.xlane.f32.xlu0 %v1484
      %v1486 = vpop.xlane.xlu0 %1485
      %v1487 = vsel %vm1098, %v1362, 0.0
      %v1488 = vadd.f32 %v1360, %v1487
      %1489 = vadd.xlane.f32.xlu0 %v1488
      %v1490 = vpop.xlane.xlu0 %1489
      %v1491 = vsel %vm1098, %v1366, 0.0
      %v1492 = vadd.f32 %v1364, %v1491
      %1493 = vadd.xlane.f32.xlu0 %v1492
      %v1494 = vpop.xlane.xlu0 %1493
      %v1495 = vsel %vm1098, %v1370, 0.0
      %v1496 = vadd.f32 %v1368, %v1495
      %1497 = vadd.xlane.f32.xlu0 %v1496
      %v1498 = vpop.xlane.xlu0 %1497
      %v1499 = vsel %vm1098, %v1374, 0.0
      %v1500 = vadd.f32 %v1372, %v1499
      %1501 = vadd.xlane.f32.xlu0 %v1500
      %v1502 = vpop.xlane.xlu0 %1501
      %v1503 = vsel %vm1098, %v1378, 0.0
      %v1504 = vadd.f32 %v1376, %v1503
      %1505 = vadd.xlane.f32.xlu0 %v1504
      %v1506 = vpop.xlane.xlu0 %1505
      %v1507 = vsel %vm1098, %v1382, 0.0
      %v1508 = vadd.f32 %v1380, %v1507
      %1509 = vadd.xlane.f32.xlu0 %v1508
      %v1510 = vpop.xlane.xlu0 %1509
      %v1511 = vsel %vm1098, %v1386, 0.0
      %v1512 = vadd.f32 %v1384, %v1511
      %1513 = vadd.xlane.f32.xlu0 %v1512
      %v1514 = vpop.xlane.xlu0 %1513
      %v1515 = vsel %vm1098, %v1390, 0.0
      %v1516 = vadd.f32 %v1388, %v1515
      %1517 = vadd.xlane.f32.xlu0 %v1516
      %v1518 = vpop.xlane.xlu0 %1517
      %v1519 = vsel %vm1098, %v1394, 0.0
      %v1520 = vadd.f32 %v1392, %v1519
      %1521 = vadd.xlane.f32.xlu0 %v1520
      %v1522 = vpop.xlane.xlu0 %1521
      %v1523 = vsel %vm1098, %v1398, 0.0
      %v1524 = vadd.f32 %v1396, %v1523
      %1525 = vadd.xlane.f32.xlu0 %v1524
      %v1526 = vpop.xlane.xlu0 %1525
      %v1527 = vsel %vm1098, %v1402, 0.0
      %v1528 = vadd.f32 %v1400, %v1527
      %1529 = vadd.xlane.f32.xlu0 %v1528
      %v1530 = vpop.xlane.xlu0 %1529
      %v1531 = vsel %vm1098, %v1406, 0.0
      %v1532 = vadd.f32 %v1404, %v1531
      %1533 = vadd.xlane.f32.xlu0 %v1532
      %v1534 = vpop.xlane.xlu0 %1533
      %v1535 = vsel %vm1098, %v1410, 0.0
      %v1536 = vadd.f32 %v1408, %v1535
      %1537 = vadd.xlane.f32.xlu0 %v1536
      %v1538 = vpop.xlane.xlu0 %1537
      %v1539 = vsel %vm1098, %v1414, 0.0
      %v1540 = vadd.f32 %v1412, %v1539
      %1541 = vadd.xlane.f32.xlu0 %v1540
      %v1542 = vpop.xlane.xlu0 %1541
      %v1543 = vsel %vm1098, %v1418, 0.0
      %v1544 = vadd.f32 %v1416, %v1543
      %1545 = vadd.xlane.f32.xlu0 %v1544
      %v1546 = vpop.xlane.xlu0 %1545
      %v1547 = vrcp.pop %v1422
      %v1548 = vrcp.pop %v1426
      %v1549 = vrcp.pop %v1430
      %v1550 = vrcp.pop %v1434
      %v1551 = vrcp.pop %v1438
      %v1552 = vrcp.pop %v1442
      %v1553 = vrcp.pop %v1446
      %v1554 = vrcp.pop %v1450
      %v1555 = vrcp.pop %v1454
      %v1556 = vrcp.pop %v1458
      %v1557 = vrcp.pop %v1462
      %v1558 = vrcp.pop %v1466
      %v1559 = vrcp.pop %v1470
      %v1560 = vrcp.pop %v1474
      %v1561 = vrcp.pop %v1478
      %v1562 = vrcp.pop %v1482
      %v1563 = vrcp.pop %v1486
      %v1564 = vrcp.pop %v1490
      %v1565 = vrcp.pop %v1494
      %v1566 = vrcp.pop %v1498
      %v1567 = vrcp.pop %v1502
      %v1568 = vrcp.pop %v1506
      %v1569 = vrcp.pop %v1510
      %v1570 = vrcp.pop %v1514
      %v1571 = vrcp.pop %v1518
      %v1572 = vrcp.pop %v1522
      %v1573 = vrcp.pop %v1526
      %v1574 = vrcp.pop %v1530
      %v1575 = vrcp.pop %v1534
      %v1576 = vrcp.pop %v1538
      %v1577 = vrcp.pop %v1542
      %v1578 = vrcp.pop %v1546
      %v1579 = vmul.f32 %v1292, %v1547
      %v1580 = vmul.f32 %v1294, %v1547
      %v1581 = vmul.f32 %v1296, %v1548
      %v1582 = vmul.f32 %v1298, %v1548
      %v1583 = vmul.f32 %v1300, %v1549
      %v1584 = vmul.f32 %v1302, %v1549
      %v1585 = vmul.f32 %v1304, %v1550
      %v1586 = vmul.f32 %v1306, %v1550
      %v1587 = vmul.f32 %v1308, %v1551
      %v1588 = vmul.f32 %v1310, %v1551
      %v1589 = vmul.f32 %v1312, %v1552
      %v1590 = vmul.f32 %v1314, %v1552
      %v1591 = vmul.f32 %v1316, %v1553
      %v1592 = vmul.f32 %v1318, %v1553
      %v1593 = vmul.f32 %v1320, %v1554
      %v1594 = vmul.f32 %v1322, %v1554
      %v1595 = vmul.f32 %v1324, %v1555
      %v1596 = vmul.f32 %v1326, %v1555
      %v1597 = vmul.f32 %v1328, %v1556
      %v1598 = vmul.f32 %v1330, %v1556
      %v1599 = vmul.f32 %v1332, %v1557
      %v1600 = vmul.f32 %v1334, %v1557
      %v1601 = vmul.f32 %v1336, %v1558
      %v1602 = vmul.f32 %v1338, %v1558
      %v1603 = vmul.f32 %v1340, %v1559
      %v1604 = vmul.f32 %v1342, %v1559
      %v1605 = vmul.f32 %v1344, %v1560
      %v1606 = vmul.f32 %v1346, %v1560
      %v1607 = vmul.f32 %v1348, %v1561
      %v1608 = vmul.f32 %v1350, %v1561
      %v1609 = vmul.f32 %v1352, %v1562
      %v1610 = vmul.f32 %v1354, %v1562
      %v1611 = vmul.f32 %v1356, %v1563
      %v1612 = vmul.f32 %v1358, %v1563
      %v1613 = vmul.f32 %v1360, %v1564
      %v1614 = vmul.f32 %v1362, %v1564
      %v1615 = vmul.f32 %v1364, %v1565
      %v1616 = vmul.f32 %v1366, %v1565
      %v1617 = vmul.f32 %v1368, %v1566
      %v1618 = vmul.f32 %v1370, %v1566
      %v1619 = vmul.f32 %v1372, %v1567
      %v1620 = vmul.f32 %v1374, %v1567
      %v1621 = vmul.f32 %v1376, %v1568
      %v1622 = vmul.f32 %v1378, %v1568
      %v1623 = vmul.f32 %v1380, %v1569
      %v1624 = vmul.f32 %v1382, %v1569
      %v1625 = vmul.f32 %v1384, %v1570
      %v1626 = vmul.f32 %v1386, %v1570
      %v1627 = vmul.f32 %v1388, %v1571
      %v1628 = vmul.f32 %v1390, %v1571
      %v1629 = vmul.f32 %v1392, %v1572
      %v1630 = vmul.f32 %v1394, %v1572
      %v1631 = vmul.f32 %v1396, %v1573
      %v1632 = vmul.f32 %v1398, %v1573
      %v1633 = vmul.f32 %v1400, %v1574
      %v1634 = vmul.f32 %v1402, %v1574
      %v1635 = vmul.f32 %v1404, %v1575
      %v1636 = vmul.f32 %v1406, %v1575
      %v1637 = vmul.f32 %v1408, %v1576
      %v1638 = vmul.f32 %v1410, %v1576
      %v1639 = vmul.f32 %v1412, %v1577
      %v1640 = vmul.f32 %v1414, %v1577
      %v1641 = vmul.f32 %v1416, %v1578
      %v1642 = vmul.f32 %v1418, %v1578
      %v1643 = vpack.c.bf16 %v1580, %v1579
      %v1644 = vpack.c.bf16 %v1582, %v1581
      %v1645 = vpack.c.bf16 %v1584, %v1583
      %v1646 = vpack.c.bf16 %v1586, %v1585
      %v1647 = vpack.c.bf16 %v1588, %v1587
      %v1648 = vpack.c.bf16 %v1590, %v1589
      %v1649 = vpack.c.bf16 %v1592, %v1591
      %v1650 = vpack.c.bf16 %v1594, %v1593
      %v1651 = vpack.c.bf16 %v1596, %v1595
      %v1652 = vpack.c.bf16 %v1598, %v1597
      %v1653 = vpack.c.bf16 %v1600, %v1599
      %v1654 = vpack.c.bf16 %v1602, %v1601
      %v1655 = vpack.c.bf16 %v1604, %v1603
      %v1656 = vpack.c.bf16 %v1606, %v1605
      %v1657 = vpack.c.bf16 %v1608, %v1607
      %v1658 = vpack.c.bf16 %v1610, %v1609
      %v1659 = vpack.c.bf16 %v1612, %v1611
      %v1660 = vpack.c.bf16 %v1614, %v1613
      %v1661 = vpack.c.bf16 %v1616, %v1615
      %v1662 = vpack.c.bf16 %v1618, %v1617
      %v1663 = vpack.c.bf16 %v1620, %v1619
      %v1664 = vpack.c.bf16 %v1622, %v1621
      %v1665 = vpack.c.bf16 %v1624, %v1623
      %v1666 = vpack.c.bf16 %v1626, %v1625
      %v1667 = vpack.c.bf16 %v1628, %v1627
      %v1668 = vpack.c.bf16 %v1630, %v1629
      %v1669 = vpack.c.bf16 %v1632, %v1631
      %v1670 = vpack.c.bf16 %v1634, %v1633
      %v1671 = vpack.c.bf16 %v1636, %v1635
      %v1672 = vpack.c.bf16 %v1638, %v1637
      %v1673 = vpack.c.bf16 %v1640, %v1639
      %v1674 = vpack.c.bf16 %v1642, %v1641
      %v1683 = vunpack.c.l.b16 %v1643
      %v1684 = vunpack.c.h.b16 %v1643
      %v1685 = vunpack.c.l.b16 %v1644
      %v1686 = vunpack.c.h.b16 %v1644
      %v1687 = vunpack.c.l.b16 %v1645
      %v1688 = vunpack.c.h.b16 %v1645
      %v1689 = vunpack.c.l.b16 %v1646
      %v1690 = vunpack.c.h.b16 %v1646
      %v1691 = vunpack.c.l.b16 %v1647
      %v1692 = vunpack.c.h.b16 %v1647
      %v1693 = vunpack.c.l.b16 %v1648
      %v1694 = vunpack.c.h.b16 %v1648
      %v1695 = vunpack.c.l.b16 %v1649
      %v1696 = vunpack.c.h.b16 %v1649
      %v1697 = vunpack.c.l.b16 %v1650
      %v1698 = vunpack.c.h.b16 %v1650
      %v1699 = vpack.c.b16 %v1685, %v1683
      %v1700 = vpack.c.b16 %v1686, %v1684
      %v1701 = vpack.c.b16 %v1689, %v1687
      %v1702 = vpack.c.b16 %v1690, %v1688
      %v1703 = vpack.c.b16 %v1693, %v1691
      %v1704 = vpack.c.b16 %v1694, %v1692
      %v1705 = vpack.c.b16 %v1697, %v1695
      %v1706 = vpack.c.b16 %v1698, %v1696
      %v1729 = vunpack.c.l.b16 %v361
      %v1730 = vunpack.c.l.b16 %v362
      %v1731 = vunpack.c.l.b16 %v363
      %v1732 = vunpack.c.l.b16 %v364
      %v1733 = vunpack.c.l.b16 %v365
      %v1734 = vunpack.c.l.b16 %v366
      %v1735 = vunpack.c.l.b16 %v367
      %v1736 = vunpack.c.l.b16 %v368
      %v1737 = vunpack.c.l.b16 %v369
      %v1738 = vunpack.c.l.b16 %v370
      %v1739 = vunpack.c.l.b16 %v371
      %v1740 = vunpack.c.l.b16 %v372
      %v1741 = vunpack.c.l.b16 %v373
      %v1742 = vunpack.c.l.b16 %v374
      %v1743 = vunpack.c.l.b16 %v375
      %v1744 = vunpack.c.l.b16 %v376
      %v1745 = vunpack.c.l.b16 %v377
      %v1746 = vunpack.c.l.b16 %v378
      %v1747 = vpack.c.b16 %v1730, %v1729
      %v1748 = vpack.c.b16 %v1732, %v1731
      %v1749 = vpack.c.b16 %v1734, %v1733
      %v1750 = vpack.c.b16 %v1736, %v1735
      %v1751 = vpack.c.b16 %v1738, %v1737
      %v1752 = vpack.c.b16 %v1740, %v1739
      %v1753 = vpack.c.b16 %v1742, %v1741
      %v1754 = vpack.c.b16 %v1744, %v1743
      %v1755 = vpack.c.b16 %v1746, %v1745
      %v1766 = vsel %vm1098, %v1700, 0
      %v1769 = vsel %vm1098, %v1702, 0
      %v1772 = vsel %vm1098, %v1704, 0
      %v1775 = vsel %vm1098, %v1706, 0
      %1777 = vmatpush.bf16.msra.mxu0 %v1754
      %1778 = vmatpush.bf16.msra.mxu0 %v1753
      %1779 = vmatpush.bf16.msra.mxu0 %v1752
      %1780 = vmatpush.bf16.msra.mxu0 %v1751
      %1781 = vmatpush.bf16.msra.mxu0 %v1750
      %1782 = vmatpush.bf16.msra.mxu0 %v1749
      %1783 = vmatpush.bf16.msra.mxu0 %v1748
      %1784 = vmatpush.bf16.msra.mxu0 %v1747
      %1785 = vmatmul.bf16.gmra.mxu0 %v1699
      %v1786 = vpop.f32.mrf.mxu0
      %v1787 = vadd.f32 0.0, %v1786
      %v1788 = vpop.f32.mrf.mxu0
      %v1789 = vadd.f32 0.0, %v1788
      %1790 = vmatmul.bf16.gmra.mxu0 %v1701
      %v1791 = vpop.f32.mrf.mxu0
      %v1792 = vadd.f32 0.0, %v1791
      %v1793 = vpop.f32.mrf.mxu0
      %v1794 = vadd.f32 0.0, %v1793
      %1795 = vmatmul.bf16.gmra.mxu0 %v1703
      %v1796 = vpop.f32.mrf.mxu0
      %v1797 = vadd.f32 0.0, %v1796
      %v1798 = vpop.f32.mrf.mxu0
      %v1799 = vadd.f32 0.0, %v1798
      %1800 = vmatmul.bf16.gmra.mxu0 %v1705
      %v1801 = vpop.f32.mrf.mxu0
      %v1802 = vadd.f32 0.0, %v1801
      %v1803 = vpop.f32.mrf.mxu0
      %v1804 = vadd.f32 0.0, %v1803
      %1805 = vdwg.mxu0
      %1806 = vmatpush.bf16.msra.mxu0 0
      %1807 = vmatpush.bf16.msra.mxu0 0
      %1808 = vmatpush.bf16.msra.mxu0 0
      %1809 = vmatpush.bf16.msra.mxu0 0
      %1810 = vmatpush.bf16.msra.mxu0 0
      %1811 = vmatpush.bf16.msra.mxu0 0
      %1812 = vmatpush.bf16.msra.mxu0 0
      %1813 = vmatpush.bf16.msra.mxu0 %v1755
      %1814 = vmatmul.bf16.gmra.mxu0 %v1766
      %v1815 = vpop.f32.mrf.mxu0
      %v1816 = vadd.f32 %v1787, %v1815
      %v1817 = vpop.f32.mrf.mxu0
      %v1818 = vadd.f32 %v1789, %v1817
      %1819 = vmatmul.bf16.gmra.mxu0 %v1769
      %v1820 = vpop.f32.mrf.mxu0
      %v1821 = vadd.f32 %v1792, %v1820
      %v1822 = vpop.f32.mrf.mxu0
      %v1823 = vadd.f32 %v1794, %v1822
      %1824 = vmatmul.bf16.gmra.mxu0 %v1772
      %v1825 = vpop.f32.mrf.mxu0
      %v1826 = vadd.f32 %v1797, %v1825
      %v1827 = vpop.f32.mrf.mxu0
      %v1828 = vadd.f32 %v1799, %v1827
      %1829 = vmatmul.bf16.gmra.mxu0 %v1775
      %v1830 = vpop.f32.mrf.mxu0
      %v1831 = vadd.f32 %v1802, %v1830
      %v1832 = vpop.f32.mrf.mxu0
      %v1833 = vadd.f32 %v1804, %v1832
      %1834 = vdwg.mxu0
      %v1843 = vunpack.c.l.b16 %v1651
      %v1844 = vunpack.c.h.b16 %v1651
      %v1845 = vunpack.c.l.b16 %v1652
      %v1846 = vunpack.c.h.b16 %v1652
      %v1847 = vunpack.c.l.b16 %v1653
      %v1848 = vunpack.c.h.b16 %v1653
      %v1849 = vunpack.c.l.b16 %v1654
      %v1850 = vunpack.c.h.b16 %v1654
      %v1851 = vunpack.c.l.b16 %v1655
      %v1852 = vunpack.c.h.b16 %v1655
      %v1853 = vunpack.c.l.b16 %v1656
      %v1854 = vunpack.c.h.b16 %v1656
      %v1855 = vunpack.c.l.b16 %v1657
      %v1856 = vunpack.c.h.b16 %v1657
      %v1857 = vunpack.c.l.b16 %v1658
      %v1858 = vunpack.c.h.b16 %v1658
      %v1859 = vpack.c.b16 %v1845, %v1843
      %v1860 = vpack.c.b16 %v1846, %v1844
      %v1861 = vpack.c.b16 %v1849, %v1847
      %v1862 = vpack.c.b16 %v1850, %v1848
      %v1863 = vpack.c.b16 %v1853, %v1851
      %v1864 = vpack.c.b16 %v1854, %v1852
      %v1865 = vpack.c.b16 %v1857, %v1855
      %v1866 = vpack.c.b16 %v1858, %v1856
      %v1889 = vunpack.c.l.b16 %v379
      %v1890 = vunpack.c.l.b16 %v380
      %v1891 = vunpack.c.l.b16 %v381
      %v1892 = vunpack.c.l.b16 %v382
      %v1893 = vunpack.c.l.b16 %v383
      %v1894 = vunpack.c.l.b16 %v384
      %v1895 = vunpack.c.l.b16 %v385
      %v1896 = vunpack.c.l.b16 %v386
      %v1897 = vunpack.c.l.b16 %v387
      %v1898 = vunpack.c.l.b16 %v388
      %v1899 = vunpack.c.l.b16 %v389
      %v1900 = vunpack.c.l.b16 %v390
      %v1901 = vunpack.c.l.b16 %v391
      %v1902 = vunpack.c.l.b16 %v392
      %v1903 = vunpack.c.l.b16 %v393
      %v1904 = vunpack.c.l.b16 %v394
      %v1905 = vunpack.c.l.b16 %v395
      %v1906 = vunpack.c.l.b16 %v396
      %v1907 = vpack.c.b16 %v1890, %v1889
      %v1908 = vpack.c.b16 %v1892, %v1891
      %v1909 = vpack.c.b16 %v1894, %v1893
      %v1910 = vpack.c.b16 %v1896, %v1895
      %v1911 = vpack.c.b16 %v1898, %v1897
      %v1912 = vpack.c.b16 %v1900, %v1899
      %v1913 = vpack.c.b16 %v1902, %v1901
      %v1914 = vpack.c.b16 %v1904, %v1903
      %v1915 = vpack.c.b16 %v1906, %v1905
      %v1926 = vsel %vm1098, %v1860, 0
      %v1929 = vsel %vm1098, %v1862, 0
      %v1932 = vsel %vm1098, %v1864, 0
      %v1935 = vsel %vm1098, %v1866, 0
      %1937 = vmatpush.bf16.msra.mxu0 %v1914
      %1938 = vmatpush.bf16.msra.mxu0 %v1913
      %1939 = vmatpush.bf16.msra.mxu0 %v1912
      %1940 = vmatpush.bf16.msra.mxu0 %v1911
      %1941 = vmatpush.bf16.msra.mxu0 %v1910
      %1942 = vmatpush.bf16.msra.mxu0 %v1909
      %1943 = vmatpush.bf16.msra.mxu0 %v1908
      %1944 = vmatpush.bf16.msra.mxu0 %v1907
      %1945 = vmatmul.bf16.gmra.mxu0 %v1859
      %v1946 = vpop.f32.mrf.mxu0
      %v1947 = vadd.f32 0.0, %v1946
      %v1948 = vpop.f32.mrf.mxu0
      %v1949 = vadd.f32 0.0, %v1948
      %1950 = vmatmul.bf16.gmra.mxu0 %v1861
      %v1951 = vpop.f32.mrf.mxu0
      %v1952 = vadd.f32 0.0, %v1951
      %v1953 = vpop.f32.mrf.mxu0
      %v1954 = vadd.f32 0.0, %v1953
      %1955 = vmatmul.bf16.gmra.mxu0 %v1863
      %v1956 = vpop.f32.mrf.mxu0
      %v1957 = vadd.f32 0.0, %v1956
      %v1958 = vpop.f32.mrf.mxu0
      %v1959 = vadd.f32 0.0, %v1958
      %1960 = vmatmul.bf16.gmra.mxu0 %v1865
      %v1961 = vpop.f32.mrf.mxu0
      %v1962 = vadd.f32 0.0, %v1961
      %v1963 = vpop.f32.mrf.mxu0
      %v1964 = vadd.f32 0.0, %v1963
      %1965 = vdwg.mxu0
      %1966 = vmatpush.bf16.msra.mxu0 0
      %1967 = vmatpush.bf16.msra.mxu0 0
      %1968 = vmatpush.bf16.msra.mxu0 0
      %1969 = vmatpush.bf16.msra.mxu0 0
      %1970 = vmatpush.bf16.msra.mxu0 0
      %1971 = vmatpush.bf16.msra.mxu0 0
      %1972 = vmatpush.bf16.msra.mxu0 0
      %1973 = vmatpush.bf16.msra.mxu0 %v1915
      %1974 = vmatmul.bf16.gmra.mxu0 %v1926
      %v1975 = vpop.f32.mrf.mxu0
      %v1976 = vadd.f32 %v1947, %v1975
      %v1977 = vpop.f32.mrf.mxu0
      %v1978 = vadd.f32 %v1949, %v1977
      %1979 = vmatmul.bf16.gmra.mxu0 %v1929
      %v1980 = vpop.f32.mrf.mxu0
      %v1981 = vadd.f32 %v1952, %v1980
      %v1982 = vpop.f32.mrf.mxu0
      %v1983 = vadd.f32 %v1954, %v1982
      %1984 = vmatmul.bf16.gmra.mxu0 %v1932
      %v1985 = vpop.f32.mrf.mxu0
      %v1986 = vadd.f32 %v1957, %v1985
      %v1987 = vpop.f32.mrf.mxu0
      %v1988 = vadd.f32 %v1959, %v1987
      %1989 = vmatmul.bf16.gmra.mxu0 %v1935
      %v1990 = vpop.f32.mrf.mxu0
      %v1991 = vadd.f32 %v1962, %v1990
      %v1992 = vpop.f32.mrf.mxu0
      %v1993 = vadd.f32 %v1964, %v1992
      %1994 = vdwg.mxu0
      %v2003 = vunpack.c.l.b16 %v1659
      %v2004 = vunpack.c.h.b16 %v1659
      %v2005 = vunpack.c.l.b16 %v1660
      %v2006 = vunpack.c.h.b16 %v1660
      %v2007 = vunpack.c.l.b16 %v1661
      %v2008 = vunpack.c.h.b16 %v1661
      %v2009 = vunpack.c.l.b16 %v1662
      %v2010 = vunpack.c.h.b16 %v1662
      %v2011 = vunpack.c.l.b16 %v1663
      %v2012 = vunpack.c.h.b16 %v1663
      %v2013 = vunpack.c.l.b16 %v1664
      %v2014 = vunpack.c.h.b16 %v1664
      %v2015 = vunpack.c.l.b16 %v1665
      %v2016 = vunpack.c.h.b16 %v1665
      %v2017 = vunpack.c.l.b16 %v1666
      %v2018 = vunpack.c.h.b16 %v1666
      %v2019 = vpack.c.b16 %v2005, %v2003
      %v2020 = vpack.c.b16 %v2006, %v2004
      %v2021 = vpack.c.b16 %v2009, %v2007
      %v2022 = vpack.c.b16 %v2010, %v2008
      %v2023 = vpack.c.b16 %v2013, %v2011
      %v2024 = vpack.c.b16 %v2014, %v2012
      %v2025 = vpack.c.b16 %v2017, %v2015
      %v2026 = vpack.c.b16 %v2018, %v2016
      %v2049 = vunpack.c.l.b16 %v397
      %v2050 = vunpack.c.l.b16 %v398
      %v2051 = vunpack.c.l.b16 %v399
      %v2052 = vunpack.c.l.b16 %v400
      %v2053 = vunpack.c.l.b16 %v401
      %v2054 = vunpack.c.l.b16 %v402
      %v2055 = vunpack.c.l.b16 %v403
      %v2056 = vunpack.c.l.b16 %v404
      %v2057 = vunpack.c.l.b16 %v405
      %v2058 = vunpack.c.l.b16 %v406
      %v2059 = vunpack.c.l.b16 %v407
      %v2060 = vunpack.c.l.b16 %v408
      %v2061 = vunpack.c.l.b16 %v409
      %v2062 = vunpack.c.l.b16 %v410
      %v2063 = vunpack.c.l.b16 %v411
      %v2064 = vunpack.c.l.b16 %v412
      %v2065 = vunpack.c.l.b16 %v413
      %v2066 = vunpack.c.l.b16 %v414
      %v2067 = vpack.c.b16 %v2050, %v2049
      %v2068 = vpack.c.b16 %v2052, %v2051
      %v2069 = vpack.c.b16 %v2054, %v2053
      %v2070 = vpack.c.b16 %v2056, %v2055
      %v2071 = vpack.c.b16 %v2058, %v2057
      %v2072 = vpack.c.b16 %v2060, %v2059
      %v2073 = vpack.c.b16 %v2062, %v2061
      %v2074 = vpack.c.b16 %v2064, %v2063
      %v2075 = vpack.c.b16 %v2066, %v2065
      %v2086 = vsel %vm1098, %v2020, 0
      %v2089 = vsel %vm1098, %v2022, 0
      %v2092 = vsel %vm1098, %v2024, 0
      %v2095 = vsel %vm1098, %v2026, 0
      %2097 = vmatpush.bf16.msra.mxu0 %v2074
      %2098 = vmatpush.bf16.msra.mxu0 %v2073
      %2099 = vmatpush.bf16.msra.mxu0 %v2072
      %2100 = vmatpush.bf16.msra.mxu0 %v2071
      %2101 = vmatpush.bf16.msra.mxu0 %v2070
      %2102 = vmatpush.bf16.msra.mxu0 %v2069
      %2103 = vmatpush.bf16.msra.mxu0 %v2068
      %2104 = vmatpush.bf16.msra.mxu0 %v2067
      %2105 = vmatmul.bf16.gmra.mxu0 %v2019
      %v2106 = vpop.f32.mrf.mxu0
      %v2107 = vadd.f32 0.0, %v2106
      %v2108 = vpop.f32.mrf.mxu0
      %v2109 = vadd.f32 0.0, %v2108
      %2110 = vmatmul.bf16.gmra.mxu0 %v2021
      %v2111 = vpop.f32.mrf.mxu0
      %v2112 = vadd.f32 0.0, %v2111
      %v2113 = vpop.f32.mrf.mxu0
      %v2114 = vadd.f32 0.0, %v2113
      %2115 = vmatmul.bf16.gmra.mxu0 %v2023
      %v2116 = vpop.f32.mrf.mxu0
      %v2117 = vadd.f32 0.0, %v2116
      %v2118 = vpop.f32.mrf.mxu0
      %v2119 = vadd.f32 0.0, %v2118
      %2120 = vmatmul.bf16.gmra.mxu0 %v2025
      %v2121 = vpop.f32.mrf.mxu0
      %v2122 = vadd.f32 0.0, %v2121
      %v2123 = vpop.f32.mrf.mxu0
      %v2124 = vadd.f32 0.0, %v2123
      %2125 = vdwg.mxu0
      %2126 = vmatpush.bf16.msra.mxu0 0
      %2127 = vmatpush.bf16.msra.mxu0 0
      %2128 = vmatpush.bf16.msra.mxu0 0
      %2129 = vmatpush.bf16.msra.mxu0 0
      %2130 = vmatpush.bf16.msra.mxu0 0
      %2131 = vmatpush.bf16.msra.mxu0 0
      %2132 = vmatpush.bf16.msra.mxu0 0
      %2133 = vmatpush.bf16.msra.mxu0 %v2075
      %2134 = vmatmul.bf16.gmra.mxu0 %v2086
      %v2135 = vpop.f32.mrf.mxu0
      %v2136 = vadd.f32 %v2107, %v2135
      %v2137 = vpop.f32.mrf.mxu0
      %v2138 = vadd.f32 %v2109, %v2137
      %2139 = vmatmul.bf16.gmra.mxu0 %v2089
      %v2140 = vpop.f32.mrf.mxu0
      %v2141 = vadd.f32 %v2112, %v2140
      %v2142 = vpop.f32.mrf.mxu0
      %v2143 = vadd.f32 %v2114, %v2142
      %2144 = vmatmul.bf16.gmra.mxu0 %v2092
      %v2145 = vpop.f32.mrf.mxu0
      %v2146 = vadd.f32 %v2117, %v2145
      %v2147 = vpop.f32.mrf.mxu0
      %v2148 = vadd.f32 %v2119, %v2147
      %2149 = vmatmul.bf16.gmra.mxu0 %v2095
      %v2150 = vpop.f32.mrf.mxu0
      %v2151 = vadd.f32 %v2122, %v2150
      %v2152 = vpop.f32.mrf.mxu0
      %v2153 = vadd.f32 %v2124, %v2152
      %2154 = vdwg.mxu0
      %v2163 = vunpack.c.l.b16 %v1667
      %v2164 = vunpack.c.h.b16 %v1667
      %v2165 = vunpack.c.l.b16 %v1668
      %v2166 = vunpack.c.h.b16 %v1668
      %v2167 = vunpack.c.l.b16 %v1669
      %v2168 = vunpack.c.h.b16 %v1669
      %v2169 = vunpack.c.l.b16 %v1670
      %v2170 = vunpack.c.h.b16 %v1670
      %v2171 = vunpack.c.l.b16 %v1671
      %v2172 = vunpack.c.h.b16 %v1671
      %v2173 = vunpack.c.l.b16 %v1672
      %v2174 = vunpack.c.h.b16 %v1672
      %v2175 = vunpack.c.l.b16 %v1673
      %v2176 = vunpack.c.h.b16 %v1673
      %v2177 = vunpack.c.l.b16 %v1674
      %v2178 = vunpack.c.h.b16 %v1674
      %v2179 = vpack.c.b16 %v2165, %v2163
      %v2180 = vpack.c.b16 %v2166, %v2164
      %v2181 = vpack.c.b16 %v2169, %v2167
      %v2182 = vpack.c.b16 %v2170, %v2168
      %v2183 = vpack.c.b16 %v2173, %v2171
      %v2184 = vpack.c.b16 %v2174, %v2172
      %v2185 = vpack.c.b16 %v2177, %v2175
      %v2186 = vpack.c.b16 %v2178, %v2176
      %v2209 = vunpack.c.l.b16 %v415
      %v2210 = vunpack.c.l.b16 %v416
      %v2211 = vunpack.c.l.b16 %v417
      %v2212 = vunpack.c.l.b16 %v418
      %v2213 = vunpack.c.l.b16 %v419
      %v2214 = vunpack.c.l.b16 %v420
      %v2215 = vunpack.c.l.b16 %v421
      %v2216 = vunpack.c.l.b16 %v422
      %v2217 = vunpack.c.l.b16 %v423
      %v2218 = vunpack.c.l.b16 %v424
      %v2219 = vunpack.c.l.b16 %v425
      %v2220 = vunpack.c.l.b16 %v426
      %v2221 = vunpack.c.l.b16 %v427
      %v2222 = vunpack.c.l.b16 %v428
      %v2223 = vunpack.c.l.b16 %v429
      %v2224 = vunpack.c.l.b16 %v430
      %v2225 = vunpack.c.l.b16 %v431
      %v2226 = vunpack.c.l.b16 %v432
      %v2227 = vpack.c.b16 %v2210, %v2209
      %v2228 = vpack.c.b16 %v2212, %v2211
      %v2229 = vpack.c.b16 %v2214, %v2213
      %v2230 = vpack.c.b16 %v2216, %v2215
      %v2231 = vpack.c.b16 %v2218, %v2217
      %v2232 = vpack.c.b16 %v2220, %v2219
      %v2233 = vpack.c.b16 %v2222, %v2221
      %v2234 = vpack.c.b16 %v2224, %v2223
      %v2235 = vpack.c.b16 %v2226, %v2225
      %v2246 = vsel %vm1098, %v2180, 0
      %v2249 = vsel %vm1098, %v2182, 0
      %v2252 = vsel %vm1098, %v2184, 0
      %v2255 = vsel %vm1098, %v2186, 0
      %2257 = vmatpush.bf16.msra.mxu0 %v2234
      %2258 = vmatpush.bf16.msra.mxu0 %v2233
      %2259 = vmatpush.bf16.msra.mxu0 %v2232
      %2260 = vmatpush.bf16.msra.mxu0 %v2231
      %2261 = vmatpush.bf16.msra.mxu0 %v2230
      %2262 = vmatpush.bf16.msra.mxu0 %v2229
      %2263 = vmatpush.bf16.msra.mxu0 %v2228
      %2264 = vmatpush.bf16.msra.mxu0 %v2227
      %2265 = vmatmul.bf16.gmra.mxu0 %v2179
      %v2266 = vpop.f32.mrf.mxu0
      %v2267 = vadd.f32 0.0, %v2266
      %v2268 = vpop.f32.mrf.mxu0
      %v2269 = vadd.f32 0.0, %v2268
      %2270 = vmatmul.bf16.gmra.mxu0 %v2181
      %v2271 = vpop.f32.mrf.mxu0
      %v2272 = vadd.f32 0.0, %v2271
      %v2273 = vpop.f32.mrf.mxu0
      %v2274 = vadd.f32 0.0, %v2273
      %2275 = vmatmul.bf16.gmra.mxu0 %v2183
      %v2276 = vpop.f32.mrf.mxu0
      %v2277 = vadd.f32 0.0, %v2276
      %v2278 = vpop.f32.mrf.mxu0
      %v2279 = vadd.f32 0.0, %v2278
      %2280 = vmatmul.bf16.gmra.mxu0 %v2185
      %v2281 = vpop.f32.mrf.mxu0
      %v2282 = vadd.f32 0.0, %v2281
      %v2283 = vpop.f32.mrf.mxu0
      %v2284 = vadd.f32 0.0, %v2283
      %2285 = vdwg.mxu0
      %2286 = vmatpush.bf16.msra.mxu0 0
      %2287 = vmatpush.bf16.msra.mxu0 0
      %2288 = vmatpush.bf16.msra.mxu0 0
      %2289 = vmatpush.bf16.msra.mxu0 0
      %2290 = vmatpush.bf16.msra.mxu0 0
      %2291 = vmatpush.bf16.msra.mxu0 0
      %2292 = vmatpush.bf16.msra.mxu0 0
      %2293 = vmatpush.bf16.msra.mxu0 %v2235
      %2294 = vmatmul.bf16.gmra.mxu0 %v2246
      %v2295 = vpop.f32.mrf.mxu0
      %v2296 = vadd.f32 %v2267, %v2295
      %v2297 = vpop.f32.mrf.mxu0
      %v2298 = vadd.f32 %v2269, %v2297
      %2299 = vmatmul.bf16.gmra.mxu0 %v2249
      %v2300 = vpop.f32.mrf.mxu0
      %v2301 = vadd.f32 %v2272, %v2300
      %v2302 = vpop.f32.mrf.mxu0
      %v2303 = vadd.f32 %v2274, %v2302
      %2304 = vmatmul.bf16.gmra.mxu0 %v2252
      %v2305 = vpop.f32.mrf.mxu0
      %v2306 = vadd.f32 %v2277, %v2305
      %v2307 = vpop.f32.mrf.mxu0
      %v2308 = vadd.f32 %v2279, %v2307
      %2309 = vmatmul.bf16.gmra.mxu0 %v2255
      %v2310 = vpop.f32.mrf.mxu0
      %v2311 = vadd.f32 %v2282, %v2310
      %v2312 = vpop.f32.mrf.mxu0
      %v2313 = vadd.f32 %v2284, %v2312
      %2314 = vdwg.mxu0
      %s2315 = scalar_lea.vmem %s3, 128
      %v2316 = vld [vmem:[%s2315] sm:$0xff]
      %v2317 = vld [vmem:[%s2315 + $0x8] sm:$0xff]
      %v2318 = vld [vmem:[%s2315 + $0x10] sm:$0xff]
      %v2319 = vld [vmem:[%s2315 + $0x18] sm:$0xff]
      %v2320 = vld [vmem:[%s2315 + $0x20] sm:$0xff]
      %v2321 = vld [vmem:[%s2315 + $0x28] sm:$0xff]
      %v2322 = vld [vmem:[%s2315 + $0x30] sm:$0xff]
      %v2323 = vld [vmem:[%s2315 + $0x38] sm:$0xff]
      %v2324 = vld [vmem:[%s2315 + $0x40] sm:$0xff]
      %v2325 = vld [vmem:[%s2315 + $0x48] sm:$0xff]
      %v2326 = vld [vmem:[%s2315 + $0x50] sm:$0xff]
      %v2327 = vld [vmem:[%s2315 + $0x58] sm:$0xff]
      %v2328 = vld [vmem:[%s2315 + $0x60] sm:$0xff]
      %v2329 = vld [vmem:[%s2315 + $0x68] sm:$0xff]
      %v2330 = vld [vmem:[%s2315 + $0x70] sm:$0xff]
      %v2331 = vld [vmem:[%s2315 + $0x78] sm:$0xff]
      %2332 = vrot.lane.b32.xlu0 %v465, 96
      %v2333 = vpop.permute.xlu0 %2332
      %2334 = vrot.lane.b32.xlu0 %v466, 96
      %v2335 = vpop.permute.xlu0 %2334
      %2336 = vrot.lane.b32.xlu0 %v467, 96
      %v2337 = vpop.permute.xlu0 %2336
      %2338 = vrot.lane.b32.xlu0 %v468, 96
      %v2339 = vpop.permute.xlu0 %2338
      %2340 = vrot.lane.b32.xlu0 %v505, 96
      %v2341 = vpop.permute.xlu0 %2340
      %2342 = vrot.lane.b32.xlu0 %v506, 96
      %v2343 = vpop.permute.xlu0 %2342
      %2344 = vrot.lane.b32.xlu0 %v507, 96
      %v2345 = vpop.permute.xlu0 %2344
      %2346 = vrot.lane.b32.xlu0 %v508, 96
      %v2347 = vpop.permute.xlu0 %2346
      %2348 = vrot.lane.b32.xlu0 %v509, 96
      %v2349 = vpop.permute.xlu0 %2348
      %2350 = vrot.lane.b32.xlu0 %v510, 96
      %v2351 = vpop.permute.xlu0 %2350
      %2352 = vrot.lane.b32.xlu0 %v511, 96
      %v2353 = vpop.permute.xlu0 %2352
      %2354 = vrot.lane.b32.xlu0 %v512, 96
      %v2355 = vpop.permute.xlu0 %2354
      %2356 = vrot.lane.b32.xlu0 %v513, 96
      %v2357 = vpop.permute.xlu0 %2356
      %v2359 = vsel %vm514, %v2333, 0
      %v2362 = vsel %vm514, %v2335, 0
      %v2365 = vsel %vm514, %v2337, 0
      %v2368 = vsel %vm514, %v2339, 0
      %v2371 = vsel %vm514, %v2341, 0
      %v2374 = vsel %vm514, %v2343, 0
      %v2377 = vsel %vm514, %v2345, 0
      %v2380 = vsel %vm514, %v2347, 0
      %v2383 = vsel %vm514, %v2349, 0
      %v2386 = vsel %vm514, %v2351, 0
      %v2389 = vsel %vm514, %v2353, 0
      %v2392 = vsel %vm514, %v2355, 0
      %v2395 = vsel %vm514, %v2357, 0
      %2397 = vmatpush.bf16.xpose.msra.mxu0 %v2392
      %2398 = vmatpush.bf16.xpose.msra.mxu0 %v2389
      %2399 = vmatpush.bf16.xpose.msra.mxu0 %v2386
      %2400 = vmatpush.bf16.xpose.msra.mxu0 %v2383
      %2401 = vmatpush.bf16.xpose.msra.mxu0 %v2380
      %2402 = vmatpush.bf16.xpose.msra.mxu0 %v2377
      %2403 = vmatpush.bf16.xpose.msra.mxu0 %v2374
      %2404 = vmatpush.bf16.xpose.msra.mxu0 %v2371
      %2405 = vmatmul.bf16.gmra.mxu0 %v2359
      %v2406 = vpop.f32.mrf.mxu0
      %v2407 = vadd.f32 %v2316, %v2406
      %v2408 = vpop.f32.mrf.mxu0
      %v2409 = vadd.f32 %v2318, %v2408
      %2410 = vmatmul.bf16.gmra.mxu0 %v2362
      %v2411 = vpop.f32.mrf.mxu0
      %v2412 = vadd.f32 %v2320, %v2411
      %v2413 = vpop.f32.mrf.mxu0
      %v2414 = vadd.f32 %v2322, %v2413
      %2415 = vmatmul.bf16.gmra.mxu0 %v2365
      %v2416 = vpop.f32.mrf.mxu0
      %v2417 = vadd.f32 %v2324, %v2416
      %v2418 = vpop.f32.mrf.mxu0
      %v2419 = vadd.f32 %v2326, %v2418
      %2420 = vmatmul.bf16.gmra.mxu0 %v2368
      %v2421 = vpop.f32.mrf.mxu0
      %v2422 = vadd.f32 %v2328, %v2421
      %v2423 = vpop.f32.mrf.mxu0
      %v2424 = vadd.f32 %v2330, %v2423
      %2425 = vdwg.mxu0
      %2426 = vmatpush.bf16.xpose.msra.mxu0 0
      %2427 = vmatpush.bf16.xpose.msra.mxu0 0
      %2428 = vmatpush.bf16.xpose.msra.mxu0 0
      %2429 = vmatpush.bf16.xpose.msra.mxu0 0
      %2430 = vmatpush.bf16.xpose.msra.mxu0 0
      %2431 = vmatpush.bf16.xpose.msra.mxu0 0
      %2432 = vmatpush.bf16.xpose.msra.mxu0 0
      %2433 = vmatpush.bf16.xpose.msra.mxu0 %v2395
      %2434 = vmatmul.bf16.gmra.mxu0 %v2359
      %v2435 = vpop.f32.mrf.mxu0
      %v2436 = vadd.f32 %v2317, %v2435
      %v2437 = vpop.f32.mrf.mxu0
      %v2438 = vadd.f32 %v2319, %v2437
      %2439 = vmatmul.bf16.gmra.mxu0 %v2362
      %v2440 = vpop.f32.mrf.mxu0
      %v2441 = vadd.f32 %v2321, %v2440
      %v2442 = vpop.f32.mrf.mxu0
      %v2443 = vadd.f32 %v2323, %v2442
      %2444 = vmatmul.bf16.gmra.mxu0 %v2365
      %v2445 = vpop.f32.mrf.mxu0
      %v2446 = vadd.f32 %v2325, %v2445
      %v2447 = vpop.f32.mrf.mxu0
      %v2448 = vadd.f32 %v2327, %v2447
      %2449 = vmatmul.bf16.gmra.mxu0 %v2368
      %v2450 = vpop.f32.mrf.mxu0
      %v2451 = vadd.f32 %v2329, %v2450
      %v2452 = vpop.f32.mrf.mxu0
      %v2453 = vadd.f32 %v2331, %v2452
      %2454 = vdwg.mxu0
      %2455 = vrot.lane.b32.xlu0 %v628, 96
      %v2456 = vpop.permute.xlu0 %2455
      %2457 = vrot.lane.b32.xlu0 %v629, 96
      %v2458 = vpop.permute.xlu0 %2457
      %2459 = vrot.lane.b32.xlu0 %v630, 96
      %v2460 = vpop.permute.xlu0 %2459
      %2461 = vrot.lane.b32.xlu0 %v631, 96
      %v2462 = vpop.permute.xlu0 %2461
      %2463 = vrot.lane.b32.xlu0 %v668, 96
      %v2464 = vpop.permute.xlu0 %2463
      %2465 = vrot.lane.b32.xlu0 %v669, 96
      %v2466 = vpop.permute.xlu0 %2465
      %2467 = vrot.lane.b32.xlu0 %v670, 96
      %v2468 = vpop.permute.xlu0 %2467
      %2469 = vrot.lane.b32.xlu0 %v671, 96
      %v2470 = vpop.permute.xlu0 %2469
      %2471 = vrot.lane.b32.xlu0 %v672, 96
      %v2472 = vpop.permute.xlu0 %2471
      %2473 = vrot.lane.b32.xlu0 %v673, 96
      %v2474 = vpop.permute.xlu0 %2473
      %2475 = vrot.lane.b32.xlu0 %v674, 96
      %v2476 = vpop.permute.xlu0 %2475
      %2477 = vrot.lane.b32.xlu0 %v675, 96
      %v2478 = vpop.permute.xlu0 %2477
      %2479 = vrot.lane.b32.xlu0 %v676, 96
      %v2480 = vpop.permute.xlu0 %2479
      %v2482 = vsel %vm514, %v2456, 0
      %v2485 = vsel %vm514, %v2458, 0
      %v2488 = vsel %vm514, %v2460, 0
      %v2491 = vsel %vm514, %v2462, 0
      %v2494 = vsel %vm514, %v2464, 0
      %v2497 = vsel %vm514, %v2466, 0
      %v2500 = vsel %vm514, %v2468, 0
      %v2503 = vsel %vm514, %v2470, 0
      %v2506 = vsel %vm514, %v2472, 0
      %v2509 = vsel %vm514, %v2474, 0
      %v2512 = vsel %vm514, %v2476, 0
      %v2515 = vsel %vm514, %v2478, 0
      %v2518 = vsel %vm514, %v2480, 0
      %2520 = vmatpush.bf16.xpose.msra.mxu0 %v2515
      %2521 = vmatpush.bf16.xpose.msra.mxu0 %v2512
      %2522 = vmatpush.bf16.xpose.msra.mxu0 %v2509
      %2523 = vmatpush.bf16.xpose.msra.mxu0 %v2506
      %2524 = vmatpush.bf16.xpose.msra.mxu0 %v2503
      %2525 = vmatpush.bf16.xpose.msra.mxu0 %v2500
      %2526 = vmatpush.bf16.xpose.msra.mxu0 %v2497
      %2527 = vmatpush.bf16.xpose.msra.mxu0 %v2494
      %2528 = vmatmul.bf16.gmra.mxu0 %v2482
      %v2529 = vpop.f32.mrf.mxu0
      %v2530 = vadd.f32 %v2316, %v2529
      %v2531 = vpop.f32.mrf.mxu0
      %v2532 = vadd.f32 %v2318, %v2531
      %2533 = vmatmul.bf16.gmra.mxu0 %v2485
      %v2534 = vpop.f32.mrf.mxu0
      %v2535 = vadd.f32 %v2320, %v2534
      %v2536 = vpop.f32.mrf.mxu0
      %v2537 = vadd.f32 %v2322, %v2536
      %2538 = vmatmul.bf16.gmra.mxu0 %v2488
      %v2539 = vpop.f32.mrf.mxu0
      %v2540 = vadd.f32 %v2324, %v2539
      %v2541 = vpop.f32.mrf.mxu0
      %v2542 = vadd.f32 %v2326, %v2541
      %2543 = vmatmul.bf16.gmra.mxu0 %v2491
      %v2544 = vpop.f32.mrf.mxu0
      %v2545 = vadd.f32 %v2328, %v2544
      %v2546 = vpop.f32.mrf.mxu0
      %v2547 = vadd.f32 %v2330, %v2546
      %2548 = vdwg.mxu0
      %2549 = vmatpush.bf16.xpose.msra.mxu0 0
      %2550 = vmatpush.bf16.xpose.msra.mxu0 0
      %2551 = vmatpush.bf16.xpose.msra.mxu0 0
      %2552 = vmatpush.bf16.xpose.msra.mxu0 0
      %2553 = vmatpush.bf16.xpose.msra.mxu0 0
      %2554 = vmatpush.bf16.xpose.msra.mxu0 0
      %2555 = vmatpush.bf16.xpose.msra.mxu0 0
      %2556 = vmatpush.bf16.xpose.msra.mxu0 %v2518
      %2557 = vmatmul.bf16.gmra.mxu0 %v2482
      %v2558 = vpop.f32.mrf.mxu0
      %v2559 = vadd.f32 %v2317, %v2558
      %v2560 = vpop.f32.mrf.mxu0
      %v2561 = vadd.f32 %v2319, %v2560
      %2562 = vmatmul.bf16.gmra.mxu0 %v2485
      %v2563 = vpop.f32.mrf.mxu0
      %v2564 = vadd.f32 %v2321, %v2563
      %v2565 = vpop.f32.mrf.mxu0
      %v2566 = vadd.f32 %v2323, %v2565
      %2567 = vmatmul.bf16.gmra.mxu0 %v2488
      %v2568 = vpop.f32.mrf.mxu0
      %v2569 = vadd.f32 %v2325, %v2568
      %v2570 = vpop.f32.mrf.mxu0
      %v2571 = vadd.f32 %v2327, %v2570
      %2572 = vmatmul.bf16.gmra.mxu0 %v2491
      %v2573 = vpop.f32.mrf.mxu0
      %v2574 = vadd.f32 %v2329, %v2573
      %v2575 = vpop.f32.mrf.mxu0
      %v2576 = vadd.f32 %v2331, %v2575
      %2577 = vdwg.mxu0
      %2578 = vrot.lane.b32.xlu0 %v790, 96
      %v2579 = vpop.permute.xlu0 %2578
      %2580 = vrot.lane.b32.xlu0 %v791, 96
      %v2581 = vpop.permute.xlu0 %2580
      %2582 = vrot.lane.b32.xlu0 %v792, 96
      %v2583 = vpop.permute.xlu0 %2582
      %2584 = vrot.lane.b32.xlu0 %v793, 96
      %v2585 = vpop.permute.xlu0 %2584
      %2586 = vrot.lane.b32.xlu0 %v830, 96
      %v2587 = vpop.permute.xlu0 %2586
      %2588 = vrot.lane.b32.xlu0 %v831, 96
      %v2589 = vpop.permute.xlu0 %2588
      %2590 = vrot.lane.b32.xlu0 %v832, 96
      %v2591 = vpop.permute.xlu0 %2590
      %2592 = vrot.lane.b32.xlu0 %v833, 96
      %v2593 = vpop.permute.xlu0 %2592
      %2594 = vrot.lane.b32.xlu0 %v834, 96
      %v2595 = vpop.permute.xlu0 %2594
      %2596 = vrot.lane.b32.xlu0 %v835, 96
      %v2597 = vpop.permute.xlu0 %2596
      %2598 = vrot.lane.b32.xlu0 %v836, 96
      %v2599 = vpop.permute.xlu0 %2598
      %2600 = vrot.lane.b32.xlu0 %v837, 96
      %v2601 = vpop.permute.xlu0 %2600
      %2602 = vrot.lane.b32.xlu0 %v838, 96
      %v2603 = vpop.permute.xlu0 %2602
      %v2605 = vsel %vm514, %v2579, 0
      %v2608 = vsel %vm514, %v2581, 0
      %v2611 = vsel %vm514, %v2583, 0
      %v2614 = vsel %vm514, %v2585, 0
      %v2617 = vsel %vm514, %v2587, 0
      %v2620 = vsel %vm514, %v2589, 0
      %v2623 = vsel %vm514, %v2591, 0
      %v2626 = vsel %vm514, %v2593, 0
      %v2629 = vsel %vm514, %v2595, 0
      %v2632 = vsel %vm514, %v2597, 0
      %v2635 = vsel %vm514, %v2599, 0
      %v2638 = vsel %vm514, %v2601, 0
      %v2641 = vsel %vm514, %v2603, 0
      %2643 = vmatpush.bf16.xpose.msra.mxu0 %v2638
      %2644 = vmatpush.bf16.xpose.msra.mxu0 %v2635
      %2645 = vmatpush.bf16.xpose.msra.mxu0 %v2632
      %2646 = vmatpush.bf16.xpose.msra.mxu0 %v2629
      %2647 = vmatpush.bf16.xpose.msra.mxu0 %v2626
      %2648 = vmatpush.bf16.xpose.msra.mxu0 %v2623
      %2649 = vmatpush.bf16.xpose.msra.mxu0 %v2620
      %2650 = vmatpush.bf16.xpose.msra.mxu0 %v2617
      %2651 = vmatmul.bf16.gmra.mxu0 %v2605
      %v2652 = vpop.f32.mrf.mxu0
      %v2653 = vadd.f32 %v2316, %v2652
      %v2654 = vpop.f32.mrf.mxu0
      %v2655 = vadd.f32 %v2318, %v2654
      %2656 = vmatmul.bf16.gmra.mxu0 %v2608
      %v2657 = vpop.f32.mrf.mxu0
      %v2658 = vadd.f32 %v2320, %v2657
      %v2659 = vpop.f32.mrf.mxu0
      %v2660 = vadd.f32 %v2322, %v2659
      %2661 = vmatmul.bf16.gmra.mxu0 %v2611
      %v2662 = vpop.f32.mrf.mxu0
      %v2663 = vadd.f32 %v2324, %v2662
      %v2664 = vpop.f32.mrf.mxu0
      %v2665 = vadd.f32 %v2326, %v2664
      %2666 = vmatmul.bf16.gmra.mxu0 %v2614
      %v2667 = vpop.f32.mrf.mxu0
      %v2668 = vadd.f32 %v2328, %v2667
      %v2669 = vpop.f32.mrf.mxu0
      %v2670 = vadd.f32 %v2330, %v2669
      %2671 = vdwg.mxu0
      %2672 = vmatpush.bf16.xpose.msra.mxu0 0
      %2673 = vmatpush.bf16.xpose.msra.mxu0 0
      %2674 = vmatpush.bf16.xpose.msra.mxu0 0
      %2675 = vmatpush.bf16.xpose.msra.mxu0 0
      %2676 = vmatpush.bf16.xpose.msra.mxu0 0
      %2677 = vmatpush.bf16.xpose.msra.mxu0 0
      %2678 = vmatpush.bf16.xpose.msra.mxu0 0
      %2679 = vmatpush.bf16.xpose.msra.mxu0 %v2641
      %2680 = vmatmul.bf16.gmra.mxu0 %v2605
      %v2681 = vpop.f32.mrf.mxu0
      %v2682 = vadd.f32 %v2317, %v2681
      %v2683 = vpop.f32.mrf.mxu0
      %v2684 = vadd.f32 %v2319, %v2683
      %2685 = vmatmul.bf16.gmra.mxu0 %v2608
      %v2686 = vpop.f32.mrf.mxu0
      %v2687 = vadd.f32 %v2321, %v2686
      %v2688 = vpop.f32.mrf.mxu0
      %v2689 = vadd.f32 %v2323, %v2688
      %2690 = vmatmul.bf16.gmra.mxu0 %v2611
      %v2691 = vpop.f32.mrf.mxu0
      %v2692 = vadd.f32 %v2325, %v2691
      %v2693 = vpop.f32.mrf.mxu0
      %v2694 = vadd.f32 %v2327, %v2693
      %2695 = vmatmul.bf16.gmra.mxu0 %v2614
      %v2696 = vpop.f32.mrf.mxu0
      %v2697 = vadd.f32 %v2329, %v2696
      %v2698 = vpop.f32.mrf.mxu0
      %v2699 = vadd.f32 %v2331, %v2698
      %2700 = vdwg.mxu0
      %2701 = vrot.lane.b32.xlu0 %v952, 96
      %v2702 = vpop.permute.xlu0 %2701
      %2703 = vrot.lane.b32.xlu0 %v953, 96
      %v2704 = vpop.permute.xlu0 %2703
      %2705 = vrot.lane.b32.xlu0 %v954, 96
      %v2706 = vpop.permute.xlu0 %2705
      %2707 = vrot.lane.b32.xlu0 %v955, 96
      %v2708 = vpop.permute.xlu0 %2707
      %2709 = vrot.lane.b32.xlu0 %v992, 96
      %v2710 = vpop.permute.xlu0 %2709
      %2711 = vrot.lane.b32.xlu0 %v993, 96
      %v2712 = vpop.permute.xlu0 %2711
      %2713 = vrot.lane.b32.xlu0 %v994, 96
      %v2714 = vpop.permute.xlu0 %2713
      %2715 = vrot.lane.b32.xlu0 %v995, 96
      %v2716 = vpop.permute.xlu0 %2715
      %2717 = vrot.lane.b32.xlu0 %v996, 96
      %v2718 = vpop.permute.xlu0 %2717
      %2719 = vrot.lane.b32.xlu0 %v997, 96
      %v2720 = vpop.permute.xlu0 %2719
      %2721 = vrot.lane.b32.xlu0 %v998, 96
      %v2722 = vpop.permute.xlu0 %2721
      %2723 = vrot.lane.b32.xlu0 %v999, 96
      %v2724 = vpop.permute.xlu0 %2723
      %2725 = vrot.lane.b32.xlu0 %v1000, 96
      %v2726 = vpop.permute.xlu0 %2725
      %v2728 = vsel %vm514, %v2702, 0
      %v2731 = vsel %vm514, %v2704, 0
      %v2734 = vsel %vm514, %v2706, 0
      %v2737 = vsel %vm514, %v2708, 0
      %v2740 = vsel %vm514, %v2710, 0
      %v2743 = vsel %vm514, %v2712, 0
      %v2746 = vsel %vm514, %v2714, 0
      %v2749 = vsel %vm514, %v2716, 0
      %v2752 = vsel %vm514, %v2718, 0
      %v2755 = vsel %vm514, %v2720, 0
      %v2758 = vsel %vm514, %v2722, 0
      %v2761 = vsel %vm514, %v2724, 0
      %v2764 = vsel %vm514, %v2726, 0
      %2766 = vmatpush.bf16.xpose.msra.mxu0 %v2761
      %2767 = vmatpush.bf16.xpose.msra.mxu0 %v2758
      %2768 = vmatpush.bf16.xpose.msra.mxu0 %v2755
      %2769 = vmatpush.bf16.xpose.msra.mxu0 %v2752
      %2770 = vmatpush.bf16.xpose.msra.mxu0 %v2749
      %2771 = vmatpush.bf16.xpose.msra.mxu0 %v2746
      %2772 = vmatpush.bf16.xpose.msra.mxu0 %v2743
      %2773 = vmatpush.bf16.xpose.msra.mxu0 %v2740
      %2774 = vmatmul.bf16.gmra.mxu0 %v2728
      %v2775 = vpop.f32.mrf.mxu0
      %v2776 = vadd.f32 %v2316, %v2775
      %v2777 = vpop.f32.mrf.mxu0
      %v2778 = vadd.f32 %v2318, %v2777
      %2779 = vmatmul.bf16.gmra.mxu0 %v2731
      %v2780 = vpop.f32.mrf.mxu0
      %v2781 = vadd.f32 %v2320, %v2780
      %v2782 = vpop.f32.mrf.mxu0
      %v2783 = vadd.f32 %v2322, %v2782
      %2784 = vmatmul.bf16.gmra.mxu0 %v2734
      %v2785 = vpop.f32.mrf.mxu0
      %v2786 = vadd.f32 %v2324, %v2785
      %v2787 = vpop.f32.mrf.mxu0
      %v2788 = vadd.f32 %v2326, %v2787
      %2789 = vmatmul.bf16.gmra.mxu0 %v2737
      %v2790 = vpop.f32.mrf.mxu0
      %v2791 = vadd.f32 %v2328, %v2790
      %v2792 = vpop.f32.mrf.mxu0
      %v2793 = vadd.f32 %v2330, %v2792
      %2794 = vdwg.mxu0
      %2795 = vmatpush.bf16.xpose.msra.mxu0 0
      %2796 = vmatpush.bf16.xpose.msra.mxu0 0
      %2797 = vmatpush.bf16.xpose.msra.mxu0 0
      %2798 = vmatpush.bf16.xpose.msra.mxu0 0
      %2799 = vmatpush.bf16.xpose.msra.mxu0 0
      %2800 = vmatpush.bf16.xpose.msra.mxu0 0
      %2801 = vmatpush.bf16.xpose.msra.mxu0 0
      %2802 = vmatpush.bf16.xpose.msra.mxu0 %v2764
      %2803 = vmatmul.bf16.gmra.mxu0 %v2728
      %v2804 = vpop.f32.mrf.mxu0
      %v2805 = vadd.f32 %v2317, %v2804
      %v2806 = vpop.f32.mrf.mxu0
      %v2807 = vadd.f32 %v2319, %v2806
      %2808 = vmatmul.bf16.gmra.mxu0 %v2731
      %v2809 = vpop.f32.mrf.mxu0
      %v2810 = vadd.f32 %v2321, %v2809
      %v2811 = vpop.f32.mrf.mxu0
      %v2812 = vadd.f32 %v2323, %v2811
      %2813 = vmatmul.bf16.gmra.mxu0 %v2734
      %v2814 = vpop.f32.mrf.mxu0
      %v2815 = vadd.f32 %v2325, %v2814
      %v2816 = vpop.f32.mrf.mxu0
      %v2817 = vadd.f32 %v2327, %v2816
      %2818 = vmatmul.bf16.gmra.mxu0 %v2737
      %v2819 = vpop.f32.mrf.mxu0
      %v2820 = vadd.f32 %v2329, %v2819
      %v2821 = vpop.f32.mrf.mxu0
      %v2822 = vadd.f32 %v2331, %v2821
      %2823 = vdwg.mxu0
      %v2824 = vsel %vm1098, %v2436, -inf
      %v2825 = vmax.f32 %v2407, %v2824
      %2826 = vmax.xlane.f32.xlu0 %v2825
      %v2827 = vpop.xlane.xlu0 %2826
      %v2828 = vsel %vm1098, %v2438, -inf
      %v2829 = vmax.f32 %v2409, %v2828
      %2830 = vmax.xlane.f32.xlu0 %v2829
      %v2831 = vpop.xlane.xlu0 %2830
      %v2832 = vsel %vm1098, %v2441, -inf
      %v2833 = vmax.f32 %v2412, %v2832
      %2834 = vmax.xlane.f32.xlu0 %v2833
      %v2835 = vpop.xlane.xlu0 %2834
      %v2836 = vsel %vm1098, %v2443, -inf
      %v2837 = vmax.f32 %v2414, %v2836
      %2838 = vmax.xlane.f32.xlu0 %v2837
      %v2839 = vpop.xlane.xlu0 %2838
      %v2840 = vsel %vm1098, %v2446, -inf
      %v2841 = vmax.f32 %v2417, %v2840
      %2842 = vmax.xlane.f32.xlu0 %v2841
      %v2843 = vpop.xlane.xlu0 %2842
      %v2844 = vsel %vm1098, %v2448, -inf
      %v2845 = vmax.f32 %v2419, %v2844
      %2846 = vmax.xlane.f32.xlu0 %v2845
      %v2847 = vpop.xlane.xlu0 %2846
      %v2848 = vsel %vm1098, %v2451, -inf
      %v2849 = vmax.f32 %v2422, %v2848
      %2850 = vmax.xlane.f32.xlu0 %v2849
      %v2851 = vpop.xlane.xlu0 %2850
      %v2852 = vsel %vm1098, %v2453, -inf
      %v2853 = vmax.f32 %v2424, %v2852
      %2854 = vmax.xlane.f32.xlu0 %v2853
      %v2855 = vpop.xlane.xlu0 %2854
      %v2856 = vsel %vm1098, %v2559, -inf
      %v2857 = vmax.f32 %v2530, %v2856
      %2858 = vmax.xlane.f32.xlu0 %v2857
      %v2859 = vpop.xlane.xlu0 %2858
      %v2860 = vsel %vm1098, %v2561, -inf
      %v2861 = vmax.f32 %v2532, %v2860
      %2862 = vmax.xlane.f32.xlu0 %v2861
      %v2863 = vpop.xlane.xlu0 %2862
      %v2864 = vsel %vm1098, %v2564, -inf
      %v2865 = vmax.f32 %v2535, %v2864
      %2866 = vmax.xlane.f32.xlu0 %v2865
      %v2867 = vpop.xlane.xlu0 %2866
      %v2868 = vsel %vm1098, %v2566, -inf
      %v2869 = vmax.f32 %v2537, %v2868
      %2870 = vmax.xlane.f32.xlu0 %v2869
      %v2871 = vpop.xlane.xlu0 %2870
      %v2872 = vsel %vm1098, %v2569, -inf
      %v2873 = vmax.f32 %v2540, %v2872
      %2874 = vmax.xlane.f32.xlu0 %v2873
      %v2875 = vpop.xlane.xlu0 %2874
      %v2876 = vsel %vm1098, %v2571, -inf
      %v2877 = vmax.f32 %v2542, %v2876
      %2878 = vmax.xlane.f32.xlu0 %v2877
      %v2879 = vpop.xlane.xlu0 %2878
      %v2880 = vsel %vm1098, %v2574, -inf
      %v2881 = vmax.f32 %v2545, %v2880
      %2882 = vmax.xlane.f32.xlu0 %v2881
      %v2883 = vpop.xlane.xlu0 %2882
      %v2884 = vsel %vm1098, %v2576, -inf
      %v2885 = vmax.f32 %v2547, %v2884
      %2886 = vmax.xlane.f32.xlu0 %v2885
      %v2887 = vpop.xlane.xlu0 %2886
      %v2888 = vsel %vm1098, %v2682, -inf
      %v2889 = vmax.f32 %v2653, %v2888
      %2890 = vmax.xlane.f32.xlu0 %v2889
      %v2891 = vpop.xlane.xlu0 %2890
      %v2892 = vsel %vm1098, %v2684, -inf
      %v2893 = vmax.f32 %v2655, %v2892
      %2894 = vmax.xlane.f32.xlu0 %v2893
      %v2895 = vpop.xlane.xlu0 %2894
      %v2896 = vsel %vm1098, %v2687, -inf
      %v2897 = vmax.f32 %v2658, %v2896
      %2898 = vmax.xlane.f32.xlu0 %v2897
      %v2899 = vpop.xlane.xlu0 %2898
      %v2900 = vsel %vm1098, %v2689, -inf
      %v2901 = vmax.f32 %v2660, %v2900
      %2902 = vmax.xlane.f32.xlu0 %v2901
      %v2903 = vpop.xlane.xlu0 %2902
      %v2904 = vsel %vm1098, %v2692, -inf
      %v2905 = vmax.f32 %v2663, %v2904
      %2906 = vmax.xlane.f32.xlu0 %v2905
      %v2907 = vpop.xlane.xlu0 %2906
      %v2908 = vsel %vm1098, %v2694, -inf
      %v2909 = vmax.f32 %v2665, %v2908
      %2910 = vmax.xlane.f32.xlu0 %v2909
      %v2911 = vpop.xlane.xlu0 %2910
      %v2912 = vsel %vm1098, %v2697, -inf
      %v2913 = vmax.f32 %v2668, %v2912
      %2914 = vmax.xlane.f32.xlu0 %v2913
      %v2915 = vpop.xlane.xlu0 %2914
      %v2916 = vsel %vm1098, %v2699, -inf
      %v2917 = vmax.f32 %v2670, %v2916
      %2918 = vmax.xlane.f32.xlu0 %v2917
      %v2919 = vpop.xlane.xlu0 %2918
      %v2920 = vsel %vm1098, %v2805, -inf
      %v2921 = vmax.f32 %v2776, %v2920
      %2922 = vmax.xlane.f32.xlu0 %v2921
      %v2923 = vpop.xlane.xlu0 %2922
      %v2924 = vsel %vm1098, %v2807, -inf
      %v2925 = vmax.f32 %v2778, %v2924
      %2926 = vmax.xlane.f32.xlu0 %v2925
      %v2927 = vpop.xlane.xlu0 %2926
      %v2928 = vsel %vm1098, %v2810, -inf
      %v2929 = vmax.f32 %v2781, %v2928
      %2930 = vmax.xlane.f32.xlu0 %v2929
      %v2931 = vpop.xlane.xlu0 %2930
      %v2932 = vsel %vm1098, %v2812, -inf
      %v2933 = vmax.f32 %v2783, %v2932
      %2934 = vmax.xlane.f32.xlu0 %v2933
      %v2935 = vpop.xlane.xlu0 %2934
      %v2936 = vsel %vm1098, %v2815, -inf
      %v2937 = vmax.f32 %v2786, %v2936
      %2938 = vmax.xlane.f32.xlu0 %v2937
      %v2939 = vpop.xlane.xlu0 %2938
      %v2940 = vsel %vm1098, %v2817, -inf
      %v2941 = vmax.f32 %v2788, %v2940
      %2942 = vmax.xlane.f32.xlu0 %v2941
      %v2943 = vpop.xlane.xlu0 %2942
      %v2944 = vsel %vm1098, %v2820, -inf
      %v2945 = vmax.f32 %v2791, %v2944
      %2946 = vmax.xlane.f32.xlu0 %v2945
      %v2947 = vpop.xlane.xlu0 %2946
      %v2948 = vsel %vm1098, %v2822, -inf
      %v2949 = vmax.f32 %v2793, %v2948
      %2950 = vmax.xlane.f32.xlu0 %v2949
      %v2951 = vpop.xlane.xlu0 %2950
      %v2952 = vsub.f32 %v2407, %v2827
      %v2953 = vsub.f32 %v2436, %v2827
      %v2954 = vsub.f32 %v2409, %v2831
      %v2955 = vsub.f32 %v2438, %v2831
      %v2956 = vsub.f32 %v2412, %v2835
      %v2957 = vsub.f32 %v2441, %v2835
      %v2958 = vsub.f32 %v2414, %v2839
      %v2959 = vsub.f32 %v2443, %v2839
      %v2960 = vsub.f32 %v2417, %v2843
      %v2961 = vsub.f32 %v2446, %v2843
      %v2962 = vsub.f32 %v2419, %v2847
      %v2963 = vsub.f32 %v2448, %v2847
      %v2964 = vsub.f32 %v2422, %v2851
      %v2965 = vsub.f32 %v2451, %v2851
      %v2966 = vsub.f32 %v2424, %v2855
      %v2967 = vsub.f32 %v2453, %v2855
      %v2968 = vsub.f32 %v2530, %v2859
      %v2969 = vsub.f32 %v2559, %v2859
      %v2970 = vsub.f32 %v2532, %v2863
      %v2971 = vsub.f32 %v2561, %v2863
      %v2972 = vsub.f32 %v2535, %v2867
      %v2973 = vsub.f32 %v2564, %v2867
      %v2974 = vsub.f32 %v2537, %v2871
      %v2975 = vsub.f32 %v2566, %v2871
      %v2976 = vsub.f32 %v2540, %v2875
      %v2977 = vsub.f32 %v2569, %v2875
      %v2978 = vsub.f32 %v2542, %v2879
      %v2979 = vsub.f32 %v2571, %v2879
      %v2980 = vsub.f32 %v2545, %v2883
      %v2981 = vsub.f32 %v2574, %v2883
      %v2982 = vsub.f32 %v2547, %v2887
      %v2983 = vsub.f32 %v2576, %v2887
      %v2984 = vsub.f32 %v2653, %v2891
      %v2985 = vsub.f32 %v2682, %v2891
      %v2986 = vsub.f32 %v2655, %v2895
      %v2987 = vsub.f32 %v2684, %v2895
      %v2988 = vsub.f32 %v2658, %v2899
      %v2989 = vsub.f32 %v2687, %v2899
      %v2990 = vsub.f32 %v2660, %v2903
      %v2991 = vsub.f32 %v2689, %v2903
      %v2992 = vsub.f32 %v2663, %v2907
      %v2993 = vsub.f32 %v2692, %v2907
      %v2994 = vsub.f32 %v2665, %v2911
      %v2995 = vsub.f32 %v2694, %v2911
      %v2996 = vsub.f32 %v2668, %v2915
      %v2997 = vsub.f32 %v2697, %v2915
      %v2998 = vsub.f32 %v2670, %v2919
      %v2999 = vsub.f32 %v2699, %v2919
      %v3000 = vsub.f32 %v2776, %v2923
      %v3001 = vsub.f32 %v2805, %v2923
      %v3002 = vsub.f32 %v2778, %v2927
      %v3003 = vsub.f32 %v2807, %v2927
      %v3004 = vsub.f32 %v2781, %v2931
      %v3005 = vsub.f32 %v2810, %v2931
      %v3006 = vsub.f32 %v2783, %v2935
      %v3007 = vsub.f32 %v2812, %v2935
      %v3008 = vsub.f32 %v2786, %v2939
      %v3009 = vsub.f32 %v2815, %v2939
      %v3010 = vsub.f32 %v2788, %v2943
      %v3011 = vsub.f32 %v2817, %v2943
      %v3012 = vsub.f32 %v2791, %v2947
      %v3013 = vsub.f32 %v2820, %v2947
      %v3014 = vsub.f32 %v2793, %v2951
      %v3015 = vsub.f32 %v2822, %v2951
      %v3016 = vmul.f32 %v2952, 1.442695
      %v3017 = vpow.pop %v3016
      %v3018 = vmul.f32 %v2953, 1.442695
      %v3019 = vpow.pop %v3018
      %v3020 = vmul.f32 %v2954, 1.442695
      %v3021 = vpow.pop %v3020
      %v3022 = vmul.f32 %v2955, 1.442695
      %v3023 = vpow.pop %v3022
      %v3024 = vmul.f32 %v2956, 1.442695
      %v3025 = vpow.pop %v3024
      %v3026 = vmul.f32 %v2957, 1.442695
      %v3027 = vpow.pop %v3026
      %v3028 = vmul.f32 %v2958, 1.442695
      %v3029 = vpow.pop %v3028
      %v3030 = vmul.f32 %v2959, 1.442695
      %v3031 = vpow.pop %v3030
      %v3032 = vmul.f32 %v2960, 1.442695
      %v3033 = vpow.pop %v3032
      %v3034 = vmul.f32 %v2961, 1.442695
      %v3035 = vpow.pop %v3034
      %v3036 = vmul.f32 %v2962, 1.442695
      %v3037 = vpow.pop %v3036
      %v3038 = vmul.f32 %v2963, 1.442695
      %v3039 = vpow.pop %v3038
      %v3040 = vmul.f32 %v2964, 1.442695
      %v3041 = vpow.pop %v3040
      %v3042 = vmul.f32 %v2965, 1.442695
      %v3043 = vpow.pop %v3042
      %v3044 = vmul.f32 %v2966, 1.442695
      %v3045 = vpow.pop %v3044
      %v3046 = vmul.f32 %v2967, 1.442695
      %v3047 = vpow.pop %v3046
      %v3048 = vmul.f32 %v2968, 1.442695
      %v3049 = vpow.pop %v3048
      %v3050 = vmul.f32 %v2969, 1.442695
      %v3051 = vpow.pop %v3050
      %v3052 = vmul.f32 %v2970, 1.442695
      %v3053 = vpow.pop %v3052
      %v3054 = vmul.f32 %v2971, 1.442695
      %v3055 = vpow.pop %v3054
      %v3056 = vmul.f32 %v2972, 1.442695
      %v3057 = vpow.pop %v3056
      %v3058 = vmul.f32 %v2973, 1.442695
      %v3059 = vpow.pop %v3058
      %v3060 = vmul.f32 %v2974, 1.442695
      %v3061 = vpow.pop %v3060
      %v3062 = vmul.f32 %v2975, 1.442695
      %v3063 = vpow.pop %v3062
      %v3064 = vmul.f32 %v2976, 1.442695
      %v3065 = vpow.pop %v3064
      %v3066 = vmul.f32 %v2977, 1.442695
      %v3067 = vpow.pop %v3066
      %v3068 = vmul.f32 %v2978, 1.442695
      %v3069 = vpow.pop %v3068
      %v3070 = vmul.f32 %v2979, 1.442695
      %v3071 = vpow.pop %v3070
      %v3072 = vmul.f32 %v2980, 1.442695
      %v3073 = vpow.pop %v3072
      %v3074 = vmul.f32 %v2981, 1.442695
      %v3075 = vpow.pop %v3074
      %v3076 = vmul.f32 %v2982, 1.442695
      %v3077 = vpow.pop %v3076
      %v3078 = vmul.f32 %v2983, 1.442695
      %v3079 = vpow.pop %v3078
      %v3080 = vmul.f32 %v2984, 1.442695
      %v3081 = vpow.pop %v3080
      %v3082 = vmul.f32 %v2985, 1.442695
      %v3083 = vpow.pop %v3082
      %v3084 = vmul.f32 %v2986, 1.442695
      %v3085 = vpow.pop %v3084
      %v3086 = vmul.f32 %v2987, 1.442695
      %v3087 = vpow.pop %v3086
      %v3088 = vmul.f32 %v2988, 1.442695
      %v3089 = vpow.pop %v3088
      %v3090 = vmul.f32 %v2989, 1.442695
      %v3091 = vpow.pop %v3090
      %v3092 = vmul.f32 %v2990, 1.442695
      %v3093 = vpow.pop %v3092
      %v3094 = vmul.f32 %v2991, 1.442695
      %v3095 = vpow.pop %v3094
      %v3096 = vmul.f32 %v2992, 1.442695
      %v3097 = vpow.pop %v3096
      %v3098 = vmul.f32 %v2993, 1.442695
      %v3099 = vpow.pop %v3098
      %v3100 = vmul.f32 %v2994, 1.442695
      %v3101 = vpow.pop %v3100
      %v3102 = vmul.f32 %v2995, 1.442695
      %v3103 = vpow.pop %v3102
      %v3104 = vmul.f32 %v2996, 1.442695
      %v3105 = vpow.pop %v3104
      %v3106 = vmul.f32 %v2997, 1.442695
      %v3107 = vpow.pop %v3106
      %v3108 = vmul.f32 %v2998, 1.442695
      %v3109 = vpow.pop %v3108
      %v3110 = vmul.f32 %v2999, 1.442695
      %v3111 = vpow.pop %v3110
      %v3112 = vmul.f32 %v3000, 1.442695
      %v3113 = vpow.pop %v3112
      %v3114 = vmul.f32 %v3001, 1.442695
      %v3115 = vpow.pop %v3114
      %v3116 = vmul.f32 %v3002, 1.442695
      %v3117 = vpow.pop %v3116
      %v3118 = vmul.f32 %v3003, 1.442695
      %v3119 = vpow.pop %v3118
      %v3120 = vmul.f32 %v3004, 1.442695
      %v3121 = vpow.pop %v3120
      %v3122 = vmul.f32 %v3005, 1.442695
      %v3123 = vpow.pop %v3122
      %v3124 = vmul.f32 %v3006, 1.442695
      %v3125 = vpow.pop %v3124
      %v3126 = vmul.f32 %v3007, 1.442695
      %v3127 = vpow.pop %v3126
      %v3128 = vmul.f32 %v3008, 1.442695
      %v3129 = vpow.pop %v3128
      %v3130 = vmul.f32 %v3009, 1.442695
      %v3131 = vpow.pop %v3130
      %v3132 = vmul.f32 %v3010, 1.442695
      %v3133 = vpow.pop %v3132
      %v3134 = vmul.f32 %v3011, 1.442695
      %v3135 = vpow.pop %v3134
      %v3136 = vmul.f32 %v3012, 1.442695
      %v3137 = vpow.pop %v3136
      %v3138 = vmul.f32 %v3013, 1.442695
      %v3139 = vpow.pop %v3138
      %v3140 = vmul.f32 %v3014, 1.442695
      %v3141 = vpow.pop %v3140
      %v3142 = vmul.f32 %v3015, 1.442695
      %v3143 = vpow.pop %v3142
      %v3144 = vsel %vm1098, %v3019, 0.0
      %v3145 = vadd.f32 %v3017, %v3144
      %3146 = vadd.xlane.f32.xlu0 %v3145
      %v3147 = vpop.xlane.xlu0 %3146
      %v3148 = vsel %vm1098, %v3023, 0.0
      %v3149 = vadd.f32 %v3021, %v3148
      %3150 = vadd.xlane.f32.xlu0 %v3149
      %v3151 = vpop.xlane.xlu0 %3150
      %v3152 = vsel %vm1098, %v3027, 0.0
      %v3153 = vadd.f32 %v3025, %v3152
      %3154 = vadd.xlane.f32.xlu0 %v3153
      %v3155 = vpop.xlane.xlu0 %3154
      %v3156 = vsel %vm1098, %v3031, 0.0
      %v3157 = vadd.f32 %v3029, %v3156
      %3158 = vadd.xlane.f32.xlu0 %v3157
      %v3159 = vpop.xlane.xlu0 %3158
      %v3160 = vsel %vm1098, %v3035, 0.0
      %v3161 = vadd.f32 %v3033, %v3160
      %3162 = vadd.xlane.f32.xlu0 %v3161
      %v3163 = vpop.xlane.xlu0 %3162
      %v3164 = vsel %vm1098, %v3039, 0.0
      %v3165 = vadd.f32 %v3037, %v3164
      %3166 = vadd.xlane.f32.xlu0 %v3165
      %v3167 = vpop.xlane.xlu0 %3166
      %v3168 = vsel %vm1098, %v3043, 0.0
      %v3169 = vadd.f32 %v3041, %v3168
      %3170 = vadd.xlane.f32.xlu0 %v3169
      %v3171 = vpop.xlane.xlu0 %3170
      %v3172 = vsel %vm1098, %v3047, 0.0
      %v3173 = vadd.f32 %v3045, %v3172
      %3174 = vadd.xlane.f32.xlu0 %v3173
      %v3175 = vpop.xlane.xlu0 %3174
      %v3176 = vsel %vm1098, %v3051, 0.0
      %v3177 = vadd.f32 %v3049, %v3176
      %3178 = vadd.xlane.f32.xlu0 %v3177
      %v3179 = vpop.xlane.xlu0 %3178
      %v3180 = vsel %vm1098, %v3055, 0.0
      %v3181 = vadd.f32 %v3053, %v3180
      %3182 = vadd.xlane.f32.xlu0 %v3181
      %v3183 = vpop.xlane.xlu0 %3182
      %v3184 = vsel %vm1098, %v3059, 0.0
      %v3185 = vadd.f32 %v3057, %v3184
      %3186 = vadd.xlane.f32.xlu0 %v3185
      %v3187 = vpop.xlane.xlu0 %3186
      %v3188 = vsel %vm1098, %v3063, 0.0
      %v3189 = vadd.f32 %v3061, %v3188
      %3190 = vadd.xlane.f32.xlu0 %v3189
      %v3191 = vpop.xlane.xlu0 %3190
      %v3192 = vsel %vm1098, %v3067, 0.0
      %v3193 = vadd.f32 %v3065, %v3192
      %3194 = vadd.xlane.f32.xlu0 %v3193
      %v3195 = vpop.xlane.xlu0 %3194
      %v3196 = vsel %vm1098, %v3071, 0.0
      %v3197 = vadd.f32 %v3069, %v3196
      %3198 = vadd.xlane.f32.xlu0 %v3197
      %v3199 = vpop.xlane.xlu0 %3198
      %v3200 = vsel %vm1098, %v3075, 0.0
      %v3201 = vadd.f32 %v3073, %v3200
      %3202 = vadd.xlane.f32.xlu0 %v3201
      %v3203 = vpop.xlane.xlu0 %3202
      %v3204 = vsel %vm1098, %v3079, 0.0
      %v3205 = vadd.f32 %v3077, %v3204
      %3206 = vadd.xlane.f32.xlu0 %v3205
      %v3207 = vpop.xlane.xlu0 %3206
      %v3208 = vsel %vm1098, %v3083, 0.0
      %v3209 = vadd.f32 %v3081, %v3208
      %3210 = vadd.xlane.f32.xlu0 %v3209
      %v3211 = vpop.xlane.xlu0 %3210
      %v3212 = vsel %vm1098, %v3087, 0.0
      %v3213 = vadd.f32 %v3085, %v3212
      %3214 = vadd.xlane.f32.xlu0 %v3213
      %v3215 = vpop.xlane.xlu0 %3214
      %v3216 = vsel %vm1098, %v3091, 0.0
      %v3217 = vadd.f32 %v3089, %v3216
      %3218 = vadd.xlane.f32.xlu0 %v3217
      %v3219 = vpop.xlane.xlu0 %3218
      %v3220 = vsel %vm1098, %v3095, 0.0
      %v3221 = vadd.f32 %v3093, %v3220
      %3222 = vadd.xlane.f32.xlu0 %v3221
      %v3223 = vpop.xlane.xlu0 %3222
      %v3224 = vsel %vm1098, %v3099, 0.0
      %v3225 = vadd.f32 %v3097, %v3224
      %3226 = vadd.xlane.f32.xlu0 %v3225
      %v3227 = vpop.xlane.xlu0 %3226
      %v3228 = vsel %vm1098, %v3103, 0.0
      %v3229 = vadd.f32 %v3101, %v3228
      %3230 = vadd.xlane.f32.xlu0 %v3229
      %v3231 = vpop.xlane.xlu0 %3230
      %v3232 = vsel %vm1098, %v3107, 0.0
      %v3233 = vadd.f32 %v3105, %v3232
      %3234 = vadd.xlane.f32.xlu0 %v3233
      %v3235 = vpop.xlane.xlu0 %3234
      %v3236 = vsel %vm1098, %v3111, 0.0
      %v3237 = vadd.f32 %v3109, %v3236
      %3238 = vadd.xlane.f32.xlu0 %v3237
      %v3239 = vpop.xlane.xlu0 %3238
      %v3240 = vsel %vm1098, %v3115, 0.0
      %v3241 = vadd.f32 %v3113, %v3240
      %3242 = vadd.xlane.f32.xlu0 %v3241
      %v3243 = vpop.xlane.xlu0 %3242
      %v3244 = vsel %vm1098, %v3119, 0.0
      %v3245 = vadd.f32 %v3117, %v3244
      %3246 = vadd.xlane.f32.xlu0 %v3245
      %v3247 = vpop.xlane.xlu0 %3246
      %v3248 = vsel %vm1098, %v3123, 0.0
      %v3249 = vadd.f32 %v3121, %v3248
      %3250 = vadd.xlane.f32.xlu0 %v3249
      %v3251 = vpop.xlane.xlu0 %3250
      %v3252 = vsel %vm1098, %v3127, 0.0
      %v3253 = vadd.f32 %v3125, %v3252
      %3254 = vadd.xlane.f32.xlu0 %v3253
      %v3255 = vpop.xlane.xlu0 %3254
      %v3256 = vsel %vm1098, %v3131, 0.0
      %v3257 = vadd.f32 %v3129, %v3256
      %3258 = vadd.xlane.f32.xlu0 %v3257
      %v3259 = vpop.xlane.xlu0 %3258
      %v3260 = vsel %vm1098, %v3135, 0.0
      %v3261 = vadd.f32 %v3133, %v3260
      %3262 = vadd.xlane.f32.xlu0 %v3261
      %v3263 = vpop.xlane.xlu0 %3262
      %v3264 = vsel %vm1098, %v3139, 0.0
      %v3265 = vadd.f32 %v3137, %v3264
      %3266 = vadd.xlane.f32.xlu0 %v3265
      %v3267 = vpop.xlane.xlu0 %3266
      %v3268 = vsel %vm1098, %v3143, 0.0
      %v3269 = vadd.f32 %v3141, %v3268
      %3270 = vadd.xlane.f32.xlu0 %v3269
      %v3271 = vpop.xlane.xlu0 %3270
      %v3272 = vrcp.pop %v3147
      %v3273 = vrcp.pop %v3151
      %v3274 = vrcp.pop %v3155
      %v3275 = vrcp.pop %v3159
      %v3276 = vrcp.pop %v3163
      %v3277 = vrcp.pop %v3167
      %v3278 = vrcp.pop %v3171
      %v3279 = vrcp.pop %v3175
      %v3280 = vrcp.pop %v3179
      %v3281 = vrcp.pop %v3183
      %v3282 = vrcp.pop %v3187
      %v3283 = vrcp.pop %v3191
      %v3284 = vrcp.pop %v3195
      %v3285 = vrcp.pop %v3199
      %v3286 = vrcp.pop %v3203
      %v3287 = vrcp.pop %v3207
      %v3288 = vrcp.pop %v3211
      %v3289 = vrcp.pop %v3215
      %v3290 = vrcp.pop %v3219
      %v3291 = vrcp.pop %v3223
      %v3292 = vrcp.pop %v3227
      %v3293 = vrcp.pop %v3231
      %v3294 = vrcp.pop %v3235
      %v3295 = vrcp.pop %v3239
      %v3296 = vrcp.pop %v3243
      %v3297 = vrcp.pop %v3247
      %v3298 = vrcp.pop %v3251
      %v3299 = vrcp.pop %v3255
      %v3300 = vrcp.pop %v3259
      %v3301 = vrcp.pop %v3263
      %v3302 = vrcp.pop %v3267
      %v3303 = vrcp.pop %v3271
      %v3304 = vmul.f32 %v3017, %v3272
      %v3305 = vmul.f32 %v3019, %v3272
      %v3306 = vmul.f32 %v3021, %v3273
      %v3307 = vmul.f32 %v3023, %v3273
      %v3308 = vmul.f32 %v3025, %v3274
      %v3309 = vmul.f32 %v3027, %v3274
      %v3310 = vmul.f32 %v3029, %v3275
      %v3311 = vmul.f32 %v3031, %v3275
      %v3312 = vmul.f32 %v3033, %v3276
      %v3313 = vmul.f32 %v3035, %v3276
      %v3314 = vmul.f32 %v3037, %v3277
      %v3315 = vmul.f32 %v3039, %v3277
      %v3316 = vmul.f32 %v3041, %v3278
      %v3317 = vmul.f32 %v3043, %v3278
      %v3318 = vmul.f32 %v3045, %v3279
      %v3319 = vmul.f32 %v3047, %v3279
      %v3320 = vmul.f32 %v3049, %v3280
      %v3321 = vmul.f32 %v3051, %v3280
      %v3322 = vmul.f32 %v3053, %v3281
      %v3323 = vmul.f32 %v3055, %v3281
      %v3324 = vmul.f32 %v3057, %v3282
      %v3325 = vmul.f32 %v3059, %v3282
      %v3326 = vmul.f32 %v3061, %v3283
      %v3327 = vmul.f32 %v3063, %v3283
      %v3328 = vmul.f32 %v3065, %v3284
      %v3329 = vmul.f32 %v3067, %v3284
      %v3330 = vmul.f32 %v3069, %v3285
      %v3331 = vmul.f32 %v3071, %v3285
      %v3332 = vmul.f32 %v3073, %v3286
      %v3333 = vmul.f32 %v3075, %v3286
      %v3334 = vmul.f32 %v3077, %v3287
      %v3335 = vmul.f32 %v3079, %v3287
      %v3336 = vmul.f32 %v3081, %v3288
      %v3337 = vmul.f32 %v3083, %v3288
      %v3338 = vmul.f32 %v3085, %v3289
      %v3339 = vmul.f32 %v3087, %v3289
      %v3340 = vmul.f32 %v3089, %v3290
      %v3341 = vmul.f32 %v3091, %v3290
      %v3342 = vmul.f32 %v3093, %v3291
      %v3343 = vmul.f32 %v3095, %v3291
      %v3344 = vmul.f32 %v3097, %v3292
      %v3345 = vmul.f32 %v3099, %v3292
      %v3346 = vmul.f32 %v3101, %v3293
      %v3347 = vmul.f32 %v3103, %v3293
      %v3348 = vmul.f32 %v3105, %v3294
      %v3349 = vmul.f32 %v3107, %v3294
      %v3350 = vmul.f32 %v3109, %v3295
      %v3351 = vmul.f32 %v3111, %v3295
      %v3352 = vmul.f32 %v3113, %v3296
      %v3353 = vmul.f32 %v3115, %v3296
      %v3354 = vmul.f32 %v3117, %v3297
      %v3355 = vmul.f32 %v3119, %v3297
      %v3356 = vmul.f32 %v3121, %v3298
      %v3357 = vmul.f32 %v3123, %v3298
      %v3358 = vmul.f32 %v3125, %v3299
      %v3359 = vmul.f32 %v3127, %v3299
      %v3360 = vmul.f32 %v3129, %v3300
      %v3361 = vmul.f32 %v3131, %v3300
      %v3362 = vmul.f32 %v3133, %v3301
      %v3363 = vmul.f32 %v3135, %v3301
      %v3364 = vmul.f32 %v3137, %v3302
      %v3365 = vmul.f32 %v3139, %v3302
      %v3366 = vmul.f32 %v3141, %v3303
      %v3367 = vmul.f32 %v3143, %v3303
      %v3368 = vpack.c.bf16 %v3305, %v3304
      %v3369 = vpack.c.bf16 %v3307, %v3306
      %v3370 = vpack.c.bf16 %v3309, %v3308
      %v3371 = vpack.c.bf16 %v3311, %v3310
      %v3372 = vpack.c.bf16 %v3313, %v3312
      %v3373 = vpack.c.bf16 %v3315, %v3314
      %v3374 = vpack.c.bf16 %v3317, %v3316
      %v3375 = vpack.c.bf16 %v3319, %v3318
      %v3376 = vpack.c.bf16 %v3321, %v3320
      %v3377 = vpack.c.bf16 %v3323, %v3322
      %v3378 = vpack.c.bf16 %v3325, %v3324
      %v3379 = vpack.c.bf16 %v3327, %v3326
      %v3380 = vpack.c.bf16 %v3329, %v3328
      %v3381 = vpack.c.bf16 %v3331, %v3330
      %v3382 = vpack.c.bf16 %v3333, %v3332
      %v3383 = vpack.c.bf16 %v3335, %v3334
      %v3384 = vpack.c.bf16 %v3337, %v3336
      %v3385 = vpack.c.bf16 %v3339, %v3338
      %v3386 = vpack.c.bf16 %v3341, %v3340
      %v3387 = vpack.c.bf16 %v3343, %v3342
      %v3388 = vpack.c.bf16 %v3345, %v3344
      %v3389 = vpack.c.bf16 %v3347, %v3346
      %v3390 = vpack.c.bf16 %v3349, %v3348
      %v3391 = vpack.c.bf16 %v3351, %v3350
      %v3392 = vpack.c.bf16 %v3353, %v3352
      %v3393 = vpack.c.bf16 %v3355, %v3354
      %v3394 = vpack.c.bf16 %v3357, %v3356
      %v3395 = vpack.c.bf16 %v3359, %v3358
      %v3396 = vpack.c.bf16 %v3361, %v3360
      %v3397 = vpack.c.bf16 %v3363, %v3362
      %v3398 = vpack.c.bf16 %v3365, %v3364
      %v3399 = vpack.c.bf16 %v3367, %v3366
      %v3408 = vunpack.c.l.b16 %v3368
      %v3409 = vunpack.c.h.b16 %v3368
      %v3410 = vunpack.c.l.b16 %v3369
      %v3411 = vunpack.c.h.b16 %v3369
      %v3412 = vunpack.c.l.b16 %v3370
      %v3413 = vunpack.c.h.b16 %v3370
      %v3414 = vunpack.c.l.b16 %v3371
      %v3415 = vunpack.c.h.b16 %v3371
      %v3416 = vunpack.c.l.b16 %v3372
      %v3417 = vunpack.c.h.b16 %v3372
      %v3418 = vunpack.c.l.b16 %v3373
      %v3419 = vunpack.c.h.b16 %v3373
      %v3420 = vunpack.c.l.b16 %v3374
      %v3421 = vunpack.c.h.b16 %v3374
      %v3422 = vunpack.c.l.b16 %v3375
      %v3423 = vunpack.c.h.b16 %v3375
      %v3424 = vpack.c.b16 %v3410, %v3408
      %v3425 = vpack.c.b16 %v3411, %v3409
      %v3426 = vpack.c.b16 %v3414, %v3412
      %v3427 = vpack.c.b16 %v3415, %v3413
      %v3428 = vpack.c.b16 %v3418, %v3416
      %v3429 = vpack.c.b16 %v3419, %v3417
      %v3430 = vpack.c.b16 %v3422, %v3420
      %v3431 = vpack.c.b16 %v3423, %v3421
      %3436 = vrot.lane.b32.xlu0 %v1747, 96
      %v3437 = vpop.permute.xlu0 %3436
      %3438 = vrot.lane.b32.xlu0 %v1748, 96
      %v3439 = vpop.permute.xlu0 %3438
      %3440 = vrot.lane.b32.xlu0 %v1749, 96
      %v3441 = vpop.permute.xlu0 %3440
      %3442 = vrot.lane.b32.xlu0 %v1750, 96
      %v3443 = vpop.permute.xlu0 %3442
      %3444 = vrot.lane.b32.xlu0 %v1751, 96
      %v3445 = vpop.permute.xlu0 %3444
      %3446 = vrot.lane.b32.xlu0 %v1752, 96
      %v3447 = vpop.permute.xlu0 %3446
      %3448 = vrot.lane.b32.xlu0 %v1753, 96
      %v3449 = vpop.permute.xlu0 %3448
      %3450 = vrot.lane.b32.xlu0 %v1754, 96
      %v3451 = vpop.permute.xlu0 %3450
      %3452 = vrot.lane.b32.xlu0 %v1755, 96
      %v3453 = vpop.permute.xlu0 %3452
      %v3464 = vsel %vm1098, %v3425, 0
      %v3467 = vsel %vm1098, %v3427, 0
      %v3470 = vsel %vm1098, %v3429, 0
      %v3473 = vsel %vm1098, %v3431, 0
      %3475 = vmatpush.bf16.msra.mxu0 %v3451
      %3476 = vmatpush.bf16.msra.mxu0 %v3449
      %3477 = vmatpush.bf16.msra.mxu0 %v3447
      %3478 = vmatpush.bf16.msra.mxu0 %v3445
      %3479 = vmatpush.bf16.msra.mxu0 %v3443
      %3480 = vmatpush.bf16.msra.mxu0 %v3441
      %3481 = vmatpush.bf16.msra.mxu0 %v3439
      %3482 = vmatpush.bf16.msra.mxu0 %v3437
      %3483 = vmatmul.bf16.gmra.mxu0 %v3424
      %v3484 = vpop.f32.mrf.mxu0
      %v3485 = vadd.f32 0.0, %v3484
      %v3486 = vpop.f32.mrf.mxu0
      %v3487 = vadd.f32 0.0, %v3486
      %3488 = vmatmul.bf16.gmra.mxu0 %v3426
      %v3489 = vpop.f32.mrf.mxu0
      %v3490 = vadd.f32 0.0, %v3489
      %v3491 = vpop.f32.mrf.mxu0
      %v3492 = vadd.f32 0.0, %v3491
      %3493 = vmatmul.bf16.gmra.mxu0 %v3428
      %v3494 = vpop.f32.mrf.mxu0
      %v3495 = vadd.f32 0.0, %v3494
      %v3496 = vpop.f32.mrf.mxu0
      %v3497 = vadd.f32 0.0, %v3496
      %3498 = vmatmul.bf16.gmra.mxu0 %v3430
      %v3499 = vpop.f32.mrf.mxu0
      %v3500 = vadd.f32 0.0, %v3499
      %v3501 = vpop.f32.mrf.mxu0
      %v3502 = vadd.f32 0.0, %v3501
      %3503 = vdwg.mxu0
      %3504 = vmatpush.bf16.msra.mxu0 0
      %3505 = vmatpush.bf16.msra.mxu0 0
      %3506 = vmatpush.bf16.msra.mxu0 0
      %3507 = vmatpush.bf16.msra.mxu0 0
      %3508 = vmatpush.bf16.msra.mxu0 0
      %3509 = vmatpush.bf16.msra.mxu0 0
      %3510 = vmatpush.bf16.msra.mxu0 0
      %3511 = vmatpush.bf16.msra.mxu0 %v3453
      %3512 = vmatmul.bf16.gmra.mxu0 %v3464
      %v3513 = vpop.f32.mrf.mxu0
      %v3514 = vadd.f32 %v3485, %v3513
      %v3515 = vpop.f32.mrf.mxu0
      %v3516 = vadd.f32 %v3487, %v3515
      %3517 = vmatmul.bf16.gmra.mxu0 %v3467
      %v3518 = vpop.f32.mrf.mxu0
      %v3519 = vadd.f32 %v3490, %v3518
      %v3520 = vpop.f32.mrf.mxu0
      %v3521 = vadd.f32 %v3492, %v3520
      %3522 = vmatmul.bf16.gmra.mxu0 %v3470
      %v3523 = vpop.f32.mrf.mxu0
      %v3524 = vadd.f32 %v3495, %v3523
      %v3525 = vpop.f32.mrf.mxu0
      %v3526 = vadd.f32 %v3497, %v3525
      %3527 = vmatmul.bf16.gmra.mxu0 %v3473
      %v3528 = vpop.f32.mrf.mxu0
      %v3529 = vadd.f32 %v3500, %v3528
      %v3530 = vpop.f32.mrf.mxu0
      %v3531 = vadd.f32 %v3502, %v3530
      %3532 = vdwg.mxu0
      %v3541 = vunpack.c.l.b16 %v3376
      %v3542 = vunpack.c.h.b16 %v3376
      %v3543 = vunpack.c.l.b16 %v3377
      %v3544 = vunpack.c.h.b16 %v3377
      %v3545 = vunpack.c.l.b16 %v3378
      %v3546 = vunpack.c.h.b16 %v3378
      %v3547 = vunpack.c.l.b16 %v3379
      %v3548 = vunpack.c.h.b16 %v3379
      %v3549 = vunpack.c.l.b16 %v3380
      %v3550 = vunpack.c.h.b16 %v3380
      %v3551 = vunpack.c.l.b16 %v3381
      %v3552 = vunpack.c.h.b16 %v3381
      %v3553 = vunpack.c.l.b16 %v3382
      %v3554 = vunpack.c.h.b16 %v3382
      %v3555 = vunpack.c.l.b16 %v3383
      %v3556 = vunpack.c.h.b16 %v3383
      %v3557 = vpack.c.b16 %v3543, %v3541
      %v3558 = vpack.c.b16 %v3544, %v3542
      %v3559 = vpack.c.b16 %v3547, %v3545
      %v3560 = vpack.c.b16 %v3548, %v3546
      %v3561 = vpack.c.b16 %v3551, %v3549
      %v3562 = vpack.c.b16 %v3552, %v3550
      %v3563 = vpack.c.b16 %v3555, %v3553
      %v3564 = vpack.c.b16 %v3556, %v3554
      %3569 = vrot.lane.b32.xlu0 %v1907, 96
      %v3570 = vpop.permute.xlu0 %3569
      %3571 = vrot.lane.b32.xlu0 %v1908, 96
      %v3572 = vpop.permute.xlu0 %3571
      %3573 = vrot.lane.b32.xlu0 %v1909, 96
      %v3574 = vpop.permute.xlu0 %3573
      %3575 = vrot.lane.b32.xlu0 %v1910, 96
      %v3576 = vpop.permute.xlu0 %3575
      %3577 = vrot.lane.b32.xlu0 %v1911, 96
      %v3578 = vpop.permute.xlu0 %3577
      %3579 = vrot.lane.b32.xlu0 %v1912, 96
      %v3580 = vpop.permute.xlu0 %3579
      %3581 = vrot.lane.b32.xlu0 %v1913, 96
      %v3582 = vpop.permute.xlu0 %3581
      %3583 = vrot.lane.b32.xlu0 %v1914, 96
      %v3584 = vpop.permute.xlu0 %3583
      %3585 = vrot.lane.b32.xlu0 %v1915, 96
      %v3586 = vpop.permute.xlu0 %3585
      %v3597 = vsel %vm1098, %v3558, 0
      %v3600 = vsel %vm1098, %v3560, 0
      %v3603 = vsel %vm1098, %v3562, 0
      %v3606 = vsel %vm1098, %v3564, 0
      %3608 = vmatpush.bf16.msra.mxu0 %v3584
      %3609 = vmatpush.bf16.msra.mxu0 %v3582
      %3610 = vmatpush.bf16.msra.mxu0 %v3580
      %3611 = vmatpush.bf16.msra.mxu0 %v3578
      %3612 = vmatpush.bf16.msra.mxu0 %v3576
      %3613 = vmatpush.bf16.msra.mxu0 %v3574
      %3614 = vmatpush.bf16.msra.mxu0 %v3572
      %3615 = vmatpush.bf16.msra.mxu0 %v3570
      %3616 = vmatmul.bf16.gmra.mxu0 %v3557
      %v3617 = vpop.f32.mrf.mxu0
      %v3618 = vadd.f32 0.0, %v3617
      %v3619 = vpop.f32.mrf.mxu0
      %v3620 = vadd.f32 0.0, %v3619
      %3621 = vmatmul.bf16.gmra.mxu0 %v3559
      %v3622 = vpop.f32.mrf.mxu0
      %v3623 = vadd.f32 0.0, %v3622
      %v3624 = vpop.f32.mrf.mxu0
      %v3625 = vadd.f32 0.0, %v3624
      %3626 = vmatmul.bf16.gmra.mxu0 %v3561
      %v3627 = vpop.f32.mrf.mxu0
      %v3628 = vadd.f32 0.0, %v3627
      %v3629 = vpop.f32.mrf.mxu0
      %v3630 = vadd.f32 0.0, %v3629
      %3631 = vmatmul.bf16.gmra.mxu0 %v3563
      %v3632 = vpop.f32.mrf.mxu0
      %v3633 = vadd.f32 0.0, %v3632
      %v3634 = vpop.f32.mrf.mxu0
      %v3635 = vadd.f32 0.0, %v3634
      %3636 = vdwg.mxu0
      %3637 = vmatpush.bf16.msra.mxu0 0
      %3638 = vmatpush.bf16.msra.mxu0 0
      %3639 = vmatpush.bf16.msra.mxu0 0
      %3640 = vmatpush.bf16.msra.mxu0 0
      %3641 = vmatpush.bf16.msra.mxu0 0
      %3642 = vmatpush.bf16.msra.mxu0 0
      %3643 = vmatpush.bf16.msra.mxu0 0
      %3644 = vmatpush.bf16.msra.mxu0 %v3586
      %3645 = vmatmul.bf16.gmra.mxu0 %v3597
      %v3646 = vpop.f32.mrf.mxu0
      %v3647 = vadd.f32 %v3618, %v3646
      %v3648 = vpop.f32.mrf.mxu0
      %v3649 = vadd.f32 %v3620, %v3648
      %3650 = vmatmul.bf16.gmra.mxu0 %v3600
      %v3651 = vpop.f32.mrf.mxu0
      %v3652 = vadd.f32 %v3623, %v3651
      %v3653 = vpop.f32.mrf.mxu0
      %v3654 = vadd.f32 %v3625, %v3653
      %3655 = vmatmul.bf16.gmra.mxu0 %v3603
      %v3656 = vpop.f32.mrf.mxu0
      %v3657 = vadd.f32 %v3628, %v3656
      %v3658 = vpop.f32.mrf.mxu0
      %v3659 = vadd.f32 %v3630, %v3658
      %3660 = vmatmul.bf16.gmra.mxu0 %v3606
      %v3661 = vpop.f32.mrf.mxu0
      %v3662 = vadd.f32 %v3633, %v3661
      %v3663 = vpop.f32.mrf.mxu0
      %v3664 = vadd.f32 %v3635, %v3663
      %3665 = vdwg.mxu0
      %v3674 = vunpack.c.l.b16 %v3384
      %v3675 = vunpack.c.h.b16 %v3384
      %v3676 = vunpack.c.l.b16 %v3385
      %v3677 = vunpack.c.h.b16 %v3385
      %v3678 = vunpack.c.l.b16 %v3386
      %v3679 = vunpack.c.h.b16 %v3386
      %v3680 = vunpack.c.l.b16 %v3387
      %v3681 = vunpack.c.h.b16 %v3387
      %v3682 = vunpack.c.l.b16 %v3388
      %v3683 = vunpack.c.h.b16 %v3388
      %v3684 = vunpack.c.l.b16 %v3389
      %v3685 = vunpack.c.h.b16 %v3389
      %v3686 = vunpack.c.l.b16 %v3390
      %v3687 = vunpack.c.h.b16 %v3390
      %v3688 = vunpack.c.l.b16 %v3391
      %v3689 = vunpack.c.h.b16 %v3391
      %v3690 = vpack.c.b16 %v3676, %v3674
      %v3691 = vpack.c.b16 %v3677, %v3675
      %v3692 = vpack.c.b16 %v3680, %v3678
      %v3693 = vpack.c.b16 %v3681, %v3679
      %v3694 = vpack.c.b16 %v3684, %v3682
      %v3695 = vpack.c.b16 %v3685, %v3683
      %v3696 = vpack.c.b16 %v3688, %v3686
      %v3697 = vpack.c.b16 %v3689, %v3687
      %3702 = vrot.lane.b32.xlu0 %v2067, 96
      %v3703 = vpop.permute.xlu0 %3702
      %3704 = vrot.lane.b32.xlu0 %v2068, 96
      %v3705 = vpop.permute.xlu0 %3704
      %3706 = vrot.lane.b32.xlu0 %v2069, 96
      %v3707 = vpop.permute.xlu0 %3706
      %3708 = vrot.lane.b32.xlu0 %v2070, 96
      %v3709 = vpop.permute.xlu0 %3708
      %3710 = vrot.lane.b32.xlu0 %v2071, 96
      %v3711 = vpop.permute.xlu0 %3710
      %3712 = vrot.lane.b32.xlu0 %v2072, 96
      %v3713 = vpop.permute.xlu0 %3712
      %3714 = vrot.lane.b32.xlu0 %v2073, 96
      %v3715 = vpop.permute.xlu0 %3714
      %3716 = vrot.lane.b32.xlu0 %v2074, 96
      %v3717 = vpop.permute.xlu0 %3716
      %3718 = vrot.lane.b32.xlu0 %v2075, 96
      %v3719 = vpop.permute.xlu0 %3718
      %v3730 = vsel %vm1098, %v3691, 0
      %v3733 = vsel %vm1098, %v3693, 0
      %v3736 = vsel %vm1098, %v3695, 0
      %v3739 = vsel %vm1098, %v3697, 0
      %3741 = vmatpush.bf16.msra.mxu0 %v3717
      %3742 = vmatpush.bf16.msra.mxu0 %v3715
      %3743 = vmatpush.bf16.msra.mxu0 %v3713
      %3744 = vmatpush.bf16.msra.mxu0 %v3711
      %3745 = vmatpush.bf16.msra.mxu0 %v3709
      %3746 = vmatpush.bf16.msra.mxu0 %v3707
      %3747 = vmatpush.bf16.msra.mxu0 %v3705
      %3748 = vmatpush.bf16.msra.mxu0 %v3703
      %3749 = vmatmul.bf16.gmra.mxu0 %v3690
      %v3750 = vpop.f32.mrf.mxu0
      %v3751 = vadd.f32 0.0, %v3750
      %v3752 = vpop.f32.mrf.mxu0
      %v3753 = vadd.f32 0.0, %v3752
      %3754 = vmatmul.bf16.gmra.mxu0 %v3692
      %v3755 = vpop.f32.mrf.mxu0
      %v3756 = vadd.f32 0.0, %v3755
      %v3757 = vpop.f32.mrf.mxu0
      %v3758 = vadd.f32 0.0, %v3757
      %3759 = vmatmul.bf16.gmra.mxu0 %v3694
      %v3760 = vpop.f32.mrf.mxu0
      %v3761 = vadd.f32 0.0, %v3760
      %v3762 = vpop.f32.mrf.mxu0
      %v3763 = vadd.f32 0.0, %v3762
      %3764 = vmatmul.bf16.gmra.mxu0 %v3696
      %v3765 = vpop.f32.mrf.mxu0
      %v3766 = vadd.f32 0.0, %v3765
      %v3767 = vpop.f32.mrf.mxu0
      %v3768 = vadd.f32 0.0, %v3767
      %3769 = vdwg.mxu0
      %3770 = vmatpush.bf16.msra.mxu0 0
      %3771 = vmatpush.bf16.msra.mxu0 0
      %3772 = vmatpush.bf16.msra.mxu0 0
      %3773 = vmatpush.bf16.msra.mxu0 0
      %3774 = vmatpush.bf16.msra.mxu0 0
      %3775 = vmatpush.bf16.msra.mxu0 0
      %3776 = vmatpush.bf16.msra.mxu0 0
      %3777 = vmatpush.bf16.msra.mxu0 %v3719
      %3778 = vmatmul.bf16.gmra.mxu0 %v3730
      %v3779 = vpop.f32.mrf.mxu0
      %v3780 = vadd.f32 %v3751, %v3779
      %v3781 = vpop.f32.mrf.mxu0
      %v3782 = vadd.f32 %v3753, %v3781
      %3783 = vmatmul.bf16.gmra.mxu0 %v3733
      %v3784 = vpop.f32.mrf.mxu0
      %v3785 = vadd.f32 %v3756, %v3784
      %v3786 = vpop.f32.mrf.mxu0
      %v3787 = vadd.f32 %v3758, %v3786
      %3788 = vmatmul.bf16.gmra.mxu0 %v3736
      %v3789 = vpop.f32.mrf.mxu0
      %v3790 = vadd.f32 %v3761, %v3789
      %v3791 = vpop.f32.mrf.mxu0
      %v3792 = vadd.f32 %v3763, %v3791
      %3793 = vmatmul.bf16.gmra.mxu0 %v3739
      %v3794 = vpop.f32.mrf.mxu0
      %v3795 = vadd.f32 %v3766, %v3794
      %v3796 = vpop.f32.mrf.mxu0
      %v3797 = vadd.f32 %v3768, %v3796
      %3798 = vdwg.mxu0
      %v3807 = vunpack.c.l.b16 %v3392
      %v3808 = vunpack.c.h.b16 %v3392
      %v3809 = vunpack.c.l.b16 %v3393
      %v3810 = vunpack.c.h.b16 %v3393
      %v3811 = vunpack.c.l.b16 %v3394
      %v3812 = vunpack.c.h.b16 %v3394
      %v3813 = vunpack.c.l.b16 %v3395
      %v3814 = vunpack.c.h.b16 %v3395
      %v3815 = vunpack.c.l.b16 %v3396
      %v3816 = vunpack.c.h.b16 %v3396
      %v3817 = vunpack.c.l.b16 %v3397
      %v3818 = vunpack.c.h.b16 %v3397
      %v3819 = vunpack.c.l.b16 %v3398
      %v3820 = vunpack.c.h.b16 %v3398
      %v3821 = vunpack.c.l.b16 %v3399
      %v3822 = vunpack.c.h.b16 %v3399
      %v3823 = vpack.c.b16 %v3809, %v3807
      %v3824 = vpack.c.b16 %v3810, %v3808
      %v3825 = vpack.c.b16 %v3813, %v3811
      %v3826 = vpack.c.b16 %v3814, %v3812
      %v3827 = vpack.c.b16 %v3817, %v3815
      %v3828 = vpack.c.b16 %v3818, %v3816
      %v3829 = vpack.c.b16 %v3821, %v3819
      %v3830 = vpack.c.b16 %v3822, %v3820
      %3835 = vrot.lane.b32.xlu0 %v2227, 96
      %v3836 = vpop.permute.xlu0 %3835
      %3837 = vrot.lane.b32.xlu0 %v2228, 96
      %v3838 = vpop.permute.xlu0 %3837
      %3839 = vrot.lane.b32.xlu0 %v2229, 96
      %v3840 = vpop.permute.xlu0 %3839
      %3841 = vrot.lane.b32.xlu0 %v2230, 96
      %v3842 = vpop.permute.xlu0 %3841
      %3843 = vrot.lane.b32.xlu0 %v2231, 96
      %v3844 = vpop.permute.xlu0 %3843
      %3845 = vrot.lane.b32.xlu0 %v2232, 96
      %v3846 = vpop.permute.xlu0 %3845
      %3847 = vrot.lane.b32.xlu0 %v2233, 96
      %v3848 = vpop.permute.xlu0 %3847
      %3849 = vrot.lane.b32.xlu0 %v2234, 96
      %v3850 = vpop.permute.xlu0 %3849
      %3851 = vrot.lane.b32.xlu0 %v2235, 96
      %v3852 = vpop.permute.xlu0 %3851
      %v3863 = vsel %vm1098, %v3824, 0
      %v3866 = vsel %vm1098, %v3826, 0
      %v3869 = vsel %vm1098, %v3828, 0
      %v3872 = vsel %vm1098, %v3830, 0
      %3874 = vmatpush.bf16.msra.mxu0 %v3850
      %3875 = vmatpush.bf16.msra.mxu0 %v3848
      %3876 = vmatpush.bf16.msra.mxu0 %v3846
      %3877 = vmatpush.bf16.msra.mxu0 %v3844
      %3878 = vmatpush.bf16.msra.mxu0 %v3842
      %3879 = vmatpush.bf16.msra.mxu0 %v3840
      %3880 = vmatpush.bf16.msra.mxu0 %v3838
      %3881 = vmatpush.bf16.msra.mxu0 %v3836
      %3882 = vmatmul.bf16.gmra.mxu0 %v3823
      %v3883 = vpop.f32.mrf.mxu0
      %v3884 = vadd.f32 0.0, %v3883
      %v3885 = vpop.f32.mrf.mxu0
      %v3886 = vadd.f32 0.0, %v3885
      %3887 = vmatmul.bf16.gmra.mxu0 %v3825
      %v3888 = vpop.f32.mrf.mxu0
      %v3889 = vadd.f32 0.0, %v3888
      %v3890 = vpop.f32.mrf.mxu0
      %v3891 = vadd.f32 0.0, %v3890
      %3892 = vmatmul.bf16.gmra.mxu0 %v3827
      %v3893 = vpop.f32.mrf.mxu0
      %v3894 = vadd.f32 0.0, %v3893
      %v3895 = vpop.f32.mrf.mxu0
      %v3896 = vadd.f32 0.0, %v3895
      %3897 = vmatmul.bf16.gmra.mxu0 %v3829
      %v3898 = vpop.f32.mrf.mxu0
      %v3899 = vadd.f32 0.0, %v3898
      %v3900 = vpop.f32.mrf.mxu0
      %v3901 = vadd.f32 0.0, %v3900
      %3902 = vdwg.mxu0
      %3903 = vmatpush.bf16.msra.mxu0 0
      %3904 = vmatpush.bf16.msra.mxu0 0
      %3905 = vmatpush.bf16.msra.mxu0 0
      %3906 = vmatpush.bf16.msra.mxu0 0
      %3907 = vmatpush.bf16.msra.mxu0 0
      %3908 = vmatpush.bf16.msra.mxu0 0
      %3909 = vmatpush.bf16.msra.mxu0 0
      %3910 = vmatpush.bf16.msra.mxu0 %v3852
      %3911 = vmatmul.bf16.gmra.mxu0 %v3863
      %v3912 = vpop.f32.mrf.mxu0
      %v3913 = vadd.f32 %v3884, %v3912
      %v3914 = vpop.f32.mrf.mxu0
      %v3915 = vadd.f32 %v3886, %v3914
      %3916 = vmatmul.bf16.gmra.mxu0 %v3866
      %v3917 = vpop.f32.mrf.mxu0
      %v3918 = vadd.f32 %v3889, %v3917
      %v3919 = vpop.f32.mrf.mxu0
      %v3920 = vadd.f32 %v3891, %v3919
      %3921 = vmatmul.bf16.gmra.mxu0 %v3869
      %v3922 = vpop.f32.mrf.mxu0
      %v3923 = vadd.f32 %v3894, %v3922
      %v3924 = vpop.f32.mrf.mxu0
      %v3925 = vadd.f32 %v3896, %v3924
      %3926 = vmatmul.bf16.gmra.mxu0 %v3872
      %v3927 = vpop.f32.mrf.mxu0
      %v3928 = vadd.f32 %v3899, %v3927
      %v3929 = vpop.f32.mrf.mxu0
      %v3930 = vadd.f32 %v3901, %v3929
      %3931 = vdwg.mxu0
      %3964 = vrot.lane.b32.xlu0 %v3514, 32
      %v3965 = vpop.permute.xlu0 %3964
      %3966 = vrot.lane.b32.xlu0 %v3516, 32
      %v3967 = vpop.permute.xlu0 %3966
      %3968 = vrot.lane.b32.xlu0 %v3519, 32
      %v3969 = vpop.permute.xlu0 %3968
      %3970 = vrot.lane.b32.xlu0 %v3521, 32
      %v3971 = vpop.permute.xlu0 %3970
      %3972 = vrot.lane.b32.xlu0 %v3524, 32
      %v3973 = vpop.permute.xlu0 %3972
      %3974 = vrot.lane.b32.xlu0 %v3526, 32
      %v3975 = vpop.permute.xlu0 %3974
      %3976 = vrot.lane.b32.xlu0 %v3529, 32
      %v3977 = vpop.permute.xlu0 %3976
      %3978 = vrot.lane.b32.xlu0 %v3531, 32
      %v3979 = vpop.permute.xlu0 %3978
      %3980 = vrot.lane.b32.xlu0 %v3647, 32
      %v3981 = vpop.permute.xlu0 %3980
      %3982 = vrot.lane.b32.xlu0 %v3649, 32
      %v3983 = vpop.permute.xlu0 %3982
      %3984 = vrot.lane.b32.xlu0 %v3652, 32
      %v3985 = vpop.permute.xlu0 %3984
      %3986 = vrot.lane.b32.xlu0 %v3654, 32
      %v3987 = vpop.permute.xlu0 %3986
      %3988 = vrot.lane.b32.xlu0 %v3657, 32
      %v3989 = vpop.permute.xlu0 %3988
      %3990 = vrot.lane.b32.xlu0 %v3659, 32
      %v3991 = vpop.permute.xlu0 %3990
      %3992 = vrot.lane.b32.xlu0 %v3662, 32
      %v3993 = vpop.permute.xlu0 %3992
      %3994 = vrot.lane.b32.xlu0 %v3664, 32
      %v3995 = vpop.permute.xlu0 %3994
      %3996 = vrot.lane.b32.xlu0 %v3780, 32
      %v3997 = vpop.permute.xlu0 %3996
      %3998 = vrot.lane.b32.xlu0 %v3782, 32
      %v3999 = vpop.permute.xlu0 %3998
      %4000 = vrot.lane.b32.xlu0 %v3785, 32
      %v4001 = vpop.permute.xlu0 %4000
      %4002 = vrot.lane.b32.xlu0 %v3787, 32
      %v4003 = vpop.permute.xlu0 %4002
      %4004 = vrot.lane.b32.xlu0 %v3790, 32
      %v4005 = vpop.permute.xlu0 %4004
      %4006 = vrot.lane.b32.xlu0 %v3792, 32
      %v4007 = vpop.permute.xlu0 %4006
      %4008 = vrot.lane.b32.xlu0 %v3795, 32
      %v4009 = vpop.permute.xlu0 %4008
      %4010 = vrot.lane.b32.xlu0 %v3797, 32
      %v4011 = vpop.permute.xlu0 %4010
      %4012 = vrot.lane.b32.xlu0 %v3913, 32
      %v4013 = vpop.permute.xlu0 %4012
      %4014 = vrot.lane.b32.xlu0 %v3915, 32
      %v4015 = vpop.permute.xlu0 %4014
      %4016 = vrot.lane.b32.xlu0 %v3918, 32
      %v4017 = vpop.permute.xlu0 %4016
      %4018 = vrot.lane.b32.xlu0 %v3920, 32
      %v4019 = vpop.permute.xlu0 %4018
      %4020 = vrot.lane.b32.xlu0 %v3923, 32
      %v4021 = vpop.permute.xlu0 %4020
      %4022 = vrot.lane.b32.xlu0 %v3925, 32
      %v4023 = vpop.permute.xlu0 %4022
      %4024 = vrot.lane.b32.xlu0 %v3928, 32
      %v4025 = vpop.permute.xlu0 %4024
      %4026 = vrot.lane.b32.xlu0 %v3930, 32
      %v4027 = vpop.permute.xlu0 %4026
      %v4060 = vsel %vm514, %v1816, %v3965
      %v4061 = vsel %vm514, %v1818, %v3967
      %v4062 = vsel %vm514, %v1821, %v3969
      %v4063 = vsel %vm514, %v1823, %v3971
      %v4064 = vsel %vm514, %v1826, %v3973
      %v4065 = vsel %vm514, %v1828, %v3975
      %v4066 = vsel %vm514, %v1831, %v3977
      %v4067 = vsel %vm514, %v1833, %v3979
      %v4068 = vsel %vm514, %v1976, %v3981
      %v4069 = vsel %vm514, %v1978, %v3983
      %v4070 = vsel %vm514, %v1981, %v3985
      %v4071 = vsel %vm514, %v1983, %v3987
      %v4072 = vsel %vm514, %v1986, %v3989
      %v4073 = vsel %vm514, %v1988, %v3991
      %v4074 = vsel %vm514, %v1991, %v3993
      %v4075 = vsel %vm514, %v1993, %v3995
      %v4076 = vsel %vm514, %v2136, %v3997
      %v4077 = vsel %vm514, %v2138, %v3999
      %v4078 = vsel %vm514, %v2141, %v4001
      %v4079 = vsel %vm514, %v2143, %v4003
      %v4080 = vsel %vm514, %v2146, %v4005
      %v4081 = vsel %vm514, %v2148, %v4007
      %v4082 = vsel %vm514, %v2151, %v4009
      %v4083 = vsel %vm514, %v2153, %v4011
      %v4084 = vsel %vm514, %v2296, %v4013
      %v4085 = vsel %vm514, %v2298, %v4015
      %v4086 = vsel %vm514, %v2301, %v4017
      %v4087 = vsel %vm514, %v2303, %v4019
      %v4088 = vsel %vm514, %v2306, %v4021
      %v4089 = vsel %vm514, %v2308, %v4023
      %v4090 = vsel %vm514, %v2311, %v4025
      %v4091 = vsel %vm514, %v2313, %v4027
      %v4092 = vpack.c.bf16 %v4060, %v4060
      %v4093 = vpack.c.bf16 %v4061, %v4061
      %v4094 = vpack.c.bf16 %v4062, %v4062
      %v4095 = vpack.c.bf16 %v4063, %v4063
      %v4096 = vpack.c.bf16 %v4064, %v4064
      %v4097 = vpack.c.bf16 %v4065, %v4065
      %v4098 = vpack.c.bf16 %v4066, %v4066
      %v4099 = vpack.c.bf16 %v4067, %v4067
      %v4100 = vpack.c.bf16 %v4068, %v4068
      %v4101 = vpack.c.bf16 %v4069, %v4069
      %v4102 = vpack.c.bf16 %v4070, %v4070
      %v4103 = vpack.c.bf16 %v4071, %v4071
      %v4104 = vpack.c.bf16 %v4072, %v4072
      %v4105 = vpack.c.bf16 %v4073, %v4073
      %v4106 = vpack.c.bf16 %v4074, %v4074
      %v4107 = vpack.c.bf16 %v4075, %v4075
      %v4108 = vpack.c.bf16 %v4076, %v4076
      %v4109 = vpack.c.bf16 %v4077, %v4077
      %v4110 = vpack.c.bf16 %v4078, %v4078
      %v4111 = vpack.c.bf16 %v4079, %v4079
      %v4112 = vpack.c.bf16 %v4080, %v4080
      %v4113 = vpack.c.bf16 %v4081, %v4081
      %v4114 = vpack.c.bf16 %v4082, %v4082
      %v4115 = vpack.c.bf16 %v4083, %v4083
      %v4116 = vpack.c.bf16 %v4084, %v4084
      %v4117 = vpack.c.bf16 %v4085, %v4085
      %v4118 = vpack.c.bf16 %v4086, %v4086
      %v4119 = vpack.c.bf16 %v4087, %v4087
      %v4120 = vpack.c.bf16 %v4088, %v4088
      %v4121 = vpack.c.bf16 %v4089, %v4089
      %v4122 = vpack.c.bf16 %v4090, %v4090
      %v4123 = vpack.c.bf16 %v4091, %v4091
      %vm4124 = vcmask 519168
      %4125 = vst.msk [vmem:[%s254] sm:$0xf] %vm4124, %v4092
      %4126 = vst.msk [vmem:[%s254 + $0x4] sm:$0xf] %vm4124, %v4093
      %4127 = vst.msk [vmem:[%s254 + $0x8] sm:$0xf] %vm4124, %v4094
      %4128 = vst.msk [vmem:[%s254 + $0xc] sm:$0xf] %vm4124, %v4095
      %4129 = vst.msk [vmem:[%s254 + $0x10] sm:$0xf] %vm4124, %v4096
      %4130 = vst.msk [vmem:[%s254 + $0x14] sm:$0xf] %vm4124, %v4097
      %4131 = vst.msk [vmem:[%s254 + $0x18] sm:$0xf] %vm4124, %v4098
      %4132 = vst.msk [vmem:[%s254 + $0x1c] sm:$0xf] %vm4124, %v4099
      %4133 = vst.msk [vmem:[%s254 + $0x20] sm:$0xf] %vm4124, %v4100
      %4134 = vst.msk [vmem:[%s254 + $0x24] sm:$0xf] %vm4124, %v4101
      %4135 = vst.msk [vmem:[%s254 + $0x28] sm:$0xf] %vm4124, %v4102
      %4136 = vst.msk [vmem:[%s254 + $0x2c] sm:$0xf] %vm4124, %v4103
      %4137 = vst.msk [vmem:[%s254 + $0x30] sm:$0xf] %vm4124, %v4104
      %4138 = vst.msk [vmem:[%s254 + $0x34] sm:$0xf] %vm4124, %v4105
      %4139 = vst.msk [vmem:[%s254 + $0x38] sm:$0xf] %vm4124, %v4106
      %4140 = vst.msk [vmem:[%s254 + $0x3c] sm:$0xf] %vm4124, %v4107
      %4141 = vst.msk [vmem:[%s254 + $0x40] sm:$0xf] %vm4124, %v4108
      %4142 = vst.msk [vmem:[%s254 + $0x44] sm:$0xf] %vm4124, %v4109
      %4143 = vst.msk [vmem:[%s254 + $0x48] sm:$0xf] %vm4124, %v4110
      %4144 = vst.msk [vmem:[%s254 + $0x4c] sm:$0xf] %vm4124, %v4111
      %4145 = vst.msk [vmem:[%s254 + $0x50] sm:$0xf] %vm4124, %v4112
      %4146 = vst.msk [vmem:[%s254 + $0x54] sm:$0xf] %vm4124, %v4113
      %4147 = vst.msk [vmem:[%s254 + $0x58] sm:$0xf] %vm4124, %v4114
      %4148 = vst.msk [vmem:[%s254 + $0x5c] sm:$0xf] %vm4124, %v4115
      %4149 = vst.msk [vmem:[%s254 + $0x60] sm:$0xf] %vm4124, %v4116
      %4150 = vst.msk [vmem:[%s254 + $0x64] sm:$0xf] %vm4124, %v4117
      %4151 = vst.msk [vmem:[%s254 + $0x68] sm:$0xf] %vm4124, %v4118
      %4152 = vst.msk [vmem:[%s254 + $0x6c] sm:$0xf] %vm4124, %v4119
      %4153 = vst.msk [vmem:[%s254 + $0x70] sm:$0xf] %vm4124, %v4120
      %4154 = vst.msk [vmem:[%s254 + $0x74] sm:$0xf] %vm4124, %v4121
      %4155 = vst.msk [vmem:[%s254 + $0x78] sm:$0xf] %vm4124, %v4122
      %4156 = vst.msk [vmem:[%s254 + $0x7c] sm:$0xf] %vm4124, %v4123
      %s4157 = smul.u32 4, %s15
      %p4158 = scmp.lt.s32.totalorder %s4157, 7
      %s4159 = scalar_select %p4158, %s4157, 7
      %s4160 = smul.addr %s4159, 8
      %s4161 = smul.addr %s4160, 4
      %s4162 = scalar_lea.vmem %s4, %s4161
      // Predicated region
      $region37: #{ocab_forward.4} parent=35 // pred_check
        %p4163 = pneg %p132
      $region38: #{ocab_forward.4} parent=35 // pred_check_branch
        %4165 = sbr.rel (%p4163) target = $region40
      $region39: #{ocab_forward.4} parent=35 // pred_region
        %s4166 = smul.u32 4, %s15
      $region40: #{ocab_forward.4} parent=35 // pred_fallthru
        _
    $region36: #{ocab_forward.4} parent=5 // pred_fallthru
      _
    %p4167 = scmp.le.s32.totalorder 2, %s10
    // Predicated region
    $region41: #{ocab_forward.4} parent=5 // pred_check
      %p4168 = pneg %p4167
    $region42: #{ocab_forward.4} parent=5 // pred_check_branch
      %4170 = sbr.rel (%p4168) target = $region44
    $region43: #{ocab_forward.4} parent=5 // pred_region
      %s4171 = ssub.s32 %s10, 2
      // Predicated region
      $region45: #{ocab_forward.4} parent=43 // pred_check
        %p4172 = pneg %p138
      $region46: #{ocab_forward.4} parent=43 // pred_check_branch
        %4174 = sbr.rel (%p4172) target = $region48
      $region47: #{ocab_forward.4} parent=43 // pred_region
        %s4175 = smul.u32 4, %s16
        %p4176 = scmp.lt.s32.totalorder %s4175, 7
        %s4177 = scalar_select %p4176, %s4175, 7
        %s4178 = smul.addr %s4177, 8
        %s4179 = smul.addr %s4178, 4
        %s4180 = scalar_lea.vmem %s4, %s4179
      $region48: #{ocab_forward.4} parent=43 // pred_fallthru
        _
    $region44: #{ocab_forward.4} parent=5 // pred_fallthru
      _
  $region6: #{ocab_forward.4} parent=0 // loop_footer
    %s14 = sadd.s32 1, %s10
  $region7: #{ocab_forward.4} parent=0 // loop_footer_branch
    %9 = sbr.rel target = $region3
  $region8: #{ocab_forward.4} parent=0 // loop_exit
    _

</llo_original>
